<compile_context>
chip_gen: v7x
topology: tpu7x:2x2x1
jax: 0.10.0
libtpu: 0.0.40
codegen_flags: <defaults>
</compile_context>

<pallas_src>
import functools

import jax
import jax.numpy as jnp
import numpy as np
from jax import lax
from jax.experimental import pallas as pl
from jax.experimental.pallas import tpu as pltpu


_UNROLL_T_MAX = 16                       # fully unroll the time loop below this
_VMEM_BUDGET = 40 * 1024 * 1024          # conservative working budget
_VMEM_LIMIT_CAP = 48 * 1024 * 1024       # <= v7x 64 MiB physical VMEM per TC


# ----------------------------------------------------------------------------
# Kernels (lane-dense: points on the last axis)
# ----------------------------------------------------------------------------
def _velocity(x, w1_cols, b1_full, w2t, b2):
    """v = W2^T tanh(W1^T x + b1) + b2, lane-dense.

    x: (D, TN); w1_cols: D x (H, 1); b1_full: (H, TN); w2t: (D, H); b2: (D, 1).
    Returns v: (D, TN), a: (H, TN).
    """
    D = x.shape[0]
    h = b1_full
    for k in range(D):
        h = h + w1_cols[k] * x[k:k + 1, :]        # (H,1)*(1,TN) broadcast FMA
    a = jnp.tanh(h)                                # EUP
    v = jnp.dot(w2t, a, preferred_element_type=jnp.float32) + b2   # MXU
    return v, a


def _shapenet_deriv_kernel(T, D, H,
                           x0_ref, w1t_ref, w2t_ref, m_ref, b1_ref, b2_ref,
                           x_out_ref, v_out_ref, dvdh_out_ref):
    TN = x0_ref.shape[1]
    scale = 2.0 / T

    # ---- hoisted loop invariants (loads + broadcasts done once) -------------
    x0 = x0_ref[...]
    w1_cols = [w1t_ref[:, k:k + 1] for k in range(D)]      # (H, 1) each
    b1_full = jnp.broadcast_to(b1_ref[...], (H, TN))
    w2t = w2t_ref[...]
    b2 = b2_ref[...]
    M = m_ref[...]                                          # (D*D, H)

    x_out_ref[0] = x0.astype(x_out_ref.dtype)               # trajectory row 0

    # dx/dh state: row k holds dx_k/dh_m over m -> (D, TN); init = identity.
    sub = lax.broadcasted_iota(jnp.int32, (D, TN), 0)
    dxdh0 = tuple((sub == k).astype(jnp.float32) for k in range(D))

    def step(t, carry):
        x = carry[0]
        dxdh = carry[1:]
        v, a = _velocity(x, w1_cols, b1_full, w2t, b2)
        s = 1.0 - a * a                                     # tanh', (H, TN)

        # Analytic Jacobian, one fused MXU push:
        #   Jf[j*D + k, i] = dv_j/dx_k at point i.
        Jf = jnp.dot(M, s, preferred_element_type=jnp.float32)   # (D*D, TN)

        # Chain rule dv_j/dh = sum_k J[j,k] * dx_k/dh : unrolled VPU FMAs;
        # each row is stored directly (no stack, no (D,D,TN) temporary).
        dv_rows = []
        for j in range(D):
            acc = Jf[j * D:j * D + 1, :] * dxdh[0]
            for k in range(1, D):
                acc = acc + Jf[j * D + k:j * D + k + 1, :] * dxdh[k]
            dv_rows.append(acc)                             # (D, TN) = dv_j/dh
            dvdh_out_ref[t, j] = acc.astype(dvdh_out_ref.dtype)

        x_new = x + v * scale
        x_out_ref[t + 1] = x_new.astype(x_out_ref.dtype)
        v_out_ref[t] = v.astype(v_out_ref.dtype)

        new_dxdh = tuple(dxdh[k] + dv_rows[k] * scale for k in range(D))
        return (x_new,) + new_dxdh

    carry = (x0,) + dxdh0
    if T <= _UNROLL_T_MAX:
        for t in range(T):
            carry = step(t, carry)
    else:
        lax.fori_loop(0, T, step, carry)


def _shapenet_noderiv_kernel(T, D, H,
                             x0_ref, w1t_ref, w2t_ref, b1_ref, b2_ref,
                             x_out_ref, v_out_ref):
    TN = x0_ref.shape[1]
    scale = 2.0 / T

    x0 = x0_ref[...]
    w1_cols = [w1t_ref[:, k:k + 1] for k in range(D)]
    b1_full = jnp.broadcast_to(b1_ref[...], (H, TN))
    w2t = w2t_ref[...]
    b2 = b2_ref[...]

    x_out_ref[0] = x0.astype(x_out_ref.dtype)

    def step(t, x):
        v, _ = _velocity(x, w1_cols, b1_full, w2t, b2)
        x_new = x + v * scale
        x_out_ref[t + 1] = x_new.astype(x_out_ref.dtype)
        v_out_ref[t] = v.astype(v_out_ref.dtype)
        return x_new

    if T <= _UNROLL_T_MAX:
        x = x0
        for t in range(T):
            x = step(t, x)
    else:
        lax.fori_loop(0, T, step, x0)


# ----------------------------------------------------------------------------
# Wrapper
# ----------------------------------------------------------------------------
def _pick_tile(N, tile_n):
    """Lane-tile size / count.  Prefer no padding and few, big tiles."""
    if N < 128:
        return N, 1, N                       # single full-extent tile
    if N % 128 == 0 and N <= max(tile_n, 128):
        return N, 1, N                       # one tile, no padding, no slice copy
    tn = min(tile_n, N)
    if tn >= 256:
        tn = (tn // 256) * 256               # fill the 256-wide MXU RHS (v6e/v7x)
    else:
        tn = 128
    num_n = -(-N // tn)
    return tn, num_n, num_n * tn


@functools.partial(jax.jit,
                   static_argnames=("T", "compute_derivative", "tile_n",
                                    "batch_major"))
def shapenet_forward(x0, params, T, compute_derivative=1, tile_n=512,
                     batch_major=False):
    """Pallas equivalent of ShapeNet.forward (compute_derivative in {0, 1}).

    Default (lane-dense) return layout:
      x_traj:    (T+1, D, N)        (row 0 is x0)
      v_traj:    (T,   D, N)
      dvdh_traj: (T,   D, D, N)     dvdh_traj[t, j, m, n] = dv_j/dh_m, or None
      d2v_traj:  None
    With batch_major=True the arrays are transposed to the torch layout
    ((T+1, N, D), (T, N, D), (T, N, D, D)).
    """
    assert compute_derivative in (0, 1)
    N, D = x0.shape
    w1 = params["w1"].astype(jnp.float32)     # (D, H)
    b1 = params["b1"].astype(jnp.float32)     # (H,)
    w2 = params["w2"].astype(jnp.float32)     # (H, D)
    b2 = params["b2"].astype(jnp.float32)     # (D,)
    H = w1.shape[1]

    tn, num_n, Np = _pick_tile(N, tile_n)

    # Rough per-tile VMEM need (bytes): double-buffered blocks + live temps.
    def vmem_est(tn_):
        out_e = (T + 1) * D * tn_ + T * D * tn_
        if compute_derivative:
            out_e += T * D * D * tn_
        in_e = D * tn_ + 2 * D * H + H + D
        if compute_derivative:
            in_e += D * D * H
        live_e = 4 * H * tn_                       # h, a, s, Jf style temporaries
        return 4 * (2 * (in_e + out_e) + live_e)

    # Shrink the lane tile if the full-T output chunk would blow the budget.
    while tn > 128 and vmem_est(tn) > _VMEM_BUDGET:
        tn = max(128, ((tn // 2) // 128) * 128)
        num_n = -(-N // tn)
        Np = num_n * tn

    # Lane-dense inputs.
    x0t = jnp.transpose(x0).astype(jnp.float32)        # (D, N) -- tiny transpose
    if Np > N:
        x0t = jnp.pad(x0t, ((0, 0), (0, Np - N)))
    w1t = jnp.transpose(w1)                            # (H, D)
    w2t = jnp.transpose(w2)                            # (D, H)
    b1c = b1.reshape(H, 1)
    b2c = b2.reshape(D, 1)

    cp = dict(dimension_semantics=("parallel",))
    need = vmem_est(tn)
    if need > 16 * 1024 * 1024:
        # Generation-safe cap (v7x has only 64 MiB physical VMEM per TC).
        cp["vmem_limit_bytes"] = min(2 * need, _VMEM_LIMIT_CAP)
    compiler_params = pltpu.CompilerParams(**cp)

    wfull = lambda n: (0, 0)

    if compute_derivative >= 1:
        # Combined Jacobian weight: M[j*D+k, h] = w2[h, j] * w1[k, h].
        m_comb = (w2t[:, None, :] * w1[None, :, :]).reshape(D * D, H)

        kernel = functools.partial(_shapenet_deriv_kernel, T, D, H)
        grid_spec = pltpu.PrefetchScalarGridSpec(
            num_scalar_prefetch=0,
            grid=(num_n,),
            in_specs=[
                pl.BlockSpec((D, tn), lambda n: (0, n)),        # x0^T tile
                pl.BlockSpec((H, D), wfull),                    # W1^T
                pl.BlockSpec((D, H), wfull),                    # W2^T
                pl.BlockSpec((D * D, H), wfull),                # combined M
                pl.BlockSpec((H, 1), wfull),                    # b1 column
                pl.BlockSpec((D, 1), wfull),                    # b2 column
            ],
            out_specs=[
                pl.BlockSpec((T + 1, D, tn), lambda n: (0, 0, n)),
                pl.BlockSpec((T, D, tn), lambda n: (0, 0, n)),
                pl.BlockSpec((T, D, D, tn), lambda n: (0, 0, 0, n)),
            ],
        )
        xT, vT, dvdhT = pl.pallas_call(
            kernel,
            out_shape=(
                jax.ShapeDtypeStruct((T + 1, D, Np), jnp.float32),
                jax.ShapeDtypeStruct((T, D, Np), jnp.float32),
                jax.ShapeDtypeStruct((T, D, D, Np), jnp.float32),
            ),
            grid_spec=grid_spec,
            compiler_params=compiler_params,
        )(x0t, w1t, w2t, m_comb, b1c, b2c)
        dvdh_traj = dvdhT[:, :, :, :N] if Np > N else dvdhT
    else:
        kernel = functools.partial(_shapenet_noderiv_kernel, T, D, H)
        grid_spec = pltpu.PrefetchScalarGridSpec(
            num_scalar_prefetch=0,
            grid=(num_n,),
            in_specs=[
                pl.BlockSpec((D, tn), lambda n: (0, n)),        # x0^T tile
                pl.BlockSpec((H, D), wfull),                    # W1^T
                pl.BlockSpec((D, H), wfull),                    # W2^T
                pl.BlockSpec((H, 1), wfull),                    # b1 column
                pl.BlockSpec((D, 1), wfull),                    # b2 column
            ],
            out_specs=[
                pl.BlockSpec((T + 1, D, tn), lambda n: (0, 0, n)),
                pl.BlockSpec((T, D, tn), lambda n: (0, 0, n)),
            ],
        )
        xT, vT = pl.pallas_call(
            kernel,
            out_shape=(
                jax.ShapeDtypeStruct((T + 1, D, Np), jnp.float32),
                jax.ShapeDtypeStruct((T, D, Np), jnp.float32),
            ),
            grid_spec=grid_spec,
            compiler_params=compiler_params,
        )(x0t, w1t, w2t, b1c, b2c)
        dvdh_traj = None

    x_traj = xT[:, :, :N] if Np > N else xT
    v_traj = vT[:, :, :N] if Np > N else vT

    if batch_major:          # optional torch-layout view (costs HBM transposes)
        x_traj = jnp.transpose(x_traj, (0, 2, 1))
        v_traj = jnp.transpose(v_traj, (0, 2, 1))
        if dvdh_traj is not None:
            dvdh_traj = jnp.transpose(dvdh_traj, (0, 3, 1, 2))
    return x_traj, v_traj, dvdh_traj, None


# ----------------------------------------------------------------------------
# Pure-JAX reference (batch-major, mirrors the torch module)
# ----------------------------------------------------------------------------
def shapenet_ref(x0, params, T):
    w1, b1, w2, b2 = params["w1"], params["b1"], params["w2"], params["b2"]
    N, D = x0.shape
    x = x0
    dxdh = jnp.broadcast_to(jnp.eye(D, dtype=jnp.float32), (N, D, D))
    xs, vs, dvs = [x0], [], []
    for _ in range(T):
        a = jnp.tanh(x @ w1 + b1)
        v = a @ w2 + b2
        s = 1.0 - a * a
        J = jnp.einsum("hj,ih,kh->ijk", w2, s, w1)        # dv/dx per sample
        dvdh = jnp.einsum("ijk,ikm->ijm", J, dxdh)
        x = x + v / T * 2
        dxdh = dxdh + dvdh / T * 2
        xs.append(x)
        vs.append(v)
        dvs.append(dvdh)
    return jnp.stack(xs), jnp.stack(vs), jnp.stack(dvs)


if __name__ == "__main__":
    N, D, H, T = 384, 3, 32, 8   # points, ndim, hidden, integration steps

    key = jax.random.PRNGKey(0)
    k_x, k_w1, k_b1, k_w2, k_b2 = jax.random.split(key, 5)
    x0 = jax.random.normal(k_x, (N, D), dtype=jnp.float32)
    params = {
        "w1": 0.3 * jax.random.normal(k_w1, (D, H), dtype=jnp.float32),
        "b1": 0.1 * jax.random.normal(k_b1, (H,), dtype=jnp.float32),
        "w2": 0.3 * jax.random.normal(k_w2, (H, D), dtype=jnp.float32),
        "b2": 0.1 * jax.random.normal(k_b2, (D,), dtype=jnp.float32),
    }

    xs_ref, vs_ref, dvs_ref = shapenet_ref(x0, params, T)
    xs_ref_ld = np.asarray(xs_ref).transpose(0, 2, 1)          # (T+1, D, N)
    vs_ref_ld = np.asarray(vs_ref).transpose(0, 2, 1)          # (T,   D, N)
    dvs_ref_ld = np.asarray(dvs_ref).transpose(0, 2, 3, 1)     # (T, D, D, N)

    # derivative path (single tile: tn = N = 384, no padding)
    x_traj, v_traj, dvdh_traj, _ = shapenet_forward(
        x0, params, T=T, compute_derivative=1)
    jax.block_until_ready(x_traj)
    jax.block_until_ready(v_traj)
    jax.block_until_ready(dvdh_traj)
    np.testing.assert_allclose(np.asarray(x_traj), xs_ref_ld, rtol=1e-4, atol=1e-4)
    np.testing.assert_allclose(np.asarray(v_traj), vs_ref_ld, rtol=1e-4, atol=1e-4)
    np.testing.assert_allclose(np.asarray(dvdh_traj), dvs_ref_ld,
                               rtol=1e-4, atol=1e-4)

    # derivative path with multiple tiles + lane padding (tn=256 -> 2 tiles)
    x_t2, v_t2, dvdh_t2, _ = shapenet_forward(
        x0, params, T=T, compute_derivative=1, tile_n=256)
    jax.block_until_ready(x_t2)
    np.testing.assert_allclose(np.asarray(x_t2), xs_ref_ld, rtol=1e-4, atol=1e-4)
    np.testing.assert_allclose(np.asarray(dvdh_t2), dvs_ref_ld,
                               rtol=1e-4, atol=1e-4)

    # no-derivative path (skips Jacobian work + dv/dh output entirely)
    x_traj0, v_traj0, dvdh0, _ = shapenet_forward(
        x0, params, T=T, compute_derivative=0)
    jax.block_until_ready(x_traj0)
    assert dvdh0 is None
    np.testing.assert_allclose(np.asarray(x_traj0), xs_ref_ld, rtol=1e-4, atol=1e-4)
    np.testing.assert_allclose(np.asarray(v_traj0), vs_ref_ld, rtol=1e-4, atol=1e-4)

    print("KERNEL_OK")
</pallas_src>

<mosaic_0001>
module attributes {stable_mosaic.version = 11 : i64} {
  func.func @_shapenet_deriv_kernel(%arg0: i32, %arg1: memref<3x384xf32, #tpu.memory_space<vmem>>, %arg2: memref<32x3xf32, #tpu.memory_space<vmem>>, %arg3: memref<3x32xf32, #tpu.memory_space<vmem>>, %arg4: memref<9x32xf32, #tpu.memory_space<vmem>>, %arg5: memref<32x1xf32, #tpu.memory_space<vmem>>, %arg6: memref<3x1xf32, #tpu.memory_space<vmem>>, %arg7: memref<9x3x384xf32, #tpu.memory_space<vmem>>, %arg8: memref<8x3x384xf32, #tpu.memory_space<vmem>>, %arg9: memref<8x3x3x384xf32, #tpu.memory_space<vmem>>) attributes {dimension_semantics = [#tpu.dimension_semantics<parallel>], iteration_bounds = array<i64: 1>, scalar_prefetch = 0 : i64, scratch_operands = 0 : i64, tpu.core_type = #tpu.core_type<tc>, window_params = [{transform_indices = @transform_0, window_bounds = array<i64: 3, 384>}, {pipeline_mode = #tpu.pipeline_mode<synchronous>, transform_indices = @transform_1, window_bounds = array<i64: 32, 3>}, {pipeline_mode = #tpu.pipeline_mode<synchronous>, transform_indices = @transform_2, window_bounds = array<i64: 3, 32>}, {pipeline_mode = #tpu.pipeline_mode<synchronous>, transform_indices = @transform_3, window_bounds = array<i64: 9, 32>}, {pipeline_mode = #tpu.pipeline_mode<synchronous>, transform_indices = @transform_4, window_bounds = array<i64: 32, 1>}, {pipeline_mode = #tpu.pipeline_mode<synchronous>, transform_indices = @transform_5, window_bounds = array<i64: 3, 1>}, {transform_indices = @transform_6, window_bounds = array<i64: 9, 3, 384>}, {transform_indices = @transform_7, window_bounds = array<i64: 8, 3, 384>}, {transform_indices = @transform_8, window_bounds = array<i64: 8, 3, 3, 384>}]} {
    %c0 = arith.constant 0 : index
    %c0_0 = arith.constant 0 : index
    %0 = vector.load %arg1[%c0, %c0_0] : memref<3x384xf32, #tpu.memory_space<vmem>>, vector<3x384xf32>
    %c0_1 = arith.constant 0 : index
    %c0_2 = arith.constant 0 : index
    %1 = vector.load %arg2[%c0_1, %c0_2] : memref<32x3xf32, #tpu.memory_space<vmem>>, vector<32x1xf32>
    %c0_3 = arith.constant 0 : index
    %c1 = arith.constant 1 : index
    %2 = vector.load %arg2[%c0_3, %c1] : memref<32x3xf32, #tpu.memory_space<vmem>>, vector<32x1xf32>
    %c0_4 = arith.constant 0 : index
    %c2 = arith.constant 2 : index
    %3 = vector.load %arg2[%c0_4, %c2] : memref<32x3xf32, #tpu.memory_space<vmem>>, vector<32x1xf32>
    %c0_5 = arith.constant 0 : index
    %c0_6 = arith.constant 0 : index
    %4 = vector.load %arg5[%c0_5, %c0_6] : memref<32x1xf32, #tpu.memory_space<vmem>>, vector<32x1xf32>
    %5 = vector.shape_cast %4 : vector<32x1xf32> to vector<32x1xf32>
    %6 = vector.broadcast %5 : vector<32x1xf32> to vector<32x384xf32>
    %c0_7 = arith.constant 0 : index
    %c0_8 = arith.constant 0 : index
    %7 = vector.load %arg3[%c0_7, %c0_8] : memref<3x32xf32, #tpu.memory_space<vmem>>, vector<3x32xf32>
    %c0_9 = arith.constant 0 : index
    %c0_10 = arith.constant 0 : index
    %8 = vector.load %arg6[%c0_9, %c0_10] : memref<3x1xf32, #tpu.memory_space<vmem>>, vector<3x1xf32>
    %c0_11 = arith.constant 0 : index
    %c0_12 = arith.constant 0 : index
    %9 = vector.load %arg4[%c0_11, %c0_12] : memref<9x32xf32, #tpu.memory_space<vmem>>, vector<9x32xf32>
    %c0_13 = arith.constant 0 : index
    %c0_14 = arith.constant 0 : index
    %c0_15 = arith.constant 0 : index
    %10 = vector.load %arg7[%c0_13, %c0_14, %c0_15] : memref<9x3x384xf32, #tpu.memory_space<vmem>>, vector<1x3x384xf32>
    %11 = vector.shape_cast %10 : vector<1x3x384xf32> to vector<3x384xf32>
    %12 = vector.shape_cast %0 : vector<3x384xf32> to vector<1x3x384xf32>
    tpu.vector_store %arg7[%c0_13, %c0_14, %c0_15], %12 {strides = array<i32>} : memref<9x3x384xf32, #tpu.memory_space<vmem>>, vector<1x3x384xf32>,
    %13 = tpu.iota {dimensions = array<i32: 0>} : vector<3x384xi32>
    %c0_i32 = arith.constant 0 : i32
    %14 = vector.broadcast %c0_i32 : i32 to vector<3x384xi32>
    %15 = arith.cmpi eq, %13, %14 : vector<3x384xi32>
    %16 = arith.extui %15 : vector<3x384xi1> to vector<3x384xi32>
    %17 = arith.sitofp %16 : vector<3x384xi32> to vector<3x384xf32>
    %c1_i32 = arith.constant 1 : i32
    %18 = vector.broadcast %c1_i32 : i32 to vector<3x384xi32>
    %19 = arith.cmpi eq, %13, %18 : vector<3x384xi32>
    %20 = arith.extui %19 : vector<3x384xi1> to vector<3x384xi32>
    %21 = arith.sitofp %20 : vector<3x384xi32> to vector<3x384xf32>
    %c2_i32 = arith.constant 2 : i32
    %22 = vector.broadcast %c2_i32 : i32 to vector<3x384xi32>
    %23 = arith.cmpi eq, %13, %22 : vector<3x384xi32>
    %24 = arith.extui %23 : vector<3x384xi1> to vector<3x384xi32>
    %25 = arith.sitofp %24 : vector<3x384xi32> to vector<3x384xf32>
    %26 = vector.extract_strided_slice %0 {offsets = [0, 0], sizes = [1, 384], strides = [1, 1]} : vector<3x384xf32> to vector<1x384xf32>
    %27 = vector.broadcast %1 : vector<32x1xf32> to vector<32x384xf32>
    %28 = vector.broadcast %26 : vector<1x384xf32> to vector<32x384xf32>
    %29 = arith.mulf %27, %28 : vector<32x384xf32>
    %30 = arith.addf %6, %29 : vector<32x384xf32>
    %31 = vector.extract_strided_slice %0 {offsets = [1, 0], sizes = [1, 384], strides = [1, 1]} : vector<3x384xf32> to vector<1x384xf32>
    %32 = vector.broadcast %2 : vector<32x1xf32> to vector<32x384xf32>
    %33 = vector.broadcast %31 : vector<1x384xf32> to vector<32x384xf32>
    %34 = arith.mulf %32, %33 : vector<32x384xf32>
    %35 = arith.addf %30, %34 : vector<32x384xf32>
    %36 = vector.extract_strided_slice %0 {offsets = [2, 0], sizes = [1, 384], strides = [1, 1]} : vector<3x384xf32> to vector<1x384xf32>
    %37 = vector.broadcast %3 : vector<32x1xf32> to vector<32x384xf32>
    %38 = vector.broadcast %36 : vector<1x384xf32> to vector<32x384xf32>
    %39 = arith.mulf %37, %38 : vector<32x384xf32>
    %40 = arith.addf %35, %39 : vector<32x384xf32>
    %41 = math.tanh %40 : vector<32x384xf32>
    %cst = arith.constant dense<0.000000e+00> : vector<3x384xf32>
    %42 = tpu.matmul %7, %41, %cst {dimension_numbers = #tpu.dot_dimension_numbers<[1], [0], [0], [1], [0, 0, 1, 1], [], []>} : vector<3x32xf32>, vector<32x384xf32>, vector<3x384xf32> -> vector<3x384xf32>
    %43 = vector.broadcast %8 : vector<3x1xf32> to vector<3x384xf32>
    %44 = arith.addf %42, %43 : vector<3x384xf32>
    %45 = arith.mulf %41, %41 : vector<32x384xf32>
    %cst_16 = arith.constant 1.000000e+00 : f32
    %46 = vector.broadcast %cst_16 : f32 to vector<32x384xf32>
    %47 = arith.subf %46, %45 : vector<32x384xf32>
    %cst_17 = arith.constant dense<0.000000e+00> : vector<9x384xf32>
    %48 = tpu.matmul %9, %47, %cst_17 {dimension_numbers = #tpu.dot_dimension_numbers<[1], [0], [0], [1], [0, 0, 1, 1], [], []>} : vector<9x32xf32>, vector<32x384xf32>, vector<9x384xf32> -> vector<9x384xf32>
    %49 = vector.extract_strided_slice %48 {offsets = [0, 0], sizes = [1, 384], strides = [1, 1]} : vector<9x384xf32> to vector<1x384xf32>
    %50 = vector.broadcast %49 : vector<1x384xf32> to vector<3x384xf32>
    %51 = arith.mulf %50, %17 : vector<3x384xf32>
    %52 = vector.extract_strided_slice %48 {offsets = [1, 0], sizes = [1, 384], strides = [1, 1]} : vector<9x384xf32> to vector<1x384xf32>
    %53 = vector.broadcast %52 : vector<1x384xf32> to vector<3x384xf32>
    %54 = arith.mulf %53, %21 : vector<3x384xf32>
    %55 = arith.addf %51, %54 : vector<3x384xf32>
    %56 = vector.extract_strided_slice %48 {offsets = [2, 0], sizes = [1, 384], strides = [1, 1]} : vector<9x384xf32> to vector<1x384xf32>
    %57 = vector.broadcast %56 : vector<1x384xf32> to vector<3x384xf32>
    %58 = arith.mulf %57, %25 : vector<3x384xf32>
    %59 = arith.addf %55, %58 : vector<3x384xf32>
    %c0_18 = arith.constant 0 : index
    %c0_19 = arith.constant 0 : index
    %c0_20 = arith.constant 0 : index
    %c0_21 = arith.constant 0 : index
    %60 = vector.load %arg9[%c0_18, %c0_19, %c0_20, %c0_21] : memref<8x3x3x384xf32, #tpu.memory_space<vmem>>, vector<1x1x3x384xf32>
    %61 = vector.shape_cast %60 : vector<1x1x3x384xf32> to vector<3x384xf32>
    %62 = vector.shape_cast %59 : vector<3x384xf32> to vector<1x1x3x384xf32>
    tpu.vector_store %arg9[%c0_18, %c0_19, %c0_20, %c0_21], %62 {strides = array<i32>} : memref<8x3x3x384xf32, #tpu.memory_space<vmem>>, vector<1x1x3x384xf32>,
    %63 = vector.extract_strided_slice %48 {offsets = [3, 0], sizes = [1, 384], strides = [1, 1]} : vector<9x384xf32> to vector<1x384xf32>
    %64 = vector.broadcast %63 : vector<1x384xf32> to vector<3x384xf32>
    %65 = arith.mulf %64, %17 : vector<3x384xf32>
    %66 = vector.extract_strided_slice %48 {offsets = [4, 0], sizes = [1, 384], strides = [1, 1]} : vector<9x384xf32> to vector<1x384xf32>
    %67 = vector.broadcast %66 : vector<1x384xf32> to vector<3x384xf32>
    %68 = arith.mulf %67, %21 : vector<3x384xf32>
    %69 = arith.addf %65, %68 : vector<3x384xf32>
    %70 = vector.extract_strided_slice %48 {offsets = [5, 0], sizes = [1, 384], strides = [1, 1]} : vector<9x384xf32> to vector<1x384xf32>
    %71 = vector.broadcast %70 : vector<1x384xf32> to vector<3x384xf32>
    %72 = arith.mulf %71, %25 : vector<3x384xf32>
    %73 = arith.addf %69, %72 : vector<3x384xf32>
    %c0_22 = arith.constant 0 : index
    %c1_23 = arith.constant 1 : index
    %c0_24 = arith.constant 0 : index
    %c0_25 = arith.constant 0 : index
    %74 = vector.load %arg9[%c0_22, %c1_23, %c0_24, %c0_25] : memref<8x3x3x384xf32, #tpu.memory_space<vmem>>, vector<1x1x3x384xf32>
    %75 = vector.shape_cast %74 : vector<1x1x3x384xf32> to vector<3x384xf32>
    %76 = vector.shape_cast %73 : vector<3x384xf32> to vector<1x1x3x384xf32>
    tpu.vector_store %arg9[%c0_22, %c1_23, %c0_24, %c0_25], %76 {strides = array<i32>} : memref<8x3x3x384xf32, #tpu.memory_space<vmem>>, vector<1x1x3x384xf32>,
    %77 = vector.extract_strided_slice %48 {offsets = [6, 0], sizes = [1, 384], strides = [1, 1]} : vector<9x384xf32> to vector<1x384xf32>
    %78 = vector.broadcast %77 : vector<1x384xf32> to vector<3x384xf32>
    %79 = arith.mulf %78, %17 : vector<3x384xf32>
    %80 = vector.extract_strided_slice %48 {offsets = [7, 0], sizes = [1, 384], strides = [1, 1]} : vector<9x384xf32> to vector<1x384xf32>
    %81 = vector.broadcast %80 : vector<1x384xf32> to vector<3x384xf32>
    %82 = arith.mulf %81, %21 : vector<3x384xf32>
    %83 = arith.addf %79, %82 : vector<3x384xf32>
    %84 = vector.extract_strided_slice %48 {offsets = [8, 0], sizes = [1, 384], strides = [1, 1]} : vector<9x384xf32> to vector<1x384xf32>
    %85 = vector.broadcast %84 : vector<1x384xf32> to vector<3x384xf32>
    %86 = arith.mulf %85, %25 : vector<3x384xf32>
    %87 = arith.addf %83, %86 : vector<3x384xf32>
    %c0_26 = arith.constant 0 : index
    %c2_27 = arith.constant 2 : index
    %c0_28 = arith.constant 0 : index
    %c0_29 = arith.constant 0 : index
    %88 = vector.load %arg9[%c0_26, %c2_27, %c0_28, %c0_29] : memref<8x3x3x384xf32, #tpu.memory_space<vmem>>, vector<1x1x3x384xf32>
    %89 = vector.shape_cast %88 : vector<1x1x3x384xf32> to vector<3x384xf32>
    %90 = vector.shape_cast %87 : vector<3x384xf32> to vector<1x1x3x384xf32>
    tpu.vector_store %arg9[%c0_26, %c2_27, %c0_28, %c0_29], %90 {strides = array<i32>} : memref<8x3x3x384xf32, #tpu.memory_space<vmem>>, vector<1x1x3x384xf32>,
    %cst_30 = arith.constant 2.500000e-01 : f32
    %91 = vector.broadcast %cst_30 : f32 to vector<3x384xf32>
    %92 = arith.mulf %44, %91 : vector<3x384xf32>
    %93 = arith.addf %0, %92 : vector<3x384xf32>
    %c1_31 = arith.constant 1 : index
    %c0_32 = arith.constant 0 : index
    %c0_33 = arith.constant 0 : index
    %94 = vector.load %arg7[%c1_31, %c0_32, %c0_33] : memref<9x3x384xf32, #tpu.memory_space<vmem>>, vector<1x3x384xf32>
    %95 = vector.shape_cast %94 : vector<1x3x384xf32> to vector<3x384xf32>
    %96 = vector.shape_cast %93 : vector<3x384xf32> to vector<1x3x384xf32>
    tpu.vector_store %arg7[%c1_31, %c0_32, %c0_33], %96 {strides = array<i32>} : memref<9x3x384xf32, #tpu.memory_space<vmem>>, vector<1x3x384xf32>,
    %c0_34 = arith.constant 0 : index
    %c0_35 = arith.constant 0 : index
    %c0_36 = arith.constant 0 : index
    %97 = vector.load %arg8[%c0_34, %c0_35, %c0_36] : memref<8x3x384xf32, #tpu.memory_space<vmem>>, vector<1x3x384xf32>
    %98 = vector.shape_cast %97 : vector<1x3x384xf32> to vector<3x384xf32>
    %99 = vector.shape_cast %44 : vector<3x384xf32> to vector<1x3x384xf32>
    tpu.vector_store %arg8[%c0_34, %c0_35, %c0_36], %99 {strides = array<i32>} : memref<8x3x384xf32, #tpu.memory_space<vmem>>, vector<1x3x384xf32>,
    %cst_37 = arith.constant 2.500000e-01 : f32
    %100 = vector.broadcast %cst_37 : f32 to vector<3x384xf32>
    %101 = arith.mulf %59, %100 : vector<3x384xf32>
    %102 = arith.addf %17, %101 : vector<3x384xf32>
    %cst_38 = arith.constant 2.500000e-01 : f32
    %103 = vector.broadcast %cst_38 : f32 to vector<3x384xf32>
    %104 = arith.mulf %73, %103 : vector<3x384xf32>
    %105 = arith.addf %21, %104 : vector<3x384xf32>
    %cst_39 = arith.constant 2.500000e-01 : f32
    %106 = vector.broadcast %cst_39 : f32 to vector<3x384xf32>
    %107 = arith.mulf %87, %106 : vector<3x384xf32>
    %108 = arith.addf %25, %107 : vector<3x384xf32>
    %109 = vector.extract_strided_slice %93 {offsets = [0, 0], sizes = [1, 384], strides = [1, 1]} : vector<3x384xf32> to vector<1x384xf32>
    %110 = vector.broadcast %1 : vector<32x1xf32> to vector<32x384xf32>
    %111 = vector.broadcast %109 : vector<1x384xf32> to vector<32x384xf32>
    %112 = arith.mulf %110, %111 : vector<32x384xf32>
    %113 = arith.addf %6, %112 : vector<32x384xf32>
    %114 = vector.extract_strided_slice %93 {offsets = [1, 0], sizes = [1, 384], strides = [1, 1]} : vector<3x384xf32> to vector<1x384xf32>
    %115 = vector.broadcast %2 : vector<32x1xf32> to vector<32x384xf32>
    %116 = vector.broadcast %114 : vector<1x384xf32> to vector<32x384xf32>
    %117 = arith.mulf %115, %116 : vector<32x384xf32>
    %118 = arith.addf %113, %117 : vector<32x384xf32>
    %119 = vector.extract_strided_slice %93 {offsets = [2, 0], sizes = [1, 384], strides = [1, 1]} : vector<3x384xf32> to vector<1x384xf32>
    %120 = vector.broadcast %3 : vector<32x1xf32> to vector<32x384xf32>
    %121 = vector.broadcast %119 : vector<1x384xf32> to vector<32x384xf32>
    %122 = arith.mulf %120, %121 : vector<32x384xf32>
    %123 = arith.addf %118, %122 : vector<32x384xf32>
    %124 = math.tanh %123 : vector<32x384xf32>
    %cst_40 = arith.constant dense<0.000000e+00> : vector<3x384xf32>
    %125 = tpu.matmul %7, %124, %cst_40 {dimension_numbers = #tpu.dot_dimension_numbers<[1], [0], [0], [1], [0, 0, 1, 1], [], []>} : vector<3x32xf32>, vector<32x384xf32>, vector<3x384xf32> -> vector<3x384xf32>
    %126 = vector.broadcast %8 : vector<3x1xf32> to vector<3x384xf32>
    %127 = arith.addf %125, %126 : vector<3x384xf32>
    %128 = arith.mulf %124, %124 : vector<32x384xf32>
    %cst_41 = arith.constant 1.000000e+00 : f32
    %129 = vector.broadcast %cst_41 : f32 to vector<32x384xf32>
    %130 = arith.subf %129, %128 : vector<32x384xf32>
    %cst_42 = arith.constant dense<0.000000e+00> : vector<9x384xf32>
    %131 = tpu.matmul %9, %130, %cst_42 {dimension_numbers = #tpu.dot_dimension_numbers<[1], [0], [0], [1], [0, 0, 1, 1], [], []>} : vector<9x32xf32>, vector<32x384xf32>, vector<9x384xf32> -> vector<9x384xf32>
    %132 = vector.extract_strided_slice %131 {offsets = [0, 0], sizes = [1, 384], strides = [1, 1]} : vector<9x384xf32> to vector<1x384xf32>
    %133 = vector.broadcast %132 : vector<1x384xf32> to vector<3x384xf32>
    %134 = arith.mulf %133, %102 : vector<3x384xf32>
    %135 = vector.extract_strided_slice %131 {offsets = [1, 0], sizes = [1, 384], strides = [1, 1]} : vector<9x384xf32> to vector<1x384xf32>
    %136 = vector.broadcast %135 : vector<1x384xf32> to vector<3x384xf32>
    %137 = arith.mulf %136, %105 : vector<3x384xf32>
    %138 = arith.addf %134, %137 : vector<3x384xf32>
    %139 = vector.extract_strided_slice %131 {offsets = [2, 0], sizes = [1, 384], strides = [1, 1]} : vector<9x384xf32> to vector<1x384xf32>
    %140 = vector.broadcast %139 : vector<1x384xf32> to vector<3x384xf32>
    %141 = arith.mulf %140, %108 : vector<3x384xf32>
    %142 = arith.addf %138, %141 : vector<3x384xf32>
    %c1_43 = arith.constant 1 : index
    %c0_44 = arith.constant 0 : index
    %c0_45 = arith.constant 0 : index
    %c0_46 = arith.constant 0 : index
    %143 = vector.load %arg9[%c1_43, %c0_44, %c0_45, %c0_46] : memref<8x3x3x384xf32, #tpu.memory_space<vmem>>, vector<1x1x3x384xf32>
    %144 = vector.shape_cast %143 : vector<1x1x3x384xf32> to vector<3x384xf32>
    %145 = vector.shape_cast %142 : vector<3x384xf32> to vector<1x1x3x384xf32>
    tpu.vector_store %arg9[%c1_43, %c0_44, %c0_45, %c0_46], %145 {strides = array<i32>} : memref<8x3x3x384xf32, #tpu.memory_space<vmem>>, vector<1x1x3x384xf32>,
    %146 = vector.extract_strided_slice %131 {offsets = [3, 0], sizes = [1, 384], strides = [1, 1]} : vector<9x384xf32> to vector<1x384xf32>
    %147 = vector.broadcast %146 : vector<1x384xf32> to vector<3x384xf32>
    %148 = arith.mulf %147, %102 : vector<3x384xf32>
    %149 = vector.extract_strided_slice %131 {offsets = [4, 0], sizes = [1, 384], strides = [1, 1]} : vector<9x384xf32> to vector<1x384xf32>
    %150 = vector.broadcast %149 : vector<1x384xf32> to vector<3x384xf32>
    %151 = arith.mulf %150, %105 : vector<3x384xf32>
    %152 = arith.addf %148, %151 : vector<3x384xf32>
    %153 = vector.extract_strided_slice %131 {offsets = [5, 0], sizes = [1, 384], strides = [1, 1]} : vector<9x384xf32> to vector<1x384xf32>
    %154 = vector.broadcast %153 : vector<1x384xf32> to vector<3x384xf32>
    %155 = arith.mulf %154, %108 : vector<3x384xf32>
    %156 = arith.addf %152, %155 : vector<3x384xf32>
    %c1_47 = arith.constant 1 : index
    %c1_48 = arith.constant 1 : index
    %c0_49 = arith.constant 0 : index
    %c0_50 = arith.constant 0 : index
    %157 = vector.load %arg9[%c1_47, %c1_48, %c0_49, %c0_50] : memref<8x3x3x384xf32, #tpu.memory_space<vmem>>, vector<1x1x3x384xf32>
    %158 = vector.shape_cast %157 : vector<1x1x3x384xf32> to vector<3x384xf32>
    %159 = vector.shape_cast %156 : vector<3x384xf32> to vector<1x1x3x384xf32>
    tpu.vector_store %arg9[%c1_47, %c1_48, %c0_49, %c0_50], %159 {strides = array<i32>} : memref<8x3x3x384xf32, #tpu.memory_space<vmem>>, vector<1x1x3x384xf32>,
    %160 = vector.extract_strided_slice %131 {offsets = [6, 0], sizes = [1, 384], strides = [1, 1]} : vector<9x384xf32> to vector<1x384xf32>
    %161 = vector.broadcast %160 : vector<1x384xf32> to vector<3x384xf32>
    %162 = arith.mulf %161, %102 : vector<3x384xf32>
    %163 = vector.extract_strided_slice %131 {offsets = [7, 0], sizes = [1, 384], strides = [1, 1]} : vector<9x384xf32> to vector<1x384xf32>
    %164 = vector.broadcast %163 : vector<1x384xf32> to vector<3x384xf32>
    %165 = arith.mulf %164, %105 : vector<3x384xf32>
    %166 = arith.addf %162, %165 : vector<3x384xf32>
    %167 = vector.extract_strided_slice %131 {offsets = [8, 0], sizes = [1, 384], strides = [1, 1]} : vector<9x384xf32> to vector<1x384xf32>
    %168 = vector.broadcast %167 : vector<1x384xf32> to vector<3x384xf32>
    %169 = arith.mulf %168, %108 : vector<3x384xf32>
    %170 = arith.addf %166, %169 : vector<3x384xf32>
    %c1_51 = arith.constant 1 : index
    %c2_52 = arith.constant 2 : index
    %c0_53 = arith.constant 0 : index
    %c0_54 = arith.constant 0 : index
    %171 = vector.load %arg9[%c1_51, %c2_52, %c0_53, %c0_54] : memref<8x3x3x384xf32, #tpu.memory_space<vmem>>, vector<1x1x3x384xf32>
    %172 = vector.shape_cast %171 : vector<1x1x3x384xf32> to vector<3x384xf32>
    %173 = vector.shape_cast %170 : vector<3x384xf32> to vector<1x1x3x384xf32>
    tpu.vector_store %arg9[%c1_51, %c2_52, %c0_53, %c0_54], %173 {strides = array<i32>} : memref<8x3x3x384xf32, #tpu.memory_space<vmem>>, vector<1x1x3x384xf32>,
    %cst_55 = arith.constant 2.500000e-01 : f32
    %174 = vector.broadcast %cst_55 : f32 to vector<3x384xf32>
    %175 = arith.mulf %127, %174 : vector<3x384xf32>
    %176 = arith.addf %93, %175 : vector<3x384xf32>
    %c2_56 = arith.constant 2 : index
    %c0_57 = arith.constant 0 : index
    %c0_58 = arith.constant 0 : index
    %177 = vector.load %arg7[%c2_56, %c0_57, %c0_58] : memref<9x3x384xf32, #tpu.memory_space<vmem>>, vector<1x3x384xf32>
    %178 = vector.shape_cast %177 : vector<1x3x384xf32> to vector<3x384xf32>
    %179 = vector.shape_cast %176 : vector<3x384xf32> to vector<1x3x384xf32>
    tpu.vector_store %arg7[%c2_56, %c0_57, %c0_58], %179 {strides = array<i32>} : memref<9x3x384xf32, #tpu.memory_space<vmem>>, vector<1x3x384xf32>,
    %c1_59 = arith.constant 1 : index
    %c0_60 = arith.constant 0 : index
    %c0_61 = arith.constant 0 : index
    %180 = vector.load %arg8[%c1_59, %c0_60, %c0_61] : memref<8x3x384xf32, #tpu.memory_space<vmem>>, vector<1x3x384xf32>
    %181 = vector.shape_cast %180 : vector<1x3x384xf32> to vector<3x384xf32>
    %182 = vector.shape_cast %127 : vector<3x384xf32> to vector<1x3x384xf32>
    tpu.vector_store %arg8[%c1_59, %c0_60, %c0_61], %182 {strides = array<i32>} : memref<8x3x384xf32, #tpu.memory_space<vmem>>, vector<1x3x384xf32>,
    %cst_62 = arith.constant 2.500000e-01 : f32
    %183 = vector.broadcast %cst_62 : f32 to vector<3x384xf32>
    %184 = arith.mulf %142, %183 : vector<3x384xf32>
    %185 = arith.addf %102, %184 : vector<3x384xf32>
    %cst_63 = arith.constant 2.500000e-01 : f32
    %186 = vector.broadcast %cst_63 : f32 to vector<3x384xf32>
    %187 = arith.mulf %156, %186 : vector<3x384xf32>
    %188 = arith.addf %105, %187 : vector<3x384xf32>
    %cst_64 = arith.constant 2.500000e-01 : f32
    %189 = vector.broadcast %cst_64 : f32 to vector<3x384xf32>
    %190 = arith.mulf %170, %189 : vector<3x384xf32>
    %191 = arith.addf %108, %190 : vector<3x384xf32>
    %192 = vector.extract_strided_slice %176 {offsets = [0, 0], sizes = [1, 384], strides = [1, 1]} : vector<3x384xf32> to vector<1x384xf32>
    %193 = vector.broadcast %1 : vector<32x1xf32> to vector<32x384xf32>
    %194 = vector.broadcast %192 : vector<1x384xf32> to vector<32x384xf32>
    %195 = arith.mulf %193, %194 : vector<32x384xf32>
    %196 = arith.addf %6, %195 : vector<32x384xf32>
    %197 = vector.extract_strided_slice %176 {offsets = [1, 0], sizes = [1, 384], strides = [1, 1]} : vector<3x384xf32> to vector<1x384xf32>
    %198 = vector.broadcast %2 : vector<32x1xf32> to vector<32x384xf32>
    %199 = vector.broadcast %197 : vector<1x384xf32> to vector<32x384xf32>
    %200 = arith.mulf %198, %199 : vector<32x384xf32>
    %201 = arith.addf %196, %200 : vector<32x384xf32>
    %202 = vector.extract_strided_slice %176 {offsets = [2, 0], sizes = [1, 384], strides = [1, 1]} : vector<3x384xf32> to vector<1x384xf32>
    %203 = vector.broadcast %3 : vector<32x1xf32> to vector<32x384xf32>
    %204 = vector.broadcast %202 : vector<1x384xf32> to vector<32x384xf32>
    %205 = arith.mulf %203, %204 : vector<32x384xf32>
    %206 = arith.addf %201, %205 : vector<32x384xf32>
    %207 = math.tanh %206 : vector<32x384xf32>
    %cst_65 = arith.constant dense<0.000000e+00> : vector<3x384xf32>
    %208 = tpu.matmul %7, %207, %cst_65 {dimension_numbers = #tpu.dot_dimension_numbers<[1], [0], [0], [1], [0, 0, 1, 1], [], []>} : vector<3x32xf32>, vector<32x384xf32>, vector<3x384xf32> -> vector<3x384xf32>
    %209 = vector.broadcast %8 : vector<3x1xf32> to vector<3x384xf32>
    %210 = arith.addf %208, %209 : vector<3x384xf32>
    %211 = arith.mulf %207, %207 : vector<32x384xf32>
    %cst_66 = arith.constant 1.000000e+00 : f32
    %212 = vector.broadcast %cst_66 : f32 to vector<32x384xf32>
    %213 = arith.subf %212, %211 : vector<32x384xf32>
    %cst_67 = arith.constant dense<0.000000e+00> : vector<9x384xf32>
    %214 = tpu.matmul %9, %213, %cst_67 {dimension_numbers = #tpu.dot_dimension_numbers<[1], [0], [0], [1], [0, 0, 1, 1], [], []>} : vector<9x32xf32>, vector<32x384xf32>, vector<9x384xf32> -> vector<9x384xf32>
    %215 = vector.extract_strided_slice %214 {offsets = [0, 0], sizes = [1, 384], strides = [1, 1]} : vector<9x384xf32> to vector<1x384xf32>
    %216 = vector.broadcast %215 : vector<1x384xf32> to vector<3x384xf32>
    %217 = arith.mulf %216, %185 : vector<3x384xf32>
    %218 = vector.extract_strided_slice %214 {offsets = [1, 0], sizes = [1, 384], strides = [1, 1]} : vector<9x384xf32> to vector<1x384xf32>
    %219 = vector.broadcast %218 : vector<1x384xf32> to vector<3x384xf32>
    %220 = arith.mulf %219, %188 : vector<3x384xf32>
    %221 = arith.addf %217, %220 : vector<3x384xf32>
    %222 = vector.extract_strided_slice %214 {offsets = [2, 0], sizes = [1, 384], strides = [1, 1]} : vector<9x384xf32> to vector<1x384xf32>
    %223 = vector.broadcast %222 : vector<1x384xf32> to vector<3x384xf32>
    %224 = arith.mulf %223, %191 : vector<3x384xf32>
    %225 = arith.addf %221, %224 : vector<3x384xf32>
    %c2_68 = arith.constant 2 : index
    %c0_69 = arith.constant 0 : index
    %c0_70 = arith.constant 0 : index
    %c0_71 = arith.constant 0 : index
    %226 = vector.load %arg9[%c2_68, %c0_69, %c0_70, %c0_71] : memref<8x3x3x384xf32, #tpu.memory_space<vmem>>, vector<1x1x3x384xf32>
    %227 = vector.shape_cast %226 : vector<1x1x3x384xf32> to vector<3x384xf32>
    %228 = vector.shape_cast %225 : vector<3x384xf32> to vector<1x1x3x384xf32>
    tpu.vector_store %arg9[%c2_68, %c0_69, %c0_70, %c0_71], %228 {strides = array<i32>} : memref<8x3x3x384xf32, #tpu.memory_space<vmem>>, vector<1x1x3x384xf32>,
    %229 = vector.extract_strided_slice %214 {offsets = [3, 0], sizes = [1, 384], strides = [1, 1]} : vector<9x384xf32> to vector<1x384xf32>
    %230 = vector.broadcast %229 : vector<1x384xf32> to vector<3x384xf32>
    %231 = arith.mulf %230, %185 : vector<3x384xf32>
    %232 = vector.extract_strided_slice %214 {offsets = [4, 0], sizes = [1, 384], strides = [1, 1]} : vector<9x384xf32> to vector<1x384xf32>
    %233 = vector.broadcast %232 : vector<1x384xf32> to vector<3x384xf32>
    %234 = arith.mulf %233, %188 : vector<3x384xf32>
    %235 = arith.addf %231, %234 : vector<3x384xf32>
    %236 = vector.extract_strided_slice %214 {offsets = [5, 0], sizes = [1, 384], strides = [1, 1]} : vector<9x384xf32> to vector<1x384xf32>
    %237 = vector.broadcast %236 : vector<1x384xf32> to vector<3x384xf32>
    %238 = arith.mulf %237, %191 : vector<3x384xf32>
    %239 = arith.addf %235, %238 : vector<3x384xf32>
    %c2_72 = arith.constant 2 : index
    %c1_73 = arith.constant 1 : index
    %c0_74 = arith.constant 0 : index
    %c0_75 = arith.constant 0 : index
    %240 = vector.load %arg9[%c2_72, %c1_73, %c0_74, %c0_75] : memref<8x3x3x384xf32, #tpu.memory_space<vmem>>, vector<1x1x3x384xf32>
    %241 = vector.shape_cast %240 : vector<1x1x3x384xf32> to vector<3x384xf32>
    %242 = vector.shape_cast %239 : vector<3x384xf32> to vector<1x1x3x384xf32>
    tpu.vector_store %arg9[%c2_72, %c1_73, %c0_74, %c0_75], %242 {strides = array<i32>} : memref<8x3x3x384xf32, #tpu.memory_space<vmem>>, vector<1x1x3x384xf32>,
    %243 = vector.extract_strided_slice %214 {offsets = [6, 0], sizes = [1, 384], strides = [1, 1]} : vector<9x384xf32> to vector<1x384xf32>
    %244 = vector.broadcast %243 : vector<1x384xf32> to vector<3x384xf32>
    %245 = arith.mulf %244, %185 : vector<3x384xf32>
    %246 = vector.extract_strided_slice %214 {offsets = [7, 0], sizes = [1, 384], strides = [1, 1]} : vector<9x384xf32> to vector<1x384xf32>
    %247 = vector.broadcast %246 : vector<1x384xf32> to vector<3x384xf32>
    %248 = arith.mulf %247, %188 : vector<3x384xf32>
    %249 = arith.addf %245, %248 : vector<3x384xf32>
    %250 = vector.extract_strided_slice %214 {offsets = [8, 0], sizes = [1, 384], strides = [1, 1]} : vector<9x384xf32> to vector<1x384xf32>
    %251 = vector.broadcast %250 : vector<1x384xf32> to vector<3x384xf32>
    %252 = arith.mulf %251, %191 : vector<3x384xf32>
    %253 = arith.addf %249, %252 : vector<3x384xf32>
    %c2_76 = arith.constant 2 : index
    %c2_77 = arith.constant 2 : index
    %c0_78 = arith.constant 0 : index
    %c0_79 = arith.constant 0 : index
    %254 = vector.load %arg9[%c2_76, %c2_77, %c0_78, %c0_79] : memref<8x3x3x384xf32, #tpu.memory_space<vmem>>, vector<1x1x3x384xf32>
    %255 = vector.shape_cast %254 : vector<1x1x3x384xf32> to vector<3x384xf32>
    %256 = vector.shape_cast %253 : vector<3x384xf32> to vector<1x1x3x384xf32>
    tpu.vector_store %arg9[%c2_76, %c2_77, %c0_78, %c0_79], %256 {strides = array<i32>} : memref<8x3x3x384xf32, #tpu.memory_space<vmem>>, vector<1x1x3x384xf32>,
    %cst_80 = arith.constant 2.500000e-01 : f32
    %257 = vector.broadcast %cst_80 : f32 to vector<3x384xf32>
    %258 = arith.mulf %210, %257 : vector<3x384xf32>
    %259 = arith.addf %176, %258 : vector<3x384xf32>
    %c3 = arith.constant 3 : index
    %c0_81 = arith.constant 0 : index
    %c0_82 = arith.constant 0 : index
    %260 = vector.load %arg7[%c3, %c0_81, %c0_82] : memref<9x3x384xf32, #tpu.memory_space<vmem>>, vector<1x3x384xf32>
    %261 = vector.shape_cast %260 : vector<1x3x384xf32> to vector<3x384xf32>
    %262 = vector.shape_cast %259 : vector<3x384xf32> to vector<1x3x384xf32>
    tpu.vector_store %arg7[%c3, %c0_81, %c0_82], %262 {strides = array<i32>} : memref<9x3x384xf32, #tpu.memory_space<vmem>>, vector<1x3x384xf32>,
    %c2_83 = arith.constant 2 : index
    %c0_84 = arith.constant 0 : index
    %c0_85 = arith.constant 0 : index
    %263 = vector.load %arg8[%c2_83, %c0_84, %c0_85] : memref<8x3x384xf32, #tpu.memory_space<vmem>>, vector<1x3x384xf32>
    %264 = vector.shape_cast %263 : vector<1x3x384xf32> to vector<3x384xf32>
    %265 = vector.shape_cast %210 : vector<3x384xf32> to vector<1x3x384xf32>
    tpu.vector_store %arg8[%c2_83, %c0_84, %c0_85], %265 {strides = array<i32>} : memref<8x3x384xf32, #tpu.memory_space<vmem>>, vector<1x3x384xf32>,
    %cst_86 = arith.constant 2.500000e-01 : f32
    %266 = vector.broadcast %cst_86 : f32 to vector<3x384xf32>
    %267 = arith.mulf %225, %266 : vector<3x384xf32>
    %268 = arith.addf %185, %267 : vector<3x384xf32>
    %cst_87 = arith.constant 2.500000e-01 : f32
    %269 = vector.broadcast %cst_87 : f32 to vector<3x384xf32>
    %270 = arith.mulf %239, %269 : vector<3x384xf32>
    %271 = arith.addf %188, %270 : vector<3x384xf32>
    %cst_88 = arith.constant 2.500000e-01 : f32
    %272 = vector.broadcast %cst_88 : f32 to vector<3x384xf32>
    %273 = arith.mulf %253, %272 : vector<3x384xf32>
    %274 = arith.addf %191, %273 : vector<3x384xf32>
    %275 = vector.extract_strided_slice %259 {offsets = [0, 0], sizes = [1, 384], strides = [1, 1]} : vector<3x384xf32> to vector<1x384xf32>
    %276 = vector.broadcast %1 : vector<32x1xf32> to vector<32x384xf32>
    %277 = vector.broadcast %275 : vector<1x384xf32> to vector<32x384xf32>
    %278 = arith.mulf %276, %277 : vector<32x384xf32>
    %279 = arith.addf %6, %278 : vector<32x384xf32>
    %280 = vector.extract_strided_slice %259 {offsets = [1, 0], sizes = [1, 384], strides = [1, 1]} : vector<3x384xf32> to vector<1x384xf32>
    %281 = vector.broadcast %2 : vector<32x1xf32> to vector<32x384xf32>
    %282 = vector.broadcast %280 : vector<1x384xf32> to vector<32x384xf32>
    %283 = arith.mulf %281, %282 : vector<32x384xf32>
    %284 = arith.addf %279, %283 : vector<32x384xf32>
    %285 = vector.extract_strided_slice %259 {offsets = [2, 0], sizes = [1, 384], strides = [1, 1]} : vector<3x384xf32> to vector<1x384xf32>
    %286 = vector.broadcast %3 : vector<32x1xf32> to vector<32x384xf32>
    %287 = vector.broadcast %285 : vector<1x384xf32> to vector<32x384xf32>
    %288 = arith.mulf %286, %287 : vector<32x384xf32>
    %289 = arith.addf %284, %288 : vector<32x384xf32>
    %290 = math.tanh %289 : vector<32x384xf32>
    %cst_89 = arith.constant dense<0.000000e+00> : vector<3x384xf32>
    %291 = tpu.matmul %7, %290, %cst_89 {dimension_numbers = #tpu.dot_dimension_numbers<[1], [0], [0], [1], [0, 0, 1, 1], [], []>} : vector<3x32xf32>, vector<32x384xf32>, vector<3x384xf32> -> vector<3x384xf32>
    %292 = vector.broadcast %8 : vector<3x1xf32> to vector<3x384xf32>
    %293 = arith.addf %291, %292 : vector<3x384xf32>
    %294 = arith.mulf %290, %290 : vector<32x384xf32>
    %cst_90 = arith.constant 1.000000e+00 : f32
    %295 = vector.broadcast %cst_90 : f32 to vector<32x384xf32>
    %296 = arith.subf %295, %294 : vector<32x384xf32>
    %cst_91 = arith.constant dense<0.000000e+00> : vector<9x384xf32>
    %297 = tpu.matmul %9, %296, %cst_91 {dimension_numbers = #tpu.dot_dimension_numbers<[1], [0], [0], [1], [0, 0, 1, 1], [], []>} : vector<9x32xf32>, vector<32x384xf32>, vector<9x384xf32> -> vector<9x384xf32>
    %298 = vector.extract_strided_slice %297 {offsets = [0, 0], sizes = [1, 384], strides = [1, 1]} : vector<9x384xf32> to vector<1x384xf32>
    %299 = vector.broadcast %298 : vector<1x384xf32> to vector<3x384xf32>
    %300 = arith.mulf %299, %268 : vector<3x384xf32>
    %301 = vector.extract_strided_slice %297 {offsets = [1, 0], sizes = [1, 384], strides = [1, 1]} : vector<9x384xf32> to vector<1x384xf32>
    %302 = vector.broadcast %301 : vector<1x384xf32> to vector<3x384xf32>
    %303 = arith.mulf %302, %271 : vector<3x384xf32>
    %304 = arith.addf %300, %303 : vector<3x384xf32>
    %305 = vector.extract_strided_slice %297 {offsets = [2, 0], sizes = [1, 384], strides = [1, 1]} : vector<9x384xf32> to vector<1x384xf32>
    %306 = vector.broadcast %305 : vector<1x384xf32> to vector<3x384xf32>
    %307 = arith.mulf %306, %274 : vector<3x384xf32>
    %308 = arith.addf %304, %307 : vector<3x384xf32>
    %c3_92 = arith.constant 3 : index
    %c0_93 = arith.constant 0 : index
    %c0_94 = arith.constant 0 : index
    %c0_95 = arith.constant 0 : index
    %309 = vector.load %arg9[%c3_92, %c0_93, %c0_94, %c0_95] : memref<8x3x3x384xf32, #tpu.memory_space<vmem>>, vector<1x1x3x384xf32>
    %310 = vector.shape_cast %309 : vector<1x1x3x384xf32> to vector<3x384xf32>
    %311 = vector.shape_cast %308 : vector<3x384xf32> to vector<1x1x3x384xf32>
    tpu.vector_store %arg9[%c3_92, %c0_93, %c0_94, %c0_95], %311 {strides = array<i32>} : memref<8x3x3x384xf32, #tpu.memory_space<vmem>>, vector<1x1x3x384xf32>,
    %312 = vector.extract_strided_slice %297 {offsets = [3, 0], sizes = [1, 384], strides = [1, 1]} : vector<9x384xf32> to vector<1x384xf32>
    %313 = vector.broadcast %312 : vector<1x384xf32> to vector<3x384xf32>
    %314 = arith.mulf %313, %268 : vector<3x384xf32>
    %315 = vector.extract_strided_slice %297 {offsets = [4, 0], sizes = [1, 384], strides = [1, 1]} : vector<9x384xf32> to vector<1x384xf32>
    %316 = vector.broadcast %315 : vector<1x384xf32> to vector<3x384xf32>
    %317 = arith.mulf %316, %271 : vector<3x384xf32>
    %318 = arith.addf %314, %317 : vector<3x384xf32>
    %319 = vector.extract_strided_slice %297 {offsets = [5, 0], sizes = [1, 384], strides = [1, 1]} : vector<9x384xf32> to vector<1x384xf32>
    %320 = vector.broadcast %319 : vector<1x384xf32> to vector<3x384xf32>
    %321 = arith.mulf %320, %274 : vector<3x384xf32>
    %322 = arith.addf %318, %321 : vector<3x384xf32>
    %c3_96 = arith.constant 3 : index
    %c1_97 = arith.constant 1 : index
    %c0_98 = arith.constant 0 : index
    %c0_99 = arith.constant 0 : index
    %323 = vector.load %arg9[%c3_96, %c1_97, %c0_98, %c0_99] : memref<8x3x3x384xf32, #tpu.memory_space<vmem>>, vector<1x1x3x384xf32>
    %324 = vector.shape_cast %323 : vector<1x1x3x384xf32> to vector<3x384xf32>
    %325 = vector.shape_cast %322 : vector<3x384xf32> to vector<1x1x3x384xf32>
    tpu.vector_store %arg9[%c3_96, %c1_97, %c0_98, %c0_99], %325 {strides = array<i32>} : memref<8x3x3x384xf32, #tpu.memory_space<vmem>>, vector<1x1x3x384xf32>,
    %326 = vector.extract_strided_slice %297 {offsets = [6, 0], sizes = [1, 384], strides = [1, 1]} : vector<9x384xf32> to vector<1x384xf32>
    %327 = vector.broadcast %326 : vector<1x384xf32> to vector<3x384xf32>
    %328 = arith.mulf %327, %268 : vector<3x384xf32>
    %329 = vector.extract_strided_slice %297 {offsets = [7, 0], sizes = [1, 384], strides = [1, 1]} : vector<9x384xf32> to vector<1x384xf32>
    %330 = vector.broadcast %329 : vector<1x384xf32> to vector<3x384xf32>
    %331 = arith.mulf %330, %271 : vector<3x384xf32>
    %332 = arith.addf %328, %331 : vector<3x384xf32>
    %333 = vector.extract_strided_slice %297 {offsets = [8, 0], sizes = [1, 384], strides = [1, 1]} : vector<9x384xf32> to vector<1x384xf32>
    %334 = vector.broadcast %333 : vector<1x384xf32> to vector<3x384xf32>
    %335 = arith.mulf %334, %274 : vector<3x384xf32>
    %336 = arith.addf %332, %335 : vector<3x384xf32>
    %c3_100 = arith.constant 3 : index
    %c2_101 = arith.constant 2 : index
    %c0_102 = arith.constant 0 : index
    %c0_103 = arith.constant 0 : index
    %337 = vector.load %arg9[%c3_100, %c2_101, %c0_102, %c0_103] : memref<8x3x3x384xf32, #tpu.memory_space<vmem>>, vector<1x1x3x384xf32>
    %338 = vector.shape_cast %337 : vector<1x1x3x384xf32> to vector<3x384xf32>
    %339 = vector.shape_cast %336 : vector<3x384xf32> to vector<1x1x3x384xf32>
    tpu.vector_store %arg9[%c3_100, %c2_101, %c0_102, %c0_103], %339 {strides = array<i32>} : memref<8x3x3x384xf32, #tpu.memory_space<vmem>>, vector<1x1x3x384xf32>,
    %cst_104 = arith.constant 2.500000e-01 : f32
    %340 = vector.broadcast %cst_104 : f32 to vector<3x384xf32>
    %341 = arith.mulf %293, %340 : vector<3x384xf32>
    %342 = arith.addf %259, %341 : vector<3x384xf32>
    %c4 = arith.constant 4 : index
    %c0_105 = arith.constant 0 : index
    %c0_106 = arith.constant 0 : index
    %343 = vector.load %arg7[%c4, %c0_105, %c0_106] : memref<9x3x384xf32, #tpu.memory_space<vmem>>, vector<1x3x384xf32>
    %344 = vector.shape_cast %343 : vector<1x3x384xf32> to vector<3x384xf32>
    %345 = vector.shape_cast %342 : vector<3x384xf32> to vector<1x3x384xf32>
    tpu.vector_store %arg7[%c4, %c0_105, %c0_106], %345 {strides = array<i32>} : memref<9x3x384xf32, #tpu.memory_space<vmem>>, vector<1x3x384xf32>,
    %c3_107 = arith.constant 3 : index
    %c0_108 = arith.constant 0 : index
    %c0_109 = arith.constant 0 : index
    %346 = vector.load %arg8[%c3_107, %c0_108, %c0_109] : memref<8x3x384xf32, #tpu.memory_space<vmem>>, vector<1x3x384xf32>
    %347 = vector.shape_cast %346 : vector<1x3x384xf32> to vector<3x384xf32>
    %348 = vector.shape_cast %293 : vector<3x384xf32> to vector<1x3x384xf32>
    tpu.vector_store %arg8[%c3_107, %c0_108, %c0_109], %348 {strides = array<i32>} : memref<8x3x384xf32, #tpu.memory_space<vmem>>, vector<1x3x384xf32>,
    %cst_110 = arith.constant 2.500000e-01 : f32
    %349 = vector.broadcast %cst_110 : f32 to vector<3x384xf32>
    %350 = arith.mulf %308, %349 : vector<3x384xf32>
    %351 = arith.addf %268, %350 : vector<3x384xf32>
    %cst_111 = arith.constant 2.500000e-01 : f32
    %352 = vector.broadcast %cst_111 : f32 to vector<3x384xf32>
    %353 = arith.mulf %322, %352 : vector<3x384xf32>
    %354 = arith.addf %271, %353 : vector<3x384xf32>
    %cst_112 = arith.constant 2.500000e-01 : f32
    %355 = vector.broadcast %cst_112 : f32 to vector<3x384xf32>
    %356 = arith.mulf %336, %355 : vector<3x384xf32>
    %357 = arith.addf %274, %356 : vector<3x384xf32>
    %358 = vector.extract_strided_slice %342 {offsets = [0, 0], sizes = [1, 384], strides = [1, 1]} : vector<3x384xf32> to vector<1x384xf32>
    %359 = vector.broadcast %1 : vector<32x1xf32> to vector<32x384xf32>
    %360 = vector.broadcast %358 : vector<1x384xf32> to vector<32x384xf32>
    %361 = arith.mulf %359, %360 : vector<32x384xf32>
    %362 = arith.addf %6, %361 : vector<32x384xf32>
    %363 = vector.extract_strided_slice %342 {offsets = [1, 0], sizes = [1, 384], strides = [1, 1]} : vector<3x384xf32> to vector<1x384xf32>
    %364 = vector.broadcast %2 : vector<32x1xf32> to vector<32x384xf32>
    %365 = vector.broadcast %363 : vector<1x384xf32> to vector<32x384xf32>
    %366 = arith.mulf %364, %365 : vector<32x384xf32>
    %367 = arith.addf %362, %366 : vector<32x384xf32>
    %368 = vector.extract_strided_slice %342 {offsets = [2, 0], sizes = [1, 384], strides = [1, 1]} : vector<3x384xf32> to vector<1x384xf32>
    %369 = vector.broadcast %3 : vector<32x1xf32> to vector<32x384xf32>
    %370 = vector.broadcast %368 : vector<1x384xf32> to vector<32x384xf32>
    %371 = arith.mulf %369, %370 : vector<32x384xf32>
    %372 = arith.addf %367, %371 : vector<32x384xf32>
    %373 = math.tanh %372 : vector<32x384xf32>
    %cst_113 = arith.constant dense<0.000000e+00> : vector<3x384xf32>
    %374 = tpu.matmul %7, %373, %cst_113 {dimension_numbers = #tpu.dot_dimension_numbers<[1], [0], [0], [1], [0, 0, 1, 1], [], []>} : vector<3x32xf32>, vector<32x384xf32>, vector<3x384xf32> -> vector<3x384xf32>
    %375 = vector.broadcast %8 : vector<3x1xf32> to vector<3x384xf32>
    %376 = arith.addf %374, %375 : vector<3x384xf32>
    %377 = arith.mulf %373, %373 : vector<32x384xf32>
    %cst_114 = arith.constant 1.000000e+00 : f32
    %378 = vector.broadcast %cst_114 : f32 to vector<32x384xf32>
    %379 = arith.subf %378, %377 : vector<32x384xf32>
    %cst_115 = arith.constant dense<0.000000e+00> : vector<9x384xf32>
    %380 = tpu.matmul %9, %379, %cst_115 {dimension_numbers = #tpu.dot_dimension_numbers<[1], [0], [0], [1], [0, 0, 1, 1], [], []>} : vector<9x32xf32>, vector<32x384xf32>, vector<9x384xf32> -> vector<9x384xf32>
    %381 = vector.extract_strided_slice %380 {offsets = [0, 0], sizes = [1, 384], strides = [1, 1]} : vector<9x384xf32> to vector<1x384xf32>
    %382 = vector.broadcast %381 : vector<1x384xf32> to vector<3x384xf32>
    %383 = arith.mulf %382, %351 : vector<3x384xf32>
    %384 = vector.extract_strided_slice %380 {offsets = [1, 0], sizes = [1, 384], strides = [1, 1]} : vector<9x384xf32> to vector<1x384xf32>
    %385 = vector.broadcast %384 : vector<1x384xf32> to vector<3x384xf32>
    %386 = arith.mulf %385, %354 : vector<3x384xf32>
    %387 = arith.addf %383, %386 : vector<3x384xf32>
    %388 = vector.extract_strided_slice %380 {offsets = [2, 0], sizes = [1, 384], strides = [1, 1]} : vector<9x384xf32> to vector<1x384xf32>
    %389 = vector.broadcast %388 : vector<1x384xf32> to vector<3x384xf32>
    %390 = arith.mulf %389, %357 : vector<3x384xf32>
    %391 = arith.addf %387, %390 : vector<3x384xf32>
    %c4_116 = arith.constant 4 : index
    %c0_117 = arith.constant 0 : index
    %c0_118 = arith.constant 0 : index
    %c0_119 = arith.constant 0 : index
    %392 = vector.load %arg9[%c4_116, %c0_117, %c0_118, %c0_119] : memref<8x3x3x384xf32, #tpu.memory_space<vmem>>, vector<1x1x3x384xf32>
    %393 = vector.shape_cast %392 : vector<1x1x3x384xf32> to vector<3x384xf32>
    %394 = vector.shape_cast %391 : vector<3x384xf32> to vector<1x1x3x384xf32>
    tpu.vector_store %arg9[%c4_116, %c0_117, %c0_118, %c0_119], %394 {strides = array<i32>} : memref<8x3x3x384xf32, #tpu.memory_space<vmem>>, vector<1x1x3x384xf32>,
    %395 = vector.extract_strided_slice %380 {offsets = [3, 0], sizes = [1, 384], strides = [1, 1]} : vector<9x384xf32> to vector<1x384xf32>
    %396 = vector.broadcast %395 : vector<1x384xf32> to vector<3x384xf32>
    %397 = arith.mulf %396, %351 : vector<3x384xf32>
    %398 = vector.extract_strided_slice %380 {offsets = [4, 0], sizes = [1, 384], strides = [1, 1]} : vector<9x384xf32> to vector<1x384xf32>
    %399 = vector.broadcast %398 : vector<1x384xf32> to vector<3x384xf32>
    %400 = arith.mulf %399, %354 : vector<3x384xf32>
    %401 = arith.addf %397, %400 : vector<3x384xf32>
    %402 = vector.extract_strided_slice %380 {offsets = [5, 0], sizes = [1, 384], strides = [1, 1]} : vector<9x384xf32> to vector<1x384xf32>
    %403 = vector.broadcast %402 : vector<1x384xf32> to vector<3x384xf32>
    %404 = arith.mulf %403, %357 : vector<3x384xf32>
    %405 = arith.addf %401, %404 : vector<3x384xf32>
    %c4_120 = arith.constant 4 : index
    %c1_121 = arith.constant 1 : index
    %c0_122 = arith.constant 0 : index
    %c0_123 = arith.constant 0 : index
    %406 = vector.load %arg9[%c4_120, %c1_121, %c0_122, %c0_123] : memref<8x3x3x384xf32, #tpu.memory_space<vmem>>, vector<1x1x3x384xf32>
    %407 = vector.shape_cast %406 : vector<1x1x3x384xf32> to vector<3x384xf32>
    %408 = vector.shape_cast %405 : vector<3x384xf32> to vector<1x1x3x384xf32>
    tpu.vector_store %arg9[%c4_120, %c1_121, %c0_122, %c0_123], %408 {strides = array<i32>} : memref<8x3x3x384xf32, #tpu.memory_space<vmem>>, vector<1x1x3x384xf32>,
    %409 = vector.extract_strided_slice %380 {offsets = [6, 0], sizes = [1, 384], strides = [1, 1]} : vector<9x384xf32> to vector<1x384xf32>
    %410 = vector.broadcast %409 : vector<1x384xf32> to vector<3x384xf32>
    %411 = arith.mulf %410, %351 : vector<3x384xf32>
    %412 = vector.extract_strided_slice %380 {offsets = [7, 0], sizes = [1, 384], strides = [1, 1]} : vector<9x384xf32> to vector<1x384xf32>
    %413 = vector.broadcast %412 : vector<1x384xf32> to vector<3x384xf32>
    %414 = arith.mulf %413, %354 : vector<3x384xf32>
    %415 = arith.addf %411, %414 : vector<3x384xf32>
    %416 = vector.extract_strided_slice %380 {offsets = [8, 0], sizes = [1, 384], strides = [1, 1]} : vector<9x384xf32> to vector<1x384xf32>
    %417 = vector.broadcast %416 : vector<1x384xf32> to vector<3x384xf32>
    %418 = arith.mulf %417, %357 : vector<3x384xf32>
    %419 = arith.addf %415, %418 : vector<3x384xf32>
    %c4_124 = arith.constant 4 : index
    %c2_125 = arith.constant 2 : index
    %c0_126 = arith.constant 0 : index
    %c0_127 = arith.constant 0 : index
    %420 = vector.load %arg9[%c4_124, %c2_125, %c0_126, %c0_127] : memref<8x3x3x384xf32, #tpu.memory_space<vmem>>, vector<1x1x3x384xf32>
    %421 = vector.shape_cast %420 : vector<1x1x3x384xf32> to vector<3x384xf32>
    %422 = vector.shape_cast %419 : vector<3x384xf32> to vector<1x1x3x384xf32>
    tpu.vector_store %arg9[%c4_124, %c2_125, %c0_126, %c0_127], %422 {strides = array<i32>} : memref<8x3x3x384xf32, #tpu.memory_space<vmem>>, vector<1x1x3x384xf32>,
    %cst_128 = arith.constant 2.500000e-01 : f32
    %423 = vector.broadcast %cst_128 : f32 to vector<3x384xf32>
    %424 = arith.mulf %376, %423 : vector<3x384xf32>
    %425 = arith.addf %342, %424 : vector<3x384xf32>
    %c5 = arith.constant 5 : index
    %c0_129 = arith.constant 0 : index
    %c0_130 = arith.constant 0 : index
    %426 = vector.load %arg7[%c5, %c0_129, %c0_130] : memref<9x3x384xf32, #tpu.memory_space<vmem>>, vector<1x3x384xf32>
    %427 = vector.shape_cast %426 : vector<1x3x384xf32> to vector<3x384xf32>
    %428 = vector.shape_cast %425 : vector<3x384xf32> to vector<1x3x384xf32>
    tpu.vector_store %arg7[%c5, %c0_129, %c0_130], %428 {strides = array<i32>} : memref<9x3x384xf32, #tpu.memory_space<vmem>>, vector<1x3x384xf32>,
    %c4_131 = arith.constant 4 : index
    %c0_132 = arith.constant 0 : index
    %c0_133 = arith.constant 0 : index
    %429 = vector.load %arg8[%c4_131, %c0_132, %c0_133] : memref<8x3x384xf32, #tpu.memory_space<vmem>>, vector<1x3x384xf32>
    %430 = vector.shape_cast %429 : vector<1x3x384xf32> to vector<3x384xf32>
    %431 = vector.shape_cast %376 : vector<3x384xf32> to vector<1x3x384xf32>
    tpu.vector_store %arg8[%c4_131, %c0_132, %c0_133], %431 {strides = array<i32>} : memref<8x3x384xf32, #tpu.memory_space<vmem>>, vector<1x3x384xf32>,
    %cst_134 = arith.constant 2.500000e-01 : f32
    %432 = vector.broadcast %cst_134 : f32 to vector<3x384xf32>
    %433 = arith.mulf %391, %432 : vector<3x384xf32>
    %434 = arith.addf %351, %433 : vector<3x384xf32>
    %cst_135 = arith.constant 2.500000e-01 : f32
    %435 = vector.broadcast %cst_135 : f32 to vector<3x384xf32>
    %436 = arith.mulf %405, %435 : vector<3x384xf32>
    %437 = arith.addf %354, %436 : vector<3x384xf32>
    %cst_136 = arith.constant 2.500000e-01 : f32
    %438 = vector.broadcast %cst_136 : f32 to vector<3x384xf32>
    %439 = arith.mulf %419, %438 : vector<3x384xf32>
    %440 = arith.addf %357, %439 : vector<3x384xf32>
    %441 = vector.extract_strided_slice %425 {offsets = [0, 0], sizes = [1, 384], strides = [1, 1]} : vector<3x384xf32> to vector<1x384xf32>
    %442 = vector.broadcast %1 : vector<32x1xf32> to vector<32x384xf32>
    %443 = vector.broadcast %441 : vector<1x384xf32> to vector<32x384xf32>
    %444 = arith.mulf %442, %443 : vector<32x384xf32>
    %445 = arith.addf %6, %444 : vector<32x384xf32>
    %446 = vector.extract_strided_slice %425 {offsets = [1, 0], sizes = [1, 384], strides = [1, 1]} : vector<3x384xf32> to vector<1x384xf32>
    %447 = vector.broadcast %2 : vector<32x1xf32> to vector<32x384xf32>
    %448 = vector.broadcast %446 : vector<1x384xf32> to vector<32x384xf32>
    %449 = arith.mulf %447, %448 : vector<32x384xf32>
    %450 = arith.addf %445, %449 : vector<32x384xf32>
    %451 = vector.extract_strided_slice %425 {offsets = [2, 0], sizes = [1, 384], strides = [1, 1]} : vector<3x384xf32> to vector<1x384xf32>
    %452 = vector.broadcast %3 : vector<32x1xf32> to vector<32x384xf32>
    %453 = vector.broadcast %451 : vector<1x384xf32> to vector<32x384xf32>
    %454 = arith.mulf %452, %453 : vector<32x384xf32>
    %455 = arith.addf %450, %454 : vector<32x384xf32>
    %456 = math.tanh %455 : vector<32x384xf32>
    %cst_137 = arith.constant dense<0.000000e+00> : vector<3x384xf32>
    %457 = tpu.matmul %7, %456, %cst_137 {dimension_numbers = #tpu.dot_dimension_numbers<[1], [0], [0], [1], [0, 0, 1, 1], [], []>} : vector<3x32xf32>, vector<32x384xf32>, vector<3x384xf32> -> vector<3x384xf32>
    %458 = vector.broadcast %8 : vector<3x1xf32> to vector<3x384xf32>
    %459 = arith.addf %457, %458 : vector<3x384xf32>
    %460 = arith.mulf %456, %456 : vector<32x384xf32>
    %cst_138 = arith.constant 1.000000e+00 : f32
    %461 = vector.broadcast %cst_138 : f32 to vector<32x384xf32>
    %462 = arith.subf %461, %460 : vector<32x384xf32>
    %cst_139 = arith.constant dense<0.000000e+00> : vector<9x384xf32>
    %463 = tpu.matmul %9, %462, %cst_139 {dimension_numbers = #tpu.dot_dimension_numbers<[1], [0], [0], [1], [0, 0, 1, 1], [], []>} : vector<9x32xf32>, vector<32x384xf32>, vector<9x384xf32> -> vector<9x384xf32>
    %464 = vector.extract_strided_slice %463 {offsets = [0, 0], sizes = [1, 384], strides = [1, 1]} : vector<9x384xf32> to vector<1x384xf32>
    %465 = vector.broadcast %464 : vector<1x384xf32> to vector<3x384xf32>
    %466 = arith.mulf %465, %434 : vector<3x384xf32>
    %467 = vector.extract_strided_slice %463 {offsets = [1, 0], sizes = [1, 384], strides = [1, 1]} : vector<9x384xf32> to vector<1x384xf32>
    %468 = vector.broadcast %467 : vector<1x384xf32> to vector<3x384xf32>
    %469 = arith.mulf %468, %437 : vector<3x384xf32>
    %470 = arith.addf %466, %469 : vector<3x384xf32>
    %471 = vector.extract_strided_slice %463 {offsets = [2, 0], sizes = [1, 384], strides = [1, 1]} : vector<9x384xf32> to vector<1x384xf32>
    %472 = vector.broadcast %471 : vector<1x384xf32> to vector<3x384xf32>
    %473 = arith.mulf %472, %440 : vector<3x384xf32>
    %474 = arith.addf %470, %473 : vector<3x384xf32>
    %c5_140 = arith.constant 5 : index
    %c0_141 = arith.constant 0 : index
    %c0_142 = arith.constant 0 : index
    %c0_143 = arith.constant 0 : index
    %475 = vector.load %arg9[%c5_140, %c0_141, %c0_142, %c0_143] : memref<8x3x3x384xf32, #tpu.memory_space<vmem>>, vector<1x1x3x384xf32>
    %476 = vector.shape_cast %475 : vector<1x1x3x384xf32> to vector<3x384xf32>
    %477 = vector.shape_cast %474 : vector<3x384xf32> to vector<1x1x3x384xf32>
    tpu.vector_store %arg9[%c5_140, %c0_141, %c0_142, %c0_143], %477 {strides = array<i32>} : memref<8x3x3x384xf32, #tpu.memory_space<vmem>>, vector<1x1x3x384xf32>,
    %478 = vector.extract_strided_slice %463 {offsets = [3, 0], sizes = [1, 384], strides = [1, 1]} : vector<9x384xf32> to vector<1x384xf32>
    %479 = vector.broadcast %478 : vector<1x384xf32> to vector<3x384xf32>
    %480 = arith.mulf %479, %434 : vector<3x384xf32>
    %481 = vector.extract_strided_slice %463 {offsets = [4, 0], sizes = [1, 384], strides = [1, 1]} : vector<9x384xf32> to vector<1x384xf32>
    %482 = vector.broadcast %481 : vector<1x384xf32> to vector<3x384xf32>
    %483 = arith.mulf %482, %437 : vector<3x384xf32>
    %484 = arith.addf %480, %483 : vector<3x384xf32>
    %485 = vector.extract_strided_slice %463 {offsets = [5, 0], sizes = [1, 384], strides = [1, 1]} : vector<9x384xf32> to vector<1x384xf32>
    %486 = vector.broadcast %485 : vector<1x384xf32> to vector<3x384xf32>
    %487 = arith.mulf %486, %440 : vector<3x384xf32>
    %488 = arith.addf %484, %487 : vector<3x384xf32>
    %c5_144 = arith.constant 5 : index
    %c1_145 = arith.constant 1 : index
    %c0_146 = arith.constant 0 : index
    %c0_147 = arith.constant 0 : index
    %489 = vector.load %arg9[%c5_144, %c1_145, %c0_146, %c0_147] : memref<8x3x3x384xf32, #tpu.memory_space<vmem>>, vector<1x1x3x384xf32>
    %490 = vector.shape_cast %489 : vector<1x1x3x384xf32> to vector<3x384xf32>
    %491 = vector.shape_cast %488 : vector<3x384xf32> to vector<1x1x3x384xf32>
    tpu.vector_store %arg9[%c5_144, %c1_145, %c0_146, %c0_147], %491 {strides = array<i32>} : memref<8x3x3x384xf32, #tpu.memory_space<vmem>>, vector<1x1x3x384xf32>,
    %492 = vector.extract_strided_slice %463 {offsets = [6, 0], sizes = [1, 384], strides = [1, 1]} : vector<9x384xf32> to vector<1x384xf32>
    %493 = vector.broadcast %492 : vector<1x384xf32> to vector<3x384xf32>
    %494 = arith.mulf %493, %434 : vector<3x384xf32>
    %495 = vector.extract_strided_slice %463 {offsets = [7, 0], sizes = [1, 384], strides = [1, 1]} : vector<9x384xf32> to vector<1x384xf32>
    %496 = vector.broadcast %495 : vector<1x384xf32> to vector<3x384xf32>
    %497 = arith.mulf %496, %437 : vector<3x384xf32>
    %498 = arith.addf %494, %497 : vector<3x384xf32>
    %499 = vector.extract_strided_slice %463 {offsets = [8, 0], sizes = [1, 384], strides = [1, 1]} : vector<9x384xf32> to vector<1x384xf32>
    %500 = vector.broadcast %499 : vector<1x384xf32> to vector<3x384xf32>
    %501 = arith.mulf %500, %440 : vector<3x384xf32>
    %502 = arith.addf %498, %501 : vector<3x384xf32>
    %c5_148 = arith.constant 5 : index
    %c2_149 = arith.constant 2 : index
    %c0_150 = arith.constant 0 : index
    %c0_151 = arith.constant 0 : index
    %503 = vector.load %arg9[%c5_148, %c2_149, %c0_150, %c0_151] : memref<8x3x3x384xf32, #tpu.memory_space<vmem>>, vector<1x1x3x384xf32>
    %504 = vector.shape_cast %503 : vector<1x1x3x384xf32> to vector<3x384xf32>
    %505 = vector.shape_cast %502 : vector<3x384xf32> to vector<1x1x3x384xf32>
    tpu.vector_store %arg9[%c5_148, %c2_149, %c0_150, %c0_151], %505 {strides = array<i32>} : memref<8x3x3x384xf32, #tpu.memory_space<vmem>>, vector<1x1x3x384xf32>,
    %cst_152 = arith.constant 2.500000e-01 : f32
    %506 = vector.broadcast %cst_152 : f32 to vector<3x384xf32>
    %507 = arith.mulf %459, %506 : vector<3x384xf32>
    %508 = arith.addf %425, %507 : vector<3x384xf32>
    %c6 = arith.constant 6 : index
    %c0_153 = arith.constant 0 : index
    %c0_154 = arith.constant 0 : index
    %509 = vector.load %arg7[%c6, %c0_153, %c0_154] : memref<9x3x384xf32, #tpu.memory_space<vmem>>, vector<1x3x384xf32>
    %510 = vector.shape_cast %509 : vector<1x3x384xf32> to vector<3x384xf32>
    %511 = vector.shape_cast %508 : vector<3x384xf32> to vector<1x3x384xf32>
    tpu.vector_store %arg7[%c6, %c0_153, %c0_154], %511 {strides = array<i32>} : memref<9x3x384xf32, #tpu.memory_space<vmem>>, vector<1x3x384xf32>,
    %c5_155 = arith.constant 5 : index
    %c0_156 = arith.constant 0 : index
    %c0_157 = arith.constant 0 : index
    %512 = vector.load %arg8[%c5_155, %c0_156, %c0_157] : memref<8x3x384xf32, #tpu.memory_space<vmem>>, vector<1x3x384xf32>
    %513 = vector.shape_cast %512 : vector<1x3x384xf32> to vector<3x384xf32>
    %514 = vector.shape_cast %459 : vector<3x384xf32> to vector<1x3x384xf32>
    tpu.vector_store %arg8[%c5_155, %c0_156, %c0_157], %514 {strides = array<i32>} : memref<8x3x384xf32, #tpu.memory_space<vmem>>, vector<1x3x384xf32>,
    %cst_158 = arith.constant 2.500000e-01 : f32
    %515 = vector.broadcast %cst_158 : f32 to vector<3x384xf32>
    %516 = arith.mulf %474, %515 : vector<3x384xf32>
    %517 = arith.addf %434, %516 : vector<3x384xf32>
    %cst_159 = arith.constant 2.500000e-01 : f32
    %518 = vector.broadcast %cst_159 : f32 to vector<3x384xf32>
    %519 = arith.mulf %488, %518 : vector<3x384xf32>
    %520 = arith.addf %437, %519 : vector<3x384xf32>
    %cst_160 = arith.constant 2.500000e-01 : f32
    %521 = vector.broadcast %cst_160 : f32 to vector<3x384xf32>
    %522 = arith.mulf %502, %521 : vector<3x384xf32>
    %523 = arith.addf %440, %522 : vector<3x384xf32>
    %524 = vector.extract_strided_slice %508 {offsets = [0, 0], sizes = [1, 384], strides = [1, 1]} : vector<3x384xf32> to vector<1x384xf32>
    %525 = vector.broadcast %1 : vector<32x1xf32> to vector<32x384xf32>
    %526 = vector.broadcast %524 : vector<1x384xf32> to vector<32x384xf32>
    %527 = arith.mulf %525, %526 : vector<32x384xf32>
    %528 = arith.addf %6, %527 : vector<32x384xf32>
    %529 = vector.extract_strided_slice %508 {offsets = [1, 0], sizes = [1, 384], strides = [1, 1]} : vector<3x384xf32> to vector<1x384xf32>
    %530 = vector.broadcast %2 : vector<32x1xf32> to vector<32x384xf32>
    %531 = vector.broadcast %529 : vector<1x384xf32> to vector<32x384xf32>
    %532 = arith.mulf %530, %531 : vector<32x384xf32>
    %533 = arith.addf %528, %532 : vector<32x384xf32>
    %534 = vector.extract_strided_slice %508 {offsets = [2, 0], sizes = [1, 384], strides = [1, 1]} : vector<3x384xf32> to vector<1x384xf32>
    %535 = vector.broadcast %3 : vector<32x1xf32> to vector<32x384xf32>
    %536 = vector.broadcast %534 : vector<1x384xf32> to vector<32x384xf32>
    %537 = arith.mulf %535, %536 : vector<32x384xf32>
    %538 = arith.addf %533, %537 : vector<32x384xf32>
    %539 = math.tanh %538 : vector<32x384xf32>
    %cst_161 = arith.constant dense<0.000000e+00> : vector<3x384xf32>
    %540 = tpu.matmul %7, %539, %cst_161 {dimension_numbers = #tpu.dot_dimension_numbers<[1], [0], [0], [1], [0, 0, 1, 1], [], []>} : vector<3x32xf32>, vector<32x384xf32>, vector<3x384xf32> -> vector<3x384xf32>
    %541 = vector.broadcast %8 : vector<3x1xf32> to vector<3x384xf32>
    %542 = arith.addf %540, %541 : vector<3x384xf32>
    %543 = arith.mulf %539, %539 : vector<32x384xf32>
    %cst_162 = arith.constant 1.000000e+00 : f32
    %544 = vector.broadcast %cst_162 : f32 to vector<32x384xf32>
    %545 = arith.subf %544, %543 : vector<32x384xf32>
    %cst_163 = arith.constant dense<0.000000e+00> : vector<9x384xf32>
    %546 = tpu.matmul %9, %545, %cst_163 {dimension_numbers = #tpu.dot_dimension_numbers<[1], [0], [0], [1], [0, 0, 1, 1], [], []>} : vector<9x32xf32>, vector<32x384xf32>, vector<9x384xf32> -> vector<9x384xf32>
    %547 = vector.extract_strided_slice %546 {offsets = [0, 0], sizes = [1, 384], strides = [1, 1]} : vector<9x384xf32> to vector<1x384xf32>
    %548 = vector.broadcast %547 : vector<1x384xf32> to vector<3x384xf32>
    %549 = arith.mulf %548, %517 : vector<3x384xf32>
    %550 = vector.extract_strided_slice %546 {offsets = [1, 0], sizes = [1, 384], strides = [1, 1]} : vector<9x384xf32> to vector<1x384xf32>
    %551 = vector.broadcast %550 : vector<1x384xf32> to vector<3x384xf32>
    %552 = arith.mulf %551, %520 : vector<3x384xf32>
    %553 = arith.addf %549, %552 : vector<3x384xf32>
    %554 = vector.extract_strided_slice %546 {offsets = [2, 0], sizes = [1, 384], strides = [1, 1]} : vector<9x384xf32> to vector<1x384xf32>
    %555 = vector.broadcast %554 : vector<1x384xf32> to vector<3x384xf32>
    %556 = arith.mulf %555, %523 : vector<3x384xf32>
    %557 = arith.addf %553, %556 : vector<3x384xf32>
    %c6_164 = arith.constant 6 : index
    %c0_165 = arith.constant 0 : index
    %c0_166 = arith.constant 0 : index
    %c0_167 = arith.constant 0 : index
    %558 = vector.load %arg9[%c6_164, %c0_165, %c0_166, %c0_167] : memref<8x3x3x384xf32, #tpu.memory_space<vmem>>, vector<1x1x3x384xf32>
    %559 = vector.shape_cast %558 : vector<1x1x3x384xf32> to vector<3x384xf32>
    %560 = vector.shape_cast %557 : vector<3x384xf32> to vector<1x1x3x384xf32>
    tpu.vector_store %arg9[%c6_164, %c0_165, %c0_166, %c0_167], %560 {strides = array<i32>} : memref<8x3x3x384xf32, #tpu.memory_space<vmem>>, vector<1x1x3x384xf32>,
    %561 = vector.extract_strided_slice %546 {offsets = [3, 0], sizes = [1, 384], strides = [1, 1]} : vector<9x384xf32> to vector<1x384xf32>
    %562 = vector.broadcast %561 : vector<1x384xf32> to vector<3x384xf32>
    %563 = arith.mulf %562, %517 : vector<3x384xf32>
    %564 = vector.extract_strided_slice %546 {offsets = [4, 0], sizes = [1, 384], strides = [1, 1]} : vector<9x384xf32> to vector<1x384xf32>
    %565 = vector.broadcast %564 : vector<1x384xf32> to vector<3x384xf32>
    %566 = arith.mulf %565, %520 : vector<3x384xf32>
    %567 = arith.addf %563, %566 : vector<3x384xf32>
    %568 = vector.extract_strided_slice %546 {offsets = [5, 0], sizes = [1, 384], strides = [1, 1]} : vector<9x384xf32> to vector<1x384xf32>
    %569 = vector.broadcast %568 : vector<1x384xf32> to vector<3x384xf32>
    %570 = arith.mulf %569, %523 : vector<3x384xf32>
    %571 = arith.addf %567, %570 : vector<3x384xf32>
    %c6_168 = arith.constant 6 : index
    %c1_169 = arith.constant 1 : index
    %c0_170 = arith.constant 0 : index
    %c0_171 = arith.constant 0 : index
    %572 = vector.load %arg9[%c6_168, %c1_169, %c0_170, %c0_171] : memref<8x3x3x384xf32, #tpu.memory_space<vmem>>, vector<1x1x3x384xf32>
    %573 = vector.shape_cast %572 : vector<1x1x3x384xf32> to vector<3x384xf32>
    %574 = vector.shape_cast %571 : vector<3x384xf32> to vector<1x1x3x384xf32>
    tpu.vector_store %arg9[%c6_168, %c1_169, %c0_170, %c0_171], %574 {strides = array<i32>} : memref<8x3x3x384xf32, #tpu.memory_space<vmem>>, vector<1x1x3x384xf32>,
    %575 = vector.extract_strided_slice %546 {offsets = [6, 0], sizes = [1, 384], strides = [1, 1]} : vector<9x384xf32> to vector<1x384xf32>
    %576 = vector.broadcast %575 : vector<1x384xf32> to vector<3x384xf32>
    %577 = arith.mulf %576, %517 : vector<3x384xf32>
    %578 = vector.extract_strided_slice %546 {offsets = [7, 0], sizes = [1, 384], strides = [1, 1]} : vector<9x384xf32> to vector<1x384xf32>
    %579 = vector.broadcast %578 : vector<1x384xf32> to vector<3x384xf32>
    %580 = arith.mulf %579, %520 : vector<3x384xf32>
    %581 = arith.addf %577, %580 : vector<3x384xf32>
    %582 = vector.extract_strided_slice %546 {offsets = [8, 0], sizes = [1, 384], strides = [1, 1]} : vector<9x384xf32> to vector<1x384xf32>
    %583 = vector.broadcast %582 : vector<1x384xf32> to vector<3x384xf32>
    %584 = arith.mulf %583, %523 : vector<3x384xf32>
    %585 = arith.addf %581, %584 : vector<3x384xf32>
    %c6_172 = arith.constant 6 : index
    %c2_173 = arith.constant 2 : index
    %c0_174 = arith.constant 0 : index
    %c0_175 = arith.constant 0 : index
    %586 = vector.load %arg9[%c6_172, %c2_173, %c0_174, %c0_175] : memref<8x3x3x384xf32, #tpu.memory_space<vmem>>, vector<1x1x3x384xf32>
    %587 = vector.shape_cast %586 : vector<1x1x3x384xf32> to vector<3x384xf32>
    %588 = vector.shape_cast %585 : vector<3x384xf32> to vector<1x1x3x384xf32>
    tpu.vector_store %arg9[%c6_172, %c2_173, %c0_174, %c0_175], %588 {strides = array<i32>} : memref<8x3x3x384xf32, #tpu.memory_space<vmem>>, vector<1x1x3x384xf32>,
    %cst_176 = arith.constant 2.500000e-01 : f32
    %589 = vector.broadcast %cst_176 : f32 to vector<3x384xf32>
    %590 = arith.mulf %542, %589 : vector<3x384xf32>
    %591 = arith.addf %508, %590 : vector<3x384xf32>
    %c7 = arith.constant 7 : index
    %c0_177 = arith.constant 0 : index
    %c0_178 = arith.constant 0 : index
    %592 = vector.load %arg7[%c7, %c0_177, %c0_178] : memref<9x3x384xf32, #tpu.memory_space<vmem>>, vector<1x3x384xf32>
    %593 = vector.shape_cast %592 : vector<1x3x384xf32> to vector<3x384xf32>
    %594 = vector.shape_cast %591 : vector<3x384xf32> to vector<1x3x384xf32>
    tpu.vector_store %arg7[%c7, %c0_177, %c0_178], %594 {strides = array<i32>} : memref<9x3x384xf32, #tpu.memory_space<vmem>>, vector<1x3x384xf32>,
    %c6_179 = arith.constant 6 : index
    %c0_180 = arith.constant 0 : index
    %c0_181 = arith.constant 0 : index
    %595 = vector.load %arg8[%c6_179, %c0_180, %c0_181] : memref<8x3x384xf32, #tpu.memory_space<vmem>>, vector<1x3x384xf32>
    %596 = vector.shape_cast %595 : vector<1x3x384xf32> to vector<3x384xf32>
    %597 = vector.shape_cast %542 : vector<3x384xf32> to vector<1x3x384xf32>
    tpu.vector_store %arg8[%c6_179, %c0_180, %c0_181], %597 {strides = array<i32>} : memref<8x3x384xf32, #tpu.memory_space<vmem>>, vector<1x3x384xf32>,
    %cst_182 = arith.constant 2.500000e-01 : f32
    %598 = vector.broadcast %cst_182 : f32 to vector<3x384xf32>
    %599 = arith.mulf %557, %598 : vector<3x384xf32>
    %600 = arith.addf %517, %599 : vector<3x384xf32>
    %cst_183 = arith.constant 2.500000e-01 : f32
    %601 = vector.broadcast %cst_183 : f32 to vector<3x384xf32>
    %602 = arith.mulf %571, %601 : vector<3x384xf32>
    %603 = arith.addf %520, %602 : vector<3x384xf32>
    %cst_184 = arith.constant 2.500000e-01 : f32
    %604 = vector.broadcast %cst_184 : f32 to vector<3x384xf32>
    %605 = arith.mulf %585, %604 : vector<3x384xf32>
    %606 = arith.addf %523, %605 : vector<3x384xf32>
    %607 = vector.extract_strided_slice %591 {offsets = [0, 0], sizes = [1, 384], strides = [1, 1]} : vector<3x384xf32> to vector<1x384xf32>
    %608 = vector.broadcast %1 : vector<32x1xf32> to vector<32x384xf32>
    %609 = vector.broadcast %607 : vector<1x384xf32> to vector<32x384xf32>
    %610 = arith.mulf %608, %609 : vector<32x384xf32>
    %611 = arith.addf %6, %610 : vector<32x384xf32>
    %612 = vector.extract_strided_slice %591 {offsets = [1, 0], sizes = [1, 384], strides = [1, 1]} : vector<3x384xf32> to vector<1x384xf32>
    %613 = vector.broadcast %2 : vector<32x1xf32> to vector<32x384xf32>
    %614 = vector.broadcast %612 : vector<1x384xf32> to vector<32x384xf32>
    %615 = arith.mulf %613, %614 : vector<32x384xf32>
    %616 = arith.addf %611, %615 : vector<32x384xf32>
    %617 = vector.extract_strided_slice %591 {offsets = [2, 0], sizes = [1, 384], strides = [1, 1]} : vector<3x384xf32> to vector<1x384xf32>
    %618 = vector.broadcast %3 : vector<32x1xf32> to vector<32x384xf32>
    %619 = vector.broadcast %617 : vector<1x384xf32> to vector<32x384xf32>
    %620 = arith.mulf %618, %619 : vector<32x384xf32>
    %621 = arith.addf %616, %620 : vector<32x384xf32>
    %622 = math.tanh %621 : vector<32x384xf32>
    %cst_185 = arith.constant dense<0.000000e+00> : vector<3x384xf32>
    %623 = tpu.matmul %7, %622, %cst_185 {dimension_numbers = #tpu.dot_dimension_numbers<[1], [0], [0], [1], [0, 0, 1, 1], [], []>} : vector<3x32xf32>, vector<32x384xf32>, vector<3x384xf32> -> vector<3x384xf32>
    %624 = vector.broadcast %8 : vector<3x1xf32> to vector<3x384xf32>
    %625 = arith.addf %623, %624 : vector<3x384xf32>
    %626 = arith.mulf %622, %622 : vector<32x384xf32>
    %cst_186 = arith.constant 1.000000e+00 : f32
    %627 = vector.broadcast %cst_186 : f32 to vector<32x384xf32>
    %628 = arith.subf %627, %626 : vector<32x384xf32>
    %cst_187 = arith.constant dense<0.000000e+00> : vector<9x384xf32>
    %629 = tpu.matmul %9, %628, %cst_187 {dimension_numbers = #tpu.dot_dimension_numbers<[1], [0], [0], [1], [0, 0, 1, 1], [], []>} : vector<9x32xf32>, vector<32x384xf32>, vector<9x384xf32> -> vector<9x384xf32>
    %630 = vector.extract_strided_slice %629 {offsets = [0, 0], sizes = [1, 384], strides = [1, 1]} : vector<9x384xf32> to vector<1x384xf32>
    %631 = vector.broadcast %630 : vector<1x384xf32> to vector<3x384xf32>
    %632 = arith.mulf %631, %600 : vector<3x384xf32>
    %633 = vector.extract_strided_slice %629 {offsets = [1, 0], sizes = [1, 384], strides = [1, 1]} : vector<9x384xf32> to vector<1x384xf32>
    %634 = vector.broadcast %633 : vector<1x384xf32> to vector<3x384xf32>
    %635 = arith.mulf %634, %603 : vector<3x384xf32>
    %636 = arith.addf %632, %635 : vector<3x384xf32>
    %637 = vector.extract_strided_slice %629 {offsets = [2, 0], sizes = [1, 384], strides = [1, 1]} : vector<9x384xf32> to vector<1x384xf32>
    %638 = vector.broadcast %637 : vector<1x384xf32> to vector<3x384xf32>
    %639 = arith.mulf %638, %606 : vector<3x384xf32>
    %640 = arith.addf %636, %639 : vector<3x384xf32>
    %c7_188 = arith.constant 7 : index
    %c0_189 = arith.constant 0 : index
    %c0_190 = arith.constant 0 : index
    %c0_191 = arith.constant 0 : index
    %641 = vector.load %arg9[%c7_188, %c0_189, %c0_190, %c0_191] : memref<8x3x3x384xf32, #tpu.memory_space<vmem>>, vector<1x1x3x384xf32>
    %642 = vector.shape_cast %641 : vector<1x1x3x384xf32> to vector<3x384xf32>
    %643 = vector.shape_cast %640 : vector<3x384xf32> to vector<1x1x3x384xf32>
    tpu.vector_store %arg9[%c7_188, %c0_189, %c0_190, %c0_191], %643 {strides = array<i32>} : memref<8x3x3x384xf32, #tpu.memory_space<vmem>>, vector<1x1x3x384xf32>,
    %644 = vector.extract_strided_slice %629 {offsets = [3, 0], sizes = [1, 384], strides = [1, 1]} : vector<9x384xf32> to vector<1x384xf32>
    %645 = vector.broadcast %644 : vector<1x384xf32> to vector<3x384xf32>
    %646 = arith.mulf %645, %600 : vector<3x384xf32>
    %647 = vector.extract_strided_slice %629 {offsets = [4, 0], sizes = [1, 384], strides = [1, 1]} : vector<9x384xf32> to vector<1x384xf32>
    %648 = vector.broadcast %647 : vector<1x384xf32> to vector<3x384xf32>
    %649 = arith.mulf %648, %603 : vector<3x384xf32>
    %650 = arith.addf %646, %649 : vector<3x384xf32>
    %651 = vector.extract_strided_slice %629 {offsets = [5, 0], sizes = [1, 384], strides = [1, 1]} : vector<9x384xf32> to vector<1x384xf32>
    %652 = vector.broadcast %651 : vector<1x384xf32> to vector<3x384xf32>
    %653 = arith.mulf %652, %606 : vector<3x384xf32>
    %654 = arith.addf %650, %653 : vector<3x384xf32>
    %c7_192 = arith.constant 7 : index
    %c1_193 = arith.constant 1 : index
    %c0_194 = arith.constant 0 : index
    %c0_195 = arith.constant 0 : index
    %655 = vector.load %arg9[%c7_192, %c1_193, %c0_194, %c0_195] : memref<8x3x3x384xf32, #tpu.memory_space<vmem>>, vector<1x1x3x384xf32>
    %656 = vector.shape_cast %655 : vector<1x1x3x384xf32> to vector<3x384xf32>
    %657 = vector.shape_cast %654 : vector<3x384xf32> to vector<1x1x3x384xf32>
    tpu.vector_store %arg9[%c7_192, %c1_193, %c0_194, %c0_195], %657 {strides = array<i32>} : memref<8x3x3x384xf32, #tpu.memory_space<vmem>>, vector<1x1x3x384xf32>,
    %658 = vector.extract_strided_slice %629 {offsets = [6, 0], sizes = [1, 384], strides = [1, 1]} : vector<9x384xf32> to vector<1x384xf32>
    %659 = vector.broadcast %658 : vector<1x384xf32> to vector<3x384xf32>
    %660 = arith.mulf %659, %600 : vector<3x384xf32>
    %661 = vector.extract_strided_slice %629 {offsets = [7, 0], sizes = [1, 384], strides = [1, 1]} : vector<9x384xf32> to vector<1x384xf32>
    %662 = vector.broadcast %661 : vector<1x384xf32> to vector<3x384xf32>
    %663 = arith.mulf %662, %603 : vector<3x384xf32>
    %664 = arith.addf %660, %663 : vector<3x384xf32>
    %665 = vector.extract_strided_slice %629 {offsets = [8, 0], sizes = [1, 384], strides = [1, 1]} : vector<9x384xf32> to vector<1x384xf32>
    %666 = vector.broadcast %665 : vector<1x384xf32> to vector<3x384xf32>
    %667 = arith.mulf %666, %606 : vector<3x384xf32>
    %668 = arith.addf %664, %667 : vector<3x384xf32>
    %c7_196 = arith.constant 7 : index
    %c2_197 = arith.constant 2 : index
    %c0_198 = arith.constant 0 : index
    %c0_199 = arith.constant 0 : index
    %669 = vector.load %arg9[%c7_196, %c2_197, %c0_198, %c0_199] : memref<8x3x3x384xf32, #tpu.memory_space<vmem>>, vector<1x1x3x384xf32>
    %670 = vector.shape_cast %669 : vector<1x1x3x384xf32> to vector<3x384xf32>
    %671 = vector.shape_cast %668 : vector<3x384xf32> to vector<1x1x3x384xf32>
    tpu.vector_store %arg9[%c7_196, %c2_197, %c0_198, %c0_199], %671 {strides = array<i32>} : memref<8x3x3x384xf32, #tpu.memory_space<vmem>>, vector<1x1x3x384xf32>,
    %cst_200 = arith.constant 2.500000e-01 : f32
    %672 = vector.broadcast %cst_200 : f32 to vector<3x384xf32>
    %673 = arith.mulf %625, %672 : vector<3x384xf32>
    %674 = arith.addf %591, %673 : vector<3x384xf32>
    %c8 = arith.constant 8 : index
    %c0_201 = arith.constant 0 : index
    %c0_202 = arith.constant 0 : index
    %675 = vector.load %arg7[%c8, %c0_201, %c0_202] : memref<9x3x384xf32, #tpu.memory_space<vmem>>, vector<1x3x384xf32>
    %676 = vector.shape_cast %675 : vector<1x3x384xf32> to vector<3x384xf32>
    %677 = vector.shape_cast %674 : vector<3x384xf32> to vector<1x3x384xf32>
    tpu.vector_store %arg7[%c8, %c0_201, %c0_202], %677 {strides = array<i32>} : memref<9x3x384xf32, #tpu.memory_space<vmem>>, vector<1x3x384xf32>,
    %c7_203 = arith.constant 7 : index
    %c0_204 = arith.constant 0 : index
    %c0_205 = arith.constant 0 : index
    %678 = vector.load %arg8[%c7_203, %c0_204, %c0_205] : memref<8x3x384xf32, #tpu.memory_space<vmem>>, vector<1x3x384xf32>
    %679 = vector.shape_cast %678 : vector<1x3x384xf32> to vector<3x384xf32>
    %680 = vector.shape_cast %625 : vector<3x384xf32> to vector<1x3x384xf32>
    tpu.vector_store %arg8[%c7_203, %c0_204, %c0_205], %680 {strides = array<i32>} : memref<8x3x384xf32, #tpu.memory_space<vmem>>, vector<1x3x384xf32>,
    return
  }
  func.func @transform_0(%arg0: i32) -> (i32, i32) {
    %c0_i32 = arith.constant 0 : i32
    %c0_i32_0 = arith.constant 0 : i32
    return %c0_i32, %arg0 : i32, i32
  }
  func.func @transform_1(%arg0: i32) -> (i32, i32) {
    %c0_i32 = arith.constant 0 : i32
    %c0_i32_0 = arith.constant 0 : i32
    %c0_i32_1 = arith.constant 0 : i32
    return %c0_i32, %c0_i32_0 : i32, i32
  }
  func.func @transform_2(%arg0: i32) -> (i32, i32) {
    %c0_i32 = arith.constant 0 : i32
    %c0_i32_0 = arith.constant 0 : i32
    %c0_i32_1 = arith.constant 0 : i32
    return %c0_i32, %c0_i32_0 : i32, i32
  }
  func.func @transform_3(%arg0: i32) -> (i32, i32) {
    %c0_i32 = arith.constant 0 : i32
    %c0_i32_0 = arith.constant 0 : i32
    %c0_i32_1 = arith.constant 0 : i32
    return %c0_i32, %c0_i32_0 : i32, i32
  }
  func.func @transform_4(%arg0: i32) -> (i32, i32) {
    %c0_i32 = arith.constant 0 : i32
    %c0_i32_0 = arith.constant 0 : i32
    %c0_i32_1 = arith.constant 0 : i32
    return %c0_i32, %c0_i32_0 : i32, i32
  }
  func.func @transform_5(%arg0: i32) -> (i32, i32) {
    %c0_i32 = arith.constant 0 : i32
    %c0_i32_0 = arith.constant 0 : i32
    %c0_i32_1 = arith.constant 0 : i32
    return %c0_i32, %c0_i32_0 : i32, i32
  }
  func.func @transform_6(%arg0: i32) -> (i32, i32, i32) {
    %c0_i32 = arith.constant 0 : i32
    %c0_i32_0 = arith.constant 0 : i32
    %c0_i32_1 = arith.constant 0 : i32
    return %c0_i32, %c0_i32_0, %arg0 : i32, i32, i32
  }
  func.func @transform_7(%arg0: i32) -> (i32, i32, i32) {
    %c0_i32 = arith.constant 0 : i32
    %c0_i32_0 = arith.constant 0 : i32
    %c0_i32_1 = arith.constant 0 : i32
    return %c0_i32, %c0_i32_0, %arg0 : i32, i32, i32
  }
  func.func @transform_8(%arg0: i32) -> (i32, i32, i32, i32) {
    %c0_i32 = arith.constant 0 : i32
    %c0_i32_0 = arith.constant 0 : i32
    %c0_i32_1 = arith.constant 0 : i32
    %c0_i32_2 = arith.constant 0 : i32
    return %c0_i32, %c0_i32_0, %c0_i32_1, %arg0 : i32, i32, i32, i32
  }
}

</mosaic_0001>

<llo_original>
// kernel: shapenet_forward.1
$region0: #{shapenet_forward.1}
  #allocation0 [shape = 'u32[]', space=smem, size = 0x4, offset = 0x4, fixed_abs, tag = 'smem constant byte address 0x4 - core index']
  #allocation1 [shape = 'u32[144,128]{1,0:T(1,128)}', space=vmem, size = 0x12000, scoped, tag = 'internal scratch']
  %s0 = inlined_call_operand.vmem [shape: f32[3,384], index: 0, kind: input, shape index: {}]
  %s1 = inlined_call_operand.vmem [shape: f32[32,3], index: 1, kind: input, shape index: {}]
  %s2 = inlined_call_operand.vmem [shape: f32[3,32], index: 2, kind: input, shape index: {}]
  %s3 = inlined_call_operand.vmem [shape: f32[9,32], index: 3, kind: input, shape index: {}]
  %s4 = inlined_call_operand.vmem [shape: f32[32,1], index: 4, kind: input, shape index: {}]
  %s5 = inlined_call_operand.vmem [shape: f32[3,1], index: 5, kind: input, shape index: {}]
  %s6 = inlined_call_operand.hbm [shape: f32[9,3,384], index: 6, kind: output, shape index: {0}]
  %s7 = inlined_call_operand.vmem [shape: f32[8,3,384], index: 7, kind: output, shape index: {1}]
  %s8 = inlined_call_operand.vmem [shape: f32[8,3,3,384], index: 8, kind: output, shape index: {2}]
  %9 = xla_tuple %s6, %s7, %s8
  %s10 = sld [smem:[#allocation0]]
  $region50: #{shapenet_forward.1} parent=0
    _
  %s12 = ssub.s32 1, %s10
  %s13 = scalar_select 0, %s12, %s10
  $region1: #{shapenet_forward.1} parent=0
    #allocation2 [shape = 'u8[55296]{0}', space=vmem, size = 0xd800, scoped, tag = 'output window, operand 0, single buffered']
    #allocation3 [shape = 's32[1]{0}', space=sflag, size = 0x4, scoped, tag = 'scoped memory for shapenet_forward.1']
    %14 = vsyncpa [#allocation3], 0
    // Predicated region
    $region2: #{shapenet_forward.1} parent=1 // pred_check
      _
    $region3: #{shapenet_forward.1} parent=1 // pred_check_branch
      %16 = sbr.rel (0) target = $region5
    $region4: #{shapenet_forward.1} parent=1 // pred_region
      _
    $region5: #{shapenet_forward.1} parent=1 // pred_fallthru
      _
    // Predicated region
    $region6: #{shapenet_forward.1} parent=1 // pred_check
      _
    $region7: #{shapenet_forward.1} parent=1 // pred_check_branch
      %18 = sbr.rel (0) target = $region9
    $region8: #{shapenet_forward.1} parent=1 // pred_region
      _
    $region9: #{shapenet_forward.1} parent=1 // pred_fallthru
      _
    // Predicated region
    $region10: #{shapenet_forward.1} parent=1 // pred_check
      _
    $region11: #{shapenet_forward.1} parent=1 // pred_check_branch
      %20 = sbr.rel (0) target = $region13
    $region12: #{shapenet_forward.1} parent=1 // pred_region
      _
    $region13: #{shapenet_forward.1} parent=1 // pred_fallthru
      _
    // Predicated region
    $region14: #{shapenet_forward.1} parent=1 // pred_check
      _
    $region15: #{shapenet_forward.1} parent=1 // pred_check_branch
      %22 = sbr.rel (0) target = $region17
    $region16: #{shapenet_forward.1} parent=1 // pred_region
      _
    $region17: #{shapenet_forward.1} parent=1 // pred_fallthru
      _
    // Predicated region
    $region18: #{shapenet_forward.1} parent=1 // pred_check
      _
    $region19: #{shapenet_forward.1} parent=1 // pred_check_branch
      %24 = sbr.rel (0) target = $region21
    $region20: #{shapenet_forward.1} parent=1 // pred_region
      _
    $region21: #{shapenet_forward.1} parent=1 // pred_fallthru
      _
    // Predicated region
    $region22: #{shapenet_forward.1} parent=1 // pred_check
      _
    $region23: #{shapenet_forward.1} parent=1 // pred_check_branch
      %26 = sbr.rel (0) target = $region25
    $region24: #{shapenet_forward.1} parent=1 // pred_region
      _
    $region25: #{shapenet_forward.1} parent=1 // pred_fallthru
      _
    %v27 = vld [vmem:[%s0] sm:$0x77]
    %v28 = vld [vmem:[%s0 + $0x8] sm:$0x7]
    %v29 = vld [vmem:[%s1] sm:$0xff]
    %v30 = vld [vmem:[%s1 + $0x8] sm:$0xff]
    %v31 = vld [vmem:[%s1 + $0x10] sm:$0xff]
    %v32 = vld [vmem:[%s1 + $0x18] sm:$0xff]
    %v33 = vld [vmem:[%s4] sm:$0xff]
    %v34 = vld [vmem:[%s4 + $0x8] sm:$0xff]
    %v35 = vld [vmem:[%s4 + $0x10] sm:$0xff]
    %v36 = vld [vmem:[%s4 + $0x18] sm:$0xff]
    %38 = vset.pattern.permute.xlu0 0
    %39 = vperm.xlu0 %38, %v33
    %v40 = vpop.permute.xlu0 %39
    %43 = vset.pattern.permute.xlu0 0
    %44 = vperm.xlu0 %43, %v34
    %v45 = vpop.permute.xlu0 %44
    %48 = vset.pattern.permute.xlu0 0
    %49 = vperm.xlu0 %48, %v35
    %v50 = vpop.permute.xlu0 %49
    %53 = vset.pattern.permute.xlu0 0
    %54 = vperm.xlu0 %53, %v36
    %v55 = vpop.permute.xlu0 %54
    %v57 = vld [vmem:[%s2] sm:$0x7]
    %v58 = vld [vmem:[%s5] sm:$0x7]
    %v59 = vld [vmem:[%s3] sm:$0xff]
    %v60 = vld [vmem:[%s3 + $0x8] sm:$0x1]
    %61 = vst [vmem:[#allocation2] sm:$0x77] %v27
    %62 = vst [vmem:[#allocation2 + $0x8] sm:$0x7] %v28
    %v63 = vlaneseq
    %v64 = vshrl.u32 %v63, 7
    %vm65 = vcmp.eq.s32.totalorder %v64, 0
    %v66 = vsel %vm65, 1, 0
    %v67 = vcvt.s32.f32 %v66
    %vm68 = vcmp.eq.s32.totalorder %v64, 1
    %v69 = vsel %vm68, 1, 0
    %v70 = vcvt.s32.f32 %v69
    %vm71 = vcmp.eq.s32.totalorder %v64, 2
    %v72 = vsel %vm71, 1, 0
    %v73 = vcvt.s32.f32 %v72
    %75 = vset.pattern.permute.xlu0 0
    %76 = vperm.xlu0 %75, %v29
    %v77 = vpop.permute.xlu0 %76
    %80 = vset.pattern.permute.xlu0 0
    %81 = vperm.xlu0 %80, %v30
    %v82 = vpop.permute.xlu0 %81
    %85 = vset.pattern.permute.xlu0 0
    %86 = vperm.xlu0 %85, %v31
    %v87 = vpop.permute.xlu0 %86
    %90 = vset.pattern.permute.xlu0 0
    %91 = vperm.xlu0 %90, %v32
    %v92 = vpop.permute.xlu0 %91
    %v96 = vlaneseq
    %v97 = vshrl.u32 %v96, 7
    %v98 = vsub.s32 0, %v97
    %v99 = vrot.slane %v27, %v98
    %v100 = vlaneseq
    %v101 = vshrl.u32 %v100, 7
    %v102 = vsub.s32 4, %v101
    %v103 = vrot.slane %v27, %v102
    %v104 = vlaneseq
    %v105 = vshrl.u32 %v104, 7
    %v106 = vsub.s32 0, %v105
    %v107 = vrot.slane %v28, %v106
    %v111 = vlaneseq
    %v112 = vshrl.u32 %v111, 7
    %v113 = vsub.s32 0, %v112
    %v114 = vrot.slane %v99, %v113
    %v115 = vlaneseq
    %v116 = vshrl.u32 %v115, 7
    %v117 = vsub.s32 0, %v116
    %v118 = vrot.slane %v103, %v117
    %v119 = vlaneseq
    %v120 = vshrl.u32 %v119, 7
    %v121 = vsub.s32 0, %v120
    %v122 = vrot.slane %v107, %v121
    %v123 = vmul.f32 %v77, %v114
    %v124 = vmul.f32 %v77, %v118
    %v125 = vmul.f32 %v77, %v122
    %v126 = vmul.f32 %v82, %v114
    %v127 = vmul.f32 %v82, %v118
    %v128 = vmul.f32 %v82, %v122
    %v129 = vmul.f32 %v87, %v114
    %v130 = vmul.f32 %v87, %v118
    %v131 = vmul.f32 %v87, %v122
    %v132 = vmul.f32 %v92, %v114
    %v133 = vmul.f32 %v92, %v118
    %v134 = vmul.f32 %v92, %v122
    %v135 = vadd.f32 %v40, %v123
    %v136 = vadd.f32 %v40, %v124
    %v137 = vadd.f32 %v40, %v125
    %v138 = vadd.f32 %v45, %v126
    %v139 = vadd.f32 %v45, %v127
    %v140 = vadd.f32 %v45, %v128
    %v141 = vadd.f32 %v50, %v129
    %v142 = vadd.f32 %v50, %v130
    %v143 = vadd.f32 %v50, %v131
    %v144 = vadd.f32 %v55, %v132
    %v145 = vadd.f32 %v55, %v133
    %v146 = vadd.f32 %v55, %v134
    %147 = vset.pattern.permute.xlu0 1
    %148 = vperm.xlu0 %147, %v29
    %v149 = vpop.permute.xlu0 %148
    %151 = vset.pattern.permute.xlu0 1
    %152 = vperm.xlu0 %151, %v30
    %v153 = vpop.permute.xlu0 %152
    %155 = vset.pattern.permute.xlu0 1
    %156 = vperm.xlu0 %155, %v31
    %v157 = vpop.permute.xlu0 %156
    %159 = vset.pattern.permute.xlu0 1
    %160 = vperm.xlu0 %159, %v32
    %v161 = vpop.permute.xlu0 %160
    %v163 = vlaneseq
    %v164 = vshrl.u32 %v163, 7
    %v165 = vsub.s32 1, %v164
    %v166 = vrot.slane %v27, %v165
    %v167 = vlaneseq
    %v168 = vshrl.u32 %v167, 7
    %v169 = vsub.s32 5, %v168
    %v170 = vrot.slane %v27, %v169
    %v171 = vlaneseq
    %v172 = vshrl.u32 %v171, 7
    %v173 = vsub.s32 1, %v172
    %v174 = vrot.slane %v28, %v173
    %v178 = vlaneseq
    %v179 = vshrl.u32 %v178, 7
    %v180 = vsub.s32 1, %v179
    %v181 = vrot.slane %v166, %v180
    %v182 = vlaneseq
    %v183 = vshrl.u32 %v182, 7
    %v184 = vsub.s32 1, %v183
    %v185 = vrot.slane %v170, %v184
    %v186 = vlaneseq
    %v187 = vshrl.u32 %v186, 7
    %v188 = vsub.s32 1, %v187
    %v189 = vrot.slane %v174, %v188
    %v190 = vmul.f32 %v149, %v181
    %v191 = vmul.f32 %v149, %v185
    %v192 = vmul.f32 %v149, %v189
    %v193 = vmul.f32 %v153, %v181
    %v194 = vmul.f32 %v153, %v185
    %v195 = vmul.f32 %v153, %v189
    %v196 = vmul.f32 %v157, %v181
    %v197 = vmul.f32 %v157, %v185
    %v198 = vmul.f32 %v157, %v189
    %v199 = vmul.f32 %v161, %v181
    %v200 = vmul.f32 %v161, %v185
    %v201 = vmul.f32 %v161, %v189
    %v202 = vadd.f32 %v135, %v190
    %v203 = vadd.f32 %v136, %v191
    %v204 = vadd.f32 %v137, %v192
    %v205 = vadd.f32 %v138, %v193
    %v206 = vadd.f32 %v139, %v194
    %v207 = vadd.f32 %v140, %v195
    %v208 = vadd.f32 %v141, %v196
    %v209 = vadd.f32 %v142, %v197
    %v210 = vadd.f32 %v143, %v198
    %v211 = vadd.f32 %v144, %v199
    %v212 = vadd.f32 %v145, %v200
    %v213 = vadd.f32 %v146, %v201
    %214 = vset.pattern.permute.xlu0 2
    %215 = vperm.xlu0 %214, %v29
    %v216 = vpop.permute.xlu0 %215
    %218 = vset.pattern.permute.xlu0 2
    %219 = vperm.xlu0 %218, %v30
    %v220 = vpop.permute.xlu0 %219
    %222 = vset.pattern.permute.xlu0 2
    %223 = vperm.xlu0 %222, %v31
    %v224 = vpop.permute.xlu0 %223
    %226 = vset.pattern.permute.xlu0 2
    %227 = vperm.xlu0 %226, %v32
    %v228 = vpop.permute.xlu0 %227
    %v230 = vlaneseq
    %v231 = vshrl.u32 %v230, 7
    %v232 = vsub.s32 2, %v231
    %v233 = vrot.slane %v27, %v232
    %v234 = vlaneseq
    %v235 = vshrl.u32 %v234, 7
    %v236 = vsub.s32 6, %v235
    %v237 = vrot.slane %v27, %v236
    %v238 = vlaneseq
    %v239 = vshrl.u32 %v238, 7
    %v240 = vsub.s32 2, %v239
    %v241 = vrot.slane %v28, %v240
    %v245 = vlaneseq
    %v246 = vshrl.u32 %v245, 7
    %v247 = vsub.s32 2, %v246
    %v248 = vrot.slane %v233, %v247
    %v249 = vlaneseq
    %v250 = vshrl.u32 %v249, 7
    %v251 = vsub.s32 2, %v250
    %v252 = vrot.slane %v237, %v251
    %v253 = vlaneseq
    %v254 = vshrl.u32 %v253, 7
    %v255 = vsub.s32 2, %v254
    %v256 = vrot.slane %v241, %v255
    %v257 = vmul.f32 %v216, %v248
    %v258 = vmul.f32 %v216, %v252
    %v259 = vmul.f32 %v216, %v256
    %v260 = vmul.f32 %v220, %v248
    %v261 = vmul.f32 %v220, %v252
    %v262 = vmul.f32 %v220, %v256
    %v263 = vmul.f32 %v224, %v248
    %v264 = vmul.f32 %v224, %v252
    %v265 = vmul.f32 %v224, %v256
    %v266 = vmul.f32 %v228, %v248
    %v267 = vmul.f32 %v228, %v252
    %v268 = vmul.f32 %v228, %v256
    %v269 = vadd.f32 %v202, %v257
    %v270 = vadd.f32 %v203, %v258
    %v271 = vadd.f32 %v204, %v259
    %v272 = vadd.f32 %v205, %v260
    %v273 = vadd.f32 %v206, %v261
    %v274 = vadd.f32 %v207, %v262
    %v275 = vadd.f32 %v208, %v263
    %v276 = vadd.f32 %v209, %v264
    %v277 = vadd.f32 %v210, %v265
    %v278 = vadd.f32 %v211, %v266
    %v279 = vadd.f32 %v212, %v267
    %v280 = vadd.f32 %v213, %v268
    %v281 = vtanh.pop %v269
    %v282 = vtanh.pop %v270
    %v283 = vtanh.pop %v271
    %v284 = vtanh.pop %v272
    %v285 = vtanh.pop %v273
    %v286 = vtanh.pop %v274
    %v287 = vtanh.pop %v275
    %v288 = vtanh.pop %v276
    %v289 = vtanh.pop %v277
    %v290 = vtanh.pop %v278
    %v291 = vtanh.pop %v279
    %v292 = vtanh.pop %v280
    %294 = vset.pattern.permute.xlu0 0
    %295 = vperm.xlu0 %294, %v58
    %v296 = vpop.permute.xlu0 %295
    %vm298 = vcmask 261120
    %v300 = vsel %vm298, %v57, 0
    %302 = vmatprep.subr.mxu0 %v282
    %303 = vmatpush1.msra.mxu0 %v281
    %304 = vmatprep.subr.mxu0 %v285
    %305 = vmatpush1.msra.mxu0 %v284
    %306 = vmatprep.subr.mxu0 %v288
    %307 = vmatpush1.msra.mxu0 %v287
    %308 = vmatprep.subr.mxu0 %v291
    %309 = vmatpush1.msra.mxu0 %v290
    %310 = vmatprep.subr.mxu0 0.0
    %311 = vmatpush1.msra.mxu0 0.0
    %312 = vmatprep.subr.mxu0 0.0
    %313 = vmatpush1.msra.mxu0 0.0
    %314 = vmatprep.subr.mxu0 0.0
    %315 = vmatpush1.msra.mxu0 0.0
    %316 = vmatprep.subr.mxu0 0.0
    %317 = vmatpush1.msra.mxu0 0.0
    %318 = vmatprep.subr.mxu0 0.0
    %319 = vmatpush1.msra.mxu0 0.0
    %320 = vmatprep.subr.mxu0 0.0
    %321 = vmatpush1.msra.mxu0 0.0
    %322 = vmatprep.subr.mxu0 0.0
    %323 = vmatpush1.msra.mxu0 0.0
    %324 = vmatprep.subr.mxu0 0.0
    %325 = vmatpush1.msra.mxu0 0.0
    %326 = vmatprep.subr.mxu0 0.0
    %327 = vmatpush1.msra.mxu0 0.0
    %328 = vmatprep.subr.mxu0 0.0
    %329 = vmatpush1.msra.mxu0 0.0
    %330 = vmatprep.subr.mxu0 0.0
    %331 = vmatpush1.msra.mxu0 0.0
    %332 = vmatprep.subr.mxu0 0.0
    %333 = vmatpush1.msra.mxu0 0.0
    %334 = vmatprep.subr.mxu0 0.0
    %335 = vmatpush1.msra.mxu0 0.0
    %336 = vmatprep.subr.mxu0 0.0
    %337 = vmatpush1.msra.mxu0 0.0
    %338 = vmatprep.subr.mxu0 0.0
    %339 = vmatpush1.msra.mxu0 0.0
    %340 = vmatprep.subr.mxu0 0.0
    %341 = vmatpush1.msra.mxu0 0.0
    %342 = vmatprep.subr.mxu0 0.0
    %343 = vmatpush1.msra.mxu0 0.0
    %344 = vmatprep.subr.mxu0 0.0
    %345 = vmatpush1.msra.mxu0 0.0
    %346 = vmatprep.subr.mxu0 0.0
    %347 = vmatpush1.msra.mxu0 0.0
    %348 = vmatprep.subr.mxu0 0.0
    %349 = vmatpush1.msra.mxu0 0.0
    %350 = vmatprep.subr.mxu0 0.0
    %351 = vmatpush1.msra.mxu0 0.0
    %352 = vmatprep.subr.mxu0 0.0
    %353 = vmatpush1.msra.mxu0 0.0
    %354 = vmatprep.subr.mxu0 0.0
    %355 = vmatpush1.msra.mxu0 0.0
    %356 = vmatprep.subr.mxu0 0.0
    %357 = vmatpush1.msra.mxu0 0.0
    %358 = vmatprep.subr.mxu0 0.0
    %359 = vmatpush1.msra.mxu0 0.0
    %360 = vmatprep.subr.mxu0 0.0
    %361 = vmatpush1.msra.mxu0 0.0
    %362 = vmatprep.subr.mxu0 0.0
    %363 = vmatpush1.msra.mxu0 0.0
    %364 = vmatprep.subr.mxu0 0.0
    %365 = vmatpush1.msra.mxu0 0.0
    %366 = vmatprep.mubr.f32.mxu0 0.0
    %367 = vmatmul.mubr.f32.gmra.mrb[0].mxu0 %v300
    %v368 = vpop.f32.mrb[0].mxu0
    %v369 = vadd.f32 %v296, %v368
    %v370 = vpop.f32.mrb[0].mxu0
    %v371 = vadd.f32 %v296, %v370
    %372 = vdwg.mxu0
    %373 = vmatprep.subr.mxu0 0.0
    %374 = vmatpush1.msra.mxu0 %v283
    %375 = vmatprep.subr.mxu0 0.0
    %376 = vmatpush1.msra.mxu0 %v286
    %377 = vmatprep.subr.mxu0 0.0
    %378 = vmatpush1.msra.mxu0 %v289
    %379 = vmatprep.subr.mxu0 0.0
    %380 = vmatpush1.msra.mxu0 %v292
    %381 = vmatprep.subr.mxu0 0.0
    %382 = vmatpush1.msra.mxu0 0.0
    %383 = vmatprep.subr.mxu0 0.0
    %384 = vmatpush1.msra.mxu0 0.0
    %385 = vmatprep.subr.mxu0 0.0
    %386 = vmatpush1.msra.mxu0 0.0
    %387 = vmatprep.subr.mxu0 0.0
    %388 = vmatpush1.msra.mxu0 0.0
    %389 = vmatprep.subr.mxu0 0.0
    %390 = vmatpush1.msra.mxu0 0.0
    %391 = vmatprep.subr.mxu0 0.0
    %392 = vmatpush1.msra.mxu0 0.0
    %393 = vmatprep.subr.mxu0 0.0
    %394 = vmatpush1.msra.mxu0 0.0
    %395 = vmatprep.subr.mxu0 0.0
    %396 = vmatpush1.msra.mxu0 0.0
    %397 = vmatprep.subr.mxu0 0.0
    %398 = vmatpush1.msra.mxu0 0.0
    %399 = vmatprep.subr.mxu0 0.0
    %400 = vmatpush1.msra.mxu0 0.0
    %401 = vmatprep.subr.mxu0 0.0
    %402 = vmatpush1.msra.mxu0 0.0
    %403 = vmatprep.subr.mxu0 0.0
    %404 = vmatpush1.msra.mxu0 0.0
    %405 = vmatprep.subr.mxu0 0.0
    %406 = vmatpush1.msra.mxu0 0.0
    %407 = vmatprep.subr.mxu0 0.0
    %408 = vmatpush1.msra.mxu0 0.0
    %409 = vmatprep.subr.mxu0 0.0
    %410 = vmatpush1.msra.mxu0 0.0
    %411 = vmatprep.subr.mxu0 0.0
    %412 = vmatpush1.msra.mxu0 0.0
    %413 = vmatprep.subr.mxu0 0.0
    %414 = vmatpush1.msra.mxu0 0.0
    %415 = vmatprep.subr.mxu0 0.0
    %416 = vmatpush1.msra.mxu0 0.0
    %417 = vmatprep.subr.mxu0 0.0
    %418 = vmatpush1.msra.mxu0 0.0
    %419 = vmatprep.subr.mxu0 0.0
    %420 = vmatpush1.msra.mxu0 0.0
    %421 = vmatprep.subr.mxu0 0.0
    %422 = vmatpush1.msra.mxu0 0.0
    %423 = vmatprep.subr.mxu0 0.0
    %424 = vmatpush1.msra.mxu0 0.0
    %425 = vmatprep.subr.mxu0 0.0
    %426 = vmatpush1.msra.mxu0 0.0
    %427 = vmatprep.subr.mxu0 0.0
    %428 = vmatpush1.msra.mxu0 0.0
    %429 = vmatprep.subr.mxu0 0.0
    %430 = vmatpush1.msra.mxu0 0.0
    %431 = vmatprep.subr.mxu0 0.0
    %432 = vmatpush1.msra.mxu0 0.0
    %433 = vmatprep.subr.mxu0 0.0
    %434 = vmatpush1.msra.mxu0 0.0
    %435 = vmatprep.subr.mxu0 0.0
    %436 = vmatpush1.msra.mxu0 0.0
    %437 = vmatprep.mubr.f32.mxu0 0.0
    %438 = vmatmul.mubr.f32.gmra.mrb[0].mxu0 %v300
    %v439 = vpop.f32.mrb[0].mxu0
    %v440 = vadd.f32 %v296, %v439
    %v441 = vpop.f32.mrb[0].mxu0
    %442 = vdwg.mxu0
    %v443 = vmul.f32 %v281, %v281
    %v444 = vmul.f32 %v282, %v282
    %v445 = vmul.f32 %v283, %v283
    %v446 = vmul.f32 %v284, %v284
    %v447 = vmul.f32 %v285, %v285
    %v448 = vmul.f32 %v286, %v286
    %v449 = vmul.f32 %v287, %v287
    %v450 = vmul.f32 %v288, %v288
    %v451 = vmul.f32 %v289, %v289
    %v452 = vmul.f32 %v290, %v290
    %v453 = vmul.f32 %v291, %v291
    %v454 = vmul.f32 %v292, %v292
    %v455 = vsub.f32 1.0, %v443
    %v456 = vsub.f32 1.0, %v444
    %v457 = vsub.f32 1.0, %v445
    %v458 = vsub.f32 1.0, %v446
    %v459 = vsub.f32 1.0, %v447
    %v460 = vsub.f32 1.0, %v448
    %v461 = vsub.f32 1.0, %v449
    %v462 = vsub.f32 1.0, %v450
    %v463 = vsub.f32 1.0, %v451
    %v464 = vsub.f32 1.0, %v452
    %v465 = vsub.f32 1.0, %v453
    %v466 = vsub.f32 1.0, %v454
    %v468 = vsel %vm298, %v59, 0
    %v471 = vsel %vm298, %v60, 0
    %473 = vmatprep.subr.mxu0 %v456
    %474 = vmatpush1.msra.mxu0 %v455
    %475 = vmatprep.subr.mxu0 %v459
    %476 = vmatpush1.msra.mxu0 %v458
    %477 = vmatprep.subr.mxu0 %v462
    %478 = vmatpush1.msra.mxu0 %v461
    %479 = vmatprep.subr.mxu0 %v465
    %480 = vmatpush1.msra.mxu0 %v464
    %481 = vmatprep.subr.mxu0 0.0
    %482 = vmatpush1.msra.mxu0 0.0
    %483 = vmatprep.subr.mxu0 0.0
    %484 = vmatpush1.msra.mxu0 0.0
    %485 = vmatprep.subr.mxu0 0.0
    %486 = vmatpush1.msra.mxu0 0.0
    %487 = vmatprep.subr.mxu0 0.0
    %488 = vmatpush1.msra.mxu0 0.0
    %489 = vmatprep.subr.mxu0 0.0
    %490 = vmatpush1.msra.mxu0 0.0
    %491 = vmatprep.subr.mxu0 0.0
    %492 = vmatpush1.msra.mxu0 0.0
    %493 = vmatprep.subr.mxu0 0.0
    %494 = vmatpush1.msra.mxu0 0.0
    %495 = vmatprep.subr.mxu0 0.0
    %496 = vmatpush1.msra.mxu0 0.0
    %497 = vmatprep.subr.mxu0 0.0
    %498 = vmatpush1.msra.mxu0 0.0
    %499 = vmatprep.subr.mxu0 0.0
    %500 = vmatpush1.msra.mxu0 0.0
    %501 = vmatprep.subr.mxu0 0.0
    %502 = vmatpush1.msra.mxu0 0.0
    %503 = vmatprep.subr.mxu0 0.0
    %504 = vmatpush1.msra.mxu0 0.0
    %505 = vmatprep.subr.mxu0 0.0
    %506 = vmatpush1.msra.mxu0 0.0
    %507 = vmatprep.subr.mxu0 0.0
    %508 = vmatpush1.msra.mxu0 0.0
    %509 = vmatprep.subr.mxu0 0.0
    %510 = vmatpush1.msra.mxu0 0.0
    %511 = vmatprep.subr.mxu0 0.0
    %512 = vmatpush1.msra.mxu0 0.0
    %513 = vmatprep.subr.mxu0 0.0
    %514 = vmatpush1.msra.mxu0 0.0
    %515 = vmatprep.subr.mxu0 0.0
    %516 = vmatpush1.msra.mxu0 0.0
    %517 = vmatprep.subr.mxu0 0.0
    %518 = vmatpush1.msra.mxu0 0.0
    %519 = vmatprep.subr.mxu0 0.0
    %520 = vmatpush1.msra.mxu0 0.0
    %521 = vmatprep.subr.mxu0 0.0
    %522 = vmatpush1.msra.mxu0 0.0
    %523 = vmatprep.subr.mxu0 0.0
    %524 = vmatpush1.msra.mxu0 0.0
    %525 = vmatprep.subr.mxu0 0.0
    %526 = vmatpush1.msra.mxu0 0.0
    %527 = vmatprep.subr.mxu0 0.0
    %528 = vmatpush1.msra.mxu0 0.0
    %529 = vmatprep.subr.mxu0 0.0
    %530 = vmatpush1.msra.mxu0 0.0
    %531 = vmatprep.subr.mxu0 0.0
    %532 = vmatpush1.msra.mxu0 0.0
    %533 = vmatprep.subr.mxu0 0.0
    %534 = vmatpush1.msra.mxu0 0.0
    %535 = vmatprep.subr.mxu0 0.0
    %536 = vmatpush1.msra.mxu0 0.0
    %537 = vmatprep.mubr.f32.mxu0 0.0
    %538 = vmatmul.mubr.f32.gmra.mrb[0].mxu0 %v468
    %v539 = vpop.f32.mrb[0].mxu0
    %v540 = vadd.f32 0.0, %v539
    %v541 = vpop.f32.mrb[0].mxu0
    %v542 = vadd.f32 0.0, %v541
    %543 = vmatprep.mubr.f32.mxu0 0.0
    %544 = vmatmul.mubr.f32.gmra.mrb[0].mxu0 %v471
    %v545 = vpop.f32.mrb[0].mxu0
    %v546 = vadd.f32 0.0, %v545
    %v547 = vpop.f32.mrb[0].mxu0
    %v548 = vadd.f32 0.0, %v547
    %549 = vdwg.mxu0
    %550 = vmatprep.subr.mxu0 0.0
    %551 = vmatpush1.msra.mxu0 %v457
    %552 = vmatprep.subr.mxu0 0.0
    %553 = vmatpush1.msra.mxu0 %v460
    %554 = vmatprep.subr.mxu0 0.0
    %555 = vmatpush1.msra.mxu0 %v463
    %556 = vmatprep.subr.mxu0 0.0
    %557 = vmatpush1.msra.mxu0 %v466
    %558 = vmatprep.subr.mxu0 0.0
    %559 = vmatpush1.msra.mxu0 0.0
    %560 = vmatprep.subr.mxu0 0.0
    %561 = vmatpush1.msra.mxu0 0.0
    %562 = vmatprep.subr.mxu0 0.0
    %563 = vmatpush1.msra.mxu0 0.0
    %564 = vmatprep.subr.mxu0 0.0
    %565 = vmatpush1.msra.mxu0 0.0
    %566 = vmatprep.subr.mxu0 0.0
    %567 = vmatpush1.msra.mxu0 0.0
    %568 = vmatprep.subr.mxu0 0.0
    %569 = vmatpush1.msra.mxu0 0.0
    %570 = vmatprep.subr.mxu0 0.0
    %571 = vmatpush1.msra.mxu0 0.0
    %572 = vmatprep.subr.mxu0 0.0
    %573 = vmatpush1.msra.mxu0 0.0
    %574 = vmatprep.subr.mxu0 0.0
    %575 = vmatpush1.msra.mxu0 0.0
    %576 = vmatprep.subr.mxu0 0.0
    %577 = vmatpush1.msra.mxu0 0.0
    %578 = vmatprep.subr.mxu0 0.0
    %579 = vmatpush1.msra.mxu0 0.0
    %580 = vmatprep.subr.mxu0 0.0
    %581 = vmatpush1.msra.mxu0 0.0
    %582 = vmatprep.subr.mxu0 0.0
    %583 = vmatpush1.msra.mxu0 0.0
    %584 = vmatprep.subr.mxu0 0.0
    %585 = vmatpush1.msra.mxu0 0.0
    %586 = vmatprep.subr.mxu0 0.0
    %587 = vmatpush1.msra.mxu0 0.0
    %588 = vmatprep.subr.mxu0 0.0
    %589 = vmatpush1.msra.mxu0 0.0
    %590 = vmatprep.subr.mxu0 0.0
    %591 = vmatpush1.msra.mxu0 0.0
    %592 = vmatprep.subr.mxu0 0.0
    %593 = vmatpush1.msra.mxu0 0.0
    %594 = vmatprep.subr.mxu0 0.0
    %595 = vmatpush1.msra.mxu0 0.0
    %596 = vmatprep.subr.mxu0 0.0
    %597 = vmatpush1.msra.mxu0 0.0
    %598 = vmatprep.subr.mxu0 0.0
    %599 = vmatpush1.msra.mxu0 0.0
    %600 = vmatprep.subr.mxu0 0.0
    %601 = vmatpush1.msra.mxu0 0.0
    %602 = vmatprep.subr.mxu0 0.0
    %603 = vmatpush1.msra.mxu0 0.0
    %604 = vmatprep.subr.mxu0 0.0
    %605 = vmatpush1.msra.mxu0 0.0
    %606 = vmatprep.subr.mxu0 0.0
    %607 = vmatpush1.msra.mxu0 0.0
    %608 = vmatprep.subr.mxu0 0.0
    %609 = vmatpush1.msra.mxu0 0.0
    %610 = vmatprep.subr.mxu0 0.0
    %611 = vmatpush1.msra.mxu0 0.0
    %612 = vmatprep.subr.mxu0 0.0
    %613 = vmatpush1.msra.mxu0 0.0
    %614 = vmatprep.mubr.f32.mxu0 0.0
    %615 = vmatmul.mubr.f32.gmra.mrb[0].mxu0 %v468
    %v616 = vpop.f32.mrb[0].mxu0
    %v617 = vadd.f32 0.0, %v616
    %v618 = vpop.f32.mrb[0].mxu0
    %619 = vmatprep.mubr.f32.mxu0 0.0
    %620 = vmatmul.mubr.f32.gmra.mrb[0].mxu0 %v471
    %v621 = vpop.f32.mrb[0].mxu0
    %v622 = vadd.f32 0.0, %v621
    %v623 = vpop.f32.mrb[0].mxu0
    %624 = vdwg.mxu0
    %v625 = vlaneseq
    %v626 = vshrl.u32 %v625, 7
    %v627 = vsub.s32 0, %v626
    %v628 = vrot.slane %v540, %v627
    %v629 = vlaneseq
    %v630 = vshrl.u32 %v629, 7
    %v631 = vsub.s32 0, %v630
    %v632 = vrot.slane %v542, %v631
    %v633 = vlaneseq
    %v634 = vshrl.u32 %v633, 7
    %v635 = vsub.s32 0, %v634
    %v636 = vrot.slane %v617, %v635
    %v637 = vmul.f32 %v628, %v67
    %v638 = vmul.f32 %v632, %v67
    %v639 = vmul.f32 %v636, %v67
    %v640 = vlaneseq
    %v641 = vshrl.u32 %v640, 7
    %v642 = vsub.s32 1, %v641
    %v643 = vrot.slane %v540, %v642
    %v644 = vlaneseq
    %v645 = vshrl.u32 %v644, 7
    %v646 = vsub.s32 1, %v645
    %v647 = vrot.slane %v542, %v646
    %v648 = vlaneseq
    %v649 = vshrl.u32 %v648, 7
    %v650 = vsub.s32 1, %v649
    %v651 = vrot.slane %v617, %v650
    %v652 = vmul.f32 %v643, %v70
    %v653 = vmul.f32 %v647, %v70
    %v654 = vmul.f32 %v651, %v70
    %v655 = vadd.f32 %v637, %v652
    %v656 = vadd.f32 %v638, %v653
    %v657 = vadd.f32 %v639, %v654
    %v658 = vlaneseq
    %v659 = vshrl.u32 %v658, 7
    %v660 = vsub.s32 2, %v659
    %v661 = vrot.slane %v540, %v660
    %v662 = vlaneseq
    %v663 = vshrl.u32 %v662, 7
    %v664 = vsub.s32 2, %v663
    %v665 = vrot.slane %v542, %v664
    %v666 = vlaneseq
    %v667 = vshrl.u32 %v666, 7
    %v668 = vsub.s32 2, %v667
    %v669 = vrot.slane %v617, %v668
    %v670 = vmul.f32 %v661, %v73
    %v671 = vmul.f32 %v665, %v73
    %v672 = vmul.f32 %v669, %v73
    %v673 = vadd.f32 %v655, %v670
    %v674 = vadd.f32 %v656, %v671
    %v675 = vadd.f32 %v657, %v672
    %v678 = vcombine.low %v673, %v674
    %680 = vst [vmem:[%s8] sm:$0x77] %v678
    %681 = vst [vmem:[%s8 + $0x8] sm:$0x7] %v675
    %v682 = vlaneseq
    %v683 = vshrl.u32 %v682, 7
    %v684 = vsub.s32 3, %v683
    %v685 = vrot.slane %v540, %v684
    %v686 = vlaneseq
    %v687 = vshrl.u32 %v686, 7
    %v688 = vsub.s32 3, %v687
    %v689 = vrot.slane %v542, %v688
    %v690 = vlaneseq
    %v691 = vshrl.u32 %v690, 7
    %v692 = vsub.s32 3, %v691
    %v693 = vrot.slane %v617, %v692
    %v694 = vmul.f32 %v685, %v67
    %v695 = vmul.f32 %v689, %v67
    %v696 = vmul.f32 %v693, %v67
    %v697 = vlaneseq
    %v698 = vshrl.u32 %v697, 7
    %v699 = vsub.s32 4, %v698
    %v700 = vrot.slane %v540, %v699
    %v701 = vlaneseq
    %v702 = vshrl.u32 %v701, 7
    %v703 = vsub.s32 4, %v702
    %v704 = vrot.slane %v542, %v703
    %v705 = vlaneseq
    %v706 = vshrl.u32 %v705, 7
    %v707 = vsub.s32 4, %v706
    %v708 = vrot.slane %v617, %v707
    %v709 = vmul.f32 %v700, %v70
    %v710 = vmul.f32 %v704, %v70
    %v711 = vmul.f32 %v708, %v70
    %v712 = vadd.f32 %v694, %v709
    %v713 = vadd.f32 %v695, %v710
    %v714 = vadd.f32 %v696, %v711
    %v715 = vlaneseq
    %v716 = vshrl.u32 %v715, 7
    %v717 = vsub.s32 5, %v716
    %v718 = vrot.slane %v540, %v717
    %v719 = vlaneseq
    %v720 = vshrl.u32 %v719, 7
    %v721 = vsub.s32 5, %v720
    %v722 = vrot.slane %v542, %v721
    %v723 = vlaneseq
    %v724 = vshrl.u32 %v723, 7
    %v725 = vsub.s32 5, %v724
    %v726 = vrot.slane %v617, %v725
    %v727 = vmul.f32 %v718, %v73
    %v728 = vmul.f32 %v722, %v73
    %v729 = vmul.f32 %v726, %v73
    %v730 = vadd.f32 %v712, %v727
    %v731 = vadd.f32 %v713, %v728
    %v732 = vadd.f32 %v714, %v729
    %v735 = vcombine.low %v730, %v731
    %s737 = scalar_lea.vmem %s8, 12
    %738 = vst [vmem:[%s737] sm:$0x77] %v735
    %739 = vst [vmem:[%s737 + $0x8] sm:$0x7] %v732
    %v740 = vlaneseq
    %v741 = vshrl.u32 %v740, 7
    %v742 = vsub.s32 6, %v741
    %v743 = vrot.slane %v540, %v742
    %v744 = vlaneseq
    %v745 = vshrl.u32 %v744, 7
    %v746 = vsub.s32 6, %v745
    %v747 = vrot.slane %v542, %v746
    %v748 = vlaneseq
    %v749 = vshrl.u32 %v748, 7
    %v750 = vsub.s32 6, %v749
    %v751 = vrot.slane %v617, %v750
    %v752 = vmul.f32 %v743, %v67
    %v753 = vmul.f32 %v747, %v67
    %v754 = vmul.f32 %v751, %v67
    %v755 = vlaneseq
    %v756 = vshrl.u32 %v755, 7
    %v757 = vsub.s32 7, %v756
    %v758 = vrot.slane %v540, %v757
    %v759 = vlaneseq
    %v760 = vshrl.u32 %v759, 7
    %v761 = vsub.s32 7, %v760
    %v762 = vrot.slane %v542, %v761
    %v763 = vlaneseq
    %v764 = vshrl.u32 %v763, 7
    %v765 = vsub.s32 7, %v764
    %v766 = vrot.slane %v617, %v765
    %v767 = vmul.f32 %v758, %v70
    %v768 = vmul.f32 %v762, %v70
    %v769 = vmul.f32 %v766, %v70
    %v770 = vadd.f32 %v752, %v767
    %v771 = vadd.f32 %v753, %v768
    %v772 = vadd.f32 %v754, %v769
    %v773 = vlaneseq
    %v774 = vshrl.u32 %v773, 7
    %v775 = vsub.s32 0, %v774
    %v776 = vrot.slane %v546, %v775
    %v777 = vlaneseq
    %v778 = vshrl.u32 %v777, 7
    %v779 = vsub.s32 0, %v778
    %v780 = vrot.slane %v548, %v779
    %v781 = vlaneseq
    %v782 = vshrl.u32 %v781, 7
    %v783 = vsub.s32 0, %v782
    %v784 = vrot.slane %v622, %v783
    %v785 = vmul.f32 %v776, %v73
    %v786 = vmul.f32 %v780, %v73
    %v787 = vmul.f32 %v784, %v73
    %v788 = vadd.f32 %v770, %v785
    %v789 = vadd.f32 %v771, %v786
    %v790 = vadd.f32 %v772, %v787
    %v793 = vcombine.low %v788, %v789
    %s795 = scalar_lea.vmem %s8, 24
    %796 = vst [vmem:[%s795] sm:$0x77] %v793
    %797 = vst [vmem:[%s795 + $0x8] sm:$0x7] %v790
    %v798 = vmul.f32 %v369, 0.25
    %v799 = vmul.f32 %v371, 0.25
    %v800 = vmul.f32 %v440, 0.25
    %v803 = vcombine.low %v798, %v799
    %v805 = vadd.f32 %v27, %v803
    %v806 = vadd.f32 %v28, %v800
    %s807 = scalar_lea.vmem [#allocation2], 12
    %808 = vst [vmem:[%s807] sm:$0x77] %v805
    %809 = vst [vmem:[%s807 + $0x8] sm:$0x7] %v806
    %v812 = vcombine.low %v369, %v371
    %814 = vst [vmem:[%s7] sm:$0x77] %v812
    %815 = vst [vmem:[%s7 + $0x8] sm:$0x7] %v440
    %v816 = vmul.f32 %v673, 0.25
    %v817 = vmul.f32 %v674, 0.25
    %v818 = vmul.f32 %v675, 0.25
    %v819 = vadd.f32 %v67, %v816
    %v820 = vadd.f32 %v67, %v817
    %v821 = vadd.f32 %v67, %v818
    %v822 = vmul.f32 %v730, 0.25
    %v823 = vmul.f32 %v731, 0.25
    %v824 = vmul.f32 %v732, 0.25
    %v825 = vadd.f32 %v70, %v822
    %v826 = vadd.f32 %v70, %v823
    %v827 = vadd.f32 %v70, %v824
    %v828 = vmul.f32 %v788, 0.25
    %v829 = vmul.f32 %v789, 0.25
    %v830 = vmul.f32 %v790, 0.25
    %v831 = vadd.f32 %v73, %v828
    %v832 = vadd.f32 %v73, %v829
    %v833 = vadd.f32 %v73, %v830
    %v836 = vlaneseq
    %v837 = vshrl.u32 %v836, 7
    %v838 = vsub.s32 0, %v837
    %v839 = vrot.slane %v805, %v838
    %v840 = vlaneseq
    %v841 = vshrl.u32 %v840, 7
    %v842 = vsub.s32 4, %v841
    %v843 = vrot.slane %v805, %v842
    %v844 = vlaneseq
    %v845 = vshrl.u32 %v844, 7
    %v846 = vsub.s32 0, %v845
    %v847 = vrot.slane %v806, %v846
    %v851 = vlaneseq
    %v852 = vshrl.u32 %v851, 7
    %v853 = vsub.s32 0, %v852
    %v854 = vrot.slane %v839, %v853
    %v855 = vlaneseq
    %v856 = vshrl.u32 %v855, 7
    %v857 = vsub.s32 0, %v856
    %v858 = vrot.slane %v843, %v857
    %v859 = vlaneseq
    %v860 = vshrl.u32 %v859, 7
    %v861 = vsub.s32 0, %v860
    %v862 = vrot.slane %v847, %v861
    %v863 = vmul.f32 %v77, %v854
    %v864 = vmul.f32 %v77, %v858
    %v865 = vmul.f32 %v77, %v862
    %v866 = vmul.f32 %v82, %v854
    %v867 = vmul.f32 %v82, %v858
    %v868 = vmul.f32 %v82, %v862
    %v869 = vmul.f32 %v87, %v854
    %v870 = vmul.f32 %v87, %v858
    %v871 = vmul.f32 %v87, %v862
    %v872 = vmul.f32 %v92, %v854
    %v873 = vmul.f32 %v92, %v858
    %v874 = vmul.f32 %v92, %v862
    %v875 = vadd.f32 %v40, %v863
    %v876 = vadd.f32 %v40, %v864
    %v877 = vadd.f32 %v40, %v865
    %v878 = vadd.f32 %v45, %v866
    %v879 = vadd.f32 %v45, %v867
    %v880 = vadd.f32 %v45, %v868
    %v881 = vadd.f32 %v50, %v869
    %v882 = vadd.f32 %v50, %v870
    %v883 = vadd.f32 %v50, %v871
    %v884 = vadd.f32 %v55, %v872
    %v885 = vadd.f32 %v55, %v873
    %v886 = vadd.f32 %v55, %v874
    %v887 = vlaneseq
    %v888 = vshrl.u32 %v887, 7
    %v889 = vsub.s32 1, %v888
    %v890 = vrot.slane %v805, %v889
    %v891 = vlaneseq
    %v892 = vshrl.u32 %v891, 7
    %v893 = vsub.s32 5, %v892
    %v894 = vrot.slane %v805, %v893
    %v895 = vlaneseq
    %v896 = vshrl.u32 %v895, 7
    %v897 = vsub.s32 1, %v896
    %v898 = vrot.slane %v806, %v897
    %v902 = vlaneseq
    %v903 = vshrl.u32 %v902, 7
    %v904 = vsub.s32 1, %v903
    %v905 = vrot.slane %v890, %v904
    %v906 = vlaneseq
    %v907 = vshrl.u32 %v906, 7
    %v908 = vsub.s32 1, %v907
    %v909 = vrot.slane %v894, %v908
    %v910 = vlaneseq
    %v911 = vshrl.u32 %v910, 7
    %v912 = vsub.s32 1, %v911
    %v913 = vrot.slane %v898, %v912
    %v914 = vmul.f32 %v149, %v905
    %v915 = vmul.f32 %v149, %v909
    %v916 = vmul.f32 %v149, %v913
    %v917 = vmul.f32 %v153, %v905
    %v918 = vmul.f32 %v153, %v909
    %v919 = vmul.f32 %v153, %v913
    %v920 = vmul.f32 %v157, %v905
    %v921 = vmul.f32 %v157, %v909
    %v922 = vmul.f32 %v157, %v913
    %v923 = vmul.f32 %v161, %v905
    %v924 = vmul.f32 %v161, %v909
    %v925 = vmul.f32 %v161, %v913
    %v926 = vadd.f32 %v875, %v914
    %v927 = vadd.f32 %v876, %v915
    %v928 = vadd.f32 %v877, %v916
    %v929 = vadd.f32 %v878, %v917
    %v930 = vadd.f32 %v879, %v918
    %v931 = vadd.f32 %v880, %v919
    %v932 = vadd.f32 %v881, %v920
    %v933 = vadd.f32 %v882, %v921
    %v934 = vadd.f32 %v883, %v922
    %v935 = vadd.f32 %v884, %v923
    %v936 = vadd.f32 %v885, %v924
    %v937 = vadd.f32 %v886, %v925
    %v938 = vlaneseq
    %v939 = vshrl.u32 %v938, 7
    %v940 = vsub.s32 2, %v939
    %v941 = vrot.slane %v805, %v940
    %v942 = vlaneseq
    %v943 = vshrl.u32 %v942, 7
    %v944 = vsub.s32 6, %v943
    %v945 = vrot.slane %v805, %v944
    %v946 = vlaneseq
    %v947 = vshrl.u32 %v946, 7
    %v948 = vsub.s32 2, %v947
    %v949 = vrot.slane %v806, %v948
    %v953 = vlaneseq
    %v954 = vshrl.u32 %v953, 7
    %v955 = vsub.s32 2, %v954
    %v956 = vrot.slane %v941, %v955
    %v957 = vlaneseq
    %v958 = vshrl.u32 %v957, 7
    %v959 = vsub.s32 2, %v958
    %v960 = vrot.slane %v945, %v959
    %v961 = vlaneseq
    %v962 = vshrl.u32 %v961, 7
    %v963 = vsub.s32 2, %v962
    %v964 = vrot.slane %v949, %v963
    %v965 = vmul.f32 %v216, %v956
    %v966 = vmul.f32 %v216, %v960
    %v967 = vmul.f32 %v216, %v964
    %v968 = vmul.f32 %v220, %v956
    %v969 = vmul.f32 %v220, %v960
    %v970 = vmul.f32 %v220, %v964
    %v971 = vmul.f32 %v224, %v956
    %v972 = vmul.f32 %v224, %v960
    %v973 = vmul.f32 %v224, %v964
    %v974 = vmul.f32 %v228, %v956
    %v975 = vmul.f32 %v228, %v960
    %v976 = vmul.f32 %v228, %v964
    %v977 = vadd.f32 %v926, %v965
    %v978 = vadd.f32 %v927, %v966
    %v979 = vadd.f32 %v928, %v967
    %v980 = vadd.f32 %v929, %v968
    %v981 = vadd.f32 %v930, %v969
    %v982 = vadd.f32 %v931, %v970
    %v983 = vadd.f32 %v932, %v971
    %v984 = vadd.f32 %v933, %v972
    %v985 = vadd.f32 %v934, %v973
    %v986 = vadd.f32 %v935, %v974
    %v987 = vadd.f32 %v936, %v975
    %v988 = vadd.f32 %v937, %v976
    %v989 = vtanh.pop %v977
    %v990 = vtanh.pop %v978
    %v991 = vtanh.pop %v979
    %v992 = vtanh.pop %v980
    %v993 = vtanh.pop %v981
    %v994 = vtanh.pop %v982
    %v995 = vtanh.pop %v983
    %v996 = vtanh.pop %v984
    %v997 = vtanh.pop %v985
    %v998 = vtanh.pop %v986
    %v999 = vtanh.pop %v987
    %v1000 = vtanh.pop %v988
    %1001 = vmatprep.subr.mxu0 %v990
    %1002 = vmatpush1.msra.mxu0 %v989
    %1003 = vmatprep.subr.mxu0 %v993
    %1004 = vmatpush1.msra.mxu0 %v992
    %1005 = vmatprep.subr.mxu0 %v996
    %1006 = vmatpush1.msra.mxu0 %v995
    %1007 = vmatprep.subr.mxu0 %v999
    %1008 = vmatpush1.msra.mxu0 %v998
    %1009 = vmatprep.subr.mxu0 0.0
    %1010 = vmatpush1.msra.mxu0 0.0
    %1011 = vmatprep.subr.mxu0 0.0
    %1012 = vmatpush1.msra.mxu0 0.0
    %1013 = vmatprep.subr.mxu0 0.0
    %1014 = vmatpush1.msra.mxu0 0.0
    %1015 = vmatprep.subr.mxu0 0.0
    %1016 = vmatpush1.msra.mxu0 0.0
    %1017 = vmatprep.subr.mxu0 0.0
    %1018 = vmatpush1.msra.mxu0 0.0
    %1019 = vmatprep.subr.mxu0 0.0
    %1020 = vmatpush1.msra.mxu0 0.0
    %1021 = vmatprep.subr.mxu0 0.0
    %1022 = vmatpush1.msra.mxu0 0.0
    %1023 = vmatprep.subr.mxu0 0.0
    %1024 = vmatpush1.msra.mxu0 0.0
    %1025 = vmatprep.subr.mxu0 0.0
    %1026 = vmatpush1.msra.mxu0 0.0
    %1027 = vmatprep.subr.mxu0 0.0
    %1028 = vmatpush1.msra.mxu0 0.0
    %1029 = vmatprep.subr.mxu0 0.0
    %1030 = vmatpush1.msra.mxu0 0.0
    %1031 = vmatprep.subr.mxu0 0.0
    %1032 = vmatpush1.msra.mxu0 0.0
    %1033 = vmatprep.subr.mxu0 0.0
    %1034 = vmatpush1.msra.mxu0 0.0
    %1035 = vmatprep.subr.mxu0 0.0
    %1036 = vmatpush1.msra.mxu0 0.0
    %1037 = vmatprep.subr.mxu0 0.0
    %1038 = vmatpush1.msra.mxu0 0.0
    %1039 = vmatprep.subr.mxu0 0.0
    %1040 = vmatpush1.msra.mxu0 0.0
    %1041 = vmatprep.subr.mxu0 0.0
    %1042 = vmatpush1.msra.mxu0 0.0
    %1043 = vmatprep.subr.mxu0 0.0
    %1044 = vmatpush1.msra.mxu0 0.0
    %1045 = vmatprep.subr.mxu0 0.0
    %1046 = vmatpush1.msra.mxu0 0.0
    %1047 = vmatprep.subr.mxu0 0.0
    %1048 = vmatpush1.msra.mxu0 0.0
    %1049 = vmatprep.subr.mxu0 0.0
    %1050 = vmatpush1.msra.mxu0 0.0
    %1051 = vmatprep.subr.mxu0 0.0
    %1052 = vmatpush1.msra.mxu0 0.0
    %1053 = vmatprep.subr.mxu0 0.0
    %1054 = vmatpush1.msra.mxu0 0.0
    %1055 = vmatprep.subr.mxu0 0.0
    %1056 = vmatpush1.msra.mxu0 0.0
    %1057 = vmatprep.subr.mxu0 0.0
    %1058 = vmatpush1.msra.mxu0 0.0
    %1059 = vmatprep.subr.mxu0 0.0
    %1060 = vmatpush1.msra.mxu0 0.0
    %1061 = vmatprep.subr.mxu0 0.0
    %1062 = vmatpush1.msra.mxu0 0.0
    %1063 = vmatprep.subr.mxu0 0.0
    %1064 = vmatpush1.msra.mxu0 0.0
    %1065 = vmatprep.mubr.f32.mxu0 0.0
    %1066 = vmatmul.mubr.f32.gmra.mrb[0].mxu0 %v300
    %v1067 = vpop.f32.mrb[0].mxu0
    %v1068 = vadd.f32 %v296, %v1067
    %v1069 = vpop.f32.mrb[0].mxu0
    %v1070 = vadd.f32 %v296, %v1069
    %1071 = vdwg.mxu0
    %1072 = vmatprep.subr.mxu0 0.0
    %1073 = vmatpush1.msra.mxu0 %v991
    %1074 = vmatprep.subr.mxu0 0.0
    %1075 = vmatpush1.msra.mxu0 %v994
    %1076 = vmatprep.subr.mxu0 0.0
    %1077 = vmatpush1.msra.mxu0 %v997
    %1078 = vmatprep.subr.mxu0 0.0
    %1079 = vmatpush1.msra.mxu0 %v1000
    %1080 = vmatprep.subr.mxu0 0.0
    %1081 = vmatpush1.msra.mxu0 0.0
    %1082 = vmatprep.subr.mxu0 0.0
    %1083 = vmatpush1.msra.mxu0 0.0
    %1084 = vmatprep.subr.mxu0 0.0
    %1085 = vmatpush1.msra.mxu0 0.0
    %1086 = vmatprep.subr.mxu0 0.0
    %1087 = vmatpush1.msra.mxu0 0.0
    %1088 = vmatprep.subr.mxu0 0.0
    %1089 = vmatpush1.msra.mxu0 0.0
    %1090 = vmatprep.subr.mxu0 0.0
    %1091 = vmatpush1.msra.mxu0 0.0
    %1092 = vmatprep.subr.mxu0 0.0
    %1093 = vmatpush1.msra.mxu0 0.0
    %1094 = vmatprep.subr.mxu0 0.0
    %1095 = vmatpush1.msra.mxu0 0.0
    %1096 = vmatprep.subr.mxu0 0.0
    %1097 = vmatpush1.msra.mxu0 0.0
    %1098 = vmatprep.subr.mxu0 0.0
    %1099 = vmatpush1.msra.mxu0 0.0
    %1100 = vmatprep.subr.mxu0 0.0
    %1101 = vmatpush1.msra.mxu0 0.0
    %1102 = vmatprep.subr.mxu0 0.0
    %1103 = vmatpush1.msra.mxu0 0.0
    %1104 = vmatprep.subr.mxu0 0.0
    %1105 = vmatpush1.msra.mxu0 0.0
    %1106 = vmatprep.subr.mxu0 0.0
    %1107 = vmatpush1.msra.mxu0 0.0
    %1108 = vmatprep.subr.mxu0 0.0
    %1109 = vmatpush1.msra.mxu0 0.0
    %1110 = vmatprep.subr.mxu0 0.0
    %1111 = vmatpush1.msra.mxu0 0.0
    %1112 = vmatprep.subr.mxu0 0.0
    %1113 = vmatpush1.msra.mxu0 0.0
    %1114 = vmatprep.subr.mxu0 0.0
    %1115 = vmatpush1.msra.mxu0 0.0
    %1116 = vmatprep.subr.mxu0 0.0
    %1117 = vmatpush1.msra.mxu0 0.0
    %1118 = vmatprep.subr.mxu0 0.0
    %1119 = vmatpush1.msra.mxu0 0.0
    %1120 = vmatprep.subr.mxu0 0.0
    %1121 = vmatpush1.msra.mxu0 0.0
    %1122 = vmatprep.subr.mxu0 0.0
    %1123 = vmatpush1.msra.mxu0 0.0
    %1124 = vmatprep.subr.mxu0 0.0
    %1125 = vmatpush1.msra.mxu0 0.0
    %1126 = vmatprep.subr.mxu0 0.0
    %1127 = vmatpush1.msra.mxu0 0.0
    %1128 = vmatprep.subr.mxu0 0.0
    %1129 = vmatpush1.msra.mxu0 0.0
    %1130 = vmatprep.subr.mxu0 0.0
    %1131 = vmatpush1.msra.mxu0 0.0
    %1132 = vmatprep.subr.mxu0 0.0
    %1133 = vmatpush1.msra.mxu0 0.0
    %1134 = vmatprep.subr.mxu0 0.0
    %1135 = vmatpush1.msra.mxu0 0.0
    %1136 = vmatprep.mubr.f32.mxu0 0.0
    %1137 = vmatmul.mubr.f32.gmra.mrb[0].mxu0 %v300
    %v1138 = vpop.f32.mrb[0].mxu0
    %v1139 = vadd.f32 %v296, %v1138
    %v1140 = vpop.f32.mrb[0].mxu0
    %1141 = vdwg.mxu0
    %v1142 = vmul.f32 %v989, %v989
    %v1143 = vmul.f32 %v990, %v990
    %v1144 = vmul.f32 %v991, %v991
    %v1145 = vmul.f32 %v992, %v992
    %v1146 = vmul.f32 %v993, %v993
    %v1147 = vmul.f32 %v994, %v994
    %v1148 = vmul.f32 %v995, %v995
    %v1149 = vmul.f32 %v996, %v996
    %v1150 = vmul.f32 %v997, %v997
    %v1151 = vmul.f32 %v998, %v998
    %v1152 = vmul.f32 %v999, %v999
    %v1153 = vmul.f32 %v1000, %v1000
    %v1154 = vsub.f32 1.0, %v1142
    %v1155 = vsub.f32 1.0, %v1143
    %v1156 = vsub.f32 1.0, %v1144
    %v1157 = vsub.f32 1.0, %v1145
    %v1158 = vsub.f32 1.0, %v1146
    %v1159 = vsub.f32 1.0, %v1147
    %v1160 = vsub.f32 1.0, %v1148
    %v1161 = vsub.f32 1.0, %v1149
    %v1162 = vsub.f32 1.0, %v1150
    %v1163 = vsub.f32 1.0, %v1151
    %v1164 = vsub.f32 1.0, %v1152
    %v1165 = vsub.f32 1.0, %v1153
    %1166 = vmatprep.subr.mxu0 %v1155
    %1167 = vmatpush1.msra.mxu0 %v1154
    %1168 = vmatprep.subr.mxu0 %v1158
    %1169 = vmatpush1.msra.mxu0 %v1157
    %1170 = vmatprep.subr.mxu0 %v1161
    %1171 = vmatpush1.msra.mxu0 %v1160
    %1172 = vmatprep.subr.mxu0 %v1164
    %1173 = vmatpush1.msra.mxu0 %v1163
    %1174 = vmatprep.subr.mxu0 0.0
    %1175 = vmatpush1.msra.mxu0 0.0
    %1176 = vmatprep.subr.mxu0 0.0
    %1177 = vmatpush1.msra.mxu0 0.0
    %1178 = vmatprep.subr.mxu0 0.0
    %1179 = vmatpush1.msra.mxu0 0.0
    %1180 = vmatprep.subr.mxu0 0.0
    %1181 = vmatpush1.msra.mxu0 0.0
    %1182 = vmatprep.subr.mxu0 0.0
    %1183 = vmatpush1.msra.mxu0 0.0
    %1184 = vmatprep.subr.mxu0 0.0
    %1185 = vmatpush1.msra.mxu0 0.0
    %1186 = vmatprep.subr.mxu0 0.0
    %1187 = vmatpush1.msra.mxu0 0.0
    %1188 = vmatprep.subr.mxu0 0.0
    %1189 = vmatpush1.msra.mxu0 0.0
    %1190 = vmatprep.subr.mxu0 0.0
    %1191 = vmatpush1.msra.mxu0 0.0
    %1192 = vmatprep.subr.mxu0 0.0
    %1193 = vmatpush1.msra.mxu0 0.0
    %1194 = vmatprep.subr.mxu0 0.0
    %1195 = vmatpush1.msra.mxu0 0.0
    %1196 = vmatprep.subr.mxu0 0.0
    %1197 = vmatpush1.msra.mxu0 0.0
    %1198 = vmatprep.subr.mxu0 0.0
    %1199 = vmatpush1.msra.mxu0 0.0
    %1200 = vmatprep.subr.mxu0 0.0
    %1201 = vmatpush1.msra.mxu0 0.0
    %1202 = vmatprep.subr.mxu0 0.0
    %1203 = vmatpush1.msra.mxu0 0.0
    %1204 = vmatprep.subr.mxu0 0.0
    %1205 = vmatpush1.msra.mxu0 0.0
    %1206 = vmatprep.subr.mxu0 0.0
    %1207 = vmatpush1.msra.mxu0 0.0
    %1208 = vmatprep.subr.mxu0 0.0
    %1209 = vmatpush1.msra.mxu0 0.0
    %1210 = vmatprep.subr.mxu0 0.0
    %1211 = vmatpush1.msra.mxu0 0.0
    %1212 = vmatprep.subr.mxu0 0.0
    %1213 = vmatpush1.msra.mxu0 0.0
    %1214 = vmatprep.subr.mxu0 0.0
    %1215 = vmatpush1.msra.mxu0 0.0
    %1216 = vmatprep.subr.mxu0 0.0
    %1217 = vmatpush1.msra.mxu0 0.0
    %1218 = vmatprep.subr.mxu0 0.0
    %1219 = vmatpush1.msra.mxu0 0.0
    %1220 = vmatprep.subr.mxu0 0.0
    %1221 = vmatpush1.msra.mxu0 0.0
    %1222 = vmatprep.subr.mxu0 0.0
    %1223 = vmatpush1.msra.mxu0 0.0
    %1224 = vmatprep.subr.mxu0 0.0
    %1225 = vmatpush1.msra.mxu0 0.0
    %1226 = vmatprep.subr.mxu0 0.0
    %1227 = vmatpush1.msra.mxu0 0.0
    %1228 = vmatprep.subr.mxu0 0.0
    %1229 = vmatpush1.msra.mxu0 0.0
    %1230 = vmatprep.mubr.f32.mxu0 0.0
    %1231 = vmatmul.mubr.f32.gmra.mrb[0].mxu0 %v468
    %v1232 = vpop.f32.mrb[0].mxu0
    %v1233 = vadd.f32 0.0, %v1232
    %v1234 = vpop.f32.mrb[0].mxu0
    %v1235 = vadd.f32 0.0, %v1234
    %1236 = vmatprep.mubr.f32.mxu0 0.0
    %1237 = vmatmul.mubr.f32.gmra.mrb[0].mxu0 %v471
    %v1238 = vpop.f32.mrb[0].mxu0
    %v1239 = vadd.f32 0.0, %v1238
    %v1240 = vpop.f32.mrb[0].mxu0
    %v1241 = vadd.f32 0.0, %v1240
    %1242 = vdwg.mxu0
    %1243 = vmatprep.subr.mxu0 0.0
    %1244 = vmatpush1.msra.mxu0 %v1156
    %1245 = vmatprep.subr.mxu0 0.0
    %1246 = vmatpush1.msra.mxu0 %v1159
    %1247 = vmatprep.subr.mxu0 0.0
    %1248 = vmatpush1.msra.mxu0 %v1162
    %1249 = vmatprep.subr.mxu0 0.0
    %1250 = vmatpush1.msra.mxu0 %v1165
    %1251 = vmatprep.subr.mxu0 0.0
    %1252 = vmatpush1.msra.mxu0 0.0
    %1253 = vmatprep.subr.mxu0 0.0
    %1254 = vmatpush1.msra.mxu0 0.0
    %1255 = vmatprep.subr.mxu0 0.0
    %1256 = vmatpush1.msra.mxu0 0.0
    %1257 = vmatprep.subr.mxu0 0.0
    %1258 = vmatpush1.msra.mxu0 0.0
    %1259 = vmatprep.subr.mxu0 0.0
    %1260 = vmatpush1.msra.mxu0 0.0
    %1261 = vmatprep.subr.mxu0 0.0
    %1262 = vmatpush1.msra.mxu0 0.0
    %1263 = vmatprep.subr.mxu0 0.0
    %1264 = vmatpush1.msra.mxu0 0.0
    %1265 = vmatprep.subr.mxu0 0.0
    %1266 = vmatpush1.msra.mxu0 0.0
    %1267 = vmatprep.subr.mxu0 0.0
    %1268 = vmatpush1.msra.mxu0 0.0
    %1269 = vmatprep.subr.mxu0 0.0
    %1270 = vmatpush1.msra.mxu0 0.0
    %1271 = vmatprep.subr.mxu0 0.0
    %1272 = vmatpush1.msra.mxu0 0.0
    %1273 = vmatprep.subr.mxu0 0.0
    %1274 = vmatpush1.msra.mxu0 0.0
    %1275 = vmatprep.subr.mxu0 0.0
    %1276 = vmatpush1.msra.mxu0 0.0
    %1277 = vmatprep.subr.mxu0 0.0
    %1278 = vmatpush1.msra.mxu0 0.0
    %1279 = vmatprep.subr.mxu0 0.0
    %1280 = vmatpush1.msra.mxu0 0.0
    %1281 = vmatprep.subr.mxu0 0.0
    %1282 = vmatpush1.msra.mxu0 0.0
    %1283 = vmatprep.subr.mxu0 0.0
    %1284 = vmatpush1.msra.mxu0 0.0
    %1285 = vmatprep.subr.mxu0 0.0
    %1286 = vmatpush1.msra.mxu0 0.0
    %1287 = vmatprep.subr.mxu0 0.0
    %1288 = vmatpush1.msra.mxu0 0.0
    %1289 = vmatprep.subr.mxu0 0.0
    %1290 = vmatpush1.msra.mxu0 0.0
    %1291 = vmatprep.subr.mxu0 0.0
    %1292 = vmatpush1.msra.mxu0 0.0
    %1293 = vmatprep.subr.mxu0 0.0
    %1294 = vmatpush1.msra.mxu0 0.0
    %1295 = vmatprep.subr.mxu0 0.0
    %1296 = vmatpush1.msra.mxu0 0.0
    %1297 = vmatprep.subr.mxu0 0.0
    %1298 = vmatpush1.msra.mxu0 0.0
    %1299 = vmatprep.subr.mxu0 0.0
    %1300 = vmatpush1.msra.mxu0 0.0
    %1301 = vmatprep.subr.mxu0 0.0
    %1302 = vmatpush1.msra.mxu0 0.0
    %1303 = vmatprep.subr.mxu0 0.0
    %1304 = vmatpush1.msra.mxu0 0.0
    %1305 = vmatprep.subr.mxu0 0.0
    %1306 = vmatpush1.msra.mxu0 0.0
    %1307 = vmatprep.mubr.f32.mxu0 0.0
    %1308 = vmatmul.mubr.f32.gmra.mrb[0].mxu0 %v468
    %v1309 = vpop.f32.mrb[0].mxu0
    %v1310 = vadd.f32 0.0, %v1309
    %v1311 = vpop.f32.mrb[0].mxu0
    %1312 = vmatprep.mubr.f32.mxu0 0.0
    %1313 = vmatmul.mubr.f32.gmra.mrb[0].mxu0 %v471
    %v1314 = vpop.f32.mrb[0].mxu0
    %v1315 = vadd.f32 0.0, %v1314
    %v1316 = vpop.f32.mrb[0].mxu0
    %1317 = vdwg.mxu0
    %v1318 = vlaneseq
    %v1319 = vshrl.u32 %v1318, 7
    %v1320 = vsub.s32 0, %v1319
    %v1321 = vrot.slane %v1233, %v1320
    %v1322 = vlaneseq
    %v1323 = vshrl.u32 %v1322, 7
    %v1324 = vsub.s32 0, %v1323
    %v1325 = vrot.slane %v1235, %v1324
    %v1326 = vlaneseq
    %v1327 = vshrl.u32 %v1326, 7
    %v1328 = vsub.s32 0, %v1327
    %v1329 = vrot.slane %v1310, %v1328
    %v1330 = vmul.f32 %v1321, %v819
    %v1331 = vmul.f32 %v1325, %v820
    %v1332 = vmul.f32 %v1329, %v821
    %v1333 = vlaneseq
    %v1334 = vshrl.u32 %v1333, 7
    %v1335 = vsub.s32 1, %v1334
    %v1336 = vrot.slane %v1233, %v1335
    %v1337 = vlaneseq
    %v1338 = vshrl.u32 %v1337, 7
    %v1339 = vsub.s32 1, %v1338
    %v1340 = vrot.slane %v1235, %v1339
    %v1341 = vlaneseq
    %v1342 = vshrl.u32 %v1341, 7
    %v1343 = vsub.s32 1, %v1342
    %v1344 = vrot.slane %v1310, %v1343
    %v1345 = vmul.f32 %v1336, %v825
    %v1346 = vmul.f32 %v1340, %v826
    %v1347 = vmul.f32 %v1344, %v827
    %v1348 = vadd.f32 %v1330, %v1345
    %v1349 = vadd.f32 %v1331, %v1346
    %v1350 = vadd.f32 %v1332, %v1347
    %v1351 = vlaneseq
    %v1352 = vshrl.u32 %v1351, 7
    %v1353 = vsub.s32 2, %v1352
    %v1354 = vrot.slane %v1233, %v1353
    %v1355 = vlaneseq
    %v1356 = vshrl.u32 %v1355, 7
    %v1357 = vsub.s32 2, %v1356
    %v1358 = vrot.slane %v1235, %v1357
    %v1359 = vlaneseq
    %v1360 = vshrl.u32 %v1359, 7
    %v1361 = vsub.s32 2, %v1360
    %v1362 = vrot.slane %v1310, %v1361
    %v1363 = vmul.f32 %v1354, %v831
    %v1364 = vmul.f32 %v1358, %v832
    %v1365 = vmul.f32 %v1362, %v833
    %v1366 = vadd.f32 %v1348, %v1363
    %v1367 = vadd.f32 %v1349, %v1364
    %v1368 = vadd.f32 %v1350, %v1365
    %v1371 = vcombine.low %v1366, %v1367
    %s1373 = scalar_lea.vmem %s8, 36
    %1374 = vst [vmem:[%s1373] sm:$0x77] %v1371
    %1375 = vst [vmem:[%s1373 + $0x8] sm:$0x7] %v1368
    %v1376 = vlaneseq
    %v1377 = vshrl.u32 %v1376, 7
    %v1378 = vsub.s32 3, %v1377
    %v1379 = vrot.slane %v1233, %v1378
    %v1380 = vlaneseq
    %v1381 = vshrl.u32 %v1380, 7
    %v1382 = vsub.s32 3, %v1381
    %v1383 = vrot.slane %v1235, %v1382
    %v1384 = vlaneseq
    %v1385 = vshrl.u32 %v1384, 7
    %v1386 = vsub.s32 3, %v1385
    %v1387 = vrot.slane %v1310, %v1386
    %v1388 = vmul.f32 %v1379, %v819
    %v1389 = vmul.f32 %v1383, %v820
    %v1390 = vmul.f32 %v1387, %v821
    %v1391 = vlaneseq
    %v1392 = vshrl.u32 %v1391, 7
    %v1393 = vsub.s32 4, %v1392
    %v1394 = vrot.slane %v1233, %v1393
    %v1395 = vlaneseq
    %v1396 = vshrl.u32 %v1395, 7
    %v1397 = vsub.s32 4, %v1396
    %v1398 = vrot.slane %v1235, %v1397
    %v1399 = vlaneseq
    %v1400 = vshrl.u32 %v1399, 7
    %v1401 = vsub.s32 4, %v1400
    %v1402 = vrot.slane %v1310, %v1401
    %v1403 = vmul.f32 %v1394, %v825
    %v1404 = vmul.f32 %v1398, %v826
    %v1405 = vmul.f32 %v1402, %v827
    %v1406 = vadd.f32 %v1388, %v1403
    %v1407 = vadd.f32 %v1389, %v1404
    %v1408 = vadd.f32 %v1390, %v1405
    %v1409 = vlaneseq
    %v1410 = vshrl.u32 %v1409, 7
    %v1411 = vsub.s32 5, %v1410
    %v1412 = vrot.slane %v1233, %v1411
    %v1413 = vlaneseq
    %v1414 = vshrl.u32 %v1413, 7
    %v1415 = vsub.s32 5, %v1414
    %v1416 = vrot.slane %v1235, %v1415
    %v1417 = vlaneseq
    %v1418 = vshrl.u32 %v1417, 7
    %v1419 = vsub.s32 5, %v1418
    %v1420 = vrot.slane %v1310, %v1419
    %v1421 = vmul.f32 %v1412, %v831
    %v1422 = vmul.f32 %v1416, %v832
    %v1423 = vmul.f32 %v1420, %v833
    %v1424 = vadd.f32 %v1406, %v1421
    %v1425 = vadd.f32 %v1407, %v1422
    %v1426 = vadd.f32 %v1408, %v1423
    %v1429 = vcombine.low %v1424, %v1425
    %s1431 = scalar_lea.vmem %s8, 48
    %1432 = vst [vmem:[%s1431] sm:$0x77] %v1429
    %1433 = vst [vmem:[%s1431 + $0x8] sm:$0x7] %v1426
    %v1434 = vlaneseq
    %v1435 = vshrl.u32 %v1434, 7
    %v1436 = vsub.s32 6, %v1435
    %v1437 = vrot.slane %v1233, %v1436
    %v1438 = vlaneseq
    %v1439 = vshrl.u32 %v1438, 7
    %v1440 = vsub.s32 6, %v1439
    %v1441 = vrot.slane %v1235, %v1440
    %v1442 = vlaneseq
    %v1443 = vshrl.u32 %v1442, 7
    %v1444 = vsub.s32 6, %v1443
    %v1445 = vrot.slane %v1310, %v1444
    %v1446 = vmul.f32 %v1437, %v819
    %v1447 = vmul.f32 %v1441, %v820
    %v1448 = vmul.f32 %v1445, %v821
    %v1449 = vlaneseq
    %v1450 = vshrl.u32 %v1449, 7
    %v1451 = vsub.s32 7, %v1450
    %v1452 = vrot.slane %v1233, %v1451
    %v1453 = vlaneseq
    %v1454 = vshrl.u32 %v1453, 7
    %v1455 = vsub.s32 7, %v1454
    %v1456 = vrot.slane %v1235, %v1455
    %v1457 = vlaneseq
    %v1458 = vshrl.u32 %v1457, 7
    %v1459 = vsub.s32 7, %v1458
    %v1460 = vrot.slane %v1310, %v1459
    %v1461 = vmul.f32 %v1452, %v825
    %v1462 = vmul.f32 %v1456, %v826
    %v1463 = vmul.f32 %v1460, %v827
    %v1464 = vadd.f32 %v1446, %v1461
    %v1465 = vadd.f32 %v1447, %v1462
    %v1466 = vadd.f32 %v1448, %v1463
    %v1467 = vlaneseq
    %v1468 = vshrl.u32 %v1467, 7
    %v1469 = vsub.s32 0, %v1468
    %v1470 = vrot.slane %v1239, %v1469
    %v1471 = vlaneseq
    %v1472 = vshrl.u32 %v1471, 7
    %v1473 = vsub.s32 0, %v1472
    %v1474 = vrot.slane %v1241, %v1473
    %v1475 = vlaneseq
    %v1476 = vshrl.u32 %v1475, 7
    %v1477 = vsub.s32 0, %v1476
    %v1478 = vrot.slane %v1315, %v1477
    %v1479 = vmul.f32 %v1470, %v831
    %v1480 = vmul.f32 %v1474, %v832
    %v1481 = vmul.f32 %v1478, %v833
    %v1482 = vadd.f32 %v1464, %v1479
    %v1483 = vadd.f32 %v1465, %v1480
    %v1484 = vadd.f32 %v1466, %v1481
    %v1487 = vcombine.low %v1482, %v1483
    %s1489 = scalar_lea.vmem %s8, 60
    %1490 = vst [vmem:[%s1489] sm:$0x77] %v1487
    %1491 = vst [vmem:[%s1489 + $0x8] sm:$0x7] %v1484
    %v1492 = vmul.f32 %v1068, 0.25
    %v1493 = vmul.f32 %v1070, 0.25
    %v1494 = vmul.f32 %v1139, 0.25
    %v1497 = vcombine.low %v1492, %v1493
    %v1499 = vadd.f32 %v805, %v1497
    %v1500 = vadd.f32 %v806, %v1494
    %s1501 = scalar_lea.vmem [#allocation2], 24
    %1502 = vst [vmem:[%s1501] sm:$0x77] %v1499
    %1503 = vst [vmem:[%s1501 + $0x8] sm:$0x7] %v1500
    %v1506 = vcombine.low %v1068, %v1070
    %s1508 = scalar_lea.vmem %s7, 12
    %1509 = vst [vmem:[%s1508] sm:$0x77] %v1506
    %1510 = vst [vmem:[%s1508 + $0x8] sm:$0x7] %v1139
    %v1511 = vmul.f32 %v1366, 0.25
    %v1512 = vmul.f32 %v1367, 0.25
    %v1513 = vmul.f32 %v1368, 0.25
    %v1514 = vadd.f32 %v819, %v1511
    %v1515 = vadd.f32 %v820, %v1512
    %v1516 = vadd.f32 %v821, %v1513
    %v1517 = vmul.f32 %v1424, 0.25
    %v1518 = vmul.f32 %v1425, 0.25
    %v1519 = vmul.f32 %v1426, 0.25
    %v1520 = vadd.f32 %v825, %v1517
    %v1521 = vadd.f32 %v826, %v1518
    %v1522 = vadd.f32 %v827, %v1519
    %v1523 = vmul.f32 %v1482, 0.25
    %v1524 = vmul.f32 %v1483, 0.25
    %v1525 = vmul.f32 %v1484, 0.25
    %v1526 = vadd.f32 %v831, %v1523
    %v1527 = vadd.f32 %v832, %v1524
    %v1528 = vadd.f32 %v833, %v1525
    %v1531 = vlaneseq
    %v1532 = vshrl.u32 %v1531, 7
    %v1533 = vsub.s32 0, %v1532
    %v1534 = vrot.slane %v1499, %v1533
    %v1535 = vlaneseq
    %v1536 = vshrl.u32 %v1535, 7
    %v1537 = vsub.s32 4, %v1536
    %v1538 = vrot.slane %v1499, %v1537
    %v1539 = vlaneseq
    %v1540 = vshrl.u32 %v1539, 7
    %v1541 = vsub.s32 0, %v1540
    %v1542 = vrot.slane %v1500, %v1541
    %v1546 = vlaneseq
    %v1547 = vshrl.u32 %v1546, 7
    %v1548 = vsub.s32 0, %v1547
    %v1549 = vrot.slane %v1534, %v1548
    %v1550 = vlaneseq
    %v1551 = vshrl.u32 %v1550, 7
    %v1552 = vsub.s32 0, %v1551
    %v1553 = vrot.slane %v1538, %v1552
    %v1554 = vlaneseq
    %v1555 = vshrl.u32 %v1554, 7
    %v1556 = vsub.s32 0, %v1555
    %v1557 = vrot.slane %v1542, %v1556
    %v1558 = vmul.f32 %v77, %v1549
    %v1559 = vmul.f32 %v77, %v1553
    %v1560 = vmul.f32 %v77, %v1557
    %v1561 = vmul.f32 %v82, %v1549
    %v1562 = vmul.f32 %v82, %v1553
    %v1563 = vmul.f32 %v82, %v1557
    %v1564 = vmul.f32 %v87, %v1549
    %v1565 = vmul.f32 %v87, %v1553
    %v1566 = vmul.f32 %v87, %v1557
    %v1567 = vmul.f32 %v92, %v1549
    %v1568 = vmul.f32 %v92, %v1553
    %v1569 = vmul.f32 %v92, %v1557
    %v1570 = vadd.f32 %v40, %v1558
    %v1571 = vadd.f32 %v40, %v1559
    %v1572 = vadd.f32 %v40, %v1560
    %v1573 = vadd.f32 %v45, %v1561
    %v1574 = vadd.f32 %v45, %v1562
    %v1575 = vadd.f32 %v45, %v1563
    %v1576 = vadd.f32 %v50, %v1564
    %v1577 = vadd.f32 %v50, %v1565
    %v1578 = vadd.f32 %v50, %v1566
    %v1579 = vadd.f32 %v55, %v1567
    %v1580 = vadd.f32 %v55, %v1568
    %v1581 = vadd.f32 %v55, %v1569
    %v1582 = vlaneseq
    %v1583 = vshrl.u32 %v1582, 7
    %v1584 = vsub.s32 1, %v1583
    %v1585 = vrot.slane %v1499, %v1584
    %v1586 = vlaneseq
    %v1587 = vshrl.u32 %v1586, 7
    %v1588 = vsub.s32 5, %v1587
    %v1589 = vrot.slane %v1499, %v1588
    %v1590 = vlaneseq
    %v1591 = vshrl.u32 %v1590, 7
    %v1592 = vsub.s32 1, %v1591
    %v1593 = vrot.slane %v1500, %v1592
    %v1597 = vlaneseq
    %v1598 = vshrl.u32 %v1597, 7
    %v1599 = vsub.s32 1, %v1598
    %v1600 = vrot.slane %v1585, %v1599
    %v1601 = vlaneseq
    %v1602 = vshrl.u32 %v1601, 7
    %v1603 = vsub.s32 1, %v1602
    %v1604 = vrot.slane %v1589, %v1603
    %v1605 = vlaneseq
    %v1606 = vshrl.u32 %v1605, 7
    %v1607 = vsub.s32 1, %v1606
    %v1608 = vrot.slane %v1593, %v1607
    %v1609 = vmul.f32 %v149, %v1600
    %v1610 = vmul.f32 %v149, %v1604
    %v1611 = vmul.f32 %v149, %v1608
    %v1612 = vmul.f32 %v153, %v1600
    %v1613 = vmul.f32 %v153, %v1604
    %v1614 = vmul.f32 %v153, %v1608
    %v1615 = vmul.f32 %v157, %v1600
    %v1616 = vmul.f32 %v157, %v1604
    %v1617 = vmul.f32 %v157, %v1608
    %v1618 = vmul.f32 %v161, %v1600
    %v1619 = vmul.f32 %v161, %v1604
    %v1620 = vmul.f32 %v161, %v1608
    %v1621 = vadd.f32 %v1570, %v1609
    %v1622 = vadd.f32 %v1571, %v1610
    %v1623 = vadd.f32 %v1572, %v1611
    %v1624 = vadd.f32 %v1573, %v1612
    %v1625 = vadd.f32 %v1574, %v1613
    %v1626 = vadd.f32 %v1575, %v1614
    %v1627 = vadd.f32 %v1576, %v1615
    %v1628 = vadd.f32 %v1577, %v1616
    %v1629 = vadd.f32 %v1578, %v1617
    %v1630 = vadd.f32 %v1579, %v1618
    %v1631 = vadd.f32 %v1580, %v1619
    %v1632 = vadd.f32 %v1581, %v1620
    %v1633 = vlaneseq
    %v1634 = vshrl.u32 %v1633, 7
    %v1635 = vsub.s32 2, %v1634
    %v1636 = vrot.slane %v1499, %v1635
    %v1637 = vlaneseq
    %v1638 = vshrl.u32 %v1637, 7
    %v1639 = vsub.s32 6, %v1638
    %v1640 = vrot.slane %v1499, %v1639
    %v1641 = vlaneseq
    %v1642 = vshrl.u32 %v1641, 7
    %v1643 = vsub.s32 2, %v1642
    %v1644 = vrot.slane %v1500, %v1643
    %v1648 = vlaneseq
    %v1649 = vshrl.u32 %v1648, 7
    %v1650 = vsub.s32 2, %v1649
    %v1651 = vrot.slane %v1636, %v1650
    %v1652 = vlaneseq
    %v1653 = vshrl.u32 %v1652, 7
    %v1654 = vsub.s32 2, %v1653
    %v1655 = vrot.slane %v1640, %v1654
    %v1656 = vlaneseq
    %v1657 = vshrl.u32 %v1656, 7
    %v1658 = vsub.s32 2, %v1657
    %v1659 = vrot.slane %v1644, %v1658
    %v1660 = vmul.f32 %v216, %v1651
    %v1661 = vmul.f32 %v216, %v1655
    %v1662 = vmul.f32 %v216, %v1659
    %v1663 = vmul.f32 %v220, %v1651
    %v1664 = vmul.f32 %v220, %v1655
    %v1665 = vmul.f32 %v220, %v1659
    %v1666 = vmul.f32 %v224, %v1651
    %v1667 = vmul.f32 %v224, %v1655
    %v1668 = vmul.f32 %v224, %v1659
    %v1669 = vmul.f32 %v228, %v1651
    %v1670 = vmul.f32 %v228, %v1655
    %v1671 = vmul.f32 %v228, %v1659
    %v1672 = vadd.f32 %v1621, %v1660
    %v1673 = vadd.f32 %v1622, %v1661
    %v1674 = vadd.f32 %v1623, %v1662
    %v1675 = vadd.f32 %v1624, %v1663
    %v1676 = vadd.f32 %v1625, %v1664
    %v1677 = vadd.f32 %v1626, %v1665
    %v1678 = vadd.f32 %v1627, %v1666
    %v1679 = vadd.f32 %v1628, %v1667
    %v1680 = vadd.f32 %v1629, %v1668
    %v1681 = vadd.f32 %v1630, %v1669
    %v1682 = vadd.f32 %v1631, %v1670
    %v1683 = vadd.f32 %v1632, %v1671
    %v1684 = vtanh.pop %v1672
    %v1685 = vtanh.pop %v1673
    %v1686 = vtanh.pop %v1674
    %v1687 = vtanh.pop %v1675
    %v1688 = vtanh.pop %v1676
    %v1689 = vtanh.pop %v1677
    %v1690 = vtanh.pop %v1678
    %v1691 = vtanh.pop %v1679
    %v1692 = vtanh.pop %v1680
    %v1693 = vtanh.pop %v1681
    %v1694 = vtanh.pop %v1682
    %v1695 = vtanh.pop %v1683
    %1696 = vmatprep.subr.mxu0 %v1685
    %1697 = vmatpush1.msra.mxu0 %v1684
    %1698 = vmatprep.subr.mxu0 %v1688
    %1699 = vmatpush1.msra.mxu0 %v1687
    %1700 = vmatprep.subr.mxu0 %v1691
    %1701 = vmatpush1.msra.mxu0 %v1690
    %1702 = vmatprep.subr.mxu0 %v1694
    %1703 = vmatpush1.msra.mxu0 %v1693
    %1704 = vmatprep.subr.mxu0 0.0
    %1705 = vmatpush1.msra.mxu0 0.0
    %1706 = vmatprep.subr.mxu0 0.0
    %1707 = vmatpush1.msra.mxu0 0.0
    %1708 = vmatprep.subr.mxu0 0.0
    %1709 = vmatpush1.msra.mxu0 0.0
    %1710 = vmatprep.subr.mxu0 0.0
    %1711 = vmatpush1.msra.mxu0 0.0
    %1712 = vmatprep.subr.mxu0 0.0
    %1713 = vmatpush1.msra.mxu0 0.0
    %1714 = vmatprep.subr.mxu0 0.0
    %1715 = vmatpush1.msra.mxu0 0.0
    %1716 = vmatprep.subr.mxu0 0.0
    %1717 = vmatpush1.msra.mxu0 0.0
    %1718 = vmatprep.subr.mxu0 0.0
    %1719 = vmatpush1.msra.mxu0 0.0
    %1720 = vmatprep.subr.mxu0 0.0
    %1721 = vmatpush1.msra.mxu0 0.0
    %1722 = vmatprep.subr.mxu0 0.0
    %1723 = vmatpush1.msra.mxu0 0.0
    %1724 = vmatprep.subr.mxu0 0.0
    %1725 = vmatpush1.msra.mxu0 0.0
    %1726 = vmatprep.subr.mxu0 0.0
    %1727 = vmatpush1.msra.mxu0 0.0
    %1728 = vmatprep.subr.mxu0 0.0
    %1729 = vmatpush1.msra.mxu0 0.0
    %1730 = vmatprep.subr.mxu0 0.0
    %1731 = vmatpush1.msra.mxu0 0.0
    %1732 = vmatprep.subr.mxu0 0.0
    %1733 = vmatpush1.msra.mxu0 0.0
    %1734 = vmatprep.subr.mxu0 0.0
    %1735 = vmatpush1.msra.mxu0 0.0
    %1736 = vmatprep.subr.mxu0 0.0
    %1737 = vmatpush1.msra.mxu0 0.0
    %1738 = vmatprep.subr.mxu0 0.0
    %1739 = vmatpush1.msra.mxu0 0.0
    %1740 = vmatprep.subr.mxu0 0.0
    %1741 = vmatpush1.msra.mxu0 0.0
    %1742 = vmatprep.subr.mxu0 0.0
    %1743 = vmatpush1.msra.mxu0 0.0
    %1744 = vmatprep.subr.mxu0 0.0
    %1745 = vmatpush1.msra.mxu0 0.0
    %1746 = vmatprep.subr.mxu0 0.0
    %1747 = vmatpush1.msra.mxu0 0.0
    %1748 = vmatprep.subr.mxu0 0.0
    %1749 = vmatpush1.msra.mxu0 0.0
    %1750 = vmatprep.subr.mxu0 0.0
    %1751 = vmatpush1.msra.mxu0 0.0
    %1752 = vmatprep.subr.mxu0 0.0
    %1753 = vmatpush1.msra.mxu0 0.0
    %1754 = vmatprep.subr.mxu0 0.0
    %1755 = vmatpush1.msra.mxu0 0.0
    %1756 = vmatprep.subr.mxu0 0.0
    %1757 = vmatpush1.msra.mxu0 0.0
    %1758 = vmatprep.subr.mxu0 0.0
    %1759 = vmatpush1.msra.mxu0 0.0
    %1760 = vmatprep.mubr.f32.mxu0 0.0
    %1761 = vmatmul.mubr.f32.gmra.mrb[0].mxu0 %v300
    %v1762 = vpop.f32.mrb[0].mxu0
    %v1763 = vadd.f32 %v296, %v1762
    %v1764 = vpop.f32.mrb[0].mxu0
    %v1765 = vadd.f32 %v296, %v1764
    %1766 = vdwg.mxu0
    %1767 = vmatprep.subr.mxu0 0.0
    %1768 = vmatpush1.msra.mxu0 %v1686
    %1769 = vmatprep.subr.mxu0 0.0
    %1770 = vmatpush1.msra.mxu0 %v1689
    %1771 = vmatprep.subr.mxu0 0.0
    %1772 = vmatpush1.msra.mxu0 %v1692
    %1773 = vmatprep.subr.mxu0 0.0
    %1774 = vmatpush1.msra.mxu0 %v1695
    %1775 = vmatprep.subr.mxu0 0.0
    %1776 = vmatpush1.msra.mxu0 0.0
    %1777 = vmatprep.subr.mxu0 0.0
    %1778 = vmatpush1.msra.mxu0 0.0
    %1779 = vmatprep.subr.mxu0 0.0
    %1780 = vmatpush1.msra.mxu0 0.0
    %1781 = vmatprep.subr.mxu0 0.0
    %1782 = vmatpush1.msra.mxu0 0.0
    %1783 = vmatprep.subr.mxu0 0.0
    %1784 = vmatpush1.msra.mxu0 0.0
    %1785 = vmatprep.subr.mxu0 0.0
    %1786 = vmatpush1.msra.mxu0 0.0
    %1787 = vmatprep.subr.mxu0 0.0
    %1788 = vmatpush1.msra.mxu0 0.0
    %1789 = vmatprep.subr.mxu0 0.0
    %1790 = vmatpush1.msra.mxu0 0.0
    %1791 = vmatprep.subr.mxu0 0.0
    %1792 = vmatpush1.msra.mxu0 0.0
    %1793 = vmatprep.subr.mxu0 0.0
    %1794 = vmatpush1.msra.mxu0 0.0
    %1795 = vmatprep.subr.mxu0 0.0
    %1796 = vmatpush1.msra.mxu0 0.0
    %1797 = vmatprep.subr.mxu0 0.0
    %1798 = vmatpush1.msra.mxu0 0.0
    %1799 = vmatprep.subr.mxu0 0.0
    %1800 = vmatpush1.msra.mxu0 0.0
    %1801 = vmatprep.subr.mxu0 0.0
    %1802 = vmatpush1.msra.mxu0 0.0
    %1803 = vmatprep.subr.mxu0 0.0
    %1804 = vmatpush1.msra.mxu0 0.0
    %1805 = vmatprep.subr.mxu0 0.0
    %1806 = vmatpush1.msra.mxu0 0.0
    %1807 = vmatprep.subr.mxu0 0.0
    %1808 = vmatpush1.msra.mxu0 0.0
    %1809 = vmatprep.subr.mxu0 0.0
    %1810 = vmatpush1.msra.mxu0 0.0
    %1811 = vmatprep.subr.mxu0 0.0
    %1812 = vmatpush1.msra.mxu0 0.0
    %1813 = vmatprep.subr.mxu0 0.0
    %1814 = vmatpush1.msra.mxu0 0.0
    %1815 = vmatprep.subr.mxu0 0.0
    %1816 = vmatpush1.msra.mxu0 0.0
    %1817 = vmatprep.subr.mxu0 0.0
    %1818 = vmatpush1.msra.mxu0 0.0
    %1819 = vmatprep.subr.mxu0 0.0
    %1820 = vmatpush1.msra.mxu0 0.0
    %1821 = vmatprep.subr.mxu0 0.0
    %1822 = vmatpush1.msra.mxu0 0.0
    %1823 = vmatprep.subr.mxu0 0.0
    %1824 = vmatpush1.msra.mxu0 0.0
    %1825 = vmatprep.subr.mxu0 0.0
    %1826 = vmatpush1.msra.mxu0 0.0
    %1827 = vmatprep.subr.mxu0 0.0
    %1828 = vmatpush1.msra.mxu0 0.0
    %1829 = vmatprep.subr.mxu0 0.0
    %1830 = vmatpush1.msra.mxu0 0.0
    %1831 = vmatprep.mubr.f32.mxu0 0.0
    %1832 = vmatmul.mubr.f32.gmra.mrb[0].mxu0 %v300
    %v1833 = vpop.f32.mrb[0].mxu0
    %v1834 = vadd.f32 %v296, %v1833
    %v1835 = vpop.f32.mrb[0].mxu0
    %1836 = vdwg.mxu0
    %v1837 = vmul.f32 %v1684, %v1684
    %v1838 = vmul.f32 %v1685, %v1685
    %v1839 = vmul.f32 %v1686, %v1686
    %v1840 = vmul.f32 %v1687, %v1687
    %v1841 = vmul.f32 %v1688, %v1688
    %v1842 = vmul.f32 %v1689, %v1689
    %v1843 = vmul.f32 %v1690, %v1690
    %v1844 = vmul.f32 %v1691, %v1691
    %v1845 = vmul.f32 %v1692, %v1692
    %v1846 = vmul.f32 %v1693, %v1693
    %v1847 = vmul.f32 %v1694, %v1694
    %v1848 = vmul.f32 %v1695, %v1695
    %v1849 = vsub.f32 1.0, %v1837
    %v1850 = vsub.f32 1.0, %v1838
    %v1851 = vsub.f32 1.0, %v1839
    %v1852 = vsub.f32 1.0, %v1840
    %v1853 = vsub.f32 1.0, %v1841
    %v1854 = vsub.f32 1.0, %v1842
    %v1855 = vsub.f32 1.0, %v1843
    %v1856 = vsub.f32 1.0, %v1844
    %v1857 = vsub.f32 1.0, %v1845
    %v1858 = vsub.f32 1.0, %v1846
    %v1859 = vsub.f32 1.0, %v1847
    %v1860 = vsub.f32 1.0, %v1848
    %1861 = vmatprep.subr.mxu0 %v1850
    %1862 = vmatpush1.msra.mxu0 %v1849
    %1863 = vmatprep.subr.mxu0 %v1853
    %1864 = vmatpush1.msra.mxu0 %v1852
    %1865 = vmatprep.subr.mxu0 %v1856
    %1866 = vmatpush1.msra.mxu0 %v1855
    %1867 = vmatprep.subr.mxu0 %v1859
    %1868 = vmatpush1.msra.mxu0 %v1858
    %1869 = vmatprep.subr.mxu0 0.0
    %1870 = vmatpush1.msra.mxu0 0.0
    %1871 = vmatprep.subr.mxu0 0.0
    %1872 = vmatpush1.msra.mxu0 0.0
    %1873 = vmatprep.subr.mxu0 0.0
    %1874 = vmatpush1.msra.mxu0 0.0
    %1875 = vmatprep.subr.mxu0 0.0
    %1876 = vmatpush1.msra.mxu0 0.0
    %1877 = vmatprep.subr.mxu0 0.0
    %1878 = vmatpush1.msra.mxu0 0.0
    %1879 = vmatprep.subr.mxu0 0.0
    %1880 = vmatpush1.msra.mxu0 0.0
    %1881 = vmatprep.subr.mxu0 0.0
    %1882 = vmatpush1.msra.mxu0 0.0
    %1883 = vmatprep.subr.mxu0 0.0
    %1884 = vmatpush1.msra.mxu0 0.0
    %1885 = vmatprep.subr.mxu0 0.0
    %1886 = vmatpush1.msra.mxu0 0.0
    %1887 = vmatprep.subr.mxu0 0.0
    %1888 = vmatpush1.msra.mxu0 0.0
    %1889 = vmatprep.subr.mxu0 0.0
    %1890 = vmatpush1.msra.mxu0 0.0
    %1891 = vmatprep.subr.mxu0 0.0
    %1892 = vmatpush1.msra.mxu0 0.0
    %1893 = vmatprep.subr.mxu0 0.0
    %1894 = vmatpush1.msra.mxu0 0.0
    %1895 = vmatprep.subr.mxu0 0.0
    %1896 = vmatpush1.msra.mxu0 0.0
    %1897 = vmatprep.subr.mxu0 0.0
    %1898 = vmatpush1.msra.mxu0 0.0
    %1899 = vmatprep.subr.mxu0 0.0
    %1900 = vmatpush1.msra.mxu0 0.0
    %1901 = vmatprep.subr.mxu0 0.0
    %1902 = vmatpush1.msra.mxu0 0.0
    %1903 = vmatprep.subr.mxu0 0.0
    %1904 = vmatpush1.msra.mxu0 0.0
    %1905 = vmatprep.subr.mxu0 0.0
    %1906 = vmatpush1.msra.mxu0 0.0
    %1907 = vmatprep.subr.mxu0 0.0
    %1908 = vmatpush1.msra.mxu0 0.0
    %1909 = vmatprep.subr.mxu0 0.0
    %1910 = vmatpush1.msra.mxu0 0.0
    %1911 = vmatprep.subr.mxu0 0.0
    %1912 = vmatpush1.msra.mxu0 0.0
    %1913 = vmatprep.subr.mxu0 0.0
    %1914 = vmatpush1.msra.mxu0 0.0
    %1915 = vmatprep.subr.mxu0 0.0
    %1916 = vmatpush1.msra.mxu0 0.0
    %1917 = vmatprep.subr.mxu0 0.0
    %1918 = vmatpush1.msra.mxu0 0.0
    %1919 = vmatprep.subr.mxu0 0.0
    %1920 = vmatpush1.msra.mxu0 0.0
    %1921 = vmatprep.subr.mxu0 0.0
    %1922 = vmatpush1.msra.mxu0 0.0
    %1923 = vmatprep.subr.mxu0 0.0
    %1924 = vmatpush1.msra.mxu0 0.0
    %1925 = vmatprep.mubr.f32.mxu0 0.0
    %1926 = vmatmul.mubr.f32.gmra.mrb[0].mxu0 %v468
    %v1927 = vpop.f32.mrb[0].mxu0
    %v1928 = vadd.f32 0.0, %v1927
    %v1929 = vpop.f32.mrb[0].mxu0
    %v1930 = vadd.f32 0.0, %v1929
    %1931 = vmatprep.mubr.f32.mxu0 0.0
    %1932 = vmatmul.mubr.f32.gmra.mrb[0].mxu0 %v471
    %v1933 = vpop.f32.mrb[0].mxu0
    %v1934 = vadd.f32 0.0, %v1933
    %v1935 = vpop.f32.mrb[0].mxu0
    %v1936 = vadd.f32 0.0, %v1935
    %1937 = vdwg.mxu0
    %1938 = vmatprep.subr.mxu0 0.0
    %1939 = vmatpush1.msra.mxu0 %v1851
    %1940 = vmatprep.subr.mxu0 0.0
    %1941 = vmatpush1.msra.mxu0 %v1854
    %1942 = vmatprep.subr.mxu0 0.0
    %1943 = vmatpush1.msra.mxu0 %v1857
    %1944 = vmatprep.subr.mxu0 0.0
    %1945 = vmatpush1.msra.mxu0 %v1860
    %1946 = vmatprep.subr.mxu0 0.0
    %1947 = vmatpush1.msra.mxu0 0.0
    %1948 = vmatprep.subr.mxu0 0.0
    %1949 = vmatpush1.msra.mxu0 0.0
    %1950 = vmatprep.subr.mxu0 0.0
    %1951 = vmatpush1.msra.mxu0 0.0
    %1952 = vmatprep.subr.mxu0 0.0
    %1953 = vmatpush1.msra.mxu0 0.0
    %1954 = vmatprep.subr.mxu0 0.0
    %1955 = vmatpush1.msra.mxu0 0.0
    %1956 = vmatprep.subr.mxu0 0.0
    %1957 = vmatpush1.msra.mxu0 0.0
    %1958 = vmatprep.subr.mxu0 0.0
    %1959 = vmatpush1.msra.mxu0 0.0
    %1960 = vmatprep.subr.mxu0 0.0
    %1961 = vmatpush1.msra.mxu0 0.0
    %1962 = vmatprep.subr.mxu0 0.0
    %1963 = vmatpush1.msra.mxu0 0.0
    %1964 = vmatprep.subr.mxu0 0.0
    %1965 = vmatpush1.msra.mxu0 0.0
    %1966 = vmatprep.subr.mxu0 0.0
    %1967 = vmatpush1.msra.mxu0 0.0
    %1968 = vmatprep.subr.mxu0 0.0
    %1969 = vmatpush1.msra.mxu0 0.0
    %1970 = vmatprep.subr.mxu0 0.0
    %1971 = vmatpush1.msra.mxu0 0.0
    %1972 = vmatprep.subr.mxu0 0.0
    %1973 = vmatpush1.msra.mxu0 0.0
    %1974 = vmatprep.subr.mxu0 0.0
    %1975 = vmatpush1.msra.mxu0 0.0
    %1976 = vmatprep.subr.mxu0 0.0
    %1977 = vmatpush1.msra.mxu0 0.0
    %1978 = vmatprep.subr.mxu0 0.0
    %1979 = vmatpush1.msra.mxu0 0.0
    %1980 = vmatprep.subr.mxu0 0.0
    %1981 = vmatpush1.msra.mxu0 0.0
    %1982 = vmatprep.subr.mxu0 0.0
    %1983 = vmatpush1.msra.mxu0 0.0
    %1984 = vmatprep.subr.mxu0 0.0
    %1985 = vmatpush1.msra.mxu0 0.0
    %1986 = vmatprep.subr.mxu0 0.0
    %1987 = vmatpush1.msra.mxu0 0.0
    %1988 = vmatprep.subr.mxu0 0.0
    %1989 = vmatpush1.msra.mxu0 0.0
    %1990 = vmatprep.subr.mxu0 0.0
    %1991 = vmatpush1.msra.mxu0 0.0
    %1992 = vmatprep.subr.mxu0 0.0
    %1993 = vmatpush1.msra.mxu0 0.0
    %1994 = vmatprep.subr.mxu0 0.0
    %1995 = vmatpush1.msra.mxu0 0.0
    %1996 = vmatprep.subr.mxu0 0.0
    %1997 = vmatpush1.msra.mxu0 0.0
    %1998 = vmatprep.subr.mxu0 0.0
    %1999 = vmatpush1.msra.mxu0 0.0
    %2000 = vmatprep.subr.mxu0 0.0
    %2001 = vmatpush1.msra.mxu0 0.0
    %2002 = vmatprep.mubr.f32.mxu0 0.0
    %2003 = vmatmul.mubr.f32.gmra.mrb[0].mxu0 %v468
    %v2004 = vpop.f32.mrb[0].mxu0
    %v2005 = vadd.f32 0.0, %v2004
    %v2006 = vpop.f32.mrb[0].mxu0
    %2007 = vmatprep.mubr.f32.mxu0 0.0
    %2008 = vmatmul.mubr.f32.gmra.mrb[0].mxu0 %v471
    %v2009 = vpop.f32.mrb[0].mxu0
    %v2010 = vadd.f32 0.0, %v2009
    %v2011 = vpop.f32.mrb[0].mxu0
    %2012 = vdwg.mxu0
    %v2013 = vlaneseq
    %v2014 = vshrl.u32 %v2013, 7
    %v2015 = vsub.s32 0, %v2014
    %v2016 = vrot.slane %v1928, %v2015
    %v2017 = vlaneseq
    %v2018 = vshrl.u32 %v2017, 7
    %v2019 = vsub.s32 0, %v2018
    %v2020 = vrot.slane %v1930, %v2019
    %v2021 = vlaneseq
    %v2022 = vshrl.u32 %v2021, 7
    %v2023 = vsub.s32 0, %v2022
    %v2024 = vrot.slane %v2005, %v2023
    %v2025 = vmul.f32 %v2016, %v1514
    %v2026 = vmul.f32 %v2020, %v1515
    %v2027 = vmul.f32 %v2024, %v1516
    %v2028 = vlaneseq
    %v2029 = vshrl.u32 %v2028, 7
    %v2030 = vsub.s32 1, %v2029
    %v2031 = vrot.slane %v1928, %v2030
    %v2032 = vlaneseq
    %v2033 = vshrl.u32 %v2032, 7
    %v2034 = vsub.s32 1, %v2033
    %v2035 = vrot.slane %v1930, %v2034
    %v2036 = vlaneseq
    %v2037 = vshrl.u32 %v2036, 7
    %v2038 = vsub.s32 1, %v2037
    %v2039 = vrot.slane %v2005, %v2038
    %v2040 = vmul.f32 %v2031, %v1520
    %v2041 = vmul.f32 %v2035, %v1521
    %v2042 = vmul.f32 %v2039, %v1522
    %v2043 = vadd.f32 %v2025, %v2040
    %v2044 = vadd.f32 %v2026, %v2041
    %v2045 = vadd.f32 %v2027, %v2042
    %v2046 = vlaneseq
    %v2047 = vshrl.u32 %v2046, 7
    %v2048 = vsub.s32 2, %v2047
    %v2049 = vrot.slane %v1928, %v2048
    %v2050 = vlaneseq
    %v2051 = vshrl.u32 %v2050, 7
    %v2052 = vsub.s32 2, %v2051
    %v2053 = vrot.slane %v1930, %v2052
    %v2054 = vlaneseq
    %v2055 = vshrl.u32 %v2054, 7
    %v2056 = vsub.s32 2, %v2055
    %v2057 = vrot.slane %v2005, %v2056
    %v2058 = vmul.f32 %v2049, %v1526
    %v2059 = vmul.f32 %v2053, %v1527
    %v2060 = vmul.f32 %v2057, %v1528
    %v2061 = vadd.f32 %v2043, %v2058
    %v2062 = vadd.f32 %v2044, %v2059
    %v2063 = vadd.f32 %v2045, %v2060
    %v2066 = vcombine.low %v2061, %v2062
    %s2068 = scalar_lea.vmem %s8, 72
    %2069 = vst [vmem:[%s2068] sm:$0x77] %v2066
    %2070 = vst [vmem:[%s2068 + $0x8] sm:$0x7] %v2063
    %v2071 = vlaneseq
    %v2072 = vshrl.u32 %v2071, 7
    %v2073 = vsub.s32 3, %v2072
    %v2074 = vrot.slane %v1928, %v2073
    %v2075 = vlaneseq
    %v2076 = vshrl.u32 %v2075, 7
    %v2077 = vsub.s32 3, %v2076
    %v2078 = vrot.slane %v1930, %v2077
    %v2079 = vlaneseq
    %v2080 = vshrl.u32 %v2079, 7
    %v2081 = vsub.s32 3, %v2080
    %v2082 = vrot.slane %v2005, %v2081
    %v2083 = vmul.f32 %v2074, %v1514
    %v2084 = vmul.f32 %v2078, %v1515
    %v2085 = vmul.f32 %v2082, %v1516
    %v2086 = vlaneseq
    %v2087 = vshrl.u32 %v2086, 7
    %v2088 = vsub.s32 4, %v2087
    %v2089 = vrot.slane %v1928, %v2088
    %v2090 = vlaneseq
    %v2091 = vshrl.u32 %v2090, 7
    %v2092 = vsub.s32 4, %v2091
    %v2093 = vrot.slane %v1930, %v2092
    %v2094 = vlaneseq
    %v2095 = vshrl.u32 %v2094, 7
    %v2096 = vsub.s32 4, %v2095
    %v2097 = vrot.slane %v2005, %v2096
    %v2098 = vmul.f32 %v2089, %v1520
    %v2099 = vmul.f32 %v2093, %v1521
    %v2100 = vmul.f32 %v2097, %v1522
    %v2101 = vadd.f32 %v2083, %v2098
    %v2102 = vadd.f32 %v2084, %v2099
    %v2103 = vadd.f32 %v2085, %v2100
    %v2104 = vlaneseq
    %v2105 = vshrl.u32 %v2104, 7
    %v2106 = vsub.s32 5, %v2105
    %v2107 = vrot.slane %v1928, %v2106
    %v2108 = vlaneseq
    %v2109 = vshrl.u32 %v2108, 7
    %v2110 = vsub.s32 5, %v2109
    %v2111 = vrot.slane %v1930, %v2110
    %v2112 = vlaneseq
    %v2113 = vshrl.u32 %v2112, 7
    %v2114 = vsub.s32 5, %v2113
    %v2115 = vrot.slane %v2005, %v2114
    %v2116 = vmul.f32 %v2107, %v1526
    %v2117 = vmul.f32 %v2111, %v1527
    %v2118 = vmul.f32 %v2115, %v1528
    %v2119 = vadd.f32 %v2101, %v2116
    %v2120 = vadd.f32 %v2102, %v2117
    %v2121 = vadd.f32 %v2103, %v2118
    %v2124 = vcombine.low %v2119, %v2120
    %s2126 = scalar_lea.vmem %s8, 84
    %2127 = vst [vmem:[%s2126] sm:$0x77] %v2124
    %2128 = vst [vmem:[%s2126 + $0x8] sm:$0x7] %v2121
    %v2129 = vlaneseq
    %v2130 = vshrl.u32 %v2129, 7
    %v2131 = vsub.s32 6, %v2130
    %v2132 = vrot.slane %v1928, %v2131
    %v2133 = vlaneseq
    %v2134 = vshrl.u32 %v2133, 7
    %v2135 = vsub.s32 6, %v2134
    %v2136 = vrot.slane %v1930, %v2135
    %v2137 = vlaneseq
    %v2138 = vshrl.u32 %v2137, 7
    %v2139 = vsub.s32 6, %v2138
    %v2140 = vrot.slane %v2005, %v2139
    %v2141 = vmul.f32 %v2132, %v1514
    %v2142 = vmul.f32 %v2136, %v1515
    %v2143 = vmul.f32 %v2140, %v1516
    %v2144 = vlaneseq
    %v2145 = vshrl.u32 %v2144, 7
    %v2146 = vsub.s32 7, %v2145
    %v2147 = vrot.slane %v1928, %v2146
    %v2148 = vlaneseq
    %v2149 = vshrl.u32 %v2148, 7
    %v2150 = vsub.s32 7, %v2149
    %v2151 = vrot.slane %v1930, %v2150
    %v2152 = vlaneseq
    %v2153 = vshrl.u32 %v2152, 7
    %v2154 = vsub.s32 7, %v2153
    %v2155 = vrot.slane %v2005, %v2154
    %v2156 = vmul.f32 %v2147, %v1520
    %v2157 = vmul.f32 %v2151, %v1521
    %v2158 = vmul.f32 %v2155, %v1522
    %v2159 = vadd.f32 %v2141, %v2156
    %v2160 = vadd.f32 %v2142, %v2157
    %v2161 = vadd.f32 %v2143, %v2158
    %v2162 = vlaneseq
    %v2163 = vshrl.u32 %v2162, 7
    %v2164 = vsub.s32 0, %v2163
    %v2165 = vrot.slane %v1934, %v2164
    %v2166 = vlaneseq
    %v2167 = vshrl.u32 %v2166, 7
    %v2168 = vsub.s32 0, %v2167
    %v2169 = vrot.slane %v1936, %v2168
    %v2170 = vlaneseq
    %v2171 = vshrl.u32 %v2170, 7
    %v2172 = vsub.s32 0, %v2171
    %v2173 = vrot.slane %v2010, %v2172
    %v2174 = vmul.f32 %v2165, %v1526
    %v2175 = vmul.f32 %v2169, %v1527
    %v2176 = vmul.f32 %v2173, %v1528
    %v2177 = vadd.f32 %v2159, %v2174
    %v2178 = vadd.f32 %v2160, %v2175
    %v2179 = vadd.f32 %v2161, %v2176
    %v2182 = vcombine.low %v2177, %v2178
    %s2184 = scalar_lea.vmem %s8, 96
    %2185 = vst [vmem:[%s2184] sm:$0x77] %v2182
    %2186 = vst [vmem:[%s2184 + $0x8] sm:$0x7] %v2179
    %v2187 = vmul.f32 %v1763, 0.25
    %v2188 = vmul.f32 %v1765, 0.25
    %v2189 = vmul.f32 %v1834, 0.25
    %v2192 = vcombine.low %v2187, %v2188
    %v2194 = vadd.f32 %v1499, %v2192
    %v2195 = vadd.f32 %v1500, %v2189
    %s2196 = scalar_lea.vmem [#allocation2], 36
    %2197 = vst [vmem:[%s2196] sm:$0x77] %v2194
    %2198 = vst [vmem:[%s2196 + $0x8] sm:$0x7] %v2195
    %v2201 = vcombine.low %v1763, %v1765
    %s2203 = scalar_lea.vmem %s7, 24
    %2204 = vst [vmem:[%s2203] sm:$0x77] %v2201
    %2205 = vst [vmem:[%s2203 + $0x8] sm:$0x7] %v1834
    %v2206 = vmul.f32 %v2061, 0.25
    %v2207 = vmul.f32 %v2062, 0.25
    %v2208 = vmul.f32 %v2063, 0.25
    %v2209 = vadd.f32 %v1514, %v2206
    %v2210 = vadd.f32 %v1515, %v2207
    %v2211 = vadd.f32 %v1516, %v2208
    %v2212 = vmul.f32 %v2119, 0.25
    %v2213 = vmul.f32 %v2120, 0.25
    %v2214 = vmul.f32 %v2121, 0.25
    %v2215 = vadd.f32 %v1520, %v2212
    %v2216 = vadd.f32 %v1521, %v2213
    %v2217 = vadd.f32 %v1522, %v2214
    %v2218 = vmul.f32 %v2177, 0.25
    %v2219 = vmul.f32 %v2178, 0.25
    %v2220 = vmul.f32 %v2179, 0.25
    %v2221 = vadd.f32 %v1526, %v2218
    %v2222 = vadd.f32 %v1527, %v2219
    %v2223 = vadd.f32 %v1528, %v2220
    %v2226 = vlaneseq
    %v2227 = vshrl.u32 %v2226, 7
    %v2228 = vsub.s32 0, %v2227
    %v2229 = vrot.slane %v2194, %v2228
    %v2230 = vlaneseq
    %v2231 = vshrl.u32 %v2230, 7
    %v2232 = vsub.s32 4, %v2231
    %v2233 = vrot.slane %v2194, %v2232
    %v2234 = vlaneseq
    %v2235 = vshrl.u32 %v2234, 7
    %v2236 = vsub.s32 0, %v2235
    %v2237 = vrot.slane %v2195, %v2236
    %v2241 = vlaneseq
    %v2242 = vshrl.u32 %v2241, 7
    %v2243 = vsub.s32 0, %v2242
    %v2244 = vrot.slane %v2229, %v2243
    %v2245 = vlaneseq
    %v2246 = vshrl.u32 %v2245, 7
    %v2247 = vsub.s32 0, %v2246
    %v2248 = vrot.slane %v2233, %v2247
    %v2249 = vlaneseq
    %v2250 = vshrl.u32 %v2249, 7
    %v2251 = vsub.s32 0, %v2250
    %v2252 = vrot.slane %v2237, %v2251
    %v2253 = vmul.f32 %v77, %v2244
    %v2254 = vmul.f32 %v77, %v2248
    %v2255 = vmul.f32 %v77, %v2252
    %v2256 = vmul.f32 %v82, %v2244
    %v2257 = vmul.f32 %v82, %v2248
    %v2258 = vmul.f32 %v82, %v2252
    %v2259 = vmul.f32 %v87, %v2244
    %v2260 = vmul.f32 %v87, %v2248
    %v2261 = vmul.f32 %v87, %v2252
    %v2262 = vmul.f32 %v92, %v2244
    %v2263 = vmul.f32 %v92, %v2248
    %v2264 = vmul.f32 %v92, %v2252
    %v2265 = vadd.f32 %v40, %v2253
    %v2266 = vadd.f32 %v40, %v2254
    %v2267 = vadd.f32 %v40, %v2255
    %v2268 = vadd.f32 %v45, %v2256
    %v2269 = vadd.f32 %v45, %v2257
    %v2270 = vadd.f32 %v45, %v2258
    %v2271 = vadd.f32 %v50, %v2259
    %v2272 = vadd.f32 %v50, %v2260
    %v2273 = vadd.f32 %v50, %v2261
    %v2274 = vadd.f32 %v55, %v2262
    %v2275 = vadd.f32 %v55, %v2263
    %v2276 = vadd.f32 %v55, %v2264
    %v2277 = vlaneseq
    %v2278 = vshrl.u32 %v2277, 7
    %v2279 = vsub.s32 1, %v2278
    %v2280 = vrot.slane %v2194, %v2279
    %v2281 = vlaneseq
    %v2282 = vshrl.u32 %v2281, 7
    %v2283 = vsub.s32 5, %v2282
    %v2284 = vrot.slane %v2194, %v2283
    %v2285 = vlaneseq
    %v2286 = vshrl.u32 %v2285, 7
    %v2287 = vsub.s32 1, %v2286
    %v2288 = vrot.slane %v2195, %v2287
    %v2292 = vlaneseq
    %v2293 = vshrl.u32 %v2292, 7
    %v2294 = vsub.s32 1, %v2293
    %v2295 = vrot.slane %v2280, %v2294
    %v2296 = vlaneseq
    %v2297 = vshrl.u32 %v2296, 7
    %v2298 = vsub.s32 1, %v2297
    %v2299 = vrot.slane %v2284, %v2298
    %v2300 = vlaneseq
    %v2301 = vshrl.u32 %v2300, 7
    %v2302 = vsub.s32 1, %v2301
    %v2303 = vrot.slane %v2288, %v2302
    %v2304 = vmul.f32 %v149, %v2295
    %v2305 = vmul.f32 %v149, %v2299
    %v2306 = vmul.f32 %v149, %v2303
    %v2307 = vmul.f32 %v153, %v2295
    %v2308 = vmul.f32 %v153, %v2299
    %v2309 = vmul.f32 %v153, %v2303
    %v2310 = vmul.f32 %v157, %v2295
    %v2311 = vmul.f32 %v157, %v2299
    %v2312 = vmul.f32 %v157, %v2303
    %v2313 = vmul.f32 %v161, %v2295
    %v2314 = vmul.f32 %v161, %v2299
    %v2315 = vmul.f32 %v161, %v2303
    %v2316 = vadd.f32 %v2265, %v2304
    %v2317 = vadd.f32 %v2266, %v2305
    %v2318 = vadd.f32 %v2267, %v2306
    %v2319 = vadd.f32 %v2268, %v2307
    %v2320 = vadd.f32 %v2269, %v2308
    %v2321 = vadd.f32 %v2270, %v2309
    %v2322 = vadd.f32 %v2271, %v2310
    %v2323 = vadd.f32 %v2272, %v2311
    %v2324 = vadd.f32 %v2273, %v2312
    %v2325 = vadd.f32 %v2274, %v2313
    %v2326 = vadd.f32 %v2275, %v2314
    %v2327 = vadd.f32 %v2276, %v2315
    %v2328 = vlaneseq
    %v2329 = vshrl.u32 %v2328, 7
    %v2330 = vsub.s32 2, %v2329
    %v2331 = vrot.slane %v2194, %v2330
    %v2332 = vlaneseq
    %v2333 = vshrl.u32 %v2332, 7
    %v2334 = vsub.s32 6, %v2333
    %v2335 = vrot.slane %v2194, %v2334
    %v2336 = vlaneseq
    %v2337 = vshrl.u32 %v2336, 7
    %v2338 = vsub.s32 2, %v2337
    %v2339 = vrot.slane %v2195, %v2338
    %v2343 = vlaneseq
    %v2344 = vshrl.u32 %v2343, 7
    %v2345 = vsub.s32 2, %v2344
    %v2346 = vrot.slane %v2331, %v2345
    %v2347 = vlaneseq
    %v2348 = vshrl.u32 %v2347, 7
    %v2349 = vsub.s32 2, %v2348
    %v2350 = vrot.slane %v2335, %v2349
    %v2351 = vlaneseq
    %v2352 = vshrl.u32 %v2351, 7
    %v2353 = vsub.s32 2, %v2352
    %v2354 = vrot.slane %v2339, %v2353
    %v2355 = vmul.f32 %v216, %v2346
    %v2356 = vmul.f32 %v216, %v2350
    %v2357 = vmul.f32 %v216, %v2354
    %v2358 = vmul.f32 %v220, %v2346
    %v2359 = vmul.f32 %v220, %v2350
    %v2360 = vmul.f32 %v220, %v2354
    %v2361 = vmul.f32 %v224, %v2346
    %v2362 = vmul.f32 %v224, %v2350
    %v2363 = vmul.f32 %v224, %v2354
    %v2364 = vmul.f32 %v228, %v2346
    %v2365 = vmul.f32 %v228, %v2350
    %v2366 = vmul.f32 %v228, %v2354
    %v2367 = vadd.f32 %v2316, %v2355
    %v2368 = vadd.f32 %v2317, %v2356
    %v2369 = vadd.f32 %v2318, %v2357
    %v2370 = vadd.f32 %v2319, %v2358
    %v2371 = vadd.f32 %v2320, %v2359
    %v2372 = vadd.f32 %v2321, %v2360
    %v2373 = vadd.f32 %v2322, %v2361
    %v2374 = vadd.f32 %v2323, %v2362
    %v2375 = vadd.f32 %v2324, %v2363
    %v2376 = vadd.f32 %v2325, %v2364
    %v2377 = vadd.f32 %v2326, %v2365
    %v2378 = vadd.f32 %v2327, %v2366
    %v2379 = vtanh.pop %v2367
    %v2380 = vtanh.pop %v2368
    %v2381 = vtanh.pop %v2369
    %v2382 = vtanh.pop %v2370
    %v2383 = vtanh.pop %v2371
    %v2384 = vtanh.pop %v2372
    %v2385 = vtanh.pop %v2373
    %v2386 = vtanh.pop %v2374
    %v2387 = vtanh.pop %v2375
    %v2388 = vtanh.pop %v2376
    %v2389 = vtanh.pop %v2377
    %v2390 = vtanh.pop %v2378
    %2391 = vmatprep.subr.mxu0 %v2380
    %2392 = vmatpush1.msra.mxu0 %v2379
    %2393 = vmatprep.subr.mxu0 %v2383
    %2394 = vmatpush1.msra.mxu0 %v2382
    %2395 = vmatprep.subr.mxu0 %v2386
    %2396 = vmatpush1.msra.mxu0 %v2385
    %2397 = vmatprep.subr.mxu0 %v2389
    %2398 = vmatpush1.msra.mxu0 %v2388
    %2399 = vmatprep.subr.mxu0 0.0
    %2400 = vmatpush1.msra.mxu0 0.0
    %2401 = vmatprep.subr.mxu0 0.0
    %2402 = vmatpush1.msra.mxu0 0.0
    %2403 = vmatprep.subr.mxu0 0.0
    %2404 = vmatpush1.msra.mxu0 0.0
    %2405 = vmatprep.subr.mxu0 0.0
    %2406 = vmatpush1.msra.mxu0 0.0
    %2407 = vmatprep.subr.mxu0 0.0
    %2408 = vmatpush1.msra.mxu0 0.0
    %2409 = vmatprep.subr.mxu0 0.0
    %2410 = vmatpush1.msra.mxu0 0.0
    %2411 = vmatprep.subr.mxu0 0.0
    %2412 = vmatpush1.msra.mxu0 0.0
    %2413 = vmatprep.subr.mxu0 0.0
    %2414 = vmatpush1.msra.mxu0 0.0
    %2415 = vmatprep.subr.mxu0 0.0
    %2416 = vmatpush1.msra.mxu0 0.0
    %2417 = vmatprep.subr.mxu0 0.0
    %2418 = vmatpush1.msra.mxu0 0.0
    %2419 = vmatprep.subr.mxu0 0.0
    %2420 = vmatpush1.msra.mxu0 0.0
    %2421 = vmatprep.subr.mxu0 0.0
    %2422 = vmatpush1.msra.mxu0 0.0
    %2423 = vmatprep.subr.mxu0 0.0
    %2424 = vmatpush1.msra.mxu0 0.0
    %2425 = vmatprep.subr.mxu0 0.0
    %2426 = vmatpush1.msra.mxu0 0.0
    %2427 = vmatprep.subr.mxu0 0.0
    %2428 = vmatpush1.msra.mxu0 0.0
    %2429 = vmatprep.subr.mxu0 0.0
    %2430 = vmatpush1.msra.mxu0 0.0
    %2431 = vmatprep.subr.mxu0 0.0
    %2432 = vmatpush1.msra.mxu0 0.0
    %2433 = vmatprep.subr.mxu0 0.0
    %2434 = vmatpush1.msra.mxu0 0.0
    %2435 = vmatprep.subr.mxu0 0.0
    %2436 = vmatpush1.msra.mxu0 0.0
    %2437 = vmatprep.subr.mxu0 0.0
    %2438 = vmatpush1.msra.mxu0 0.0
    %2439 = vmatprep.subr.mxu0 0.0
    %2440 = vmatpush1.msra.mxu0 0.0
    %2441 = vmatprep.subr.mxu0 0.0
    %2442 = vmatpush1.msra.mxu0 0.0
    %2443 = vmatprep.subr.mxu0 0.0
    %2444 = vmatpush1.msra.mxu0 0.0
    %2445 = vmatprep.subr.mxu0 0.0
    %2446 = vmatpush1.msra.mxu0 0.0
    %2447 = vmatprep.subr.mxu0 0.0
    %2448 = vmatpush1.msra.mxu0 0.0
    %2449 = vmatprep.subr.mxu0 0.0
    %2450 = vmatpush1.msra.mxu0 0.0
    %2451 = vmatprep.subr.mxu0 0.0
    %2452 = vmatpush1.msra.mxu0 0.0
    %2453 = vmatprep.subr.mxu0 0.0
    %2454 = vmatpush1.msra.mxu0 0.0
    %2455 = vmatprep.mubr.f32.mxu0 0.0
    %2456 = vmatmul.mubr.f32.gmra.mrb[0].mxu0 %v300
    %v2457 = vpop.f32.mrb[0].mxu0
    %v2458 = vadd.f32 %v296, %v2457
    %v2459 = vpop.f32.mrb[0].mxu0
    %v2460 = vadd.f32 %v296, %v2459
    %2461 = vdwg.mxu0
    %2462 = vmatprep.subr.mxu0 0.0
    %2463 = vmatpush1.msra.mxu0 %v2381
    %2464 = vmatprep.subr.mxu0 0.0
    %2465 = vmatpush1.msra.mxu0 %v2384
    %2466 = vmatprep.subr.mxu0 0.0
    %2467 = vmatpush1.msra.mxu0 %v2387
    %2468 = vmatprep.subr.mxu0 0.0
    %2469 = vmatpush1.msra.mxu0 %v2390
    %2470 = vmatprep.subr.mxu0 0.0
    %2471 = vmatpush1.msra.mxu0 0.0
    %2472 = vmatprep.subr.mxu0 0.0
    %2473 = vmatpush1.msra.mxu0 0.0
    %2474 = vmatprep.subr.mxu0 0.0
    %2475 = vmatpush1.msra.mxu0 0.0
    %2476 = vmatprep.subr.mxu0 0.0
    %2477 = vmatpush1.msra.mxu0 0.0
    %2478 = vmatprep.subr.mxu0 0.0
    %2479 = vmatpush1.msra.mxu0 0.0
    %2480 = vmatprep.subr.mxu0 0.0
    %2481 = vmatpush1.msra.mxu0 0.0
    %2482 = vmatprep.subr.mxu0 0.0
    %2483 = vmatpush1.msra.mxu0 0.0
    %2484 = vmatprep.subr.mxu0 0.0
    %2485 = vmatpush1.msra.mxu0 0.0
    %2486 = vmatprep.subr.mxu0 0.0
    %2487 = vmatpush1.msra.mxu0 0.0
    %2488 = vmatprep.subr.mxu0 0.0
    %2489 = vmatpush1.msra.mxu0 0.0
    %2490 = vmatprep.subr.mxu0 0.0
    %2491 = vmatpush1.msra.mxu0 0.0
    %2492 = vmatprep.subr.mxu0 0.0
    %2493 = vmatpush1.msra.mxu0 0.0
    %2494 = vmatprep.subr.mxu0 0.0
    %2495 = vmatpush1.msra.mxu0 0.0
    %2496 = vmatprep.subr.mxu0 0.0
    %2497 = vmatpush1.msra.mxu0 0.0
    %2498 = vmatprep.subr.mxu0 0.0
    %2499 = vmatpush1.msra.mxu0 0.0
    %2500 = vmatprep.subr.mxu0 0.0
    %2501 = vmatpush1.msra.mxu0 0.0
    %2502 = vmatprep.subr.mxu0 0.0
    %2503 = vmatpush1.msra.mxu0 0.0
    %2504 = vmatprep.subr.mxu0 0.0
    %2505 = vmatpush1.msra.mxu0 0.0
    %2506 = vmatprep.subr.mxu0 0.0
    %2507 = vmatpush1.msra.mxu0 0.0
    %2508 = vmatprep.subr.mxu0 0.0
    %2509 = vmatpush1.msra.mxu0 0.0
    %2510 = vmatprep.subr.mxu0 0.0
    %2511 = vmatpush1.msra.mxu0 0.0
    %2512 = vmatprep.subr.mxu0 0.0
    %2513 = vmatpush1.msra.mxu0 0.0
    %2514 = vmatprep.subr.mxu0 0.0
    %2515 = vmatpush1.msra.mxu0 0.0
    %2516 = vmatprep.subr.mxu0 0.0
    %2517 = vmatpush1.msra.mxu0 0.0
    %2518 = vmatprep.subr.mxu0 0.0
    %2519 = vmatpush1.msra.mxu0 0.0
    %2520 = vmatprep.subr.mxu0 0.0
    %2521 = vmatpush1.msra.mxu0 0.0
    %2522 = vmatprep.subr.mxu0 0.0
    %2523 = vmatpush1.msra.mxu0 0.0
    %2524 = vmatprep.subr.mxu0 0.0
    %2525 = vmatpush1.msra.mxu0 0.0
    %2526 = vmatprep.mubr.f32.mxu0 0.0
    %2527 = vmatmul.mubr.f32.gmra.mrb[0].mxu0 %v300
    %v2528 = vpop.f32.mrb[0].mxu0
    %v2529 = vadd.f32 %v296, %v2528
    %v2530 = vpop.f32.mrb[0].mxu0
    %2531 = vdwg.mxu0
    %v2532 = vmul.f32 %v2379, %v2379
    %v2533 = vmul.f32 %v2380, %v2380
    %v2534 = vmul.f32 %v2381, %v2381
    %v2535 = vmul.f32 %v2382, %v2382
    %v2536 = vmul.f32 %v2383, %v2383
    %v2537 = vmul.f32 %v2384, %v2384
    %v2538 = vmul.f32 %v2385, %v2385
    %v2539 = vmul.f32 %v2386, %v2386
    %v2540 = vmul.f32 %v2387, %v2387
    %v2541 = vmul.f32 %v2388, %v2388
    %v2542 = vmul.f32 %v2389, %v2389
    %v2543 = vmul.f32 %v2390, %v2390
    %v2544 = vsub.f32 1.0, %v2532
    %v2545 = vsub.f32 1.0, %v2533
    %v2546 = vsub.f32 1.0, %v2534
    %v2547 = vsub.f32 1.0, %v2535
    %v2548 = vsub.f32 1.0, %v2536
    %v2549 = vsub.f32 1.0, %v2537
    %v2550 = vsub.f32 1.0, %v2538
    %v2551 = vsub.f32 1.0, %v2539
    %v2552 = vsub.f32 1.0, %v2540
    %v2553 = vsub.f32 1.0, %v2541
    %v2554 = vsub.f32 1.0, %v2542
    %v2555 = vsub.f32 1.0, %v2543
    %2556 = vmatprep.subr.mxu0 %v2545
    %2557 = vmatpush1.msra.mxu0 %v2544
    %2558 = vmatprep.subr.mxu0 %v2548
    %2559 = vmatpush1.msra.mxu0 %v2547
    %2560 = vmatprep.subr.mxu0 %v2551
    %2561 = vmatpush1.msra.mxu0 %v2550
    %2562 = vmatprep.subr.mxu0 %v2554
    %2563 = vmatpush1.msra.mxu0 %v2553
    %2564 = vmatprep.subr.mxu0 0.0
    %2565 = vmatpush1.msra.mxu0 0.0
    %2566 = vmatprep.subr.mxu0 0.0
    %2567 = vmatpush1.msra.mxu0 0.0
    %2568 = vmatprep.subr.mxu0 0.0
    %2569 = vmatpush1.msra.mxu0 0.0
    %2570 = vmatprep.subr.mxu0 0.0
    %2571 = vmatpush1.msra.mxu0 0.0
    %2572 = vmatprep.subr.mxu0 0.0
    %2573 = vmatpush1.msra.mxu0 0.0
    %2574 = vmatprep.subr.mxu0 0.0
    %2575 = vmatpush1.msra.mxu0 0.0
    %2576 = vmatprep.subr.mxu0 0.0
    %2577 = vmatpush1.msra.mxu0 0.0
    %2578 = vmatprep.subr.mxu0 0.0
    %2579 = vmatpush1.msra.mxu0 0.0
    %2580 = vmatprep.subr.mxu0 0.0
    %2581 = vmatpush1.msra.mxu0 0.0
    %2582 = vmatprep.subr.mxu0 0.0
    %2583 = vmatpush1.msra.mxu0 0.0
    %2584 = vmatprep.subr.mxu0 0.0
    %2585 = vmatpush1.msra.mxu0 0.0
    %2586 = vmatprep.subr.mxu0 0.0
    %2587 = vmatpush1.msra.mxu0 0.0
    %2588 = vmatprep.subr.mxu0 0.0
    %2589 = vmatpush1.msra.mxu0 0.0
    %2590 = vmatprep.subr.mxu0 0.0
    %2591 = vmatpush1.msra.mxu0 0.0
    %2592 = vmatprep.subr.mxu0 0.0
    %2593 = vmatpush1.msra.mxu0 0.0
    %2594 = vmatprep.subr.mxu0 0.0
    %2595 = vmatpush1.msra.mxu0 0.0
    %2596 = vmatprep.subr.mxu0 0.0
    %2597 = vmatpush1.msra.mxu0 0.0
    %2598 = vmatprep.subr.mxu0 0.0
    %2599 = vmatpush1.msra.mxu0 0.0
    %2600 = vmatprep.subr.mxu0 0.0
    %2601 = vmatpush1.msra.mxu0 0.0
    %2602 = vmatprep.subr.mxu0 0.0
    %2603 = vmatpush1.msra.mxu0 0.0
    %2604 = vmatprep.subr.mxu0 0.0
    %2605 = vmatpush1.msra.mxu0 0.0
    %2606 = vmatprep.subr.mxu0 0.0
    %2607 = vmatpush1.msra.mxu0 0.0
    %2608 = vmatprep.subr.mxu0 0.0
    %2609 = vmatpush1.msra.mxu0 0.0
    %2610 = vmatprep.subr.mxu0 0.0
    %2611 = vmatpush1.msra.mxu0 0.0
    %2612 = vmatprep.subr.mxu0 0.0
    %2613 = vmatpush1.msra.mxu0 0.0
    %2614 = vmatprep.subr.mxu0 0.0
    %2615 = vmatpush1.msra.mxu0 0.0
    %2616 = vmatprep.subr.mxu0 0.0
    %2617 = vmatpush1.msra.mxu0 0.0
    %2618 = vmatprep.subr.mxu0 0.0
    %2619 = vmatpush1.msra.mxu0 0.0
    %2620 = vmatprep.mubr.f32.mxu0 0.0
    %2621 = vmatmul.mubr.f32.gmra.mrb[0].mxu0 %v468
    %v2622 = vpop.f32.mrb[0].mxu0
    %v2623 = vadd.f32 0.0, %v2622
    %v2624 = vpop.f32.mrb[0].mxu0
    %v2625 = vadd.f32 0.0, %v2624
    %2626 = vmatprep.mubr.f32.mxu0 0.0
    %2627 = vmatmul.mubr.f32.gmra.mrb[0].mxu0 %v471
    %v2628 = vpop.f32.mrb[0].mxu0
    %v2629 = vadd.f32 0.0, %v2628
    %v2630 = vpop.f32.mrb[0].mxu0
    %v2631 = vadd.f32 0.0, %v2630
    %2632 = vdwg.mxu0
    %2633 = vmatprep.subr.mxu0 0.0
    %2634 = vmatpush1.msra.mxu0 %v2546
    %2635 = vmatprep.subr.mxu0 0.0
    %2636 = vmatpush1.msra.mxu0 %v2549
    %2637 = vmatprep.subr.mxu0 0.0
    %2638 = vmatpush1.msra.mxu0 %v2552
    %2639 = vmatprep.subr.mxu0 0.0
    %2640 = vmatpush1.msra.mxu0 %v2555
    %2641 = vmatprep.subr.mxu0 0.0
    %2642 = vmatpush1.msra.mxu0 0.0
    %2643 = vmatprep.subr.mxu0 0.0
    %2644 = vmatpush1.msra.mxu0 0.0
    %2645 = vmatprep.subr.mxu0 0.0
    %2646 = vmatpush1.msra.mxu0 0.0
    %2647 = vmatprep.subr.mxu0 0.0
    %2648 = vmatpush1.msra.mxu0 0.0
    %2649 = vmatprep.subr.mxu0 0.0
    %2650 = vmatpush1.msra.mxu0 0.0
    %2651 = vmatprep.subr.mxu0 0.0
    %2652 = vmatpush1.msra.mxu0 0.0
    %2653 = vmatprep.subr.mxu0 0.0
    %2654 = vmatpush1.msra.mxu0 0.0
    %2655 = vmatprep.subr.mxu0 0.0
    %2656 = vmatpush1.msra.mxu0 0.0
    %2657 = vmatprep.subr.mxu0 0.0
    %2658 = vmatpush1.msra.mxu0 0.0
    %2659 = vmatprep.subr.mxu0 0.0
    %2660 = vmatpush1.msra.mxu0 0.0
    %2661 = vmatprep.subr.mxu0 0.0
    %2662 = vmatpush1.msra.mxu0 0.0
    %2663 = vmatprep.subr.mxu0 0.0
    %2664 = vmatpush1.msra.mxu0 0.0
    %2665 = vmatprep.subr.mxu0 0.0
    %2666 = vmatpush1.msra.mxu0 0.0
    %2667 = vmatprep.subr.mxu0 0.0
    %2668 = vmatpush1.msra.mxu0 0.0
    %2669 = vmatprep.subr.mxu0 0.0
    %2670 = vmatpush1.msra.mxu0 0.0
    %2671 = vmatprep.subr.mxu0 0.0
    %2672 = vmatpush1.msra.mxu0 0.0
    %2673 = vmatprep.subr.mxu0 0.0
    %2674 = vmatpush1.msra.mxu0 0.0
    %2675 = vmatprep.subr.mxu0 0.0
    %2676 = vmatpush1.msra.mxu0 0.0
    %2677 = vmatprep.subr.mxu0 0.0
    %2678 = vmatpush1.msra.mxu0 0.0
    %2679 = vmatprep.subr.mxu0 0.0
    %2680 = vmatpush1.msra.mxu0 0.0
    %2681 = vmatprep.subr.mxu0 0.0
    %2682 = vmatpush1.msra.mxu0 0.0
    %2683 = vmatprep.subr.mxu0 0.0
    %2684 = vmatpush1.msra.mxu0 0.0
    %2685 = vmatprep.subr.mxu0 0.0
    %2686 = vmatpush1.msra.mxu0 0.0
    %2687 = vmatprep.subr.mxu0 0.0
    %2688 = vmatpush1.msra.mxu0 0.0
    %2689 = vmatprep.subr.mxu0 0.0
    %2690 = vmatpush1.msra.mxu0 0.0
    %2691 = vmatprep.subr.mxu0 0.0
    %2692 = vmatpush1.msra.mxu0 0.0
    %2693 = vmatprep.subr.mxu0 0.0
    %2694 = vmatpush1.msra.mxu0 0.0
    %2695 = vmatprep.subr.mxu0 0.0
    %2696 = vmatpush1.msra.mxu0 0.0
    %2697 = vmatprep.mubr.f32.mxu0 0.0
    %2698 = vmatmul.mubr.f32.gmra.mrb[0].mxu0 %v468
    %v2699 = vpop.f32.mrb[0].mxu0
    %v2700 = vadd.f32 0.0, %v2699
    %v2701 = vpop.f32.mrb[0].mxu0
    %2702 = vmatprep.mubr.f32.mxu0 0.0
    %2703 = vmatmul.mubr.f32.gmra.mrb[0].mxu0 %v471
    %v2704 = vpop.f32.mrb[0].mxu0
    %v2705 = vadd.f32 0.0, %v2704
    %v2706 = vpop.f32.mrb[0].mxu0
    %2707 = vdwg.mxu0
    %v2708 = vlaneseq
    %v2709 = vshrl.u32 %v2708, 7
    %v2710 = vsub.s32 0, %v2709
    %v2711 = vrot.slane %v2623, %v2710
    %v2712 = vlaneseq
    %v2713 = vshrl.u32 %v2712, 7
    %v2714 = vsub.s32 0, %v2713
    %v2715 = vrot.slane %v2625, %v2714
    %v2716 = vlaneseq
    %v2717 = vshrl.u32 %v2716, 7
    %v2718 = vsub.s32 0, %v2717
    %v2719 = vrot.slane %v2700, %v2718
    %v2720 = vmul.f32 %v2711, %v2209
    %v2721 = vmul.f32 %v2715, %v2210
    %v2722 = vmul.f32 %v2719, %v2211
    %v2723 = vlaneseq
    %v2724 = vshrl.u32 %v2723, 7
    %v2725 = vsub.s32 1, %v2724
    %v2726 = vrot.slane %v2623, %v2725
    %v2727 = vlaneseq
    %v2728 = vshrl.u32 %v2727, 7
    %v2729 = vsub.s32 1, %v2728
    %v2730 = vrot.slane %v2625, %v2729
    %v2731 = vlaneseq
    %v2732 = vshrl.u32 %v2731, 7
    %v2733 = vsub.s32 1, %v2732
    %v2734 = vrot.slane %v2700, %v2733
    %v2735 = vmul.f32 %v2726, %v2215
    %v2736 = vmul.f32 %v2730, %v2216
    %v2737 = vmul.f32 %v2734, %v2217
    %v2738 = vadd.f32 %v2720, %v2735
    %v2739 = vadd.f32 %v2721, %v2736
    %v2740 = vadd.f32 %v2722, %v2737
    %v2741 = vlaneseq
    %v2742 = vshrl.u32 %v2741, 7
    %v2743 = vsub.s32 2, %v2742
    %v2744 = vrot.slane %v2623, %v2743
    %v2745 = vlaneseq
    %v2746 = vshrl.u32 %v2745, 7
    %v2747 = vsub.s32 2, %v2746
    %v2748 = vrot.slane %v2625, %v2747
    %v2749 = vlaneseq
    %v2750 = vshrl.u32 %v2749, 7
    %v2751 = vsub.s32 2, %v2750
    %v2752 = vrot.slane %v2700, %v2751
    %v2753 = vmul.f32 %v2744, %v2221
    %v2754 = vmul.f32 %v2748, %v2222
    %v2755 = vmul.f32 %v2752, %v2223
    %v2756 = vadd.f32 %v2738, %v2753
    %v2757 = vadd.f32 %v2739, %v2754
    %v2758 = vadd.f32 %v2740, %v2755
    %v2761 = vcombine.low %v2756, %v2757
    %s2763 = scalar_lea.vmem %s8, 108
    %2764 = vst [vmem:[%s2763] sm:$0x77] %v2761
    %2765 = vst [vmem:[%s2763 + $0x8] sm:$0x7] %v2758
    %v2766 = vlaneseq
    %v2767 = vshrl.u32 %v2766, 7
    %v2768 = vsub.s32 3, %v2767
    %v2769 = vrot.slane %v2623, %v2768
    %v2770 = vlaneseq
    %v2771 = vshrl.u32 %v2770, 7
    %v2772 = vsub.s32 3, %v2771
    %v2773 = vrot.slane %v2625, %v2772
    %v2774 = vlaneseq
    %v2775 = vshrl.u32 %v2774, 7
    %v2776 = vsub.s32 3, %v2775
    %v2777 = vrot.slane %v2700, %v2776
    %v2778 = vmul.f32 %v2769, %v2209
    %v2779 = vmul.f32 %v2773, %v2210
    %v2780 = vmul.f32 %v2777, %v2211
    %v2781 = vlaneseq
    %v2782 = vshrl.u32 %v2781, 7
    %v2783 = vsub.s32 4, %v2782
    %v2784 = vrot.slane %v2623, %v2783
    %v2785 = vlaneseq
    %v2786 = vshrl.u32 %v2785, 7
    %v2787 = vsub.s32 4, %v2786
    %v2788 = vrot.slane %v2625, %v2787
    %v2789 = vlaneseq
    %v2790 = vshrl.u32 %v2789, 7
    %v2791 = vsub.s32 4, %v2790
    %v2792 = vrot.slane %v2700, %v2791
    %v2793 = vmul.f32 %v2784, %v2215
    %v2794 = vmul.f32 %v2788, %v2216
    %v2795 = vmul.f32 %v2792, %v2217
    %v2796 = vadd.f32 %v2778, %v2793
    %v2797 = vadd.f32 %v2779, %v2794
    %v2798 = vadd.f32 %v2780, %v2795
    %v2799 = vlaneseq
    %v2800 = vshrl.u32 %v2799, 7
    %v2801 = vsub.s32 5, %v2800
    %v2802 = vrot.slane %v2623, %v2801
    %v2803 = vlaneseq
    %v2804 = vshrl.u32 %v2803, 7
    %v2805 = vsub.s32 5, %v2804
    %v2806 = vrot.slane %v2625, %v2805
    %v2807 = vlaneseq
    %v2808 = vshrl.u32 %v2807, 7
    %v2809 = vsub.s32 5, %v2808
    %v2810 = vrot.slane %v2700, %v2809
    %v2811 = vmul.f32 %v2802, %v2221
    %v2812 = vmul.f32 %v2806, %v2222
    %v2813 = vmul.f32 %v2810, %v2223
    %v2814 = vadd.f32 %v2796, %v2811
    %v2815 = vadd.f32 %v2797, %v2812
    %v2816 = vadd.f32 %v2798, %v2813
    %v2819 = vcombine.low %v2814, %v2815
    %s2821 = scalar_lea.vmem %s8, 120
    %2822 = vst [vmem:[%s2821] sm:$0x77] %v2819
    %2823 = vst [vmem:[%s2821 + $0x8] sm:$0x7] %v2816
    %v2824 = vlaneseq
    %v2825 = vshrl.u32 %v2824, 7
    %v2826 = vsub.s32 6, %v2825
    %v2827 = vrot.slane %v2623, %v2826
    %v2828 = vlaneseq
    %v2829 = vshrl.u32 %v2828, 7
    %v2830 = vsub.s32 6, %v2829
    %v2831 = vrot.slane %v2625, %v2830
    %v2832 = vlaneseq
    %v2833 = vshrl.u32 %v2832, 7
    %v2834 = vsub.s32 6, %v2833
    %v2835 = vrot.slane %v2700, %v2834
    %v2836 = vmul.f32 %v2827, %v2209
    %v2837 = vmul.f32 %v2831, %v2210
    %v2838 = vmul.f32 %v2835, %v2211
    %v2839 = vlaneseq
    %v2840 = vshrl.u32 %v2839, 7
    %v2841 = vsub.s32 7, %v2840
    %v2842 = vrot.slane %v2623, %v2841
    %v2843 = vlaneseq
    %v2844 = vshrl.u32 %v2843, 7
    %v2845 = vsub.s32 7, %v2844
    %v2846 = vrot.slane %v2625, %v2845
    %v2847 = vlaneseq
    %v2848 = vshrl.u32 %v2847, 7
    %v2849 = vsub.s32 7, %v2848
    %v2850 = vrot.slane %v2700, %v2849
    %v2851 = vmul.f32 %v2842, %v2215
    %v2852 = vmul.f32 %v2846, %v2216
    %v2853 = vmul.f32 %v2850, %v2217
    %v2854 = vadd.f32 %v2836, %v2851
    %v2855 = vadd.f32 %v2837, %v2852
    %v2856 = vadd.f32 %v2838, %v2853
    %v2857 = vlaneseq
    %v2858 = vshrl.u32 %v2857, 7
    %v2859 = vsub.s32 0, %v2858
    %v2860 = vrot.slane %v2629, %v2859
    %v2861 = vlaneseq
    %v2862 = vshrl.u32 %v2861, 7
    %v2863 = vsub.s32 0, %v2862
    %v2864 = vrot.slane %v2631, %v2863
    %v2865 = vlaneseq
    %v2866 = vshrl.u32 %v2865, 7
    %v2867 = vsub.s32 0, %v2866
    %v2868 = vrot.slane %v2705, %v2867
    %v2869 = vmul.f32 %v2860, %v2221
    %v2870 = vmul.f32 %v2864, %v2222
    %v2871 = vmul.f32 %v2868, %v2223
    %v2872 = vadd.f32 %v2854, %v2869
    %v2873 = vadd.f32 %v2855, %v2870
    %v2874 = vadd.f32 %v2856, %v2871
    %v2877 = vcombine.low %v2872, %v2873
    %s2879 = scalar_lea.vmem %s8, 132
    %2880 = vst [vmem:[%s2879] sm:$0x77] %v2877
    %2881 = vst [vmem:[%s2879 + $0x8] sm:$0x7] %v2874
    %v2882 = vmul.f32 %v2458, 0.25
    %v2883 = vmul.f32 %v2460, 0.25
    %v2884 = vmul.f32 %v2529, 0.25
    %v2887 = vcombine.low %v2882, %v2883
    %v2889 = vadd.f32 %v2194, %v2887
    %v2890 = vadd.f32 %v2195, %v2884
    %s2891 = scalar_lea.vmem [#allocation2], 48
    %2892 = vst [vmem:[%s2891] sm:$0x77] %v2889
    %2893 = vst [vmem:[%s2891 + $0x8] sm:$0x7] %v2890
    %v2896 = vcombine.low %v2458, %v2460
    %s2898 = scalar_lea.vmem %s7, 36
    %2899 = vst [vmem:[%s2898] sm:$0x77] %v2896
    %2900 = vst [vmem:[%s2898 + $0x8] sm:$0x7] %v2529
    %v2901 = vmul.f32 %v2756, 0.25
    %v2902 = vmul.f32 %v2757, 0.25
    %v2903 = vmul.f32 %v2758, 0.25
    %v2904 = vadd.f32 %v2209, %v2901
    %v2905 = vadd.f32 %v2210, %v2902
    %v2906 = vadd.f32 %v2211, %v2903
    %v2907 = vmul.f32 %v2814, 0.25
    %v2908 = vmul.f32 %v2815, 0.25
    %v2909 = vmul.f32 %v2816, 0.25
    %v2910 = vadd.f32 %v2215, %v2907
    %v2911 = vadd.f32 %v2216, %v2908
    %v2912 = vadd.f32 %v2217, %v2909
    %v2913 = vmul.f32 %v2872, 0.25
    %v2914 = vmul.f32 %v2873, 0.25
    %v2915 = vmul.f32 %v2874, 0.25
    %v2916 = vadd.f32 %v2221, %v2913
    %v2917 = vadd.f32 %v2222, %v2914
    %v2918 = vadd.f32 %v2223, %v2915
    %v2921 = vlaneseq
    %v2922 = vshrl.u32 %v2921, 7
    %v2923 = vsub.s32 0, %v2922
    %v2924 = vrot.slane %v2889, %v2923
    %v2925 = vlaneseq
    %v2926 = vshrl.u32 %v2925, 7
    %v2927 = vsub.s32 4, %v2926
    %v2928 = vrot.slane %v2889, %v2927
    %v2929 = vlaneseq
    %v2930 = vshrl.u32 %v2929, 7
    %v2931 = vsub.s32 0, %v2930
    %v2932 = vrot.slane %v2890, %v2931
    %v2936 = vlaneseq
    %v2937 = vshrl.u32 %v2936, 7
    %v2938 = vsub.s32 0, %v2937
    %v2939 = vrot.slane %v2924, %v2938
    %v2940 = vlaneseq
    %v2941 = vshrl.u32 %v2940, 7
    %v2942 = vsub.s32 0, %v2941
    %v2943 = vrot.slane %v2928, %v2942
    %v2944 = vlaneseq
    %v2945 = vshrl.u32 %v2944, 7
    %v2946 = vsub.s32 0, %v2945
    %v2947 = vrot.slane %v2932, %v2946
    %v2948 = vmul.f32 %v77, %v2939
    %v2949 = vmul.f32 %v77, %v2943
    %v2950 = vmul.f32 %v77, %v2947
    %v2951 = vmul.f32 %v82, %v2939
    %v2952 = vmul.f32 %v82, %v2943
    %v2953 = vmul.f32 %v82, %v2947
    %v2954 = vmul.f32 %v87, %v2939
    %v2955 = vmul.f32 %v87, %v2943
    %v2956 = vmul.f32 %v87, %v2947
    %v2957 = vmul.f32 %v92, %v2939
    %v2958 = vmul.f32 %v92, %v2943
    %v2959 = vmul.f32 %v92, %v2947
    %v2960 = vadd.f32 %v40, %v2948
    %v2961 = vadd.f32 %v40, %v2949
    %v2962 = vadd.f32 %v40, %v2950
    %v2963 = vadd.f32 %v45, %v2951
    %v2964 = vadd.f32 %v45, %v2952
    %v2965 = vadd.f32 %v45, %v2953
    %v2966 = vadd.f32 %v50, %v2954
    %v2967 = vadd.f32 %v50, %v2955
    %v2968 = vadd.f32 %v50, %v2956
    %v2969 = vadd.f32 %v55, %v2957
    %v2970 = vadd.f32 %v55, %v2958
    %v2971 = vadd.f32 %v55, %v2959
    %v2972 = vlaneseq
    %v2973 = vshrl.u32 %v2972, 7
    %v2974 = vsub.s32 1, %v2973
    %v2975 = vrot.slane %v2889, %v2974
    %v2976 = vlaneseq
    %v2977 = vshrl.u32 %v2976, 7
    %v2978 = vsub.s32 5, %v2977
    %v2979 = vrot.slane %v2889, %v2978
    %v2980 = vlaneseq
    %v2981 = vshrl.u32 %v2980, 7
    %v2982 = vsub.s32 1, %v2981
    %v2983 = vrot.slane %v2890, %v2982
    %v2987 = vlaneseq
    %v2988 = vshrl.u32 %v2987, 7
    %v2989 = vsub.s32 1, %v2988
    %v2990 = vrot.slane %v2975, %v2989
    %v2991 = vlaneseq
    %v2992 = vshrl.u32 %v2991, 7
    %v2993 = vsub.s32 1, %v2992
    %v2994 = vrot.slane %v2979, %v2993
    %v2995 = vlaneseq
    %v2996 = vshrl.u32 %v2995, 7
    %v2997 = vsub.s32 1, %v2996
    %v2998 = vrot.slane %v2983, %v2997
    %v2999 = vmul.f32 %v149, %v2990
    %v3000 = vmul.f32 %v149, %v2994
    %v3001 = vmul.f32 %v149, %v2998
    %v3002 = vmul.f32 %v153, %v2990
    %v3003 = vmul.f32 %v153, %v2994
    %v3004 = vmul.f32 %v153, %v2998
    %v3005 = vmul.f32 %v157, %v2990
    %v3006 = vmul.f32 %v157, %v2994
    %v3007 = vmul.f32 %v157, %v2998
    %v3008 = vmul.f32 %v161, %v2990
    %v3009 = vmul.f32 %v161, %v2994
    %v3010 = vmul.f32 %v161, %v2998
    %v3011 = vadd.f32 %v2960, %v2999
    %v3012 = vadd.f32 %v2961, %v3000
    %v3013 = vadd.f32 %v2962, %v3001
    %v3014 = vadd.f32 %v2963, %v3002
    %v3015 = vadd.f32 %v2964, %v3003
    %v3016 = vadd.f32 %v2965, %v3004
    %v3017 = vadd.f32 %v2966, %v3005
    %v3018 = vadd.f32 %v2967, %v3006
    %v3019 = vadd.f32 %v2968, %v3007
    %v3020 = vadd.f32 %v2969, %v3008
    %v3021 = vadd.f32 %v2970, %v3009
    %v3022 = vadd.f32 %v2971, %v3010
    %v3023 = vlaneseq
    %v3024 = vshrl.u32 %v3023, 7
    %v3025 = vsub.s32 2, %v3024
    %v3026 = vrot.slane %v2889, %v3025
    %v3027 = vlaneseq
    %v3028 = vshrl.u32 %v3027, 7
    %v3029 = vsub.s32 6, %v3028
    %v3030 = vrot.slane %v2889, %v3029
    %v3031 = vlaneseq
    %v3032 = vshrl.u32 %v3031, 7
    %v3033 = vsub.s32 2, %v3032
    %v3034 = vrot.slane %v2890, %v3033
    %v3038 = vlaneseq
    %v3039 = vshrl.u32 %v3038, 7
    %v3040 = vsub.s32 2, %v3039
    %v3041 = vrot.slane %v3026, %v3040
    %v3042 = vlaneseq
    %v3043 = vshrl.u32 %v3042, 7
    %v3044 = vsub.s32 2, %v3043
    %v3045 = vrot.slane %v3030, %v3044
    %v3046 = vlaneseq
    %v3047 = vshrl.u32 %v3046, 7
    %v3048 = vsub.s32 2, %v3047
    %v3049 = vrot.slane %v3034, %v3048
    %v3050 = vmul.f32 %v216, %v3041
    %v3051 = vmul.f32 %v216, %v3045
    %v3052 = vmul.f32 %v216, %v3049
    %v3053 = vmul.f32 %v220, %v3041
    %v3054 = vmul.f32 %v220, %v3045
    %v3055 = vmul.f32 %v220, %v3049
    %v3056 = vmul.f32 %v224, %v3041
    %v3057 = vmul.f32 %v224, %v3045
    %v3058 = vmul.f32 %v224, %v3049
    %v3059 = vmul.f32 %v228, %v3041
    %v3060 = vmul.f32 %v228, %v3045
    %v3061 = vmul.f32 %v228, %v3049
    %v3062 = vadd.f32 %v3011, %v3050
    %v3063 = vadd.f32 %v3012, %v3051
    %v3064 = vadd.f32 %v3013, %v3052
    %v3065 = vadd.f32 %v3014, %v3053
    %v3066 = vadd.f32 %v3015, %v3054
    %v3067 = vadd.f32 %v3016, %v3055
    %v3068 = vadd.f32 %v3017, %v3056
    %v3069 = vadd.f32 %v3018, %v3057
    %v3070 = vadd.f32 %v3019, %v3058
    %v3071 = vadd.f32 %v3020, %v3059
    %v3072 = vadd.f32 %v3021, %v3060
    %v3073 = vadd.f32 %v3022, %v3061
    %v3074 = vtanh.pop %v3062
    %v3075 = vtanh.pop %v3063
    %v3076 = vtanh.pop %v3064
    %v3077 = vtanh.pop %v3065
    %v3078 = vtanh.pop %v3066
    %v3079 = vtanh.pop %v3067
    %v3080 = vtanh.pop %v3068
    %v3081 = vtanh.pop %v3069
    %v3082 = vtanh.pop %v3070
    %v3083 = vtanh.pop %v3071
    %v3084 = vtanh.pop %v3072
    %v3085 = vtanh.pop %v3073
    %3086 = vmatprep.subr.mxu0 %v3075
    %3087 = vmatpush1.msra.mxu0 %v3074
    %3088 = vmatprep.subr.mxu0 %v3078
    %3089 = vmatpush1.msra.mxu0 %v3077
    %3090 = vmatprep.subr.mxu0 %v3081
    %3091 = vmatpush1.msra.mxu0 %v3080
    %3092 = vmatprep.subr.mxu0 %v3084
    %3093 = vmatpush1.msra.mxu0 %v3083
    %3094 = vmatprep.subr.mxu0 0.0
    %3095 = vmatpush1.msra.mxu0 0.0
    %3096 = vmatprep.subr.mxu0 0.0
    %3097 = vmatpush1.msra.mxu0 0.0
    %3098 = vmatprep.subr.mxu0 0.0
    %3099 = vmatpush1.msra.mxu0 0.0
    %3100 = vmatprep.subr.mxu0 0.0
    %3101 = vmatpush1.msra.mxu0 0.0
    %3102 = vmatprep.subr.mxu0 0.0
    %3103 = vmatpush1.msra.mxu0 0.0
    %3104 = vmatprep.subr.mxu0 0.0
    %3105 = vmatpush1.msra.mxu0 0.0
    %3106 = vmatprep.subr.mxu0 0.0
    %3107 = vmatpush1.msra.mxu0 0.0
    %3108 = vmatprep.subr.mxu0 0.0
    %3109 = vmatpush1.msra.mxu0 0.0
    %3110 = vmatprep.subr.mxu0 0.0
    %3111 = vmatpush1.msra.mxu0 0.0
    %3112 = vmatprep.subr.mxu0 0.0
    %3113 = vmatpush1.msra.mxu0 0.0
    %3114 = vmatprep.subr.mxu0 0.0
    %3115 = vmatpush1.msra.mxu0 0.0
    %3116 = vmatprep.subr.mxu0 0.0
    %3117 = vmatpush1.msra.mxu0 0.0
    %3118 = vmatprep.subr.mxu0 0.0
    %3119 = vmatpush1.msra.mxu0 0.0
    %3120 = vmatprep.subr.mxu0 0.0
    %3121 = vmatpush1.msra.mxu0 0.0
    %3122 = vmatprep.subr.mxu0 0.0
    %3123 = vmatpush1.msra.mxu0 0.0
    %3124 = vmatprep.subr.mxu0 0.0
    %3125 = vmatpush1.msra.mxu0 0.0
    %3126 = vmatprep.subr.mxu0 0.0
    %3127 = vmatpush1.msra.mxu0 0.0
    %3128 = vmatprep.subr.mxu0 0.0
    %3129 = vmatpush1.msra.mxu0 0.0
    %3130 = vmatprep.subr.mxu0 0.0
    %3131 = vmatpush1.msra.mxu0 0.0
    %3132 = vmatprep.subr.mxu0 0.0
    %3133 = vmatpush1.msra.mxu0 0.0
    %3134 = vmatprep.subr.mxu0 0.0
    %3135 = vmatpush1.msra.mxu0 0.0
    %3136 = vmatprep.subr.mxu0 0.0
    %3137 = vmatpush1.msra.mxu0 0.0
    %3138 = vmatprep.subr.mxu0 0.0
    %3139 = vmatpush1.msra.mxu0 0.0
    %3140 = vmatprep.subr.mxu0 0.0
    %3141 = vmatpush1.msra.mxu0 0.0
    %3142 = vmatprep.subr.mxu0 0.0
    %3143 = vmatpush1.msra.mxu0 0.0
    %3144 = vmatprep.subr.mxu0 0.0
    %3145 = vmatpush1.msra.mxu0 0.0
    %3146 = vmatprep.subr.mxu0 0.0
    %3147 = vmatpush1.msra.mxu0 0.0
    %3148 = vmatprep.subr.mxu0 0.0
    %3149 = vmatpush1.msra.mxu0 0.0
    %3150 = vmatprep.mubr.f32.mxu0 0.0
    %3151 = vmatmul.mubr.f32.gmra.mrb[0].mxu0 %v300
    %v3152 = vpop.f32.mrb[0].mxu0
    %v3153 = vadd.f32 %v296, %v3152
    %v3154 = vpop.f32.mrb[0].mxu0
    %v3155 = vadd.f32 %v296, %v3154
    %3156 = vdwg.mxu0
    %3157 = vmatprep.subr.mxu0 0.0
    %3158 = vmatpush1.msra.mxu0 %v3076
    %3159 = vmatprep.subr.mxu0 0.0
    %3160 = vmatpush1.msra.mxu0 %v3079
    %3161 = vmatprep.subr.mxu0 0.0
    %3162 = vmatpush1.msra.mxu0 %v3082
    %3163 = vmatprep.subr.mxu0 0.0
    %3164 = vmatpush1.msra.mxu0 %v3085
    %3165 = vmatprep.subr.mxu0 0.0
    %3166 = vmatpush1.msra.mxu0 0.0
    %3167 = vmatprep.subr.mxu0 0.0
    %3168 = vmatpush1.msra.mxu0 0.0
    %3169 = vmatprep.subr.mxu0 0.0
    %3170 = vmatpush1.msra.mxu0 0.0
    %3171 = vmatprep.subr.mxu0 0.0
    %3172 = vmatpush1.msra.mxu0 0.0
    %3173 = vmatprep.subr.mxu0 0.0
    %3174 = vmatpush1.msra.mxu0 0.0
    %3175 = vmatprep.subr.mxu0 0.0
    %3176 = vmatpush1.msra.mxu0 0.0
    %3177 = vmatprep.subr.mxu0 0.0
    %3178 = vmatpush1.msra.mxu0 0.0
    %3179 = vmatprep.subr.mxu0 0.0
    %3180 = vmatpush1.msra.mxu0 0.0
    %3181 = vmatprep.subr.mxu0 0.0
    %3182 = vmatpush1.msra.mxu0 0.0
    %3183 = vmatprep.subr.mxu0 0.0
    %3184 = vmatpush1.msra.mxu0 0.0
    %3185 = vmatprep.subr.mxu0 0.0
    %3186 = vmatpush1.msra.mxu0 0.0
    %3187 = vmatprep.subr.mxu0 0.0
    %3188 = vmatpush1.msra.mxu0 0.0
    %3189 = vmatprep.subr.mxu0 0.0
    %3190 = vmatpush1.msra.mxu0 0.0
    %3191 = vmatprep.subr.mxu0 0.0
    %3192 = vmatpush1.msra.mxu0 0.0
    %3193 = vmatprep.subr.mxu0 0.0
    %3194 = vmatpush1.msra.mxu0 0.0
    %3195 = vmatprep.subr.mxu0 0.0
    %3196 = vmatpush1.msra.mxu0 0.0
    %3197 = vmatprep.subr.mxu0 0.0
    %3198 = vmatpush1.msra.mxu0 0.0
    %3199 = vmatprep.subr.mxu0 0.0
    %3200 = vmatpush1.msra.mxu0 0.0
    %3201 = vmatprep.subr.mxu0 0.0
    %3202 = vmatpush1.msra.mxu0 0.0
    %3203 = vmatprep.subr.mxu0 0.0
    %3204 = vmatpush1.msra.mxu0 0.0
    %3205 = vmatprep.subr.mxu0 0.0
    %3206 = vmatpush1.msra.mxu0 0.0
    %3207 = vmatprep.subr.mxu0 0.0
    %3208 = vmatpush1.msra.mxu0 0.0
    %3209 = vmatprep.subr.mxu0 0.0
    %3210 = vmatpush1.msra.mxu0 0.0
    %3211 = vmatprep.subr.mxu0 0.0
    %3212 = vmatpush1.msra.mxu0 0.0
    %3213 = vmatprep.subr.mxu0 0.0
    %3214 = vmatpush1.msra.mxu0 0.0
    %3215 = vmatprep.subr.mxu0 0.0
    %3216 = vmatpush1.msra.mxu0 0.0
    %3217 = vmatprep.subr.mxu0 0.0
    %3218 = vmatpush1.msra.mxu0 0.0
    %3219 = vmatprep.subr.mxu0 0.0
    %3220 = vmatpush1.msra.mxu0 0.0
    %3221 = vmatprep.mubr.f32.mxu0 0.0
    %3222 = vmatmul.mubr.f32.gmra.mrb[0].mxu0 %v300
    %v3223 = vpop.f32.mrb[0].mxu0
    %v3224 = vadd.f32 %v296, %v3223
    %v3225 = vpop.f32.mrb[0].mxu0
    %3226 = vdwg.mxu0
    %v3227 = vmul.f32 %v3074, %v3074
    %v3228 = vmul.f32 %v3075, %v3075
    %v3229 = vmul.f32 %v3076, %v3076
    %v3230 = vmul.f32 %v3077, %v3077
    %v3231 = vmul.f32 %v3078, %v3078
    %v3232 = vmul.f32 %v3079, %v3079
    %v3233 = vmul.f32 %v3080, %v3080
    %v3234 = vmul.f32 %v3081, %v3081
    %v3235 = vmul.f32 %v3082, %v3082
    %v3236 = vmul.f32 %v3083, %v3083
    %v3237 = vmul.f32 %v3084, %v3084
    %v3238 = vmul.f32 %v3085, %v3085
    %v3239 = vsub.f32 1.0, %v3227
    %v3240 = vsub.f32 1.0, %v3228
    %v3241 = vsub.f32 1.0, %v3229
    %v3242 = vsub.f32 1.0, %v3230
    %v3243 = vsub.f32 1.0, %v3231
    %v3244 = vsub.f32 1.0, %v3232
    %v3245 = vsub.f32 1.0, %v3233
    %v3246 = vsub.f32 1.0, %v3234
    %v3247 = vsub.f32 1.0, %v3235
    %v3248 = vsub.f32 1.0, %v3236
    %v3249 = vsub.f32 1.0, %v3237
    %v3250 = vsub.f32 1.0, %v3238
    %3251 = vmatprep.subr.mxu0 %v3240
    %3252 = vmatpush1.msra.mxu0 %v3239
    %3253 = vmatprep.subr.mxu0 %v3243
    %3254 = vmatpush1.msra.mxu0 %v3242
    %3255 = vmatprep.subr.mxu0 %v3246
    %3256 = vmatpush1.msra.mxu0 %v3245
    %3257 = vmatprep.subr.mxu0 %v3249
    %3258 = vmatpush1.msra.mxu0 %v3248
    %3259 = vmatprep.subr.mxu0 0.0
    %3260 = vmatpush1.msra.mxu0 0.0
    %3261 = vmatprep.subr.mxu0 0.0
    %3262 = vmatpush1.msra.mxu0 0.0
    %3263 = vmatprep.subr.mxu0 0.0
    %3264 = vmatpush1.msra.mxu0 0.0
    %3265 = vmatprep.subr.mxu0 0.0
    %3266 = vmatpush1.msra.mxu0 0.0
    %3267 = vmatprep.subr.mxu0 0.0
    %3268 = vmatpush1.msra.mxu0 0.0
    %3269 = vmatprep.subr.mxu0 0.0
    %3270 = vmatpush1.msra.mxu0 0.0
    %3271 = vmatprep.subr.mxu0 0.0
    %3272 = vmatpush1.msra.mxu0 0.0
    %3273 = vmatprep.subr.mxu0 0.0
    %3274 = vmatpush1.msra.mxu0 0.0
    %3275 = vmatprep.subr.mxu0 0.0
    %3276 = vmatpush1.msra.mxu0 0.0
    %3277 = vmatprep.subr.mxu0 0.0
    %3278 = vmatpush1.msra.mxu0 0.0
    %3279 = vmatprep.subr.mxu0 0.0
    %3280 = vmatpush1.msra.mxu0 0.0
    %3281 = vmatprep.subr.mxu0 0.0
    %3282 = vmatpush1.msra.mxu0 0.0
    %3283 = vmatprep.subr.mxu0 0.0
    %3284 = vmatpush1.msra.mxu0 0.0
    %3285 = vmatprep.subr.mxu0 0.0
    %3286 = vmatpush1.msra.mxu0 0.0
    %3287 = vmatprep.subr.mxu0 0.0
    %3288 = vmatpush1.msra.mxu0 0.0
    %3289 = vmatprep.subr.mxu0 0.0
    %3290 = vmatpush1.msra.mxu0 0.0
    %3291 = vmatprep.subr.mxu0 0.0
    %3292 = vmatpush1.msra.mxu0 0.0
    %3293 = vmatprep.subr.mxu0 0.0
    %3294 = vmatpush1.msra.mxu0 0.0
    %3295 = vmatprep.subr.mxu0 0.0
    %3296 = vmatpush1.msra.mxu0 0.0
    %3297 = vmatprep.subr.mxu0 0.0
    %3298 = vmatpush1.msra.mxu0 0.0
    %3299 = vmatprep.subr.mxu0 0.0
    %3300 = vmatpush1.msra.mxu0 0.0
    %3301 = vmatprep.subr.mxu0 0.0
    %3302 = vmatpush1.msra.mxu0 0.0
    %3303 = vmatprep.subr.mxu0 0.0
    %3304 = vmatpush1.msra.mxu0 0.0
    %3305 = vmatprep.subr.mxu0 0.0
    %3306 = vmatpush1.msra.mxu0 0.0
    %3307 = vmatprep.subr.mxu0 0.0
    %3308 = vmatpush1.msra.mxu0 0.0
    %3309 = vmatprep.subr.mxu0 0.0
    %3310 = vmatpush1.msra.mxu0 0.0
    %3311 = vmatprep.subr.mxu0 0.0
    %3312 = vmatpush1.msra.mxu0 0.0
    %3313 = vmatprep.subr.mxu0 0.0
    %3314 = vmatpush1.msra.mxu0 0.0
    %3315 = vmatprep.mubr.f32.mxu0 0.0
    %3316 = vmatmul.mubr.f32.gmra.mrb[0].mxu0 %v468
    %v3317 = vpop.f32.mrb[0].mxu0
    %v3318 = vadd.f32 0.0, %v3317
    %v3319 = vpop.f32.mrb[0].mxu0
    %v3320 = vadd.f32 0.0, %v3319
    %3321 = vmatprep.mubr.f32.mxu0 0.0
    %3322 = vmatmul.mubr.f32.gmra.mrb[0].mxu0 %v471
    %v3323 = vpop.f32.mrb[0].mxu0
    %v3324 = vadd.f32 0.0, %v3323
    %v3325 = vpop.f32.mrb[0].mxu0
    %v3326 = vadd.f32 0.0, %v3325
    %3327 = vdwg.mxu0
    %3328 = vmatprep.subr.mxu0 0.0
    %3329 = vmatpush1.msra.mxu0 %v3241
    %3330 = vmatprep.subr.mxu0 0.0
    %3331 = vmatpush1.msra.mxu0 %v3244
    %3332 = vmatprep.subr.mxu0 0.0
    %3333 = vmatpush1.msra.mxu0 %v3247
    %3334 = vmatprep.subr.mxu0 0.0
    %3335 = vmatpush1.msra.mxu0 %v3250
    %3336 = vmatprep.subr.mxu0 0.0
    %3337 = vmatpush1.msra.mxu0 0.0
    %3338 = vmatprep.subr.mxu0 0.0
    %3339 = vmatpush1.msra.mxu0 0.0
    %3340 = vmatprep.subr.mxu0 0.0
    %3341 = vmatpush1.msra.mxu0 0.0
    %3342 = vmatprep.subr.mxu0 0.0
    %3343 = vmatpush1.msra.mxu0 0.0
    %3344 = vmatprep.subr.mxu0 0.0
    %3345 = vmatpush1.msra.mxu0 0.0
    %3346 = vmatprep.subr.mxu0 0.0
    %3347 = vmatpush1.msra.mxu0 0.0
    %3348 = vmatprep.subr.mxu0 0.0
    %3349 = vmatpush1.msra.mxu0 0.0
    %3350 = vmatprep.subr.mxu0 0.0
    %3351 = vmatpush1.msra.mxu0 0.0
    %3352 = vmatprep.subr.mxu0 0.0
    %3353 = vmatpush1.msra.mxu0 0.0
    %3354 = vmatprep.subr.mxu0 0.0
    %3355 = vmatpush1.msra.mxu0 0.0
    %3356 = vmatprep.subr.mxu0 0.0
    %3357 = vmatpush1.msra.mxu0 0.0
    %3358 = vmatprep.subr.mxu0 0.0
    %3359 = vmatpush1.msra.mxu0 0.0
    %3360 = vmatprep.subr.mxu0 0.0
    %3361 = vmatpush1.msra.mxu0 0.0
    %3362 = vmatprep.subr.mxu0 0.0
    %3363 = vmatpush1.msra.mxu0 0.0
    %3364 = vmatprep.subr.mxu0 0.0
    %3365 = vmatpush1.msra.mxu0 0.0
    %3366 = vmatprep.subr.mxu0 0.0
    %3367 = vmatpush1.msra.mxu0 0.0
    %3368 = vmatprep.subr.mxu0 0.0
    %3369 = vmatpush1.msra.mxu0 0.0
    %3370 = vmatprep.subr.mxu0 0.0
    %3371 = vmatpush1.msra.mxu0 0.0
    %3372 = vmatprep.subr.mxu0 0.0
    %3373 = vmatpush1.msra.mxu0 0.0
    %3374 = vmatprep.subr.mxu0 0.0
    %3375 = vmatpush1.msra.mxu0 0.0
    %3376 = vmatprep.subr.mxu0 0.0
    %3377 = vmatpush1.msra.mxu0 0.0
    %3378 = vmatprep.subr.mxu0 0.0
    %3379 = vmatpush1.msra.mxu0 0.0
    %3380 = vmatprep.subr.mxu0 0.0
    %3381 = vmatpush1.msra.mxu0 0.0
    %3382 = vmatprep.subr.mxu0 0.0
    %3383 = vmatpush1.msra.mxu0 0.0
    %3384 = vmatprep.subr.mxu0 0.0
    %3385 = vmatpush1.msra.mxu0 0.0
    %3386 = vmatprep.subr.mxu0 0.0
    %3387 = vmatpush1.msra.mxu0 0.0
    %3388 = vmatprep.subr.mxu0 0.0
    %3389 = vmatpush1.msra.mxu0 0.0
    %3390 = vmatprep.subr.mxu0 0.0
    %3391 = vmatpush1.msra.mxu0 0.0
    %3392 = vmatprep.mubr.f32.mxu0 0.0
    %3393 = vmatmul.mubr.f32.gmra.mrb[0].mxu0 %v468
    %v3394 = vpop.f32.mrb[0].mxu0
    %v3395 = vadd.f32 0.0, %v3394
    %v3396 = vpop.f32.mrb[0].mxu0
    %3397 = vmatprep.mubr.f32.mxu0 0.0
    %3398 = vmatmul.mubr.f32.gmra.mrb[0].mxu0 %v471
    %v3399 = vpop.f32.mrb[0].mxu0
    %v3400 = vadd.f32 0.0, %v3399
    %v3401 = vpop.f32.mrb[0].mxu0
    %3402 = vdwg.mxu0
    %v3403 = vlaneseq
    %v3404 = vshrl.u32 %v3403, 7
    %v3405 = vsub.s32 0, %v3404
    %v3406 = vrot.slane %v3318, %v3405
    %v3407 = vlaneseq
    %v3408 = vshrl.u32 %v3407, 7
    %v3409 = vsub.s32 0, %v3408
    %v3410 = vrot.slane %v3320, %v3409
    %v3411 = vlaneseq
    %v3412 = vshrl.u32 %v3411, 7
    %v3413 = vsub.s32 0, %v3412
    %v3414 = vrot.slane %v3395, %v3413
    %v3415 = vmul.f32 %v3406, %v2904
    %v3416 = vmul.f32 %v3410, %v2905
    %v3417 = vmul.f32 %v3414, %v2906
    %v3418 = vlaneseq
    %v3419 = vshrl.u32 %v3418, 7
    %v3420 = vsub.s32 1, %v3419
    %v3421 = vrot.slane %v3318, %v3420
    %v3422 = vlaneseq
    %v3423 = vshrl.u32 %v3422, 7
    %v3424 = vsub.s32 1, %v3423
    %v3425 = vrot.slane %v3320, %v3424
    %v3426 = vlaneseq
    %v3427 = vshrl.u32 %v3426, 7
    %v3428 = vsub.s32 1, %v3427
    %v3429 = vrot.slane %v3395, %v3428
    %v3430 = vmul.f32 %v3421, %v2910
    %v3431 = vmul.f32 %v3425, %v2911
    %v3432 = vmul.f32 %v3429, %v2912
    %v3433 = vadd.f32 %v3415, %v3430
    %v3434 = vadd.f32 %v3416, %v3431
    %v3435 = vadd.f32 %v3417, %v3432
    %v3436 = vlaneseq
    %v3437 = vshrl.u32 %v3436, 7
    %v3438 = vsub.s32 2, %v3437
    %v3439 = vrot.slane %v3318, %v3438
    %v3440 = vlaneseq
    %v3441 = vshrl.u32 %v3440, 7
    %v3442 = vsub.s32 2, %v3441
    %v3443 = vrot.slane %v3320, %v3442
    %v3444 = vlaneseq
    %v3445 = vshrl.u32 %v3444, 7
    %v3446 = vsub.s32 2, %v3445
    %v3447 = vrot.slane %v3395, %v3446
    %v3448 = vmul.f32 %v3439, %v2916
    %v3449 = vmul.f32 %v3443, %v2917
    %v3450 = vmul.f32 %v3447, %v2918
    %v3451 = vadd.f32 %v3433, %v3448
    %v3452 = vadd.f32 %v3434, %v3449
    %v3453 = vadd.f32 %v3435, %v3450
    %v3456 = vcombine.low %v3451, %v3452
    %s3458 = scalar_lea.vmem %s8, 144
    %3459 = vst [vmem:[%s3458] sm:$0x77] %v3456
    %3460 = vst [vmem:[%s3458 + $0x8] sm:$0x7] %v3453
    %v3461 = vlaneseq
    %v3462 = vshrl.u32 %v3461, 7
    %v3463 = vsub.s32 3, %v3462
    %v3464 = vrot.slane %v3318, %v3463
    %v3465 = vlaneseq
    %v3466 = vshrl.u32 %v3465, 7
    %v3467 = vsub.s32 3, %v3466
    %v3468 = vrot.slane %v3320, %v3467
    %v3469 = vlaneseq
    %v3470 = vshrl.u32 %v3469, 7
    %v3471 = vsub.s32 3, %v3470
    %v3472 = vrot.slane %v3395, %v3471
    %v3473 = vmul.f32 %v3464, %v2904
    %v3474 = vmul.f32 %v3468, %v2905
    %v3475 = vmul.f32 %v3472, %v2906
    %v3476 = vlaneseq
    %v3477 = vshrl.u32 %v3476, 7
    %v3478 = vsub.s32 4, %v3477
    %v3479 = vrot.slane %v3318, %v3478
    %v3480 = vlaneseq
    %v3481 = vshrl.u32 %v3480, 7
    %v3482 = vsub.s32 4, %v3481
    %v3483 = vrot.slane %v3320, %v3482
    %v3484 = vlaneseq
    %v3485 = vshrl.u32 %v3484, 7
    %v3486 = vsub.s32 4, %v3485
    %v3487 = vrot.slane %v3395, %v3486
    %v3488 = vmul.f32 %v3479, %v2910
    %v3489 = vmul.f32 %v3483, %v2911
    %v3490 = vmul.f32 %v3487, %v2912
    %v3491 = vadd.f32 %v3473, %v3488
    %v3492 = vadd.f32 %v3474, %v3489
    %v3493 = vadd.f32 %v3475, %v3490
    %v3494 = vlaneseq
    %v3495 = vshrl.u32 %v3494, 7
    %v3496 = vsub.s32 5, %v3495
    %v3497 = vrot.slane %v3318, %v3496
    %v3498 = vlaneseq
    %v3499 = vshrl.u32 %v3498, 7
    %v3500 = vsub.s32 5, %v3499
    %v3501 = vrot.slane %v3320, %v3500
    %v3502 = vlaneseq
    %v3503 = vshrl.u32 %v3502, 7
    %v3504 = vsub.s32 5, %v3503
    %v3505 = vrot.slane %v3395, %v3504
    %v3506 = vmul.f32 %v3497, %v2916
    %v3507 = vmul.f32 %v3501, %v2917
    %v3508 = vmul.f32 %v3505, %v2918
    %v3509 = vadd.f32 %v3491, %v3506
    %v3510 = vadd.f32 %v3492, %v3507
    %v3511 = vadd.f32 %v3493, %v3508
    %v3514 = vcombine.low %v3509, %v3510
    %s3516 = scalar_lea.vmem %s8, 156
    %3517 = vst [vmem:[%s3516] sm:$0x77] %v3514
    %3518 = vst [vmem:[%s3516 + $0x8] sm:$0x7] %v3511
    %v3519 = vlaneseq
    %v3520 = vshrl.u32 %v3519, 7
    %v3521 = vsub.s32 6, %v3520
    %v3522 = vrot.slane %v3318, %v3521
    %v3523 = vlaneseq
    %v3524 = vshrl.u32 %v3523, 7
    %v3525 = vsub.s32 6, %v3524
    %v3526 = vrot.slane %v3320, %v3525
    %v3527 = vlaneseq
    %v3528 = vshrl.u32 %v3527, 7
    %v3529 = vsub.s32 6, %v3528
    %v3530 = vrot.slane %v3395, %v3529
    %v3531 = vmul.f32 %v3522, %v2904
    %v3532 = vmul.f32 %v3526, %v2905
    %v3533 = vmul.f32 %v3530, %v2906
    %v3534 = vlaneseq
    %v3535 = vshrl.u32 %v3534, 7
    %v3536 = vsub.s32 7, %v3535
    %v3537 = vrot.slane %v3318, %v3536
    %v3538 = vlaneseq
    %v3539 = vshrl.u32 %v3538, 7
    %v3540 = vsub.s32 7, %v3539
    %v3541 = vrot.slane %v3320, %v3540
    %v3542 = vlaneseq
    %v3543 = vshrl.u32 %v3542, 7
    %v3544 = vsub.s32 7, %v3543
    %v3545 = vrot.slane %v3395, %v3544
    %v3546 = vmul.f32 %v3537, %v2910
    %v3547 = vmul.f32 %v3541, %v2911
    %v3548 = vmul.f32 %v3545, %v2912
    %v3549 = vadd.f32 %v3531, %v3546
    %v3550 = vadd.f32 %v3532, %v3547
    %v3551 = vadd.f32 %v3533, %v3548
    %v3552 = vlaneseq
    %v3553 = vshrl.u32 %v3552, 7
    %v3554 = vsub.s32 0, %v3553
    %v3555 = vrot.slane %v3324, %v3554
    %v3556 = vlaneseq
    %v3557 = vshrl.u32 %v3556, 7
    %v3558 = vsub.s32 0, %v3557
    %v3559 = vrot.slane %v3326, %v3558
    %v3560 = vlaneseq
    %v3561 = vshrl.u32 %v3560, 7
    %v3562 = vsub.s32 0, %v3561
    %v3563 = vrot.slane %v3400, %v3562
    %v3564 = vmul.f32 %v3555, %v2916
    %v3565 = vmul.f32 %v3559, %v2917
    %v3566 = vmul.f32 %v3563, %v2918
    %v3567 = vadd.f32 %v3549, %v3564
    %v3568 = vadd.f32 %v3550, %v3565
    %v3569 = vadd.f32 %v3551, %v3566
    %v3572 = vcombine.low %v3567, %v3568
    %s3574 = scalar_lea.vmem %s8, 168
    %3575 = vst [vmem:[%s3574] sm:$0x77] %v3572
    %3576 = vst [vmem:[%s3574 + $0x8] sm:$0x7] %v3569
    %v3577 = vmul.f32 %v3153, 0.25
    %v3578 = vmul.f32 %v3155, 0.25
    %v3579 = vmul.f32 %v3224, 0.25
    %v3582 = vcombine.low %v3577, %v3578
    %v3584 = vadd.f32 %v2889, %v3582
    %v3585 = vadd.f32 %v2890, %v3579
    %s3586 = scalar_lea.vmem [#allocation2], 60
    %3587 = vst [vmem:[%s3586] sm:$0x77] %v3584
    %3588 = vst [vmem:[%s3586 + $0x8] sm:$0x7] %v3585
    %v3591 = vcombine.low %v3153, %v3155
    %s3593 = scalar_lea.vmem %s7, 48
    %3594 = vst [vmem:[%s3593] sm:$0x77] %v3591
    %3595 = vst [vmem:[%s3593 + $0x8] sm:$0x7] %v3224
    %v3596 = vmul.f32 %v3451, 0.25
    %v3597 = vmul.f32 %v3452, 0.25
    %v3598 = vmul.f32 %v3453, 0.25
    %v3599 = vadd.f32 %v2904, %v3596
    %v3600 = vadd.f32 %v2905, %v3597
    %v3601 = vadd.f32 %v2906, %v3598
    %v3602 = vmul.f32 %v3509, 0.25
    %v3603 = vmul.f32 %v3510, 0.25
    %v3604 = vmul.f32 %v3511, 0.25
    %v3605 = vadd.f32 %v2910, %v3602
    %v3606 = vadd.f32 %v2911, %v3603
    %v3607 = vadd.f32 %v2912, %v3604
    %v3608 = vmul.f32 %v3567, 0.25
    %v3609 = vmul.f32 %v3568, 0.25
    %v3610 = vmul.f32 %v3569, 0.25
    %v3611 = vadd.f32 %v2916, %v3608
    %v3612 = vadd.f32 %v2917, %v3609
    %v3613 = vadd.f32 %v2918, %v3610
    %v3616 = vlaneseq
    %v3617 = vshrl.u32 %v3616, 7
    %v3618 = vsub.s32 0, %v3617
    %v3619 = vrot.slane %v3584, %v3618
    %v3620 = vlaneseq
    %v3621 = vshrl.u32 %v3620, 7
    %v3622 = vsub.s32 4, %v3621
    %v3623 = vrot.slane %v3584, %v3622
    %v3624 = vlaneseq
    %v3625 = vshrl.u32 %v3624, 7
    %v3626 = vsub.s32 0, %v3625
    %v3627 = vrot.slane %v3585, %v3626
    %v3631 = vlaneseq
    %v3632 = vshrl.u32 %v3631, 7
    %v3633 = vsub.s32 0, %v3632
    %v3634 = vrot.slane %v3619, %v3633
    %v3635 = vlaneseq
    %v3636 = vshrl.u32 %v3635, 7
    %v3637 = vsub.s32 0, %v3636
    %v3638 = vrot.slane %v3623, %v3637
    %v3639 = vlaneseq
    %v3640 = vshrl.u32 %v3639, 7
    %v3641 = vsub.s32 0, %v3640
    %v3642 = vrot.slane %v3627, %v3641
    %v3643 = vmul.f32 %v77, %v3634
    %v3644 = vmul.f32 %v77, %v3638
    %v3645 = vmul.f32 %v77, %v3642
    %v3646 = vmul.f32 %v82, %v3634
    %v3647 = vmul.f32 %v82, %v3638
    %v3648 = vmul.f32 %v82, %v3642
    %v3649 = vmul.f32 %v87, %v3634
    %v3650 = vmul.f32 %v87, %v3638
    %v3651 = vmul.f32 %v87, %v3642
    %v3652 = vmul.f32 %v92, %v3634
    %v3653 = vmul.f32 %v92, %v3638
    %v3654 = vmul.f32 %v92, %v3642
    %v3655 = vadd.f32 %v40, %v3643
    %v3656 = vadd.f32 %v40, %v3644
    %v3657 = vadd.f32 %v40, %v3645
    %v3658 = vadd.f32 %v45, %v3646
    %v3659 = vadd.f32 %v45, %v3647
    %v3660 = vadd.f32 %v45, %v3648
    %v3661 = vadd.f32 %v50, %v3649
    %v3662 = vadd.f32 %v50, %v3650
    %v3663 = vadd.f32 %v50, %v3651
    %v3664 = vadd.f32 %v55, %v3652
    %v3665 = vadd.f32 %v55, %v3653
    %v3666 = vadd.f32 %v55, %v3654
    %v3667 = vlaneseq
    %v3668 = vshrl.u32 %v3667, 7
    %v3669 = vsub.s32 1, %v3668
    %v3670 = vrot.slane %v3584, %v3669
    %v3671 = vlaneseq
    %v3672 = vshrl.u32 %v3671, 7
    %v3673 = vsub.s32 5, %v3672
    %v3674 = vrot.slane %v3584, %v3673
    %v3675 = vlaneseq
    %v3676 = vshrl.u32 %v3675, 7
    %v3677 = vsub.s32 1, %v3676
    %v3678 = vrot.slane %v3585, %v3677
    %v3682 = vlaneseq
    %v3683 = vshrl.u32 %v3682, 7
    %v3684 = vsub.s32 1, %v3683
    %v3685 = vrot.slane %v3670, %v3684
    %v3686 = vlaneseq
    %v3687 = vshrl.u32 %v3686, 7
    %v3688 = vsub.s32 1, %v3687
    %v3689 = vrot.slane %v3674, %v3688
    %v3690 = vlaneseq
    %v3691 = vshrl.u32 %v3690, 7
    %v3692 = vsub.s32 1, %v3691
    %v3693 = vrot.slane %v3678, %v3692
    %v3694 = vmul.f32 %v149, %v3685
    %v3695 = vmul.f32 %v149, %v3689
    %v3696 = vmul.f32 %v149, %v3693
    %v3697 = vmul.f32 %v153, %v3685
    %v3698 = vmul.f32 %v153, %v3689
    %v3699 = vmul.f32 %v153, %v3693
    %v3700 = vmul.f32 %v157, %v3685
    %v3701 = vmul.f32 %v157, %v3689
    %v3702 = vmul.f32 %v157, %v3693
    %v3703 = vmul.f32 %v161, %v3685
    %v3704 = vmul.f32 %v161, %v3689
    %v3705 = vmul.f32 %v161, %v3693
    %v3706 = vadd.f32 %v3655, %v3694
    %v3707 = vadd.f32 %v3656, %v3695
    %v3708 = vadd.f32 %v3657, %v3696
    %v3709 = vadd.f32 %v3658, %v3697
    %v3710 = vadd.f32 %v3659, %v3698
    %v3711 = vadd.f32 %v3660, %v3699
    %v3712 = vadd.f32 %v3661, %v3700
    %v3713 = vadd.f32 %v3662, %v3701
    %v3714 = vadd.f32 %v3663, %v3702
    %v3715 = vadd.f32 %v3664, %v3703
    %v3716 = vadd.f32 %v3665, %v3704
    %v3717 = vadd.f32 %v3666, %v3705
    %v3718 = vlaneseq
    %v3719 = vshrl.u32 %v3718, 7
    %v3720 = vsub.s32 2, %v3719
    %v3721 = vrot.slane %v3584, %v3720
    %v3722 = vlaneseq
    %v3723 = vshrl.u32 %v3722, 7
    %v3724 = vsub.s32 6, %v3723
    %v3725 = vrot.slane %v3584, %v3724
    %v3726 = vlaneseq
    %v3727 = vshrl.u32 %v3726, 7
    %v3728 = vsub.s32 2, %v3727
    %v3729 = vrot.slane %v3585, %v3728
    %v3733 = vlaneseq
    %v3734 = vshrl.u32 %v3733, 7
    %v3735 = vsub.s32 2, %v3734
    %v3736 = vrot.slane %v3721, %v3735
    %v3737 = vlaneseq
    %v3738 = vshrl.u32 %v3737, 7
    %v3739 = vsub.s32 2, %v3738
    %v3740 = vrot.slane %v3725, %v3739
    %v3741 = vlaneseq
    %v3742 = vshrl.u32 %v3741, 7
    %v3743 = vsub.s32 2, %v3742
    %v3744 = vrot.slane %v3729, %v3743
    %v3745 = vmul.f32 %v216, %v3736
    %v3746 = vmul.f32 %v216, %v3740
    %v3747 = vmul.f32 %v216, %v3744
    %v3748 = vmul.f32 %v220, %v3736
    %v3749 = vmul.f32 %v220, %v3740
    %v3750 = vmul.f32 %v220, %v3744
    %v3751 = vmul.f32 %v224, %v3736
    %v3752 = vmul.f32 %v224, %v3740
    %v3753 = vmul.f32 %v224, %v3744
    %v3754 = vmul.f32 %v228, %v3736
    %v3755 = vmul.f32 %v228, %v3740
    %v3756 = vmul.f32 %v228, %v3744
    %v3757 = vadd.f32 %v3706, %v3745
    %v3758 = vadd.f32 %v3707, %v3746
    %v3759 = vadd.f32 %v3708, %v3747
    %v3760 = vadd.f32 %v3709, %v3748
    %v3761 = vadd.f32 %v3710, %v3749
    %v3762 = vadd.f32 %v3711, %v3750
    %v3763 = vadd.f32 %v3712, %v3751
    %v3764 = vadd.f32 %v3713, %v3752
    %v3765 = vadd.f32 %v3714, %v3753
    %v3766 = vadd.f32 %v3715, %v3754
    %v3767 = vadd.f32 %v3716, %v3755
    %v3768 = vadd.f32 %v3717, %v3756
    %v3769 = vtanh.pop %v3757
    %v3770 = vtanh.pop %v3758
    %v3771 = vtanh.pop %v3759
    %v3772 = vtanh.pop %v3760
    %v3773 = vtanh.pop %v3761
    %v3774 = vtanh.pop %v3762
    %v3775 = vtanh.pop %v3763
    %v3776 = vtanh.pop %v3764
    %v3777 = vtanh.pop %v3765
    %v3778 = vtanh.pop %v3766
    %v3779 = vtanh.pop %v3767
    %v3780 = vtanh.pop %v3768
    %3781 = vmatprep.subr.mxu0 %v3770
    %3782 = vmatpush1.msra.mxu0 %v3769
    %3783 = vmatprep.subr.mxu0 %v3773
    %3784 = vmatpush1.msra.mxu0 %v3772
    %3785 = vmatprep.subr.mxu0 %v3776
    %3786 = vmatpush1.msra.mxu0 %v3775
    %3787 = vmatprep.subr.mxu0 %v3779
    %3788 = vmatpush1.msra.mxu0 %v3778
    %3789 = vmatprep.subr.mxu0 0.0
    %3790 = vmatpush1.msra.mxu0 0.0
    %3791 = vmatprep.subr.mxu0 0.0
    %3792 = vmatpush1.msra.mxu0 0.0
    %3793 = vmatprep.subr.mxu0 0.0
    %3794 = vmatpush1.msra.mxu0 0.0
    %3795 = vmatprep.subr.mxu0 0.0
    %3796 = vmatpush1.msra.mxu0 0.0
    %3797 = vmatprep.subr.mxu0 0.0
    %3798 = vmatpush1.msra.mxu0 0.0
    %3799 = vmatprep.subr.mxu0 0.0
    %3800 = vmatpush1.msra.mxu0 0.0
    %3801 = vmatprep.subr.mxu0 0.0
    %3802 = vmatpush1.msra.mxu0 0.0
    %3803 = vmatprep.subr.mxu0 0.0
    %3804 = vmatpush1.msra.mxu0 0.0
    %3805 = vmatprep.subr.mxu0 0.0
    %3806 = vmatpush1.msra.mxu0 0.0
    %3807 = vmatprep.subr.mxu0 0.0
    %3808 = vmatpush1.msra.mxu0 0.0
    %3809 = vmatprep.subr.mxu0 0.0
    %3810 = vmatpush1.msra.mxu0 0.0
    %3811 = vmatprep.subr.mxu0 0.0
    %3812 = vmatpush1.msra.mxu0 0.0
    %3813 = vmatprep.subr.mxu0 0.0
    %3814 = vmatpush1.msra.mxu0 0.0
    %3815 = vmatprep.subr.mxu0 0.0
    %3816 = vmatpush1.msra.mxu0 0.0
    %3817 = vmatprep.subr.mxu0 0.0
    %3818 = vmatpush1.msra.mxu0 0.0
    %3819 = vmatprep.subr.mxu0 0.0
    %3820 = vmatpush1.msra.mxu0 0.0
    %3821 = vmatprep.subr.mxu0 0.0
    %3822 = vmatpush1.msra.mxu0 0.0
    %3823 = vmatprep.subr.mxu0 0.0
    %3824 = vmatpush1.msra.mxu0 0.0
    %3825 = vmatprep.subr.mxu0 0.0
    %3826 = vmatpush1.msra.mxu0 0.0
    %3827 = vmatprep.subr.mxu0 0.0
    %3828 = vmatpush1.msra.mxu0 0.0
    %3829 = vmatprep.subr.mxu0 0.0
    %3830 = vmatpush1.msra.mxu0 0.0
    %3831 = vmatprep.subr.mxu0 0.0
    %3832 = vmatpush1.msra.mxu0 0.0
    %3833 = vmatprep.subr.mxu0 0.0
    %3834 = vmatpush1.msra.mxu0 0.0
    %3835 = vmatprep.subr.mxu0 0.0
    %3836 = vmatpush1.msra.mxu0 0.0
    %3837 = vmatprep.subr.mxu0 0.0
    %3838 = vmatpush1.msra.mxu0 0.0
    %3839 = vmatprep.subr.mxu0 0.0
    %3840 = vmatpush1.msra.mxu0 0.0
    %3841 = vmatprep.subr.mxu0 0.0
    %3842 = vmatpush1.msra.mxu0 0.0
    %3843 = vmatprep.subr.mxu0 0.0
    %3844 = vmatpush1.msra.mxu0 0.0
    %3845 = vmatprep.mubr.f32.mxu0 0.0
    %3846 = vmatmul.mubr.f32.gmra.mrb[0].mxu0 %v300
    %v3847 = vpop.f32.mrb[0].mxu0
    %v3848 = vadd.f32 %v296, %v3847
    %v3849 = vpop.f32.mrb[0].mxu0
    %v3850 = vadd.f32 %v296, %v3849
    %3851 = vdwg.mxu0
    %3852 = vmatprep.subr.mxu0 0.0
    %3853 = vmatpush1.msra.mxu0 %v3771
    %3854 = vmatprep.subr.mxu0 0.0
    %3855 = vmatpush1.msra.mxu0 %v3774
    %3856 = vmatprep.subr.mxu0 0.0
    %3857 = vmatpush1.msra.mxu0 %v3777
    %3858 = vmatprep.subr.mxu0 0.0
    %3859 = vmatpush1.msra.mxu0 %v3780
    %3860 = vmatprep.subr.mxu0 0.0
    %3861 = vmatpush1.msra.mxu0 0.0
    %3862 = vmatprep.subr.mxu0 0.0
    %3863 = vmatpush1.msra.mxu0 0.0
    %3864 = vmatprep.subr.mxu0 0.0
    %3865 = vmatpush1.msra.mxu0 0.0
    %3866 = vmatprep.subr.mxu0 0.0
    %3867 = vmatpush1.msra.mxu0 0.0
    %3868 = vmatprep.subr.mxu0 0.0
    %3869 = vmatpush1.msra.mxu0 0.0
    %3870 = vmatprep.subr.mxu0 0.0
    %3871 = vmatpush1.msra.mxu0 0.0
    %3872 = vmatprep.subr.mxu0 0.0
    %3873 = vmatpush1.msra.mxu0 0.0
    %3874 = vmatprep.subr.mxu0 0.0
    %3875 = vmatpush1.msra.mxu0 0.0
    %3876 = vmatprep.subr.mxu0 0.0
    %3877 = vmatpush1.msra.mxu0 0.0
    %3878 = vmatprep.subr.mxu0 0.0
    %3879 = vmatpush1.msra.mxu0 0.0
    %3880 = vmatprep.subr.mxu0 0.0
    %3881 = vmatpush1.msra.mxu0 0.0
    %3882 = vmatprep.subr.mxu0 0.0
    %3883 = vmatpush1.msra.mxu0 0.0
    %3884 = vmatprep.subr.mxu0 0.0
    %3885 = vmatpush1.msra.mxu0 0.0
    %3886 = vmatprep.subr.mxu0 0.0
    %3887 = vmatpush1.msra.mxu0 0.0
    %3888 = vmatprep.subr.mxu0 0.0
    %3889 = vmatpush1.msra.mxu0 0.0
    %3890 = vmatprep.subr.mxu0 0.0
    %3891 = vmatpush1.msra.mxu0 0.0
    %3892 = vmatprep.subr.mxu0 0.0
    %3893 = vmatpush1.msra.mxu0 0.0
    %3894 = vmatprep.subr.mxu0 0.0
    %3895 = vmatpush1.msra.mxu0 0.0
    %3896 = vmatprep.subr.mxu0 0.0
    %3897 = vmatpush1.msra.mxu0 0.0
    %3898 = vmatprep.subr.mxu0 0.0
    %3899 = vmatpush1.msra.mxu0 0.0
    %3900 = vmatprep.subr.mxu0 0.0
    %3901 = vmatpush1.msra.mxu0 0.0
    %3902 = vmatprep.subr.mxu0 0.0
    %3903 = vmatpush1.msra.mxu0 0.0
    %3904 = vmatprep.subr.mxu0 0.0
    %3905 = vmatpush1.msra.mxu0 0.0
    %3906 = vmatprep.subr.mxu0 0.0
    %3907 = vmatpush1.msra.mxu0 0.0
    %3908 = vmatprep.subr.mxu0 0.0
    %3909 = vmatpush1.msra.mxu0 0.0
    %3910 = vmatprep.subr.mxu0 0.0
    %3911 = vmatpush1.msra.mxu0 0.0
    %3912 = vmatprep.subr.mxu0 0.0
    %3913 = vmatpush1.msra.mxu0 0.0
    %3914 = vmatprep.subr.mxu0 0.0
    %3915 = vmatpush1.msra.mxu0 0.0
    %3916 = vmatprep.mubr.f32.mxu0 0.0
    %3917 = vmatmul.mubr.f32.gmra.mrb[0].mxu0 %v300
    %v3918 = vpop.f32.mrb[0].mxu0
    %v3919 = vadd.f32 %v296, %v3918
    %v3920 = vpop.f32.mrb[0].mxu0
    %3921 = vdwg.mxu0
    %v3922 = vmul.f32 %v3769, %v3769
    %v3923 = vmul.f32 %v3770, %v3770
    %v3924 = vmul.f32 %v3771, %v3771
    %v3925 = vmul.f32 %v3772, %v3772
    %v3926 = vmul.f32 %v3773, %v3773
    %v3927 = vmul.f32 %v3774, %v3774
    %v3928 = vmul.f32 %v3775, %v3775
    %v3929 = vmul.f32 %v3776, %v3776
    %v3930 = vmul.f32 %v3777, %v3777
    %v3931 = vmul.f32 %v3778, %v3778
    %v3932 = vmul.f32 %v3779, %v3779
    %v3933 = vmul.f32 %v3780, %v3780
    %v3934 = vsub.f32 1.0, %v3922
    %v3935 = vsub.f32 1.0, %v3923
    %v3936 = vsub.f32 1.0, %v3924
    %v3937 = vsub.f32 1.0, %v3925
    %v3938 = vsub.f32 1.0, %v3926
    %v3939 = vsub.f32 1.0, %v3927
    %v3940 = vsub.f32 1.0, %v3928
    %v3941 = vsub.f32 1.0, %v3929
    %v3942 = vsub.f32 1.0, %v3930
    %v3943 = vsub.f32 1.0, %v3931
    %v3944 = vsub.f32 1.0, %v3932
    %v3945 = vsub.f32 1.0, %v3933
    %3946 = vmatprep.subr.mxu0 %v3935
    %3947 = vmatpush1.msra.mxu0 %v3934
    %3948 = vmatprep.subr.mxu0 %v3938
    %3949 = vmatpush1.msra.mxu0 %v3937
    %3950 = vmatprep.subr.mxu0 %v3941
    %3951 = vmatpush1.msra.mxu0 %v3940
    %3952 = vmatprep.subr.mxu0 %v3944
    %3953 = vmatpush1.msra.mxu0 %v3943
    %3954 = vmatprep.subr.mxu0 0.0
    %3955 = vmatpush1.msra.mxu0 0.0
    %3956 = vmatprep.subr.mxu0 0.0
    %3957 = vmatpush1.msra.mxu0 0.0
    %3958 = vmatprep.subr.mxu0 0.0
    %3959 = vmatpush1.msra.mxu0 0.0
    %3960 = vmatprep.subr.mxu0 0.0
    %3961 = vmatpush1.msra.mxu0 0.0
    %3962 = vmatprep.subr.mxu0 0.0
    %3963 = vmatpush1.msra.mxu0 0.0
    %3964 = vmatprep.subr.mxu0 0.0
    %3965 = vmatpush1.msra.mxu0 0.0
    %3966 = vmatprep.subr.mxu0 0.0
    %3967 = vmatpush1.msra.mxu0 0.0
    %3968 = vmatprep.subr.mxu0 0.0
    %3969 = vmatpush1.msra.mxu0 0.0
    %3970 = vmatprep.subr.mxu0 0.0
    %3971 = vmatpush1.msra.mxu0 0.0
    %3972 = vmatprep.subr.mxu0 0.0
    %3973 = vmatpush1.msra.mxu0 0.0
    %3974 = vmatprep.subr.mxu0 0.0
    %3975 = vmatpush1.msra.mxu0 0.0
    %3976 = vmatprep.subr.mxu0 0.0
    %3977 = vmatpush1.msra.mxu0 0.0
    %3978 = vmatprep.subr.mxu0 0.0
    %3979 = vmatpush1.msra.mxu0 0.0
    %3980 = vmatprep.subr.mxu0 0.0
    %3981 = vmatpush1.msra.mxu0 0.0
    %3982 = vmatprep.subr.mxu0 0.0
    %3983 = vmatpush1.msra.mxu0 0.0
    %3984 = vmatprep.subr.mxu0 0.0
    %3985 = vmatpush1.msra.mxu0 0.0
    %3986 = vmatprep.subr.mxu0 0.0
    %3987 = vmatpush1.msra.mxu0 0.0
    %3988 = vmatprep.subr.mxu0 0.0
    %3989 = vmatpush1.msra.mxu0 0.0
    %3990 = vmatprep.subr.mxu0 0.0
    %3991 = vmatpush1.msra.mxu0 0.0
    %3992 = vmatprep.subr.mxu0 0.0
    %3993 = vmatpush1.msra.mxu0 0.0
    %3994 = vmatprep.subr.mxu0 0.0
    %3995 = vmatpush1.msra.mxu0 0.0
    %3996 = vmatprep.subr.mxu0 0.0
    %3997 = vmatpush1.msra.mxu0 0.0
    %3998 = vmatprep.subr.mxu0 0.0
    %3999 = vmatpush1.msra.mxu0 0.0
    %4000 = vmatprep.subr.mxu0 0.0
    %4001 = vmatpush1.msra.mxu0 0.0
    %4002 = vmatprep.subr.mxu0 0.0
    %4003 = vmatpush1.msra.mxu0 0.0
    %4004 = vmatprep.subr.mxu0 0.0
    %4005 = vmatpush1.msra.mxu0 0.0
    %4006 = vmatprep.subr.mxu0 0.0
    %4007 = vmatpush1.msra.mxu0 0.0
    %4008 = vmatprep.subr.mxu0 0.0
    %4009 = vmatpush1.msra.mxu0 0.0
    %4010 = vmatprep.mubr.f32.mxu0 0.0
    %4011 = vmatmul.mubr.f32.gmra.mrb[0].mxu0 %v468
    %v4012 = vpop.f32.mrb[0].mxu0
    %v4013 = vadd.f32 0.0, %v4012
    %v4014 = vpop.f32.mrb[0].mxu0
    %v4015 = vadd.f32 0.0, %v4014
    %4016 = vmatprep.mubr.f32.mxu0 0.0
    %4017 = vmatmul.mubr.f32.gmra.mrb[0].mxu0 %v471
    %v4018 = vpop.f32.mrb[0].mxu0
    %v4019 = vadd.f32 0.0, %v4018
    %v4020 = vpop.f32.mrb[0].mxu0
    %v4021 = vadd.f32 0.0, %v4020
    %4022 = vdwg.mxu0
    %4023 = vmatprep.subr.mxu0 0.0
    %4024 = vmatpush1.msra.mxu0 %v3936
    %4025 = vmatprep.subr.mxu0 0.0
    %4026 = vmatpush1.msra.mxu0 %v3939
    %4027 = vmatprep.subr.mxu0 0.0
    %4028 = vmatpush1.msra.mxu0 %v3942
    %4029 = vmatprep.subr.mxu0 0.0
    %4030 = vmatpush1.msra.mxu0 %v3945
    %4031 = vmatprep.subr.mxu0 0.0
    %4032 = vmatpush1.msra.mxu0 0.0
    %4033 = vmatprep.subr.mxu0 0.0
    %4034 = vmatpush1.msra.mxu0 0.0
    %4035 = vmatprep.subr.mxu0 0.0
    %4036 = vmatpush1.msra.mxu0 0.0
    %4037 = vmatprep.subr.mxu0 0.0
    %4038 = vmatpush1.msra.mxu0 0.0
    %4039 = vmatprep.subr.mxu0 0.0
    %4040 = vmatpush1.msra.mxu0 0.0
    %4041 = vmatprep.subr.mxu0 0.0
    %4042 = vmatpush1.msra.mxu0 0.0
    %4043 = vmatprep.subr.mxu0 0.0
    %4044 = vmatpush1.msra.mxu0 0.0
    %4045 = vmatprep.subr.mxu0 0.0
    %4046 = vmatpush1.msra.mxu0 0.0
    %4047 = vmatprep.subr.mxu0 0.0
    %4048 = vmatpush1.msra.mxu0 0.0
    %4049 = vmatprep.subr.mxu0 0.0
    %4050 = vmatpush1.msra.mxu0 0.0
    %4051 = vmatprep.subr.mxu0 0.0
    %4052 = vmatpush1.msra.mxu0 0.0
    %4053 = vmatprep.subr.mxu0 0.0
    %4054 = vmatpush1.msra.mxu0 0.0
    %4055 = vmatprep.subr.mxu0 0.0
    %4056 = vmatpush1.msra.mxu0 0.0
    %4057 = vmatprep.subr.mxu0 0.0
    %4058 = vmatpush1.msra.mxu0 0.0
    %4059 = vmatprep.subr.mxu0 0.0
    %4060 = vmatpush1.msra.mxu0 0.0
    %4061 = vmatprep.subr.mxu0 0.0
    %4062 = vmatpush1.msra.mxu0 0.0
    %4063 = vmatprep.subr.mxu0 0.0
    %4064 = vmatpush1.msra.mxu0 0.0
    %4065 = vmatprep.subr.mxu0 0.0
    %4066 = vmatpush1.msra.mxu0 0.0
    %4067 = vmatprep.subr.mxu0 0.0
    %4068 = vmatpush1.msra.mxu0 0.0
    %4069 = vmatprep.subr.mxu0 0.0
    %4070 = vmatpush1.msra.mxu0 0.0
    %4071 = vmatprep.subr.mxu0 0.0
    %4072 = vmatpush1.msra.mxu0 0.0
    %4073 = vmatprep.subr.mxu0 0.0
    %4074 = vmatpush1.msra.mxu0 0.0
    %4075 = vmatprep.subr.mxu0 0.0
    %4076 = vmatpush1.msra.mxu0 0.0
    %4077 = vmatprep.subr.mxu0 0.0
    %4078 = vmatpush1.msra.mxu0 0.0
    %4079 = vmatprep.subr.mxu0 0.0
    %4080 = vmatpush1.msra.mxu0 0.0
    %4081 = vmatprep.subr.mxu0 0.0
    %4082 = vmatpush1.msra.mxu0 0.0
    %4083 = vmatprep.subr.mxu0 0.0
    %4084 = vmatpush1.msra.mxu0 0.0
    %4085 = vmatprep.subr.mxu0 0.0
    %4086 = vmatpush1.msra.mxu0 0.0
    %4087 = vmatprep.mubr.f32.mxu0 0.0
    %4088 = vmatmul.mubr.f32.gmra.mrb[0].mxu0 %v468
    %v4089 = vpop.f32.mrb[0].mxu0
    %v4090 = vadd.f32 0.0, %v4089
    %v4091 = vpop.f32.mrb[0].mxu0
    %4092 = vmatprep.mubr.f32.mxu0 0.0
    %4093 = vmatmul.mubr.f32.gmra.mrb[0].mxu0 %v471
    %v4094 = vpop.f32.mrb[0].mxu0
    %v4095 = vadd.f32 0.0, %v4094
    %v4096 = vpop.f32.mrb[0].mxu0
    %4097 = vdwg.mxu0
    %v4098 = vlaneseq
    %v4099 = vshrl.u32 %v4098, 7
    %v4100 = vsub.s32 0, %v4099
    %v4101 = vrot.slane %v4013, %v4100
    %v4102 = vlaneseq
    %v4103 = vshrl.u32 %v4102, 7
    %v4104 = vsub.s32 0, %v4103
    %v4105 = vrot.slane %v4015, %v4104
    %v4106 = vlaneseq
    %v4107 = vshrl.u32 %v4106, 7
    %v4108 = vsub.s32 0, %v4107
    %v4109 = vrot.slane %v4090, %v4108
    %v4110 = vmul.f32 %v4101, %v3599
    %v4111 = vmul.f32 %v4105, %v3600
    %v4112 = vmul.f32 %v4109, %v3601
    %v4113 = vlaneseq
    %v4114 = vshrl.u32 %v4113, 7
    %v4115 = vsub.s32 1, %v4114
    %v4116 = vrot.slane %v4013, %v4115
    %v4117 = vlaneseq
    %v4118 = vshrl.u32 %v4117, 7
    %v4119 = vsub.s32 1, %v4118
    %v4120 = vrot.slane %v4015, %v4119
    %v4121 = vlaneseq
    %v4122 = vshrl.u32 %v4121, 7
    %v4123 = vsub.s32 1, %v4122
    %v4124 = vrot.slane %v4090, %v4123
    %v4125 = vmul.f32 %v4116, %v3605
    %v4126 = vmul.f32 %v4120, %v3606
    %v4127 = vmul.f32 %v4124, %v3607
    %v4128 = vadd.f32 %v4110, %v4125
    %v4129 = vadd.f32 %v4111, %v4126
    %v4130 = vadd.f32 %v4112, %v4127
    %v4131 = vlaneseq
    %v4132 = vshrl.u32 %v4131, 7
    %v4133 = vsub.s32 2, %v4132
    %v4134 = vrot.slane %v4013, %v4133
    %v4135 = vlaneseq
    %v4136 = vshrl.u32 %v4135, 7
    %v4137 = vsub.s32 2, %v4136
    %v4138 = vrot.slane %v4015, %v4137
    %v4139 = vlaneseq
    %v4140 = vshrl.u32 %v4139, 7
    %v4141 = vsub.s32 2, %v4140
    %v4142 = vrot.slane %v4090, %v4141
    %v4143 = vmul.f32 %v4134, %v3611
    %v4144 = vmul.f32 %v4138, %v3612
    %v4145 = vmul.f32 %v4142, %v3613
    %v4146 = vadd.f32 %v4128, %v4143
    %v4147 = vadd.f32 %v4129, %v4144
    %v4148 = vadd.f32 %v4130, %v4145
    %v4151 = vcombine.low %v4146, %v4147
    %s4153 = scalar_lea.vmem %s8, 180
    %4154 = vst [vmem:[%s4153] sm:$0x77] %v4151
    %4155 = vst [vmem:[%s4153 + $0x8] sm:$0x7] %v4148
    %v4156 = vlaneseq
    %v4157 = vshrl.u32 %v4156, 7
    %v4158 = vsub.s32 3, %v4157
    %v4159 = vrot.slane %v4013, %v4158
    %v4160 = vlaneseq
    %v4161 = vshrl.u32 %v4160, 7
    %v4162 = vsub.s32 3, %v4161
    %v4163 = vrot.slane %v4015, %v4162
    %v4164 = vlaneseq
    %v4165 = vshrl.u32 %v4164, 7
    %v4166 = vsub.s32 3, %v4165
    %v4167 = vrot.slane %v4090, %v4166
    %v4168 = vmul.f32 %v4159, %v3599
    %v4169 = vmul.f32 %v4163, %v3600
    %v4170 = vmul.f32 %v4167, %v3601
    %v4171 = vlaneseq
    %v4172 = vshrl.u32 %v4171, 7
    %v4173 = vsub.s32 4, %v4172
    %v4174 = vrot.slane %v4013, %v4173
    %v4175 = vlaneseq
    %v4176 = vshrl.u32 %v4175, 7
    %v4177 = vsub.s32 4, %v4176
    %v4178 = vrot.slane %v4015, %v4177
    %v4179 = vlaneseq
    %v4180 = vshrl.u32 %v4179, 7
    %v4181 = vsub.s32 4, %v4180
    %v4182 = vrot.slane %v4090, %v4181
    %v4183 = vmul.f32 %v4174, %v3605
    %v4184 = vmul.f32 %v4178, %v3606
    %v4185 = vmul.f32 %v4182, %v3607
    %v4186 = vadd.f32 %v4168, %v4183
    %v4187 = vadd.f32 %v4169, %v4184
    %v4188 = vadd.f32 %v4170, %v4185
    %v4189 = vlaneseq
    %v4190 = vshrl.u32 %v4189, 7
    %v4191 = vsub.s32 5, %v4190
    %v4192 = vrot.slane %v4013, %v4191
    %v4193 = vlaneseq
    %v4194 = vshrl.u32 %v4193, 7
    %v4195 = vsub.s32 5, %v4194
    %v4196 = vrot.slane %v4015, %v4195
    %v4197 = vlaneseq
    %v4198 = vshrl.u32 %v4197, 7
    %v4199 = vsub.s32 5, %v4198
    %v4200 = vrot.slane %v4090, %v4199
    %v4201 = vmul.f32 %v4192, %v3611
    %v4202 = vmul.f32 %v4196, %v3612
    %v4203 = vmul.f32 %v4200, %v3613
    %v4204 = vadd.f32 %v4186, %v4201
    %v4205 = vadd.f32 %v4187, %v4202
    %v4206 = vadd.f32 %v4188, %v4203
    %v4209 = vcombine.low %v4204, %v4205
    %s4211 = scalar_lea.vmem %s8, 192
    %4212 = vst [vmem:[%s4211] sm:$0x77] %v4209
    %4213 = vst [vmem:[%s4211 + $0x8] sm:$0x7] %v4206
    %v4214 = vlaneseq
    %v4215 = vshrl.u32 %v4214, 7
    %v4216 = vsub.s32 6, %v4215
    %v4217 = vrot.slane %v4013, %v4216
    %v4218 = vlaneseq
    %v4219 = vshrl.u32 %v4218, 7
    %v4220 = vsub.s32 6, %v4219
    %v4221 = vrot.slane %v4015, %v4220
    %v4222 = vlaneseq
    %v4223 = vshrl.u32 %v4222, 7
    %v4224 = vsub.s32 6, %v4223
    %v4225 = vrot.slane %v4090, %v4224
    %v4226 = vmul.f32 %v4217, %v3599
    %v4227 = vmul.f32 %v4221, %v3600
    %v4228 = vmul.f32 %v4225, %v3601
    %v4229 = vlaneseq
    %v4230 = vshrl.u32 %v4229, 7
    %v4231 = vsub.s32 7, %v4230
    %v4232 = vrot.slane %v4013, %v4231
    %v4233 = vlaneseq
    %v4234 = vshrl.u32 %v4233, 7
    %v4235 = vsub.s32 7, %v4234
    %v4236 = vrot.slane %v4015, %v4235
    %v4237 = vlaneseq
    %v4238 = vshrl.u32 %v4237, 7
    %v4239 = vsub.s32 7, %v4238
    %v4240 = vrot.slane %v4090, %v4239
    %v4241 = vmul.f32 %v4232, %v3605
    %v4242 = vmul.f32 %v4236, %v3606
    %v4243 = vmul.f32 %v4240, %v3607
    %v4244 = vadd.f32 %v4226, %v4241
    %v4245 = vadd.f32 %v4227, %v4242
    %v4246 = vadd.f32 %v4228, %v4243
    %v4247 = vlaneseq
    %v4248 = vshrl.u32 %v4247, 7
    %v4249 = vsub.s32 0, %v4248
    %v4250 = vrot.slane %v4019, %v4249
    %v4251 = vlaneseq
    %v4252 = vshrl.u32 %v4251, 7
    %v4253 = vsub.s32 0, %v4252
    %v4254 = vrot.slane %v4021, %v4253
    %v4255 = vlaneseq
    %v4256 = vshrl.u32 %v4255, 7
    %v4257 = vsub.s32 0, %v4256
    %v4258 = vrot.slane %v4095, %v4257
    %v4259 = vmul.f32 %v4250, %v3611
    %v4260 = vmul.f32 %v4254, %v3612
    %v4261 = vmul.f32 %v4258, %v3613
    %v4262 = vadd.f32 %v4244, %v4259
    %v4263 = vadd.f32 %v4245, %v4260
    %v4264 = vadd.f32 %v4246, %v4261
    %v4267 = vcombine.low %v4262, %v4263
    %s4269 = scalar_lea.vmem %s8, 204
    %4270 = vst [vmem:[%s4269] sm:$0x77] %v4267
    %4271 = vst [vmem:[%s4269 + $0x8] sm:$0x7] %v4264
    %v4272 = vmul.f32 %v3848, 0.25
    %v4273 = vmul.f32 %v3850, 0.25
    %v4274 = vmul.f32 %v3919, 0.25
    %v4277 = vcombine.low %v4272, %v4273
    %v4279 = vadd.f32 %v3584, %v4277
    %v4280 = vadd.f32 %v3585, %v4274
    %s4281 = scalar_lea.vmem [#allocation2], 72
    %4282 = vst [vmem:[%s4281] sm:$0x77] %v4279
    %4283 = vst [vmem:[%s4281 + $0x8] sm:$0x7] %v4280
    %v4286 = vcombine.low %v3848, %v3850
    %s4288 = scalar_lea.vmem %s7, 60
    %4289 = vst [vmem:[%s4288] sm:$0x77] %v4286
    %4290 = vst [vmem:[%s4288 + $0x8] sm:$0x7] %v3919
    %v4291 = vmul.f32 %v4146, 0.25
    %v4292 = vmul.f32 %v4147, 0.25
    %v4293 = vmul.f32 %v4148, 0.25
    %v4294 = vadd.f32 %v3599, %v4291
    %v4295 = vadd.f32 %v3600, %v4292
    %v4296 = vadd.f32 %v3601, %v4293
    %v4297 = vmul.f32 %v4204, 0.25
    %v4298 = vmul.f32 %v4205, 0.25
    %v4299 = vmul.f32 %v4206, 0.25
    %v4300 = vadd.f32 %v3605, %v4297
    %v4301 = vadd.f32 %v3606, %v4298
    %v4302 = vadd.f32 %v3607, %v4299
    %v4303 = vmul.f32 %v4262, 0.25
    %v4304 = vmul.f32 %v4263, 0.25
    %v4305 = vmul.f32 %v4264, 0.25
    %v4306 = vadd.f32 %v3611, %v4303
    %v4307 = vadd.f32 %v3612, %v4304
    %v4308 = vadd.f32 %v3613, %v4305
    %v4311 = vlaneseq
    %v4312 = vshrl.u32 %v4311, 7
    %v4313 = vsub.s32 0, %v4312
    %v4314 = vrot.slane %v4279, %v4313
    %v4315 = vlaneseq
    %v4316 = vshrl.u32 %v4315, 7
    %v4317 = vsub.s32 4, %v4316
    %v4318 = vrot.slane %v4279, %v4317
    %v4319 = vlaneseq
    %v4320 = vshrl.u32 %v4319, 7
    %v4321 = vsub.s32 0, %v4320
    %v4322 = vrot.slane %v4280, %v4321
    %v4326 = vlaneseq
    %v4327 = vshrl.u32 %v4326, 7
    %v4328 = vsub.s32 0, %v4327
    %v4329 = vrot.slane %v4314, %v4328
    %v4330 = vlaneseq
    %v4331 = vshrl.u32 %v4330, 7
    %v4332 = vsub.s32 0, %v4331
    %v4333 = vrot.slane %v4318, %v4332
    %v4334 = vlaneseq
    %v4335 = vshrl.u32 %v4334, 7
    %v4336 = vsub.s32 0, %v4335
    %v4337 = vrot.slane %v4322, %v4336
    %v4338 = vmul.f32 %v77, %v4329
    %v4339 = vmul.f32 %v77, %v4333
    %v4340 = vmul.f32 %v77, %v4337
    %v4341 = vmul.f32 %v82, %v4329
    %v4342 = vmul.f32 %v82, %v4333
    %v4343 = vmul.f32 %v82, %v4337
    %v4344 = vmul.f32 %v87, %v4329
    %v4345 = vmul.f32 %v87, %v4333
    %v4346 = vmul.f32 %v87, %v4337
    %v4347 = vmul.f32 %v92, %v4329
    %v4348 = vmul.f32 %v92, %v4333
    %v4349 = vmul.f32 %v92, %v4337
    %v4350 = vadd.f32 %v40, %v4338
    %v4351 = vadd.f32 %v40, %v4339
    %v4352 = vadd.f32 %v40, %v4340
    %v4353 = vadd.f32 %v45, %v4341
    %v4354 = vadd.f32 %v45, %v4342
    %v4355 = vadd.f32 %v45, %v4343
    %v4356 = vadd.f32 %v50, %v4344
    %v4357 = vadd.f32 %v50, %v4345
    %v4358 = vadd.f32 %v50, %v4346
    %v4359 = vadd.f32 %v55, %v4347
    %v4360 = vadd.f32 %v55, %v4348
    %v4361 = vadd.f32 %v55, %v4349
    %v4362 = vlaneseq
    %v4363 = vshrl.u32 %v4362, 7
    %v4364 = vsub.s32 1, %v4363
    %v4365 = vrot.slane %v4279, %v4364
    %v4366 = vlaneseq
    %v4367 = vshrl.u32 %v4366, 7
    %v4368 = vsub.s32 5, %v4367
    %v4369 = vrot.slane %v4279, %v4368
    %v4370 = vlaneseq
    %v4371 = vshrl.u32 %v4370, 7
    %v4372 = vsub.s32 1, %v4371
    %v4373 = vrot.slane %v4280, %v4372
    %v4377 = vlaneseq
    %v4378 = vshrl.u32 %v4377, 7
    %v4379 = vsub.s32 1, %v4378
    %v4380 = vrot.slane %v4365, %v4379
    %v4381 = vlaneseq
    %v4382 = vshrl.u32 %v4381, 7
    %v4383 = vsub.s32 1, %v4382
    %v4384 = vrot.slane %v4369, %v4383
    %v4385 = vlaneseq
    %v4386 = vshrl.u32 %v4385, 7
    %v4387 = vsub.s32 1, %v4386
    %v4388 = vrot.slane %v4373, %v4387
    %v4389 = vmul.f32 %v149, %v4380
    %v4390 = vmul.f32 %v149, %v4384
    %v4391 = vmul.f32 %v149, %v4388
    %v4392 = vmul.f32 %v153, %v4380
    %v4393 = vmul.f32 %v153, %v4384
    %v4394 = vmul.f32 %v153, %v4388
    %v4395 = vmul.f32 %v157, %v4380
    %v4396 = vmul.f32 %v157, %v4384
    %v4397 = vmul.f32 %v157, %v4388
    %v4398 = vmul.f32 %v161, %v4380
    %v4399 = vmul.f32 %v161, %v4384
    %v4400 = vmul.f32 %v161, %v4388
    %v4401 = vadd.f32 %v4350, %v4389
    %v4402 = vadd.f32 %v4351, %v4390
    %v4403 = vadd.f32 %v4352, %v4391
    %v4404 = vadd.f32 %v4353, %v4392
    %v4405 = vadd.f32 %v4354, %v4393
    %v4406 = vadd.f32 %v4355, %v4394
    %v4407 = vadd.f32 %v4356, %v4395
    %v4408 = vadd.f32 %v4357, %v4396
    %v4409 = vadd.f32 %v4358, %v4397
    %v4410 = vadd.f32 %v4359, %v4398
    %v4411 = vadd.f32 %v4360, %v4399
    %v4412 = vadd.f32 %v4361, %v4400
    %v4413 = vlaneseq
    %v4414 = vshrl.u32 %v4413, 7
    %v4415 = vsub.s32 2, %v4414
    %v4416 = vrot.slane %v4279, %v4415
    %v4417 = vlaneseq
    %v4418 = vshrl.u32 %v4417, 7
    %v4419 = vsub.s32 6, %v4418
    %v4420 = vrot.slane %v4279, %v4419
    %v4421 = vlaneseq
    %v4422 = vshrl.u32 %v4421, 7
    %v4423 = vsub.s32 2, %v4422
    %v4424 = vrot.slane %v4280, %v4423
    %v4428 = vlaneseq
    %v4429 = vshrl.u32 %v4428, 7
    %v4430 = vsub.s32 2, %v4429
    %v4431 = vrot.slane %v4416, %v4430
    %v4432 = vlaneseq
    %v4433 = vshrl.u32 %v4432, 7
    %v4434 = vsub.s32 2, %v4433
    %v4435 = vrot.slane %v4420, %v4434
    %v4436 = vlaneseq
    %v4437 = vshrl.u32 %v4436, 7
    %v4438 = vsub.s32 2, %v4437
    %v4439 = vrot.slane %v4424, %v4438
    %v4440 = vmul.f32 %v216, %v4431
    %v4441 = vmul.f32 %v216, %v4435
    %v4442 = vmul.f32 %v216, %v4439
    %v4443 = vmul.f32 %v220, %v4431
    %v4444 = vmul.f32 %v220, %v4435
    %v4445 = vmul.f32 %v220, %v4439
    %v4446 = vmul.f32 %v224, %v4431
    %v4447 = vmul.f32 %v224, %v4435
    %v4448 = vmul.f32 %v224, %v4439
    %v4449 = vmul.f32 %v228, %v4431
    %v4450 = vmul.f32 %v228, %v4435
    %v4451 = vmul.f32 %v228, %v4439
    %v4452 = vadd.f32 %v4401, %v4440
    %v4453 = vadd.f32 %v4402, %v4441
    %v4454 = vadd.f32 %v4403, %v4442
    %v4455 = vadd.f32 %v4404, %v4443
    %v4456 = vadd.f32 %v4405, %v4444
    %v4457 = vadd.f32 %v4406, %v4445
    %v4458 = vadd.f32 %v4407, %v4446
    %v4459 = vadd.f32 %v4408, %v4447
    %v4460 = vadd.f32 %v4409, %v4448
    %v4461 = vadd.f32 %v4410, %v4449
    %v4462 = vadd.f32 %v4411, %v4450
    %v4463 = vadd.f32 %v4412, %v4451
    %v4464 = vtanh.pop %v4452
    %v4465 = vtanh.pop %v4453
    %v4466 = vtanh.pop %v4454
    %v4467 = vtanh.pop %v4455
    %v4468 = vtanh.pop %v4456
    %v4469 = vtanh.pop %v4457
    %v4470 = vtanh.pop %v4458
    %v4471 = vtanh.pop %v4459
    %v4472 = vtanh.pop %v4460
    %v4473 = vtanh.pop %v4461
    %v4474 = vtanh.pop %v4462
    %v4475 = vtanh.pop %v4463
    %4476 = vmatprep.subr.mxu0 %v4465
    %4477 = vmatpush1.msra.mxu0 %v4464
    %4478 = vmatprep.subr.mxu0 %v4468
    %4479 = vmatpush1.msra.mxu0 %v4467
    %4480 = vmatprep.subr.mxu0 %v4471
    %4481 = vmatpush1.msra.mxu0 %v4470
    %4482 = vmatprep.subr.mxu0 %v4474
    %4483 = vmatpush1.msra.mxu0 %v4473
    %4484 = vmatprep.subr.mxu0 0.0
    %4485 = vmatpush1.msra.mxu0 0.0
    %4486 = vmatprep.subr.mxu0 0.0
    %4487 = vmatpush1.msra.mxu0 0.0
    %4488 = vmatprep.subr.mxu0 0.0
    %4489 = vmatpush1.msra.mxu0 0.0
    %4490 = vmatprep.subr.mxu0 0.0
    %4491 = vmatpush1.msra.mxu0 0.0
    %4492 = vmatprep.subr.mxu0 0.0
    %4493 = vmatpush1.msra.mxu0 0.0
    %4494 = vmatprep.subr.mxu0 0.0
    %4495 = vmatpush1.msra.mxu0 0.0
    %4496 = vmatprep.subr.mxu0 0.0
    %4497 = vmatpush1.msra.mxu0 0.0
    %4498 = vmatprep.subr.mxu0 0.0
    %4499 = vmatpush1.msra.mxu0 0.0
    %4500 = vmatprep.subr.mxu0 0.0
    %4501 = vmatpush1.msra.mxu0 0.0
    %4502 = vmatprep.subr.mxu0 0.0
    %4503 = vmatpush1.msra.mxu0 0.0
    %4504 = vmatprep.subr.mxu0 0.0
    %4505 = vmatpush1.msra.mxu0 0.0
    %4506 = vmatprep.subr.mxu0 0.0
    %4507 = vmatpush1.msra.mxu0 0.0
    %4508 = vmatprep.subr.mxu0 0.0
    %4509 = vmatpush1.msra.mxu0 0.0
    %4510 = vmatprep.subr.mxu0 0.0
    %4511 = vmatpush1.msra.mxu0 0.0
    %4512 = vmatprep.subr.mxu0 0.0
    %4513 = vmatpush1.msra.mxu0 0.0
    %4514 = vmatprep.subr.mxu0 0.0
    %4515 = vmatpush1.msra.mxu0 0.0
    %4516 = vmatprep.subr.mxu0 0.0
    %4517 = vmatpush1.msra.mxu0 0.0
    %4518 = vmatprep.subr.mxu0 0.0
    %4519 = vmatpush1.msra.mxu0 0.0
    %4520 = vmatprep.subr.mxu0 0.0
    %4521 = vmatpush1.msra.mxu0 0.0
    %4522 = vmatprep.subr.mxu0 0.0
    %4523 = vmatpush1.msra.mxu0 0.0
    %4524 = vmatprep.subr.mxu0 0.0
    %4525 = vmatpush1.msra.mxu0 0.0
    %4526 = vmatprep.subr.mxu0 0.0
    %4527 = vmatpush1.msra.mxu0 0.0
    %4528 = vmatprep.subr.mxu0 0.0
    %4529 = vmatpush1.msra.mxu0 0.0
    %4530 = vmatprep.subr.mxu0 0.0
    %4531 = vmatpush1.msra.mxu0 0.0
    %4532 = vmatprep.subr.mxu0 0.0
    %4533 = vmatpush1.msra.mxu0 0.0
    %4534 = vmatprep.subr.mxu0 0.0
    %4535 = vmatpush1.msra.mxu0 0.0
    %4536 = vmatprep.subr.mxu0 0.0
    %4537 = vmatpush1.msra.mxu0 0.0
    %4538 = vmatprep.subr.mxu0 0.0
    %4539 = vmatpush1.msra.mxu0 0.0
    %4540 = vmatprep.mubr.f32.mxu0 0.0
    %4541 = vmatmul.mubr.f32.gmra.mrb[0].mxu0 %v300
    %v4542 = vpop.f32.mrb[0].mxu0
    %v4543 = vadd.f32 %v296, %v4542
    %v4544 = vpop.f32.mrb[0].mxu0
    %v4545 = vadd.f32 %v296, %v4544
    %4546 = vdwg.mxu0
    %4547 = vmatprep.subr.mxu0 0.0
    %4548 = vmatpush1.msra.mxu0 %v4466
    %4549 = vmatprep.subr.mxu0 0.0
    %4550 = vmatpush1.msra.mxu0 %v4469
    %4551 = vmatprep.subr.mxu0 0.0
    %4552 = vmatpush1.msra.mxu0 %v4472
    %4553 = vmatprep.subr.mxu0 0.0
    %4554 = vmatpush1.msra.mxu0 %v4475
    %4555 = vmatprep.subr.mxu0 0.0
    %4556 = vmatpush1.msra.mxu0 0.0
    %4557 = vmatprep.subr.mxu0 0.0
    %4558 = vmatpush1.msra.mxu0 0.0
    %4559 = vmatprep.subr.mxu0 0.0
    %4560 = vmatpush1.msra.mxu0 0.0
    %4561 = vmatprep.subr.mxu0 0.0
    %4562 = vmatpush1.msra.mxu0 0.0
    %4563 = vmatprep.subr.mxu0 0.0
    %4564 = vmatpush1.msra.mxu0 0.0
    %4565 = vmatprep.subr.mxu0 0.0
    %4566 = vmatpush1.msra.mxu0 0.0
    %4567 = vmatprep.subr.mxu0 0.0
    %4568 = vmatpush1.msra.mxu0 0.0
    %4569 = vmatprep.subr.mxu0 0.0
    %4570 = vmatpush1.msra.mxu0 0.0
    %4571 = vmatprep.subr.mxu0 0.0
    %4572 = vmatpush1.msra.mxu0 0.0
    %4573 = vmatprep.subr.mxu0 0.0
    %4574 = vmatpush1.msra.mxu0 0.0
    %4575 = vmatprep.subr.mxu0 0.0
    %4576 = vmatpush1.msra.mxu0 0.0
    %4577 = vmatprep.subr.mxu0 0.0
    %4578 = vmatpush1.msra.mxu0 0.0
    %4579 = vmatprep.subr.mxu0 0.0
    %4580 = vmatpush1.msra.mxu0 0.0
    %4581 = vmatprep.subr.mxu0 0.0
    %4582 = vmatpush1.msra.mxu0 0.0
    %4583 = vmatprep.subr.mxu0 0.0
    %4584 = vmatpush1.msra.mxu0 0.0
    %4585 = vmatprep.subr.mxu0 0.0
    %4586 = vmatpush1.msra.mxu0 0.0
    %4587 = vmatprep.subr.mxu0 0.0
    %4588 = vmatpush1.msra.mxu0 0.0
    %4589 = vmatprep.subr.mxu0 0.0
    %4590 = vmatpush1.msra.mxu0 0.0
    %4591 = vmatprep.subr.mxu0 0.0
    %4592 = vmatpush1.msra.mxu0 0.0
    %4593 = vmatprep.subr.mxu0 0.0
    %4594 = vmatpush1.msra.mxu0 0.0
    %4595 = vmatprep.subr.mxu0 0.0
    %4596 = vmatpush1.msra.mxu0 0.0
    %4597 = vmatprep.subr.mxu0 0.0
    %4598 = vmatpush1.msra.mxu0 0.0
    %4599 = vmatprep.subr.mxu0 0.0
    %4600 = vmatpush1.msra.mxu0 0.0
    %4601 = vmatprep.subr.mxu0 0.0
    %4602 = vmatpush1.msra.mxu0 0.0
    %4603 = vmatprep.subr.mxu0 0.0
    %4604 = vmatpush1.msra.mxu0 0.0
    %4605 = vmatprep.subr.mxu0 0.0
    %4606 = vmatpush1.msra.mxu0 0.0
    %4607 = vmatprep.subr.mxu0 0.0
    %4608 = vmatpush1.msra.mxu0 0.0
    %4609 = vmatprep.subr.mxu0 0.0
    %4610 = vmatpush1.msra.mxu0 0.0
    %4611 = vmatprep.mubr.f32.mxu0 0.0
    %4612 = vmatmul.mubr.f32.gmra.mrb[0].mxu0 %v300
    %v4613 = vpop.f32.mrb[0].mxu0
    %v4614 = vadd.f32 %v296, %v4613
    %v4615 = vpop.f32.mrb[0].mxu0
    %4616 = vdwg.mxu0
    %v4617 = vmul.f32 %v4464, %v4464
    %v4618 = vmul.f32 %v4465, %v4465
    %v4619 = vmul.f32 %v4466, %v4466
    %v4620 = vmul.f32 %v4467, %v4467
    %v4621 = vmul.f32 %v4468, %v4468
    %v4622 = vmul.f32 %v4469, %v4469
    %v4623 = vmul.f32 %v4470, %v4470
    %v4624 = vmul.f32 %v4471, %v4471
    %v4625 = vmul.f32 %v4472, %v4472
    %v4626 = vmul.f32 %v4473, %v4473
    %v4627 = vmul.f32 %v4474, %v4474
    %v4628 = vmul.f32 %v4475, %v4475
    %v4629 = vsub.f32 1.0, %v4617
    %v4630 = vsub.f32 1.0, %v4618
    %v4631 = vsub.f32 1.0, %v4619
    %v4632 = vsub.f32 1.0, %v4620
    %v4633 = vsub.f32 1.0, %v4621
    %v4634 = vsub.f32 1.0, %v4622
    %v4635 = vsub.f32 1.0, %v4623
    %v4636 = vsub.f32 1.0, %v4624
    %v4637 = vsub.f32 1.0, %v4625
    %v4638 = vsub.f32 1.0, %v4626
    %v4639 = vsub.f32 1.0, %v4627
    %v4640 = vsub.f32 1.0, %v4628
    %4641 = vmatprep.subr.mxu0 %v4630
    %4642 = vmatpush1.msra.mxu0 %v4629
    %4643 = vmatprep.subr.mxu0 %v4633
    %4644 = vmatpush1.msra.mxu0 %v4632
    %4645 = vmatprep.subr.mxu0 %v4636
    %4646 = vmatpush1.msra.mxu0 %v4635
    %4647 = vmatprep.subr.mxu0 %v4639
    %4648 = vmatpush1.msra.mxu0 %v4638
    %4649 = vmatprep.subr.mxu0 0.0
    %4650 = vmatpush1.msra.mxu0 0.0
    %4651 = vmatprep.subr.mxu0 0.0
    %4652 = vmatpush1.msra.mxu0 0.0
    %4653 = vmatprep.subr.mxu0 0.0
    %4654 = vmatpush1.msra.mxu0 0.0
    %4655 = vmatprep.subr.mxu0 0.0
    %4656 = vmatpush1.msra.mxu0 0.0
    %4657 = vmatprep.subr.mxu0 0.0
    %4658 = vmatpush1.msra.mxu0 0.0
    %4659 = vmatprep.subr.mxu0 0.0
    %4660 = vmatpush1.msra.mxu0 0.0
    %4661 = vmatprep.subr.mxu0 0.0
    %4662 = vmatpush1.msra.mxu0 0.0
    %4663 = vmatprep.subr.mxu0 0.0
    %4664 = vmatpush1.msra.mxu0 0.0
    %4665 = vmatprep.subr.mxu0 0.0
    %4666 = vmatpush1.msra.mxu0 0.0
    %4667 = vmatprep.subr.mxu0 0.0
    %4668 = vmatpush1.msra.mxu0 0.0
    %4669 = vmatprep.subr.mxu0 0.0
    %4670 = vmatpush1.msra.mxu0 0.0
    %4671 = vmatprep.subr.mxu0 0.0
    %4672 = vmatpush1.msra.mxu0 0.0
    %4673 = vmatprep.subr.mxu0 0.0
    %4674 = vmatpush1.msra.mxu0 0.0
    %4675 = vmatprep.subr.mxu0 0.0
    %4676 = vmatpush1.msra.mxu0 0.0
    %4677 = vmatprep.subr.mxu0 0.0
    %4678 = vmatpush1.msra.mxu0 0.0
    %4679 = vmatprep.subr.mxu0 0.0
    %4680 = vmatpush1.msra.mxu0 0.0
    %4681 = vmatprep.subr.mxu0 0.0
    %4682 = vmatpush1.msra.mxu0 0.0
    %4683 = vmatprep.subr.mxu0 0.0
    %4684 = vmatpush1.msra.mxu0 0.0
    %4685 = vmatprep.subr.mxu0 0.0
    %4686 = vmatpush1.msra.mxu0 0.0
    %4687 = vmatprep.subr.mxu0 0.0
    %4688 = vmatpush1.msra.mxu0 0.0
    %4689 = vmatprep.subr.mxu0 0.0
    %4690 = vmatpush1.msra.mxu0 0.0
    %4691 = vmatprep.subr.mxu0 0.0
    %4692 = vmatpush1.msra.mxu0 0.0
    %4693 = vmatprep.subr.mxu0 0.0
    %4694 = vmatpush1.msra.mxu0 0.0
    %4695 = vmatprep.subr.mxu0 0.0
    %4696 = vmatpush1.msra.mxu0 0.0
    %4697 = vmatprep.subr.mxu0 0.0
    %4698 = vmatpush1.msra.mxu0 0.0
    %4699 = vmatprep.subr.mxu0 0.0
    %4700 = vmatpush1.msra.mxu0 0.0
    %4701 = vmatprep.subr.mxu0 0.0
    %4702 = vmatpush1.msra.mxu0 0.0
    %4703 = vmatprep.subr.mxu0 0.0
    %4704 = vmatpush1.msra.mxu0 0.0
    %4705 = vmatprep.mubr.f32.mxu0 0.0
    %4706 = vmatmul.mubr.f32.gmra.mrb[0].mxu0 %v468
    %v4707 = vpop.f32.mrb[0].mxu0
    %v4708 = vadd.f32 0.0, %v4707
    %v4709 = vpop.f32.mrb[0].mxu0
    %v4710 = vadd.f32 0.0, %v4709
    %4711 = vmatprep.mubr.f32.mxu0 0.0
    %4712 = vmatmul.mubr.f32.gmra.mrb[0].mxu0 %v471
    %v4713 = vpop.f32.mrb[0].mxu0
    %v4714 = vadd.f32 0.0, %v4713
    %v4715 = vpop.f32.mrb[0].mxu0
    %v4716 = vadd.f32 0.0, %v4715
    %4717 = vdwg.mxu0
    %4718 = vmatprep.subr.mxu0 0.0
    %4719 = vmatpush1.msra.mxu0 %v4631
    %4720 = vmatprep.subr.mxu0 0.0
    %4721 = vmatpush1.msra.mxu0 %v4634
    %4722 = vmatprep.subr.mxu0 0.0
    %4723 = vmatpush1.msra.mxu0 %v4637
    %4724 = vmatprep.subr.mxu0 0.0
    %4725 = vmatpush1.msra.mxu0 %v4640
    %4726 = vmatprep.subr.mxu0 0.0
    %4727 = vmatpush1.msra.mxu0 0.0
    %4728 = vmatprep.subr.mxu0 0.0
    %4729 = vmatpush1.msra.mxu0 0.0
    %4730 = vmatprep.subr.mxu0 0.0
    %4731 = vmatpush1.msra.mxu0 0.0
    %4732 = vmatprep.subr.mxu0 0.0
    %4733 = vmatpush1.msra.mxu0 0.0
    %4734 = vmatprep.subr.mxu0 0.0
    %4735 = vmatpush1.msra.mxu0 0.0
    %4736 = vmatprep.subr.mxu0 0.0
    %4737 = vmatpush1.msra.mxu0 0.0
    %4738 = vmatprep.subr.mxu0 0.0
    %4739 = vmatpush1.msra.mxu0 0.0
    %4740 = vmatprep.subr.mxu0 0.0
    %4741 = vmatpush1.msra.mxu0 0.0
    %4742 = vmatprep.subr.mxu0 0.0
    %4743 = vmatpush1.msra.mxu0 0.0
    %4744 = vmatprep.subr.mxu0 0.0
    %4745 = vmatpush1.msra.mxu0 0.0
    %4746 = vmatprep.subr.mxu0 0.0
    %4747 = vmatpush1.msra.mxu0 0.0
    %4748 = vmatprep.subr.mxu0 0.0
    %4749 = vmatpush1.msra.mxu0 0.0
    %4750 = vmatprep.subr.mxu0 0.0
    %4751 = vmatpush1.msra.mxu0 0.0
    %4752 = vmatprep.subr.mxu0 0.0
    %4753 = vmatpush1.msra.mxu0 0.0
    %4754 = vmatprep.subr.mxu0 0.0
    %4755 = vmatpush1.msra.mxu0 0.0
    %4756 = vmatprep.subr.mxu0 0.0
    %4757 = vmatpush1.msra.mxu0 0.0
    %4758 = vmatprep.subr.mxu0 0.0
    %4759 = vmatpush1.msra.mxu0 0.0
    %4760 = vmatprep.subr.mxu0 0.0
    %4761 = vmatpush1.msra.mxu0 0.0
    %4762 = vmatprep.subr.mxu0 0.0
    %4763 = vmatpush1.msra.mxu0 0.0
    %4764 = vmatprep.subr.mxu0 0.0
    %4765 = vmatpush1.msra.mxu0 0.0
    %4766 = vmatprep.subr.mxu0 0.0
    %4767 = vmatpush1.msra.mxu0 0.0
    %4768 = vmatprep.subr.mxu0 0.0
    %4769 = vmatpush1.msra.mxu0 0.0
    %4770 = vmatprep.subr.mxu0 0.0
    %4771 = vmatpush1.msra.mxu0 0.0
    %4772 = vmatprep.subr.mxu0 0.0
    %4773 = vmatpush1.msra.mxu0 0.0
    %4774 = vmatprep.subr.mxu0 0.0
    %4775 = vmatpush1.msra.mxu0 0.0
    %4776 = vmatprep.subr.mxu0 0.0
    %4777 = vmatpush1.msra.mxu0 0.0
    %4778 = vmatprep.subr.mxu0 0.0
    %4779 = vmatpush1.msra.mxu0 0.0
    %4780 = vmatprep.subr.mxu0 0.0
    %4781 = vmatpush1.msra.mxu0 0.0
    %4782 = vmatprep.mubr.f32.mxu0 0.0
    %4783 = vmatmul.mubr.f32.gmra.mrb[0].mxu0 %v468
    %v4784 = vpop.f32.mrb[0].mxu0
    %v4785 = vadd.f32 0.0, %v4784
    %v4786 = vpop.f32.mrb[0].mxu0
    %4787 = vmatprep.mubr.f32.mxu0 0.0
    %4788 = vmatmul.mubr.f32.gmra.mrb[0].mxu0 %v471
    %v4789 = vpop.f32.mrb[0].mxu0
    %v4790 = vadd.f32 0.0, %v4789
    %v4791 = vpop.f32.mrb[0].mxu0
    %4792 = vdwg.mxu0
    %v4793 = vlaneseq
    %v4794 = vshrl.u32 %v4793, 7
    %v4795 = vsub.s32 0, %v4794
    %v4796 = vrot.slane %v4708, %v4795
    %v4797 = vlaneseq
    %v4798 = vshrl.u32 %v4797, 7
    %v4799 = vsub.s32 0, %v4798
    %v4800 = vrot.slane %v4710, %v4799
    %v4801 = vlaneseq
    %v4802 = vshrl.u32 %v4801, 7
    %v4803 = vsub.s32 0, %v4802
    %v4804 = vrot.slane %v4785, %v4803
    %v4805 = vmul.f32 %v4796, %v4294
    %v4806 = vmul.f32 %v4800, %v4295
    %v4807 = vmul.f32 %v4804, %v4296
    %v4808 = vlaneseq
    %v4809 = vshrl.u32 %v4808, 7
    %v4810 = vsub.s32 1, %v4809
    %v4811 = vrot.slane %v4708, %v4810
    %v4812 = vlaneseq
    %v4813 = vshrl.u32 %v4812, 7
    %v4814 = vsub.s32 1, %v4813
    %v4815 = vrot.slane %v4710, %v4814
    %v4816 = vlaneseq
    %v4817 = vshrl.u32 %v4816, 7
    %v4818 = vsub.s32 1, %v4817
    %v4819 = vrot.slane %v4785, %v4818
    %v4820 = vmul.f32 %v4811, %v4300
    %v4821 = vmul.f32 %v4815, %v4301
    %v4822 = vmul.f32 %v4819, %v4302
    %v4823 = vadd.f32 %v4805, %v4820
    %v4824 = vadd.f32 %v4806, %v4821
    %v4825 = vadd.f32 %v4807, %v4822
    %v4826 = vlaneseq
    %v4827 = vshrl.u32 %v4826, 7
    %v4828 = vsub.s32 2, %v4827
    %v4829 = vrot.slane %v4708, %v4828
    %v4830 = vlaneseq
    %v4831 = vshrl.u32 %v4830, 7
    %v4832 = vsub.s32 2, %v4831
    %v4833 = vrot.slane %v4710, %v4832
    %v4834 = vlaneseq
    %v4835 = vshrl.u32 %v4834, 7
    %v4836 = vsub.s32 2, %v4835
    %v4837 = vrot.slane %v4785, %v4836
    %v4838 = vmul.f32 %v4829, %v4306
    %v4839 = vmul.f32 %v4833, %v4307
    %v4840 = vmul.f32 %v4837, %v4308
    %v4841 = vadd.f32 %v4823, %v4838
    %v4842 = vadd.f32 %v4824, %v4839
    %v4843 = vadd.f32 %v4825, %v4840
    %v4846 = vcombine.low %v4841, %v4842
    %s4848 = scalar_lea.vmem %s8, 216
    %4849 = vst [vmem:[%s4848] sm:$0x77] %v4846
    %4850 = vst [vmem:[%s4848 + $0x8] sm:$0x7] %v4843
    %v4851 = vlaneseq
    %v4852 = vshrl.u32 %v4851, 7
    %v4853 = vsub.s32 3, %v4852
    %v4854 = vrot.slane %v4708, %v4853
    %v4855 = vlaneseq
    %v4856 = vshrl.u32 %v4855, 7
    %v4857 = vsub.s32 3, %v4856
    %v4858 = vrot.slane %v4710, %v4857
    %v4859 = vlaneseq
    %v4860 = vshrl.u32 %v4859, 7
    %v4861 = vsub.s32 3, %v4860
    %v4862 = vrot.slane %v4785, %v4861
    %v4863 = vmul.f32 %v4854, %v4294
    %v4864 = vmul.f32 %v4858, %v4295
    %v4865 = vmul.f32 %v4862, %v4296
    %v4866 = vlaneseq
    %v4867 = vshrl.u32 %v4866, 7
    %v4868 = vsub.s32 4, %v4867
    %v4869 = vrot.slane %v4708, %v4868
    %v4870 = vlaneseq
    %v4871 = vshrl.u32 %v4870, 7
    %v4872 = vsub.s32 4, %v4871
    %v4873 = vrot.slane %v4710, %v4872
    %v4874 = vlaneseq
    %v4875 = vshrl.u32 %v4874, 7
    %v4876 = vsub.s32 4, %v4875
    %v4877 = vrot.slane %v4785, %v4876
    %v4878 = vmul.f32 %v4869, %v4300
    %v4879 = vmul.f32 %v4873, %v4301
    %v4880 = vmul.f32 %v4877, %v4302
    %v4881 = vadd.f32 %v4863, %v4878
    %v4882 = vadd.f32 %v4864, %v4879
    %v4883 = vadd.f32 %v4865, %v4880
    %v4884 = vlaneseq
    %v4885 = vshrl.u32 %v4884, 7
    %v4886 = vsub.s32 5, %v4885
    %v4887 = vrot.slane %v4708, %v4886
    %v4888 = vlaneseq
    %v4889 = vshrl.u32 %v4888, 7
    %v4890 = vsub.s32 5, %v4889
    %v4891 = vrot.slane %v4710, %v4890
    %v4892 = vlaneseq
    %v4893 = vshrl.u32 %v4892, 7
    %v4894 = vsub.s32 5, %v4893
    %v4895 = vrot.slane %v4785, %v4894
    %v4896 = vmul.f32 %v4887, %v4306
    %v4897 = vmul.f32 %v4891, %v4307
    %v4898 = vmul.f32 %v4895, %v4308
    %v4899 = vadd.f32 %v4881, %v4896
    %v4900 = vadd.f32 %v4882, %v4897
    %v4901 = vadd.f32 %v4883, %v4898
    %v4904 = vcombine.low %v4899, %v4900
    %s4906 = scalar_lea.vmem %s8, 228
    %4907 = vst [vmem:[%s4906] sm:$0x77] %v4904
    %4908 = vst [vmem:[%s4906 + $0x8] sm:$0x7] %v4901
    %v4909 = vlaneseq
    %v4910 = vshrl.u32 %v4909, 7
    %v4911 = vsub.s32 6, %v4910
    %v4912 = vrot.slane %v4708, %v4911
    %v4913 = vlaneseq
    %v4914 = vshrl.u32 %v4913, 7
    %v4915 = vsub.s32 6, %v4914
    %v4916 = vrot.slane %v4710, %v4915
    %v4917 = vlaneseq
    %v4918 = vshrl.u32 %v4917, 7
    %v4919 = vsub.s32 6, %v4918
    %v4920 = vrot.slane %v4785, %v4919
    %v4921 = vmul.f32 %v4912, %v4294
    %v4922 = vmul.f32 %v4916, %v4295
    %v4923 = vmul.f32 %v4920, %v4296
    %v4924 = vlaneseq
    %v4925 = vshrl.u32 %v4924, 7
    %v4926 = vsub.s32 7, %v4925
    %v4927 = vrot.slane %v4708, %v4926
    %v4928 = vlaneseq
    %v4929 = vshrl.u32 %v4928, 7
    %v4930 = vsub.s32 7, %v4929
    %v4931 = vrot.slane %v4710, %v4930
    %v4932 = vlaneseq
    %v4933 = vshrl.u32 %v4932, 7
    %v4934 = vsub.s32 7, %v4933
    %v4935 = vrot.slane %v4785, %v4934
    %v4936 = vmul.f32 %v4927, %v4300
    %v4937 = vmul.f32 %v4931, %v4301
    %v4938 = vmul.f32 %v4935, %v4302
    %v4939 = vadd.f32 %v4921, %v4936
    %v4940 = vadd.f32 %v4922, %v4937
    %v4941 = vadd.f32 %v4923, %v4938
    %v4942 = vlaneseq
    %v4943 = vshrl.u32 %v4942, 7
    %v4944 = vsub.s32 0, %v4943
    %v4945 = vrot.slane %v4714, %v4944
    %v4946 = vlaneseq
    %v4947 = vshrl.u32 %v4946, 7
    %v4948 = vsub.s32 0, %v4947
    %v4949 = vrot.slane %v4716, %v4948
    %v4950 = vlaneseq
    %v4951 = vshrl.u32 %v4950, 7
    %v4952 = vsub.s32 0, %v4951
    %v4953 = vrot.slane %v4790, %v4952
    %v4954 = vmul.f32 %v4945, %v4306
    %v4955 = vmul.f32 %v4949, %v4307
    %v4956 = vmul.f32 %v4953, %v4308
    %v4957 = vadd.f32 %v4939, %v4954
    %v4958 = vadd.f32 %v4940, %v4955
    %v4959 = vadd.f32 %v4941, %v4956
    %v4962 = vcombine.low %v4957, %v4958
    %s4964 = scalar_lea.vmem %s8, 240
    %4965 = vst [vmem:[%s4964] sm:$0x77] %v4962
    %4966 = vst [vmem:[%s4964 + $0x8] sm:$0x7] %v4959
    %v4967 = vmul.f32 %v4543, 0.25
    %v4968 = vmul.f32 %v4545, 0.25
    %v4969 = vmul.f32 %v4614, 0.25
    %v4972 = vcombine.low %v4967, %v4968
    %v4974 = vadd.f32 %v4279, %v4972
    %v4975 = vadd.f32 %v4280, %v4969
    %s4976 = scalar_lea.vmem [#allocation2], 84
    %4977 = vst [vmem:[%s4976] sm:$0x77] %v4974
    %4978 = vst [vmem:[%s4976 + $0x8] sm:$0x7] %v4975
    %v4981 = vcombine.low %v4543, %v4545
    %s4983 = scalar_lea.vmem %s7, 72
    %4984 = vst [vmem:[%s4983] sm:$0x77] %v4981
    %4985 = vst [vmem:[%s4983 + $0x8] sm:$0x7] %v4614
    %v4986 = vmul.f32 %v4841, 0.25
    %v4987 = vmul.f32 %v4842, 0.25
    %v4988 = vmul.f32 %v4843, 0.25
    %v4989 = vadd.f32 %v4294, %v4986
    %v4990 = vadd.f32 %v4295, %v4987
    %v4991 = vadd.f32 %v4296, %v4988
    %v4992 = vmul.f32 %v4899, 0.25
    %v4993 = vmul.f32 %v4900, 0.25
    %v4994 = vmul.f32 %v4901, 0.25
    %v4995 = vadd.f32 %v4300, %v4992
    %v4996 = vadd.f32 %v4301, %v4993
    %v4997 = vadd.f32 %v4302, %v4994
    %v4998 = vmul.f32 %v4957, 0.25
    %v4999 = vmul.f32 %v4958, 0.25
    %v5000 = vmul.f32 %v4959, 0.25
    %v5001 = vadd.f32 %v4306, %v4998
    %v5002 = vadd.f32 %v4307, %v4999
    %v5003 = vadd.f32 %v4308, %v5000
    %v5006 = vlaneseq
    %v5007 = vshrl.u32 %v5006, 7
    %v5008 = vsub.s32 0, %v5007
    %v5009 = vrot.slane %v4974, %v5008
    %v5010 = vlaneseq
    %v5011 = vshrl.u32 %v5010, 7
    %v5012 = vsub.s32 4, %v5011
    %v5013 = vrot.slane %v4974, %v5012
    %v5014 = vlaneseq
    %v5015 = vshrl.u32 %v5014, 7
    %v5016 = vsub.s32 0, %v5015
    %v5017 = vrot.slane %v4975, %v5016
    %v5021 = vlaneseq
    %v5022 = vshrl.u32 %v5021, 7
    %v5023 = vsub.s32 0, %v5022
    %v5024 = vrot.slane %v5009, %v5023
    %v5025 = vlaneseq
    %v5026 = vshrl.u32 %v5025, 7
    %v5027 = vsub.s32 0, %v5026
    %v5028 = vrot.slane %v5013, %v5027
    %v5029 = vlaneseq
    %v5030 = vshrl.u32 %v5029, 7
    %v5031 = vsub.s32 0, %v5030
    %v5032 = vrot.slane %v5017, %v5031
    %v5033 = vmul.f32 %v77, %v5024
    %v5034 = vmul.f32 %v77, %v5028
    %v5035 = vmul.f32 %v77, %v5032
    %v5036 = vmul.f32 %v82, %v5024
    %v5037 = vmul.f32 %v82, %v5028
    %v5038 = vmul.f32 %v82, %v5032
    %v5039 = vmul.f32 %v87, %v5024
    %v5040 = vmul.f32 %v87, %v5028
    %v5041 = vmul.f32 %v87, %v5032
    %v5042 = vmul.f32 %v92, %v5024
    %v5043 = vmul.f32 %v92, %v5028
    %v5044 = vmul.f32 %v92, %v5032
    %v5045 = vadd.f32 %v40, %v5033
    %v5046 = vadd.f32 %v40, %v5034
    %v5047 = vadd.f32 %v40, %v5035
    %v5048 = vadd.f32 %v45, %v5036
    %v5049 = vadd.f32 %v45, %v5037
    %v5050 = vadd.f32 %v45, %v5038
    %v5051 = vadd.f32 %v50, %v5039
    %v5052 = vadd.f32 %v50, %v5040
    %v5053 = vadd.f32 %v50, %v5041
    %v5054 = vadd.f32 %v55, %v5042
    %v5055 = vadd.f32 %v55, %v5043
    %v5056 = vadd.f32 %v55, %v5044
    %v5057 = vlaneseq
    %v5058 = vshrl.u32 %v5057, 7
    %v5059 = vsub.s32 1, %v5058
    %v5060 = vrot.slane %v4974, %v5059
    %v5061 = vlaneseq
    %v5062 = vshrl.u32 %v5061, 7
    %v5063 = vsub.s32 5, %v5062
    %v5064 = vrot.slane %v4974, %v5063
    %v5065 = vlaneseq
    %v5066 = vshrl.u32 %v5065, 7
    %v5067 = vsub.s32 1, %v5066
    %v5068 = vrot.slane %v4975, %v5067
    %v5072 = vlaneseq
    %v5073 = vshrl.u32 %v5072, 7
    %v5074 = vsub.s32 1, %v5073
    %v5075 = vrot.slane %v5060, %v5074
    %v5076 = vlaneseq
    %v5077 = vshrl.u32 %v5076, 7
    %v5078 = vsub.s32 1, %v5077
    %v5079 = vrot.slane %v5064, %v5078
    %v5080 = vlaneseq
    %v5081 = vshrl.u32 %v5080, 7
    %v5082 = vsub.s32 1, %v5081
    %v5083 = vrot.slane %v5068, %v5082
    %v5084 = vmul.f32 %v149, %v5075
    %v5085 = vmul.f32 %v149, %v5079
    %v5086 = vmul.f32 %v149, %v5083
    %v5087 = vmul.f32 %v153, %v5075
    %v5088 = vmul.f32 %v153, %v5079
    %v5089 = vmul.f32 %v153, %v5083
    %v5090 = vmul.f32 %v157, %v5075
    %v5091 = vmul.f32 %v157, %v5079
    %v5092 = vmul.f32 %v157, %v5083
    %v5093 = vmul.f32 %v161, %v5075
    %v5094 = vmul.f32 %v161, %v5079
    %v5095 = vmul.f32 %v161, %v5083
    %v5096 = vadd.f32 %v5045, %v5084
    %v5097 = vadd.f32 %v5046, %v5085
    %v5098 = vadd.f32 %v5047, %v5086
    %v5099 = vadd.f32 %v5048, %v5087
    %v5100 = vadd.f32 %v5049, %v5088
    %v5101 = vadd.f32 %v5050, %v5089
    %v5102 = vadd.f32 %v5051, %v5090
    %v5103 = vadd.f32 %v5052, %v5091
    %v5104 = vadd.f32 %v5053, %v5092
    %v5105 = vadd.f32 %v5054, %v5093
    %v5106 = vadd.f32 %v5055, %v5094
    %v5107 = vadd.f32 %v5056, %v5095
    %v5108 = vlaneseq
    %v5109 = vshrl.u32 %v5108, 7
    %v5110 = vsub.s32 2, %v5109
    %v5111 = vrot.slane %v4974, %v5110
    %v5112 = vlaneseq
    %v5113 = vshrl.u32 %v5112, 7
    %v5114 = vsub.s32 6, %v5113
    %v5115 = vrot.slane %v4974, %v5114
    %v5116 = vlaneseq
    %v5117 = vshrl.u32 %v5116, 7
    %v5118 = vsub.s32 2, %v5117
    %v5119 = vrot.slane %v4975, %v5118
    %v5123 = vlaneseq
    %v5124 = vshrl.u32 %v5123, 7
    %v5125 = vsub.s32 2, %v5124
    %v5126 = vrot.slane %v5111, %v5125
    %v5127 = vlaneseq
    %v5128 = vshrl.u32 %v5127, 7
    %v5129 = vsub.s32 2, %v5128
    %v5130 = vrot.slane %v5115, %v5129
    %v5131 = vlaneseq
    %v5132 = vshrl.u32 %v5131, 7
    %v5133 = vsub.s32 2, %v5132
    %v5134 = vrot.slane %v5119, %v5133
    %v5135 = vmul.f32 %v216, %v5126
    %v5136 = vmul.f32 %v216, %v5130
    %v5137 = vmul.f32 %v216, %v5134
    %v5138 = vmul.f32 %v220, %v5126
    %v5139 = vmul.f32 %v220, %v5130
    %v5140 = vmul.f32 %v220, %v5134
    %v5141 = vmul.f32 %v224, %v5126
    %v5142 = vmul.f32 %v224, %v5130
    %v5143 = vmul.f32 %v224, %v5134
    %v5144 = vmul.f32 %v228, %v5126
    %v5145 = vmul.f32 %v228, %v5130
    %v5146 = vmul.f32 %v228, %v5134
    %v5147 = vadd.f32 %v5096, %v5135
    %v5148 = vadd.f32 %v5097, %v5136
    %v5149 = vadd.f32 %v5098, %v5137
    %v5150 = vadd.f32 %v5099, %v5138
    %v5151 = vadd.f32 %v5100, %v5139
    %v5152 = vadd.f32 %v5101, %v5140
    %v5153 = vadd.f32 %v5102, %v5141
    %v5154 = vadd.f32 %v5103, %v5142
    %v5155 = vadd.f32 %v5104, %v5143
    %v5156 = vadd.f32 %v5105, %v5144
    %v5157 = vadd.f32 %v5106, %v5145
    %v5158 = vadd.f32 %v5107, %v5146
    %v5159 = vtanh.pop %v5147
    %v5160 = vtanh.pop %v5148
    %v5161 = vtanh.pop %v5149
    %v5162 = vtanh.pop %v5150
    %v5163 = vtanh.pop %v5151
    %v5164 = vtanh.pop %v5152
    %v5165 = vtanh.pop %v5153
    %v5166 = vtanh.pop %v5154
    %v5167 = vtanh.pop %v5155
    %v5168 = vtanh.pop %v5156
    %v5169 = vtanh.pop %v5157
    %v5170 = vtanh.pop %v5158
    %5171 = vmatprep.subr.mxu0 %v5160
    %5172 = vmatpush1.msra.mxu0 %v5159
    %5173 = vmatprep.subr.mxu0 %v5163
    %5174 = vmatpush1.msra.mxu0 %v5162
    %5175 = vmatprep.subr.mxu0 %v5166
    %5176 = vmatpush1.msra.mxu0 %v5165
    %5177 = vmatprep.subr.mxu0 %v5169
    %5178 = vmatpush1.msra.mxu0 %v5168
    %5179 = vmatprep.subr.mxu0 0.0
    %5180 = vmatpush1.msra.mxu0 0.0
    %5181 = vmatprep.subr.mxu0 0.0
    %5182 = vmatpush1.msra.mxu0 0.0
    %5183 = vmatprep.subr.mxu0 0.0
    %5184 = vmatpush1.msra.mxu0 0.0
    %5185 = vmatprep.subr.mxu0 0.0
    %5186 = vmatpush1.msra.mxu0 0.0
    %5187 = vmatprep.subr.mxu0 0.0
    %5188 = vmatpush1.msra.mxu0 0.0
    %5189 = vmatprep.subr.mxu0 0.0
    %5190 = vmatpush1.msra.mxu0 0.0
    %5191 = vmatprep.subr.mxu0 0.0
    %5192 = vmatpush1.msra.mxu0 0.0
    %5193 = vmatprep.subr.mxu0 0.0
    %5194 = vmatpush1.msra.mxu0 0.0
    %5195 = vmatprep.subr.mxu0 0.0
    %5196 = vmatpush1.msra.mxu0 0.0
    %5197 = vmatprep.subr.mxu0 0.0
    %5198 = vmatpush1.msra.mxu0 0.0
    %5199 = vmatprep.subr.mxu0 0.0
    %5200 = vmatpush1.msra.mxu0 0.0
    %5201 = vmatprep.subr.mxu0 0.0
    %5202 = vmatpush1.msra.mxu0 0.0
    %5203 = vmatprep.subr.mxu0 0.0
    %5204 = vmatpush1.msra.mxu0 0.0
    %5205 = vmatprep.subr.mxu0 0.0
    %5206 = vmatpush1.msra.mxu0 0.0
    %5207 = vmatprep.subr.mxu0 0.0
    %5208 = vmatpush1.msra.mxu0 0.0
    %5209 = vmatprep.subr.mxu0 0.0
    %5210 = vmatpush1.msra.mxu0 0.0
    %5211 = vmatprep.subr.mxu0 0.0
    %5212 = vmatpush1.msra.mxu0 0.0
    %5213 = vmatprep.subr.mxu0 0.0
    %5214 = vmatpush1.msra.mxu0 0.0
    %5215 = vmatprep.subr.mxu0 0.0
    %5216 = vmatpush1.msra.mxu0 0.0
    %5217 = vmatprep.subr.mxu0 0.0
    %5218 = vmatpush1.msra.mxu0 0.0
    %5219 = vmatprep.subr.mxu0 0.0
    %5220 = vmatpush1.msra.mxu0 0.0
    %5221 = vmatprep.subr.mxu0 0.0
    %5222 = vmatpush1.msra.mxu0 0.0
    %5223 = vmatprep.subr.mxu0 0.0
    %5224 = vmatpush1.msra.mxu0 0.0
    %5225 = vmatprep.subr.mxu0 0.0
    %5226 = vmatpush1.msra.mxu0 0.0
    %5227 = vmatprep.subr.mxu0 0.0
    %5228 = vmatpush1.msra.mxu0 0.0
    %5229 = vmatprep.subr.mxu0 0.0
    %5230 = vmatpush1.msra.mxu0 0.0
    %5231 = vmatprep.subr.mxu0 0.0
    %5232 = vmatpush1.msra.mxu0 0.0
    %5233 = vmatprep.subr.mxu0 0.0
    %5234 = vmatpush1.msra.mxu0 0.0
    %5235 = vmatprep.mubr.f32.mxu0 0.0
    %5236 = vmatmul.mubr.f32.gmra.mrb[0].mxu0 %v300
    %v5237 = vpop.f32.mrb[0].mxu0
    %v5238 = vadd.f32 %v296, %v5237
    %v5239 = vpop.f32.mrb[0].mxu0
    %v5240 = vadd.f32 %v296, %v5239
    %5241 = vdwg.mxu0
    %5242 = vmatprep.subr.mxu0 0.0
    %5243 = vmatpush1.msra.mxu0 %v5161
    %5244 = vmatprep.subr.mxu0 0.0
    %5245 = vmatpush1.msra.mxu0 %v5164
    %5246 = vmatprep.subr.mxu0 0.0
    %5247 = vmatpush1.msra.mxu0 %v5167
    %5248 = vmatprep.subr.mxu0 0.0
    %5249 = vmatpush1.msra.mxu0 %v5170
    %5250 = vmatprep.subr.mxu0 0.0
    %5251 = vmatpush1.msra.mxu0 0.0
    %5252 = vmatprep.subr.mxu0 0.0
    %5253 = vmatpush1.msra.mxu0 0.0
    %5254 = vmatprep.subr.mxu0 0.0
    %5255 = vmatpush1.msra.mxu0 0.0
    %5256 = vmatprep.subr.mxu0 0.0
    %5257 = vmatpush1.msra.mxu0 0.0
    %5258 = vmatprep.subr.mxu0 0.0
    %5259 = vmatpush1.msra.mxu0 0.0
    %5260 = vmatprep.subr.mxu0 0.0
    %5261 = vmatpush1.msra.mxu0 0.0
    %5262 = vmatprep.subr.mxu0 0.0
    %5263 = vmatpush1.msra.mxu0 0.0
    %5264 = vmatprep.subr.mxu0 0.0
    %5265 = vmatpush1.msra.mxu0 0.0
    %5266 = vmatprep.subr.mxu0 0.0
    %5267 = vmatpush1.msra.mxu0 0.0
    %5268 = vmatprep.subr.mxu0 0.0
    %5269 = vmatpush1.msra.mxu0 0.0
    %5270 = vmatprep.subr.mxu0 0.0
    %5271 = vmatpush1.msra.mxu0 0.0
    %5272 = vmatprep.subr.mxu0 0.0
    %5273 = vmatpush1.msra.mxu0 0.0
    %5274 = vmatprep.subr.mxu0 0.0
    %5275 = vmatpush1.msra.mxu0 0.0
    %5276 = vmatprep.subr.mxu0 0.0
    %5277 = vmatpush1.msra.mxu0 0.0
    %5278 = vmatprep.subr.mxu0 0.0
    %5279 = vmatpush1.msra.mxu0 0.0
    %5280 = vmatprep.subr.mxu0 0.0
    %5281 = vmatpush1.msra.mxu0 0.0
    %5282 = vmatprep.subr.mxu0 0.0
    %5283 = vmatpush1.msra.mxu0 0.0
    %5284 = vmatprep.subr.mxu0 0.0
    %5285 = vmatpush1.msra.mxu0 0.0
    %5286 = vmatprep.subr.mxu0 0.0
    %5287 = vmatpush1.msra.mxu0 0.0
    %5288 = vmatprep.subr.mxu0 0.0
    %5289 = vmatpush1.msra.mxu0 0.0
    %5290 = vmatprep.subr.mxu0 0.0
    %5291 = vmatpush1.msra.mxu0 0.0
    %5292 = vmatprep.subr.mxu0 0.0
    %5293 = vmatpush1.msra.mxu0 0.0
    %5294 = vmatprep.subr.mxu0 0.0
    %5295 = vmatpush1.msra.mxu0 0.0
    %5296 = vmatprep.subr.mxu0 0.0
    %5297 = vmatpush1.msra.mxu0 0.0
    %5298 = vmatprep.subr.mxu0 0.0
    %5299 = vmatpush1.msra.mxu0 0.0
    %5300 = vmatprep.subr.mxu0 0.0
    %5301 = vmatpush1.msra.mxu0 0.0
    %5302 = vmatprep.subr.mxu0 0.0
    %5303 = vmatpush1.msra.mxu0 0.0
    %5304 = vmatprep.subr.mxu0 0.0
    %5305 = vmatpush1.msra.mxu0 0.0
    %5306 = vmatprep.mubr.f32.mxu0 0.0
    %5307 = vmatmul.mubr.f32.gmra.mrb[0].mxu0 %v300
    %v5308 = vpop.f32.mrb[0].mxu0
    %v5309 = vadd.f32 %v296, %v5308
    %v5310 = vpop.f32.mrb[0].mxu0
    %5311 = vdwg.mxu0
    %v5312 = vmul.f32 %v5159, %v5159
    %v5313 = vmul.f32 %v5160, %v5160
    %v5314 = vmul.f32 %v5161, %v5161
    %v5315 = vmul.f32 %v5162, %v5162
    %v5316 = vmul.f32 %v5163, %v5163
    %v5317 = vmul.f32 %v5164, %v5164
    %v5318 = vmul.f32 %v5165, %v5165
    %v5319 = vmul.f32 %v5166, %v5166
    %v5320 = vmul.f32 %v5167, %v5167
    %v5321 = vmul.f32 %v5168, %v5168
    %v5322 = vmul.f32 %v5169, %v5169
    %v5323 = vmul.f32 %v5170, %v5170
    %v5324 = vsub.f32 1.0, %v5312
    %v5325 = vsub.f32 1.0, %v5313
    %v5326 = vsub.f32 1.0, %v5314
    %v5327 = vsub.f32 1.0, %v5315
    %v5328 = vsub.f32 1.0, %v5316
    %v5329 = vsub.f32 1.0, %v5317
    %v5330 = vsub.f32 1.0, %v5318
    %v5331 = vsub.f32 1.0, %v5319
    %v5332 = vsub.f32 1.0, %v5320
    %v5333 = vsub.f32 1.0, %v5321
    %v5334 = vsub.f32 1.0, %v5322
    %v5335 = vsub.f32 1.0, %v5323
    %5336 = vmatprep.subr.mxu0 %v5325
    %5337 = vmatpush1.msra.mxu0 %v5324
    %5338 = vmatprep.subr.mxu0 %v5328
    %5339 = vmatpush1.msra.mxu0 %v5327
    %5340 = vmatprep.subr.mxu0 %v5331
    %5341 = vmatpush1.msra.mxu0 %v5330
    %5342 = vmatprep.subr.mxu0 %v5334
    %5343 = vmatpush1.msra.mxu0 %v5333
    %5344 = vmatprep.subr.mxu0 0.0
    %5345 = vmatpush1.msra.mxu0 0.0
    %5346 = vmatprep.subr.mxu0 0.0
    %5347 = vmatpush1.msra.mxu0 0.0
    %5348 = vmatprep.subr.mxu0 0.0
    %5349 = vmatpush1.msra.mxu0 0.0
    %5350 = vmatprep.subr.mxu0 0.0
    %5351 = vmatpush1.msra.mxu0 0.0
    %5352 = vmatprep.subr.mxu0 0.0
    %5353 = vmatpush1.msra.mxu0 0.0
    %5354 = vmatprep.subr.mxu0 0.0
    %5355 = vmatpush1.msra.mxu0 0.0
    %5356 = vmatprep.subr.mxu0 0.0
    %5357 = vmatpush1.msra.mxu0 0.0
    %5358 = vmatprep.subr.mxu0 0.0
    %5359 = vmatpush1.msra.mxu0 0.0
    %5360 = vmatprep.subr.mxu0 0.0
    %5361 = vmatpush1.msra.mxu0 0.0
    %5362 = vmatprep.subr.mxu0 0.0
    %5363 = vmatpush1.msra.mxu0 0.0
    %5364 = vmatprep.subr.mxu0 0.0
    %5365 = vmatpush1.msra.mxu0 0.0
    %5366 = vmatprep.subr.mxu0 0.0
    %5367 = vmatpush1.msra.mxu0 0.0
    %5368 = vmatprep.subr.mxu0 0.0
    %5369 = vmatpush1.msra.mxu0 0.0
    %5370 = vmatprep.subr.mxu0 0.0
    %5371 = vmatpush1.msra.mxu0 0.0
    %5372 = vmatprep.subr.mxu0 0.0
    %5373 = vmatpush1.msra.mxu0 0.0
    %5374 = vmatprep.subr.mxu0 0.0
    %5375 = vmatpush1.msra.mxu0 0.0
    %5376 = vmatprep.subr.mxu0 0.0
    %5377 = vmatpush1.msra.mxu0 0.0
    %5378 = vmatprep.subr.mxu0 0.0
    %5379 = vmatpush1.msra.mxu0 0.0
    %5380 = vmatprep.subr.mxu0 0.0
    %5381 = vmatpush1.msra.mxu0 0.0
    %5382 = vmatprep.subr.mxu0 0.0
    %5383 = vmatpush1.msra.mxu0 0.0
    %5384 = vmatprep.subr.mxu0 0.0
    %5385 = vmatpush1.msra.mxu0 0.0
    %5386 = vmatprep.subr.mxu0 0.0
    %5387 = vmatpush1.msra.mxu0 0.0
    %5388 = vmatprep.subr.mxu0 0.0
    %5389 = vmatpush1.msra.mxu0 0.0
    %5390 = vmatprep.subr.mxu0 0.0
    %5391 = vmatpush1.msra.mxu0 0.0
    %5392 = vmatprep.subr.mxu0 0.0
    %5393 = vmatpush1.msra.mxu0 0.0
    %5394 = vmatprep.subr.mxu0 0.0
    %5395 = vmatpush1.msra.mxu0 0.0
    %5396 = vmatprep.subr.mxu0 0.0
    %5397 = vmatpush1.msra.mxu0 0.0
    %5398 = vmatprep.subr.mxu0 0.0
    %5399 = vmatpush1.msra.mxu0 0.0
    %5400 = vmatprep.mubr.f32.mxu0 0.0
    %5401 = vmatmul.mubr.f32.gmra.mrb[0].mxu0 %v468
    %v5402 = vpop.f32.mrb[0].mxu0
    %v5403 = vadd.f32 0.0, %v5402
    %v5404 = vpop.f32.mrb[0].mxu0
    %v5405 = vadd.f32 0.0, %v5404
    %5406 = vmatprep.mubr.f32.mxu0 0.0
    %5407 = vmatmul.mubr.f32.gmra.mrb[0].mxu0 %v471
    %v5408 = vpop.f32.mrb[0].mxu0
    %v5409 = vadd.f32 0.0, %v5408
    %v5410 = vpop.f32.mrb[0].mxu0
    %v5411 = vadd.f32 0.0, %v5410
    %5412 = vdwg.mxu0
    %5413 = vmatprep.subr.mxu0 0.0
    %5414 = vmatpush1.msra.mxu0 %v5326
    %5415 = vmatprep.subr.mxu0 0.0
    %5416 = vmatpush1.msra.mxu0 %v5329
    %5417 = vmatprep.subr.mxu0 0.0
    %5418 = vmatpush1.msra.mxu0 %v5332
    %5419 = vmatprep.subr.mxu0 0.0
    %5420 = vmatpush1.msra.mxu0 %v5335
    %5421 = vmatprep.subr.mxu0 0.0
    %5422 = vmatpush1.msra.mxu0 0.0
    %5423 = vmatprep.subr.mxu0 0.0
    %5424 = vmatpush1.msra.mxu0 0.0
    %5425 = vmatprep.subr.mxu0 0.0
    %5426 = vmatpush1.msra.mxu0 0.0
    %5427 = vmatprep.subr.mxu0 0.0
    %5428 = vmatpush1.msra.mxu0 0.0
    %5429 = vmatprep.subr.mxu0 0.0
    %5430 = vmatpush1.msra.mxu0 0.0
    %5431 = vmatprep.subr.mxu0 0.0
    %5432 = vmatpush1.msra.mxu0 0.0
    %5433 = vmatprep.subr.mxu0 0.0
    %5434 = vmatpush1.msra.mxu0 0.0
    %5435 = vmatprep.subr.mxu0 0.0
    %5436 = vmatpush1.msra.mxu0 0.0
    %5437 = vmatprep.subr.mxu0 0.0
    %5438 = vmatpush1.msra.mxu0 0.0
    %5439 = vmatprep.subr.mxu0 0.0
    %5440 = vmatpush1.msra.mxu0 0.0
    %5441 = vmatprep.subr.mxu0 0.0
    %5442 = vmatpush1.msra.mxu0 0.0
    %5443 = vmatprep.subr.mxu0 0.0
    %5444 = vmatpush1.msra.mxu0 0.0
    %5445 = vmatprep.subr.mxu0 0.0
    %5446 = vmatpush1.msra.mxu0 0.0
    %5447 = vmatprep.subr.mxu0 0.0
    %5448 = vmatpush1.msra.mxu0 0.0
    %5449 = vmatprep.subr.mxu0 0.0
    %5450 = vmatpush1.msra.mxu0 0.0
    %5451 = vmatprep.subr.mxu0 0.0
    %5452 = vmatpush1.msra.mxu0 0.0
    %5453 = vmatprep.subr.mxu0 0.0
    %5454 = vmatpush1.msra.mxu0 0.0
    %5455 = vmatprep.subr.mxu0 0.0
    %5456 = vmatpush1.msra.mxu0 0.0
    %5457 = vmatprep.subr.mxu0 0.0
    %5458 = vmatpush1.msra.mxu0 0.0
    %5459 = vmatprep.subr.mxu0 0.0
    %5460 = vmatpush1.msra.mxu0 0.0
    %5461 = vmatprep.subr.mxu0 0.0
    %5462 = vmatpush1.msra.mxu0 0.0
    %5463 = vmatprep.subr.mxu0 0.0
    %5464 = vmatpush1.msra.mxu0 0.0
    %5465 = vmatprep.subr.mxu0 0.0
    %5466 = vmatpush1.msra.mxu0 0.0
    %5467 = vmatprep.subr.mxu0 0.0
    %5468 = vmatpush1.msra.mxu0 0.0
    %5469 = vmatprep.subr.mxu0 0.0
    %5470 = vmatpush1.msra.mxu0 0.0
    %5471 = vmatprep.subr.mxu0 0.0
    %5472 = vmatpush1.msra.mxu0 0.0
    %5473 = vmatprep.subr.mxu0 0.0
    %5474 = vmatpush1.msra.mxu0 0.0
    %5475 = vmatprep.subr.mxu0 0.0
    %5476 = vmatpush1.msra.mxu0 0.0
    %5477 = vmatprep.mubr.f32.mxu0 0.0
    %5478 = vmatmul.mubr.f32.gmra.mrb[0].mxu0 %v468
    %v5479 = vpop.f32.mrb[0].mxu0
    %v5480 = vadd.f32 0.0, %v5479
    %v5481 = vpop.f32.mrb[0].mxu0
    %5482 = vmatprep.mubr.f32.mxu0 0.0
    %5483 = vmatmul.mubr.f32.gmra.mrb[0].mxu0 %v471
    %v5484 = vpop.f32.mrb[0].mxu0
    %v5485 = vadd.f32 0.0, %v5484
    %v5486 = vpop.f32.mrb[0].mxu0
    %5487 = vdwg.mxu0
    %v5488 = vlaneseq
    %v5489 = vshrl.u32 %v5488, 7
    %v5490 = vsub.s32 0, %v5489
    %v5491 = vrot.slane %v5403, %v5490
    %v5492 = vlaneseq
    %v5493 = vshrl.u32 %v5492, 7
    %v5494 = vsub.s32 0, %v5493
    %v5495 = vrot.slane %v5405, %v5494
    %v5496 = vlaneseq
    %v5497 = vshrl.u32 %v5496, 7
    %v5498 = vsub.s32 0, %v5497
    %v5499 = vrot.slane %v5480, %v5498
    %v5500 = vmul.f32 %v5491, %v4989
    %v5501 = vmul.f32 %v5495, %v4990
    %v5502 = vmul.f32 %v5499, %v4991
    %v5503 = vlaneseq
    %v5504 = vshrl.u32 %v5503, 7
    %v5505 = vsub.s32 1, %v5504
    %v5506 = vrot.slane %v5403, %v5505
    %v5507 = vlaneseq
    %v5508 = vshrl.u32 %v5507, 7
    %v5509 = vsub.s32 1, %v5508
    %v5510 = vrot.slane %v5405, %v5509
    %v5511 = vlaneseq
    %v5512 = vshrl.u32 %v5511, 7
    %v5513 = vsub.s32 1, %v5512
    %v5514 = vrot.slane %v5480, %v5513
    %v5515 = vmul.f32 %v5506, %v4995
    %v5516 = vmul.f32 %v5510, %v4996
    %v5517 = vmul.f32 %v5514, %v4997
    %v5518 = vadd.f32 %v5500, %v5515
    %v5519 = vadd.f32 %v5501, %v5516
    %v5520 = vadd.f32 %v5502, %v5517
    %v5521 = vlaneseq
    %v5522 = vshrl.u32 %v5521, 7
    %v5523 = vsub.s32 2, %v5522
    %v5524 = vrot.slane %v5403, %v5523
    %v5525 = vlaneseq
    %v5526 = vshrl.u32 %v5525, 7
    %v5527 = vsub.s32 2, %v5526
    %v5528 = vrot.slane %v5405, %v5527
    %v5529 = vlaneseq
    %v5530 = vshrl.u32 %v5529, 7
    %v5531 = vsub.s32 2, %v5530
    %v5532 = vrot.slane %v5480, %v5531
    %v5533 = vmul.f32 %v5524, %v5001
    %v5534 = vmul.f32 %v5528, %v5002
    %v5535 = vmul.f32 %v5532, %v5003
    %v5536 = vadd.f32 %v5518, %v5533
    %v5537 = vadd.f32 %v5519, %v5534
    %v5538 = vadd.f32 %v5520, %v5535
    %v5541 = vcombine.low %v5536, %v5537
    %s5543 = scalar_lea.vmem %s8, 252
    %5544 = vst [vmem:[%s5543] sm:$0x77] %v5541
    %5545 = vst [vmem:[%s5543 + $0x8] sm:$0x7] %v5538
    %v5546 = vlaneseq
    %v5547 = vshrl.u32 %v5546, 7
    %v5548 = vsub.s32 3, %v5547
    %v5549 = vrot.slane %v5403, %v5548
    %v5550 = vlaneseq
    %v5551 = vshrl.u32 %v5550, 7
    %v5552 = vsub.s32 3, %v5551
    %v5553 = vrot.slane %v5405, %v5552
    %v5554 = vlaneseq
    %v5555 = vshrl.u32 %v5554, 7
    %v5556 = vsub.s32 3, %v5555
    %v5557 = vrot.slane %v5480, %v5556
    %v5558 = vmul.f32 %v5549, %v4989
    %v5559 = vmul.f32 %v5553, %v4990
    %v5560 = vmul.f32 %v5557, %v4991
    %v5561 = vlaneseq
    %v5562 = vshrl.u32 %v5561, 7
    %v5563 = vsub.s32 4, %v5562
    %v5564 = vrot.slane %v5403, %v5563
    %v5565 = vlaneseq
    %v5566 = vshrl.u32 %v5565, 7
    %v5567 = vsub.s32 4, %v5566
    %v5568 = vrot.slane %v5405, %v5567
    %v5569 = vlaneseq
    %v5570 = vshrl.u32 %v5569, 7
    %v5571 = vsub.s32 4, %v5570
    %v5572 = vrot.slane %v5480, %v5571
    %v5573 = vmul.f32 %v5564, %v4995
    %v5574 = vmul.f32 %v5568, %v4996
    %v5575 = vmul.f32 %v5572, %v4997
    %v5576 = vadd.f32 %v5558, %v5573
    %v5577 = vadd.f32 %v5559, %v5574
    %v5578 = vadd.f32 %v5560, %v5575
    %v5579 = vlaneseq
    %v5580 = vshrl.u32 %v5579, 7
    %v5581 = vsub.s32 5, %v5580
    %v5582 = vrot.slane %v5403, %v5581
    %v5583 = vlaneseq
    %v5584 = vshrl.u32 %v5583, 7
    %v5585 = vsub.s32 5, %v5584
    %v5586 = vrot.slane %v5405, %v5585
    %v5587 = vlaneseq
    %v5588 = vshrl.u32 %v5587, 7
    %v5589 = vsub.s32 5, %v5588
    %v5590 = vrot.slane %v5480, %v5589
    %v5591 = vmul.f32 %v5582, %v5001
    %v5592 = vmul.f32 %v5586, %v5002
    %v5593 = vmul.f32 %v5590, %v5003
    %v5594 = vadd.f32 %v5576, %v5591
    %v5595 = vadd.f32 %v5577, %v5592
    %v5596 = vadd.f32 %v5578, %v5593
    %v5599 = vcombine.low %v5594, %v5595
    %s5601 = scalar_lea.vmem %s8, 264
    %5602 = vst [vmem:[%s5601] sm:$0x77] %v5599
    %5603 = vst [vmem:[%s5601 + $0x8] sm:$0x7] %v5596
    %v5604 = vlaneseq
    %v5605 = vshrl.u32 %v5604, 7
    %v5606 = vsub.s32 6, %v5605
    %v5607 = vrot.slane %v5403, %v5606
    %v5608 = vlaneseq
    %v5609 = vshrl.u32 %v5608, 7
    %v5610 = vsub.s32 6, %v5609
    %v5611 = vrot.slane %v5405, %v5610
    %v5612 = vlaneseq
    %v5613 = vshrl.u32 %v5612, 7
    %v5614 = vsub.s32 6, %v5613
    %v5615 = vrot.slane %v5480, %v5614
    %v5616 = vmul.f32 %v5607, %v4989
    %v5617 = vmul.f32 %v5611, %v4990
    %v5618 = vmul.f32 %v5615, %v4991
    %v5619 = vlaneseq
    %v5620 = vshrl.u32 %v5619, 7
    %v5621 = vsub.s32 7, %v5620
    %v5622 = vrot.slane %v5403, %v5621
    %v5623 = vlaneseq
    %v5624 = vshrl.u32 %v5623, 7
    %v5625 = vsub.s32 7, %v5624
    %v5626 = vrot.slane %v5405, %v5625
    %v5627 = vlaneseq
    %v5628 = vshrl.u32 %v5627, 7
    %v5629 = vsub.s32 7, %v5628
    %v5630 = vrot.slane %v5480, %v5629
    %v5631 = vmul.f32 %v5622, %v4995
    %v5632 = vmul.f32 %v5626, %v4996
    %v5633 = vmul.f32 %v5630, %v4997
    %v5634 = vadd.f32 %v5616, %v5631
    %v5635 = vadd.f32 %v5617, %v5632
    %v5636 = vadd.f32 %v5618, %v5633
    %v5637 = vlaneseq
    %v5638 = vshrl.u32 %v5637, 7
    %v5639 = vsub.s32 0, %v5638
    %v5640 = vrot.slane %v5409, %v5639
    %v5641 = vlaneseq
    %v5642 = vshrl.u32 %v5641, 7
    %v5643 = vsub.s32 0, %v5642
    %v5644 = vrot.slane %v5411, %v5643
    %v5645 = vlaneseq
    %v5646 = vshrl.u32 %v5645, 7
    %v5647 = vsub.s32 0, %v5646
    %v5648 = vrot.slane %v5485, %v5647
    %v5649 = vmul.f32 %v5640, %v5001
    %v5650 = vmul.f32 %v5644, %v5002
    %v5651 = vmul.f32 %v5648, %v5003
    %v5652 = vadd.f32 %v5634, %v5649
    %v5653 = vadd.f32 %v5635, %v5650
    %v5654 = vadd.f32 %v5636, %v5651
    %v5657 = vcombine.low %v5652, %v5653
    %s5659 = scalar_lea.vmem %s8, 276
    %5660 = vst [vmem:[%s5659] sm:$0x77] %v5657
    %5661 = vst [vmem:[%s5659 + $0x8] sm:$0x7] %v5654
    %v5662 = vmul.f32 %v5238, 0.25
    %v5663 = vmul.f32 %v5240, 0.25
    %v5664 = vmul.f32 %v5309, 0.25
    %v5667 = vcombine.low %v5662, %v5663
    %v5669 = vadd.f32 %v4974, %v5667
    %v5670 = vadd.f32 %v4975, %v5664
    %s5671 = scalar_lea.vmem [#allocation2], 96
    %5672 = vst [vmem:[%s5671] sm:$0x77] %v5669
    %5673 = vst [vmem:[%s5671 + $0x8] sm:$0x7] %v5670
    %v5676 = vcombine.low %v5238, %v5240
    %s5678 = scalar_lea.vmem %s7, 84
    %5679 = vst [vmem:[%s5678] sm:$0x77] %v5676
    %5680 = vst [vmem:[%s5678 + $0x8] sm:$0x7] %v5309
    // Predicated region
    $region26: #{shapenet_forward.1} parent=1 // pred_check
      _
    $region27: #{shapenet_forward.1} parent=1 // pred_check_branch
      %5682 = sbr.rel (0) target = $region29
    $region28: #{shapenet_forward.1} parent=1 // pred_region
      %s5684 = ssub.s32 1728, 1728
      %5685 = vsyncadd [#allocation3], %s5684
      %s5686 = sshll.u32 [#allocation2], 4
      %s5687 = int_to_ptr.vmem [resolvable:$true] %s5686
      %5692 = dma.vmem_to_hbm [thread:$0]  %s5687, 1728, %s6, [#allocation3], 192, 192, 12
    $region29: #{shapenet_forward.1} parent=1 // pred_fallthru
      _
    // Predicated region
    $region30: #{shapenet_forward.1} parent=1 // pred_check
      _
    $region31: #{shapenet_forward.1} parent=1 // pred_check_branch
      %5694 = sbr.rel (0) target = $region33
    $region32: #{shapenet_forward.1} parent=1 // pred_region
      _
    $region33: #{shapenet_forward.1} parent=1 // pred_fallthru
      _
    // Predicated region
    $region34: #{shapenet_forward.1} parent=1 // pred_check
      _
    $region35: #{shapenet_forward.1} parent=1 // pred_check_branch
      %5696 = sbr.rel (0) target = $region37
    $region36: #{shapenet_forward.1} parent=1 // pred_region
      _
    $region37: #{shapenet_forward.1} parent=1 // pred_fallthru
      _
    // Predicated region
    $region38: #{shapenet_forward.1} parent=1 // pred_check
      _
    $region39: #{shapenet_forward.1} parent=1 // pred_check_branch
      %5698 = sbr.rel (0) target = $region41
    $region40: #{shapenet_forward.1} parent=1 // pred_region
      %5699 = dma.done [#allocation3], 1728
    $region41: #{shapenet_forward.1} parent=1 // pred_fallthru
      _
    // Predicated region
    $region42: #{shapenet_forward.1} parent=1 // pred_check
      _
    $region43: #{shapenet_forward.1} parent=1 // pred_check_branch
      %5701 = sbr.rel (0) target = $region45
    $region44: #{shapenet_forward.1} parent=1 // pred_region
      _
    $region45: #{shapenet_forward.1} parent=1 // pred_fallthru
      _
    // Predicated region
    $region46: #{shapenet_forward.1} parent=1 // pred_check
      _
    $region47: #{shapenet_forward.1} parent=1 // pred_check_branch
      %5703 = sbr.rel (0) target = $region49
    $region48: #{shapenet_forward.1} parent=1 // pred_region
      _
    $region49: #{shapenet_forward.1} parent=1 // pred_fallthru
      _
    %5704 = vsyncpa [#allocation3], 1

</llo_original>
